<compile_context>
chip_gen: v7x
topology: tpu7x:2x2x1
jax: 0.10.0
libtpu: 0.0.40
codegen_flags: <defaults>
</compile_context>

<pallas_src>
import jax
import jax.numpy as jnp
from jax.experimental import pallas as pl
from jax.experimental.pallas import tpu as pltpu

# ----------------------------- small ViT config -----------------------------
B = 2
IN_CHANS = 3
IMG = 28
PATCH = 14
GRID_HW = IMG // PATCH                # 2
NUM_PATCHES = GRID_HW * GRID_HW       # 4
PATCH_DIM = IN_CHANS * PATCH * PATCH  # 588
PATCH_DIM_PAD = 640                   # zero-padded to 5*128 lanes
EMBED_DIM = 128
NUM_HEADS = 4
HEAD_DIM = EMBED_DIM // NUM_HEADS     # 32
MLP_HIDDEN = 4 * EMBED_DIM            # 512
DEPTH = 4
NUM_BLOCKS_RUN = DEPTH - 1            # get_intermediate_layers(n={DEPTH-2})
NUM_REG = 4
NUM_PREFIX = 1 + NUM_REG              # cls + 4 register tokens
SEQ = NUM_PREFIX + NUM_PATCHES        # 9
TOK = B * SEQ                         # 18 -- batch folded into token rows
N_PRE = B * NUM_PREFIX                # 10 prefix rows (first in the buffer)
N_PATCH = B * NUM_PATCHES             # 8 patch rows (last; exactly one (8,128) tile)
LN_EPS = 1e-6
ATTN_SCALE = HEAD_DIM ** -0.5         # folded into qkv_w/qkv_b host-side
SQRT_HALF = 0.7071067811865476        # 1/sqrt(2) for exact (erf) GELU
NEG_INF = -1e30


# ------------------------------- kernel helpers -------------------------------
def _layernorm(v, g, b):
    mu = jnp.mean(v, axis=-1, keepdims=True)
    c = v - mu
    var = jnp.mean(c * c, axis=-1, keepdims=True)
    return c * jax.lax.rsqrt(var + LN_EPS) * g + b


def _bf16_dot(a, w_bf16):
    # bf16 inputs, f32 accumulation (MXU-native).
    return jnp.dot(a.astype(jnp.bfloat16), w_bf16,
                   preferred_element_type=jnp.float32)


# ------------------------------ fused forward kernel ---------------------------
def _dinov2_fused_kernel(
        patches_ref,                    # (N_PATCH, PATCH_DIM_PAD)    f32
        conv_w_ref,                     # (PATCH_DIM_PAD, EMBED_DIM)  bf16
        conv_b_ref,                     # (1, EMBED_DIM)              f32
        pos_ref,                        # (N_PATCH, EMBED_DIM)        f32 (tiled per image)
        prefix_ref,                     # (N_PRE, EMBED_DIM)          f32 (cls+reg, tiled)
        attn_bias_ref,                  # (TOK, TOK)                  f32 block-diag by image
        ln1g_ref, ln1b_ref,             # (NB, 1, D)
        qkvw_ref, qkvb_ref,             # (NB, D, 3D) bf16 (Q pre-scaled), (NB, 1, 3D)
        projw_ref, projb_ref,           # (NB, D, D)  bf16, (NB, 1, D)
        ls1_ref,                        # (NB, 1, D)
        ln2g_ref, ln2b_ref,             # (NB, 1, D)
        fc1w_ref, fc1b_ref,             # (NB, D, MLP) bf16, (NB, 1, MLP)
        fc2w_ref, fc2b_ref,             # (NB, MLP, D) bf16, (NB, 1, D)
        ls2_ref,                        # (NB, 1, D)
        o_ref):                         # (N_PATCH, EMBED_DIM) f32 output (one tile)

    # ---- patch embed (conv as matmul, K padded to 640) + bias ----------------
    pe = _bf16_dot(patches_ref[...], conv_w_ref[...]) + conv_b_ref[...]   # (8, D)

    # ---- token buffer (prefix-first layout), assembled in registers ----------
    # no_embed_class: pos embed only on patch tokens; prefix gets none.
    x = jnp.concatenate([prefix_ref[...], pe + pos_ref[...]], axis=0)     # (TOK, D)
    attn_bias = attn_bias_ref[...]      # block-diagonal: no cross-image attention

    # ---- transformer blocks 0 .. DEPTH-2 (unrolled, weights VMEM-resident) ----
    for i in range(NUM_BLOCKS_RUN):
        # hoist per-block params into locals (single ref read each)
        ln1g, ln1b = ln1g_ref[i], ln1b_ref[i]
        qkv_w, qkv_b = qkvw_ref[i], qkvb_ref[i]
        proj_w, proj_b = projw_ref[i], projb_ref[i]
        ls1 = ls1_ref[i]
        ln2g, ln2b = ln2g_ref[i], ln2b_ref[i]
        fc1_w, fc1_b = fc1w_ref[i], fc1b_ref[i]
        fc2_w, fc2_b = fc2w_ref[i], fc2b_ref[i]
        ls2 = ls2_ref[i]

        # --------------------------- attention branch -------------------------
        h = _layernorm(x, ln1g, ln1b)
        # ATTN_SCALE already folded into the Q columns of qkv_w / qkv_b.
        # Single bf16 cast of the whole QKV activation before per-head slicing.
        qkv = (_bf16_dot(h, qkv_w) + qkv_b).astype(jnp.bfloat16)          # (TOK, 3D)
        q = qkv[:, 0 * EMBED_DIM:1 * EMBED_DIM]
        k = qkv[:, 1 * EMBED_DIM:2 * EMBED_DIM]
        v = qkv[:, 2 * EMBED_DIM:3 * EMBED_DIM]

        head_outs = []
        for hh in range(NUM_HEADS):
            lo = hh * HEAD_DIM
            qh = q[:, lo:lo + HEAD_DIM]
            kh = k[:, lo:lo + HEAD_DIM]
            vh = v[:, lo:lo + HEAD_DIM]
            # q @ k^T via contracting dims (no materialized transpose)
            s = jax.lax.dot_general(qh, kh, (((1,), (1,)), ((), ())),
                                    preferred_element_type=jnp.float32)
            s = s + attn_bias                                  # (TOK, TOK)
            s = s - jnp.max(s, axis=-1, keepdims=True)
            p = jnp.exp(s)
            p = p * pl.reciprocal(jnp.sum(p, axis=-1, keepdims=True), approx=True)
            head_outs.append(jnp.dot(p.astype(jnp.bfloat16), vh,
                                     preferred_element_type=jnp.float32))
        attn = jnp.concatenate(head_outs, axis=-1)             # (TOK, D)
        attn = _bf16_dot(attn, proj_w) + proj_b
        x = x + attn * ls1                                     # LayerScale 1 + residual

        # ------------------------------ MLP branch -----------------------------
        h2 = _layernorm(x, ln2g, ln2b)
        h2 = _bf16_dot(h2, fc1_w) + fc1_b
        h2 = 0.5 * h2 * (1.0 + jax.lax.erf(h2 * SQRT_HALF))    # exact GELU (nn.GELU)
        h2 = _bf16_dot(h2, fc2_w) + fc2_b
        x = x + h2 * ls2                                       # LayerScale 2 + residual

    # ---- norm=False -> no final LN; patch rows are the trailing (8,128) tile ---
    o_ref[...] = x[N_PRE:, :]


# ------------------------------ parameter init --------------------------------
def init_params(key):
    def nrm(k, shape, scale=0.02):
        return (scale * jax.random.normal(k, shape)).astype(jnp.float32)

    keys = jax.random.split(key, 8 + DEPTH)
    params = {
        # conv weight kept in PyTorch layout (D, C, P, P), flattened for matmul later
        "conv_w": nrm(keys[0], (EMBED_DIM, IN_CHANS, PATCH, PATCH)),
        "conv_b": nrm(keys[1], (1, EMBED_DIM)),
        "pos_embed": nrm(keys[2], (NUM_PATCHES, EMBED_DIM)),
        "cls_token": nrm(keys[3], (1, 1, EMBED_DIM)),
        "reg_token": nrm(keys[4], (1, NUM_REG, EMBED_DIM)),
        "blocks": [],
    }
    for i in range(DEPTH):
        bk = jax.random.split(keys[8 + i], 9)
        params["blocks"].append({
            "ln1_g": jnp.ones((1, EMBED_DIM), jnp.float32),
            "ln1_b": jnp.zeros((1, EMBED_DIM), jnp.float32),
            "qkv_w": nrm(bk[0], (EMBED_DIM, 3 * EMBED_DIM)),
            "qkv_b": nrm(bk[1], (1, 3 * EMBED_DIM)),
            "proj_w": nrm(bk[2], (EMBED_DIM, EMBED_DIM)),
            "proj_b": nrm(bk[3], (1, EMBED_DIM)),
            # NOTE: synthetic LayerScale init (DINOv2 uses ~1e-5); kept O(0.02)
            # so the blocks contribute visibly to the output in this test.
            "ls1": nrm(bk[4], (1, EMBED_DIM)),
            "ln2_g": jnp.ones((1, EMBED_DIM), jnp.float32),
            "ln2_b": jnp.zeros((1, EMBED_DIM), jnp.float32),
            "fc1_w": nrm(bk[5], (EMBED_DIM, MLP_HIDDEN)),
            "fc1_b": nrm(bk[6], (1, MLP_HIDDEN)),
            "fc2_w": nrm(bk[7], (MLP_HIDDEN, EMBED_DIM)),
            "fc2_b": jnp.zeros((1, EMBED_DIM), jnp.float32),
            "ls2": nrm(bk[8], (1, EMBED_DIM)),
        })
    return params


def prepare_kernel_params(params):
    """One-time conversion to kernel layout:
      * stack per-block weights, cast matmul weights to bf16
      * fold ATTN_SCALE into the Q third of qkv_w / qkv_b
      * flatten + zero-pad the conv weight (K: 588 -> 640)
      * tile cls+reg prefix and pos_embed per image (prefix-first token layout)
      * build the block-diagonal attention bias for that layout
    """
    blocks = params["blocks"][:NUM_BLOCKS_RUN]

    def stack(name, dtype=jnp.float32):
        return jnp.stack([blk[name] for blk in blocks]).astype(dtype)

    # conv as matmul, padded to a lane-multiple contraction dim
    conv_w = params["conv_w"].reshape(EMBED_DIM, PATCH_DIM).T          # (588, D)
    conv_w = jnp.pad(conv_w, ((0, PATCH_DIM_PAD - PATCH_DIM), (0, 0)))
    conv_w = conv_w.astype(jnp.bfloat16)

    # fold attention scale into Q columns (weights & bias)
    scale_cols = jnp.concatenate(
        [jnp.full((EMBED_DIM,), ATTN_SCALE, jnp.float32),
         jnp.ones((2 * EMBED_DIM,), jnp.float32)])
    qkv_w = (stack("qkv_w") * scale_cols).astype(jnp.bfloat16)
    qkv_b = stack("qkv_b") * scale_cols

    # prefix-first token layout: [B copies of (cls+reg)] then [B blocks of patches]
    prefix = jnp.concatenate([params["cls_token"][0], params["reg_token"][0]],
                             axis=0)                                   # (5, D)
    prefix_all = jnp.tile(prefix, (B, 1))                              # (10, D)
    pos_all = jnp.tile(params["pos_embed"], (B, 1))                    # (8, D)

    image_id = jnp.concatenate([jnp.repeat(jnp.arange(B), NUM_PREFIX),
                                jnp.repeat(jnp.arange(B), NUM_PATCHES)])
    attn_bias = jnp.where(image_id[:, None] == image_id[None, :],
                          0.0, NEG_INF).astype(jnp.float32)            # (TOK, TOK)

    return {
        "conv_w": conv_w,
        "conv_b": params["conv_b"],
        "pos_embed": pos_all,
        "prefix": prefix_all,
        "attn_bias": attn_bias,
        "ln1_g": stack("ln1_g"), "ln1_b": stack("ln1_b"),
        "qkv_w": qkv_w, "qkv_b": qkv_b,
        "proj_w": stack("proj_w", jnp.bfloat16), "proj_b": stack("proj_b"),
        "ls1": stack("ls1"),
        "ln2_g": stack("ln2_g"), "ln2_b": stack("ln2_b"),
        "fc1_w": stack("fc1_w", jnp.bfloat16), "fc1_b": stack("fc1_b"),
        "fc2_w": stack("fc2_w", jnp.bfloat16), "fc2_b": stack("fc2_b"),
        "ls2": stack("ls2"),
    }


# ------------------------------ full forward ----------------------------------
@jax.jit
def timm_dinov2_vision_encoder_forward(images, kp):
    """images: NCHW float32 [B, C, IMG, IMG]. Returns (None, patch_features)."""
    # unfold NCHW image into conv patches (matches Conv2d k=stride=PATCH),
    # zero-pad the contraction dim to 640 lanes
    x = images.reshape(B, IN_CHANS, GRID_HW, PATCH, GRID_HW, PATCH)
    x = x.transpose(0, 2, 4, 1, 3, 5).reshape(N_PATCH, PATCH_DIM)
    x = jnp.pad(x, ((0, 0), (0, PATCH_DIM_PAD - PATCH_DIM)))

    # single fused, gridless pallas_call: patch embed + prefix tokens + all blocks
    # + prefix strip.  ~1.2 MB bf16 weights + tiny activations -> all VMEM-resident.
    flat = pl.pallas_call(
        _dinov2_fused_kernel,
        out_shape=jax.ShapeDtypeStruct((N_PATCH, EMBED_DIM), jnp.float32),
    )(x, kp["conv_w"], kp["conv_b"], kp["pos_embed"], kp["prefix"], kp["attn_bias"],
      kp["ln1_g"], kp["ln1_b"], kp["qkv_w"], kp["qkv_b"],
      kp["proj_w"], kp["proj_b"], kp["ls1"],
      kp["ln2_g"], kp["ln2_b"], kp["fc1_w"], kp["fc1_b"],
      kp["fc2_w"], kp["fc2_b"], kp["ls2"])

    patch_features = flat.reshape(B, NUM_PATCHES, EMBED_DIM)   # free layout plumbing
    return (None, patch_features)


if __name__ == "__main__":
    key = jax.random.PRNGKey(0)
    k_img, k_par = jax.random.split(key)
    images = jax.random.normal(k_img, (B, IN_CHANS, IMG, IMG), dtype=jnp.float32)
    params = init_params(k_par)
    kparams = prepare_kernel_params(params)

    none_out, patch_features = timm_dinov2_vision_encoder_forward(images, kparams)
    patch_features = jax.block_until_ready(patch_features)

    assert none_out is None
    assert patch_features.shape == (B, NUM_PATCHES, EMBED_DIM)
    assert patch_features.dtype == jnp.float32
    assert bool(jnp.all(jnp.isfinite(patch_features)))
    print("KERNEL_OK")
</pallas_src>

<mosaic_0001>
module attributes {stable_mosaic.version = 11 : i64} {
  func.func @_dinov2_fused_kernel(%arg0: memref<8x640xf32, #tpu.memory_space<vmem>>, %arg1: memref<640x128xbf16, #tpu.memory_space<vmem>>, %arg2: memref<1x128xf32, #tpu.memory_space<vmem>>, %arg3: memref<8x128xf32, #tpu.memory_space<vmem>>, %arg4: memref<10x128xf32, #tpu.memory_space<vmem>>, %arg5: memref<18x18xf32, #tpu.memory_space<vmem>>, %arg6: memref<3x1x128xf32, #tpu.memory_space<vmem>>, %arg7: memref<3x1x128xf32, #tpu.memory_space<vmem>>, %arg8: memref<3x128x384xbf16, #tpu.memory_space<vmem>>, %arg9: memref<3x1x384xf32, #tpu.memory_space<vmem>>, %arg10: memref<3x128x128xbf16, #tpu.memory_space<vmem>>, %arg11: memref<3x1x128xf32, #tpu.memory_space<vmem>>, %arg12: memref<3x1x128xf32, #tpu.memory_space<vmem>>, %arg13: memref<3x1x128xf32, #tpu.memory_space<vmem>>, %arg14: memref<3x1x128xf32, #tpu.memory_space<vmem>>, %arg15: memref<3x128x512xbf16, #tpu.memory_space<vmem>>, %arg16: memref<3x1x512xf32, #tpu.memory_space<vmem>>, %arg17: memref<3x512x128xbf16, #tpu.memory_space<vmem>>, %arg18: memref<3x1x128xf32, #tpu.memory_space<vmem>>, %arg19: memref<3x1x128xf32, #tpu.memory_space<vmem>>, %arg20: memref<8x128xf32, #tpu.memory_space<vmem>>) attributes {dimension_semantics = [], scalar_prefetch = 0 : i64, scratch_operands = 0 : i64, tpu.core_type = #tpu.core_type<tc>} {
    %c0 = arith.constant 0 : index
    %c0_0 = arith.constant 0 : index
    %0 = vector.load %arg0[%c0, %c0_0] : memref<8x640xf32, #tpu.memory_space<vmem>>, vector<8x640xf32>
    %c0_1 = arith.constant 0 : index
    %c0_2 = arith.constant 0 : index
    %1 = vector.load %arg1[%c0_1, %c0_2] : memref<640x128xbf16, #tpu.memory_space<vmem>>, vector<640x128xbf16>
    %2 = arith.truncf %0 : vector<8x640xf32> to vector<8x640xbf16>
    %cst = arith.constant dense<0.000000e+00> : vector<8x128xf32>
    %3 = tpu.matmul %2, %1, %cst {dimension_numbers = #tpu.dot_dimension_numbers<[1], [0], [0], [1], [0, 0, 1, 1], [], []>} : vector<8x640xbf16>, vector<640x128xbf16>, vector<8x128xf32> -> vector<8x128xf32>
    %c0_3 = arith.constant 0 : index
    %c0_4 = arith.constant 0 : index
    %4 = vector.load %arg2[%c0_3, %c0_4] : memref<1x128xf32, #tpu.memory_space<vmem>>, vector<1x128xf32>
    %5 = vector.broadcast %4 : vector<1x128xf32> to vector<8x128xf32>
    %6 = arith.addf %3, %5 : vector<8x128xf32>
    %c0_5 = arith.constant 0 : index
    %c0_6 = arith.constant 0 : index
    %7 = vector.load %arg4[%c0_5, %c0_6] : memref<10x128xf32, #tpu.memory_space<vmem>>, vector<10x128xf32>
    %c0_7 = arith.constant 0 : index
    %c0_8 = arith.constant 0 : index
    %8 = vector.load %arg3[%c0_7, %c0_8] : memref<8x128xf32, #tpu.memory_space<vmem>>, vector<8x128xf32>
    %9 = arith.addf %6, %8 : vector<8x128xf32>
    %10 = tpu.concatenate %7, %9 in 0 : vector<10x128xf32>, vector<8x128xf32> -> vector<18x128xf32>
    %c0_9 = arith.constant 0 : index
    %c0_10 = arith.constant 0 : index
    %11 = vector.load %arg5[%c0_9, %c0_10] : memref<18x18xf32, #tpu.memory_space<vmem>>, vector<18x18xf32>
    %c0_11 = arith.constant 0 : index
    %c0_12 = arith.constant 0 : index
    %c0_13 = arith.constant 0 : index
    %12 = vector.load %arg6[%c0_11, %c0_12, %c0_13] : memref<3x1x128xf32, #tpu.memory_space<vmem>>, vector<1x1x128xf32>
    %13 = vector.shape_cast %12 : vector<1x1x128xf32> to vector<1x128xf32>
    %c0_14 = arith.constant 0 : index
    %c0_15 = arith.constant 0 : index
    %c0_16 = arith.constant 0 : index
    %14 = vector.load %arg7[%c0_14, %c0_15, %c0_16] : memref<3x1x128xf32, #tpu.memory_space<vmem>>, vector<1x1x128xf32>
    %15 = vector.shape_cast %14 : vector<1x1x128xf32> to vector<1x128xf32>
    %c0_17 = arith.constant 0 : index
    %c0_18 = arith.constant 0 : index
    %c0_19 = arith.constant 0 : index
    %16 = vector.load %arg8[%c0_17, %c0_18, %c0_19] : memref<3x128x384xbf16, #tpu.memory_space<vmem>>, vector<1x128x384xbf16>
    %17 = vector.shape_cast %16 : vector<1x128x384xbf16> to vector<128x384xbf16>
    %c0_20 = arith.constant 0 : index
    %c0_21 = arith.constant 0 : index
    %c0_22 = arith.constant 0 : index
    %18 = vector.load %arg9[%c0_20, %c0_21, %c0_22] : memref<3x1x384xf32, #tpu.memory_space<vmem>>, vector<1x1x384xf32>
    %19 = vector.shape_cast %18 : vector<1x1x384xf32> to vector<1x384xf32>
    %c0_23 = arith.constant 0 : index
    %c0_24 = arith.constant 0 : index
    %c0_25 = arith.constant 0 : index
    %20 = vector.load %arg10[%c0_23, %c0_24, %c0_25] : memref<3x128x128xbf16, #tpu.memory_space<vmem>>, vector<1x128x128xbf16>
    %21 = vector.shape_cast %20 : vector<1x128x128xbf16> to vector<128x128xbf16>
    %c0_26 = arith.constant 0 : index
    %c0_27 = arith.constant 0 : index
    %c0_28 = arith.constant 0 : index
    %22 = vector.load %arg11[%c0_26, %c0_27, %c0_28] : memref<3x1x128xf32, #tpu.memory_space<vmem>>, vector<1x1x128xf32>
    %23 = vector.shape_cast %22 : vector<1x1x128xf32> to vector<1x128xf32>
    %c0_29 = arith.constant 0 : index
    %c0_30 = arith.constant 0 : index
    %c0_31 = arith.constant 0 : index
    %24 = vector.load %arg12[%c0_29, %c0_30, %c0_31] : memref<3x1x128xf32, #tpu.memory_space<vmem>>, vector<1x1x128xf32>
    %25 = vector.shape_cast %24 : vector<1x1x128xf32> to vector<1x128xf32>
    %c0_32 = arith.constant 0 : index
    %c0_33 = arith.constant 0 : index
    %c0_34 = arith.constant 0 : index
    %26 = vector.load %arg13[%c0_32, %c0_33, %c0_34] : memref<3x1x128xf32, #tpu.memory_space<vmem>>, vector<1x1x128xf32>
    %27 = vector.shape_cast %26 : vector<1x1x128xf32> to vector<1x128xf32>
    %c0_35 = arith.constant 0 : index
    %c0_36 = arith.constant 0 : index
    %c0_37 = arith.constant 0 : index
    %28 = vector.load %arg14[%c0_35, %c0_36, %c0_37] : memref<3x1x128xf32, #tpu.memory_space<vmem>>, vector<1x1x128xf32>
    %29 = vector.shape_cast %28 : vector<1x1x128xf32> to vector<1x128xf32>
    %c0_38 = arith.constant 0 : index
    %c0_39 = arith.constant 0 : index
    %c0_40 = arith.constant 0 : index
    %30 = vector.load %arg15[%c0_38, %c0_39, %c0_40] : memref<3x128x512xbf16, #tpu.memory_space<vmem>>, vector<1x128x512xbf16>
    %31 = vector.shape_cast %30 : vector<1x128x512xbf16> to vector<128x512xbf16>
    %c0_41 = arith.constant 0 : index
    %c0_42 = arith.constant 0 : index
    %c0_43 = arith.constant 0 : index
    %32 = vector.load %arg16[%c0_41, %c0_42, %c0_43] : memref<3x1x512xf32, #tpu.memory_space<vmem>>, vector<1x1x512xf32>
    %33 = vector.shape_cast %32 : vector<1x1x512xf32> to vector<1x512xf32>
    %c0_44 = arith.constant 0 : index
    %c0_45 = arith.constant 0 : index
    %c0_46 = arith.constant 0 : index
    %34 = vector.load %arg17[%c0_44, %c0_45, %c0_46] : memref<3x512x128xbf16, #tpu.memory_space<vmem>>, vector<1x512x128xbf16>
    %35 = vector.shape_cast %34 : vector<1x512x128xbf16> to vector<512x128xbf16>
    %c0_47 = arith.constant 0 : index
    %c0_48 = arith.constant 0 : index
    %c0_49 = arith.constant 0 : index
    %36 = vector.load %arg18[%c0_47, %c0_48, %c0_49] : memref<3x1x128xf32, #tpu.memory_space<vmem>>, vector<1x1x128xf32>
    %37 = vector.shape_cast %36 : vector<1x1x128xf32> to vector<1x128xf32>
    %c0_50 = arith.constant 0 : index
    %c0_51 = arith.constant 0 : index
    %c0_52 = arith.constant 0 : index
    %38 = vector.load %arg19[%c0_50, %c0_51, %c0_52] : memref<3x1x128xf32, #tpu.memory_space<vmem>>, vector<1x1x128xf32>
    %39 = vector.shape_cast %38 : vector<1x1x128xf32> to vector<1x128xf32>
    %cst_53 = arith.constant dense<0.000000e+00> : vector<18xf32>
    %40 = vector.multi_reduction <add>, %10, %cst_53 [1] : vector<18x128xf32> to vector<18xf32>
    %41 = vector.shape_cast %40 : vector<18xf32> to vector<18x1xf32>
    %cst_54 = arith.constant 1.280000e+02 : f32
    %42 = vector.broadcast %cst_54 : f32 to vector<18x1xf32>
    %43 = arith.divf %41, %42 : vector<18x1xf32>
    %44 = vector.broadcast %43 : vector<18x1xf32> to vector<18x128xf32>
    %45 = arith.subf %10, %44 : vector<18x128xf32>
    %46 = arith.mulf %45, %45 : vector<18x128xf32>
    %cst_55 = arith.constant dense<0.000000e+00> : vector<18xf32>
    %47 = vector.multi_reduction <add>, %46, %cst_55 [1] : vector<18x128xf32> to vector<18xf32>
    %48 = vector.shape_cast %47 : vector<18xf32> to vector<18x1xf32>
    %cst_56 = arith.constant 1.280000e+02 : f32
    %49 = vector.broadcast %cst_56 : f32 to vector<18x1xf32>
    %50 = arith.divf %48, %49 : vector<18x1xf32>
    %cst_57 = arith.constant 9.99999997E-7 : f32
    %51 = vector.broadcast %cst_57 : f32 to vector<18x1xf32>
    %52 = arith.addf %50, %51 : vector<18x1xf32>
    %53 = math.rsqrt %52 : vector<18x1xf32>
    %54 = vector.broadcast %53 : vector<18x1xf32> to vector<18x128xf32>
    %55 = arith.mulf %45, %54 : vector<18x128xf32>
    %56 = vector.broadcast %13 : vector<1x128xf32> to vector<18x128xf32>
    %57 = arith.mulf %55, %56 : vector<18x128xf32>
    %58 = vector.broadcast %15 : vector<1x128xf32> to vector<18x128xf32>
    %59 = arith.addf %57, %58 : vector<18x128xf32>
    %60 = arith.truncf %59 : vector<18x128xf32> to vector<18x128xbf16>
    %cst_58 = arith.constant dense<0.000000e+00> : vector<18x384xf32>
    %61 = tpu.matmul %60, %17, %cst_58 {dimension_numbers = #tpu.dot_dimension_numbers<[1], [0], [0], [1], [0, 0, 1, 1], [], []>} : vector<18x128xbf16>, vector<128x384xbf16>, vector<18x384xf32> -> vector<18x384xf32>
    %62 = vector.broadcast %19 : vector<1x384xf32> to vector<18x384xf32>
    %63 = arith.addf %61, %62 : vector<18x384xf32>
    %64 = arith.truncf %63 : vector<18x384xf32> to vector<18x384xbf16>
    %65 = vector.extract_strided_slice %64 {offsets = [0, 0], sizes = [18, 128], strides = [1, 1]} : vector<18x384xbf16> to vector<18x128xbf16>
    %66 = vector.extract_strided_slice %64 {offsets = [0, 128], sizes = [18, 128], strides = [1, 1]} : vector<18x384xbf16> to vector<18x128xbf16>
    %67 = vector.extract_strided_slice %64 {offsets = [0, 256], sizes = [18, 128], strides = [1, 1]} : vector<18x384xbf16> to vector<18x128xbf16>
    %68 = vector.extract_strided_slice %65 {offsets = [0, 0], sizes = [18, 32], strides = [1, 1]} : vector<18x128xbf16> to vector<18x32xbf16>
    %69 = vector.extract_strided_slice %66 {offsets = [0, 0], sizes = [18, 32], strides = [1, 1]} : vector<18x128xbf16> to vector<18x32xbf16>
    %70 = vector.extract_strided_slice %67 {offsets = [0, 0], sizes = [18, 32], strides = [1, 1]} : vector<18x128xbf16> to vector<18x32xbf16>
    %cst_59 = arith.constant dense<0.000000e+00> : vector<18x18xf32>
    %71 = tpu.matmul %68, %69, %cst_59 {dimension_numbers = #tpu.dot_dimension_numbers<[1], [1], [0], [0], [0, 0, 1, 0], [], []>} : vector<18x32xbf16>, vector<18x32xbf16>, vector<18x18xf32> -> vector<18x18xf32>
    %72 = arith.addf %71, %11 : vector<18x18xf32>
    %cst_60 = arith.constant dense<0xFF800000> : vector<18xf32>
    %73 = vector.multi_reduction <maximumf>, %72, %cst_60 [1] : vector<18x18xf32> to vector<18xf32>
    %74 = vector.shape_cast %73 : vector<18xf32> to vector<18x1xf32>
    %75 = vector.broadcast %74 : vector<18x1xf32> to vector<18x18xf32>
    %76 = arith.subf %72, %75 : vector<18x18xf32>
    %77 = math.exp %76 : vector<18x18xf32>
    %cst_61 = arith.constant dense<0.000000e+00> : vector<18xf32>
    %78 = vector.multi_reduction <add>, %77, %cst_61 [1] : vector<18x18xf32> to vector<18xf32>
    %79 = vector.shape_cast %78 : vector<18xf32> to vector<18x1xf32>
    %80 = tpu.reciprocal %79 {approx = true} : vector<18x1xf32> -> vector<18x1xf32>
    %81 = vector.broadcast %80 : vector<18x1xf32> to vector<18x18xf32>
    %82 = arith.mulf %77, %81 : vector<18x18xf32>
    %83 = arith.truncf %82 : vector<18x18xf32> to vector<18x18xbf16>
    %cst_62 = arith.constant dense<0.000000e+00> : vector<18x32xf32>
    %84 = tpu.matmul %83, %70, %cst_62 {dimension_numbers = #tpu.dot_dimension_numbers<[1], [0], [0], [1], [0, 0, 1, 1], [], []>} : vector<18x18xbf16>, vector<18x32xbf16>, vector<18x32xf32> -> vector<18x32xf32>
    %85 = vector.extract_strided_slice %65 {offsets = [0, 32], sizes = [18, 32], strides = [1, 1]} : vector<18x128xbf16> to vector<18x32xbf16>
    %86 = vector.extract_strided_slice %66 {offsets = [0, 32], sizes = [18, 32], strides = [1, 1]} : vector<18x128xbf16> to vector<18x32xbf16>
    %87 = vector.extract_strided_slice %67 {offsets = [0, 32], sizes = [18, 32], strides = [1, 1]} : vector<18x128xbf16> to vector<18x32xbf16>
    %cst_63 = arith.constant dense<0.000000e+00> : vector<18x18xf32>
    %88 = tpu.matmul %85, %86, %cst_63 {dimension_numbers = #tpu.dot_dimension_numbers<[1], [1], [0], [0], [0, 0, 1, 0], [], []>} : vector<18x32xbf16>, vector<18x32xbf16>, vector<18x18xf32> -> vector<18x18xf32>
    %89 = arith.addf %88, %11 : vector<18x18xf32>
    %cst_64 = arith.constant dense<0xFF800000> : vector<18xf32>
    %90 = vector.multi_reduction <maximumf>, %89, %cst_64 [1] : vector<18x18xf32> to vector<18xf32>
    %91 = vector.shape_cast %90 : vector<18xf32> to vector<18x1xf32>
    %92 = vector.broadcast %91 : vector<18x1xf32> to vector<18x18xf32>
    %93 = arith.subf %89, %92 : vector<18x18xf32>
    %94 = math.exp %93 : vector<18x18xf32>
    %cst_65 = arith.constant dense<0.000000e+00> : vector<18xf32>
    %95 = vector.multi_reduction <add>, %94, %cst_65 [1] : vector<18x18xf32> to vector<18xf32>
    %96 = vector.shape_cast %95 : vector<18xf32> to vector<18x1xf32>
    %97 = tpu.reciprocal %96 {approx = true} : vector<18x1xf32> -> vector<18x1xf32>
    %98 = vector.broadcast %97 : vector<18x1xf32> to vector<18x18xf32>
    %99 = arith.mulf %94, %98 : vector<18x18xf32>
    %100 = arith.truncf %99 : vector<18x18xf32> to vector<18x18xbf16>
    %cst_66 = arith.constant dense<0.000000e+00> : vector<18x32xf32>
    %101 = tpu.matmul %100, %87, %cst_66 {dimension_numbers = #tpu.dot_dimension_numbers<[1], [0], [0], [1], [0, 0, 1, 1], [], []>} : vector<18x18xbf16>, vector<18x32xbf16>, vector<18x32xf32> -> vector<18x32xf32>
    %102 = vector.extract_strided_slice %65 {offsets = [0, 64], sizes = [18, 32], strides = [1, 1]} : vector<18x128xbf16> to vector<18x32xbf16>
    %103 = vector.extract_strided_slice %66 {offsets = [0, 64], sizes = [18, 32], strides = [1, 1]} : vector<18x128xbf16> to vector<18x32xbf16>
    %104 = vector.extract_strided_slice %67 {offsets = [0, 64], sizes = [18, 32], strides = [1, 1]} : vector<18x128xbf16> to vector<18x32xbf16>
    %cst_67 = arith.constant dense<0.000000e+00> : vector<18x18xf32>
    %105 = tpu.matmul %102, %103, %cst_67 {dimension_numbers = #tpu.dot_dimension_numbers<[1], [1], [0], [0], [0, 0, 1, 0], [], []>} : vector<18x32xbf16>, vector<18x32xbf16>, vector<18x18xf32> -> vector<18x18xf32>
    %106 = arith.addf %105, %11 : vector<18x18xf32>
    %cst_68 = arith.constant dense<0xFF800000> : vector<18xf32>
    %107 = vector.multi_reduction <maximumf>, %106, %cst_68 [1] : vector<18x18xf32> to vector<18xf32>
    %108 = vector.shape_cast %107 : vector<18xf32> to vector<18x1xf32>
    %109 = vector.broadcast %108 : vector<18x1xf32> to vector<18x18xf32>
    %110 = arith.subf %106, %109 : vector<18x18xf32>
    %111 = math.exp %110 : vector<18x18xf32>
    %cst_69 = arith.constant dense<0.000000e+00> : vector<18xf32>
    %112 = vector.multi_reduction <add>, %111, %cst_69 [1] : vector<18x18xf32> to vector<18xf32>
    %113 = vector.shape_cast %112 : vector<18xf32> to vector<18x1xf32>
    %114 = tpu.reciprocal %113 {approx = true} : vector<18x1xf32> -> vector<18x1xf32>
    %115 = vector.broadcast %114 : vector<18x1xf32> to vector<18x18xf32>
    %116 = arith.mulf %111, %115 : vector<18x18xf32>
    %117 = arith.truncf %116 : vector<18x18xf32> to vector<18x18xbf16>
    %cst_70 = arith.constant dense<0.000000e+00> : vector<18x32xf32>
    %118 = tpu.matmul %117, %104, %cst_70 {dimension_numbers = #tpu.dot_dimension_numbers<[1], [0], [0], [1], [0, 0, 1, 1], [], []>} : vector<18x18xbf16>, vector<18x32xbf16>, vector<18x32xf32> -> vector<18x32xf32>
    %119 = vector.extract_strided_slice %65 {offsets = [0, 96], sizes = [18, 32], strides = [1, 1]} : vector<18x128xbf16> to vector<18x32xbf16>
    %120 = vector.extract_strided_slice %66 {offsets = [0, 96], sizes = [18, 32], strides = [1, 1]} : vector<18x128xbf16> to vector<18x32xbf16>
    %121 = vector.extract_strided_slice %67 {offsets = [0, 96], sizes = [18, 32], strides = [1, 1]} : vector<18x128xbf16> to vector<18x32xbf16>
    %cst_71 = arith.constant dense<0.000000e+00> : vector<18x18xf32>
    %122 = tpu.matmul %119, %120, %cst_71 {dimension_numbers = #tpu.dot_dimension_numbers<[1], [1], [0], [0], [0, 0, 1, 0], [], []>} : vector<18x32xbf16>, vector<18x32xbf16>, vector<18x18xf32> -> vector<18x18xf32>
    %123 = arith.addf %122, %11 : vector<18x18xf32>
    %cst_72 = arith.constant dense<0xFF800000> : vector<18xf32>
    %124 = vector.multi_reduction <maximumf>, %123, %cst_72 [1] : vector<18x18xf32> to vector<18xf32>
    %125 = vector.shape_cast %124 : vector<18xf32> to vector<18x1xf32>
    %126 = vector.broadcast %125 : vector<18x1xf32> to vector<18x18xf32>
    %127 = arith.subf %123, %126 : vector<18x18xf32>
    %128 = math.exp %127 : vector<18x18xf32>
    %cst_73 = arith.constant dense<0.000000e+00> : vector<18xf32>
    %129 = vector.multi_reduction <add>, %128, %cst_73 [1] : vector<18x18xf32> to vector<18xf32>
    %130 = vector.shape_cast %129 : vector<18xf32> to vector<18x1xf32>
    %131 = tpu.reciprocal %130 {approx = true} : vector<18x1xf32> -> vector<18x1xf32>
    %132 = vector.broadcast %131 : vector<18x1xf32> to vector<18x18xf32>
    %133 = arith.mulf %128, %132 : vector<18x18xf32>
    %134 = arith.truncf %133 : vector<18x18xf32> to vector<18x18xbf16>
    %cst_74 = arith.constant dense<0.000000e+00> : vector<18x32xf32>
    %135 = tpu.matmul %134, %121, %cst_74 {dimension_numbers = #tpu.dot_dimension_numbers<[1], [0], [0], [1], [0, 0, 1, 1], [], []>} : vector<18x18xbf16>, vector<18x32xbf16>, vector<18x32xf32> -> vector<18x32xf32>
    %136 = tpu.concatenate %84, %101, %118, %135 in 1 : vector<18x32xf32>, vector<18x32xf32>, vector<18x32xf32>, vector<18x32xf32> -> vector<18x128xf32>
    %137 = arith.truncf %136 : vector<18x128xf32> to vector<18x128xbf16>
    %cst_75 = arith.constant dense<0.000000e+00> : vector<18x128xf32>
    %138 = tpu.matmul %137, %21, %cst_75 {dimension_numbers = #tpu.dot_dimension_numbers<[1], [0], [0], [1], [0, 0, 1, 1], [], []>} : vector<18x128xbf16>, vector<128x128xbf16>, vector<18x128xf32> -> vector<18x128xf32>
    %139 = vector.broadcast %23 : vector<1x128xf32> to vector<18x128xf32>
    %140 = arith.addf %138, %139 : vector<18x128xf32>
    %141 = vector.broadcast %25 : vector<1x128xf32> to vector<18x128xf32>
    %142 = arith.mulf %140, %141 : vector<18x128xf32>
    %143 = arith.addf %10, %142 : vector<18x128xf32>
    %cst_76 = arith.constant dense<0.000000e+00> : vector<18xf32>
    %144 = vector.multi_reduction <add>, %143, %cst_76 [1] : vector<18x128xf32> to vector<18xf32>
    %145 = vector.shape_cast %144 : vector<18xf32> to vector<18x1xf32>
    %cst_77 = arith.constant 1.280000e+02 : f32
    %146 = vector.broadcast %cst_77 : f32 to vector<18x1xf32>
    %147 = arith.divf %145, %146 : vector<18x1xf32>
    %148 = vector.broadcast %147 : vector<18x1xf32> to vector<18x128xf32>
    %149 = arith.subf %143, %148 : vector<18x128xf32>
    %150 = arith.mulf %149, %149 : vector<18x128xf32>
    %cst_78 = arith.constant dense<0.000000e+00> : vector<18xf32>
    %151 = vector.multi_reduction <add>, %150, %cst_78 [1] : vector<18x128xf32> to vector<18xf32>
    %152 = vector.shape_cast %151 : vector<18xf32> to vector<18x1xf32>
    %cst_79 = arith.constant 1.280000e+02 : f32
    %153 = vector.broadcast %cst_79 : f32 to vector<18x1xf32>
    %154 = arith.divf %152, %153 : vector<18x1xf32>
    %cst_80 = arith.constant 9.99999997E-7 : f32
    %155 = vector.broadcast %cst_80 : f32 to vector<18x1xf32>
    %156 = arith.addf %154, %155 : vector<18x1xf32>
    %157 = math.rsqrt %156 : vector<18x1xf32>
    %158 = vector.broadcast %157 : vector<18x1xf32> to vector<18x128xf32>
    %159 = arith.mulf %149, %158 : vector<18x128xf32>
    %160 = vector.broadcast %27 : vector<1x128xf32> to vector<18x128xf32>
    %161 = arith.mulf %159, %160 : vector<18x128xf32>
    %162 = vector.broadcast %29 : vector<1x128xf32> to vector<18x128xf32>
    %163 = arith.addf %161, %162 : vector<18x128xf32>
    %164 = arith.truncf %163 : vector<18x128xf32> to vector<18x128xbf16>
    %cst_81 = arith.constant dense<0.000000e+00> : vector<18x512xf32>
    %165 = tpu.matmul %164, %31, %cst_81 {dimension_numbers = #tpu.dot_dimension_numbers<[1], [0], [0], [1], [0, 0, 1, 1], [], []>} : vector<18x128xbf16>, vector<128x512xbf16>, vector<18x512xf32> -> vector<18x512xf32>
    %166 = vector.broadcast %33 : vector<1x512xf32> to vector<18x512xf32>
    %167 = arith.addf %165, %166 : vector<18x512xf32>
    %cst_82 = arith.constant 5.000000e-01 : f32
    %168 = vector.broadcast %cst_82 : f32 to vector<18x512xf32>
    %169 = arith.mulf %168, %167 : vector<18x512xf32>
    %cst_83 = arith.constant 0.707106769 : f32
    %170 = vector.broadcast %cst_83 : f32 to vector<18x512xf32>
    %171 = arith.mulf %167, %170 : vector<18x512xf32>
    %172 = math.erf %171 : vector<18x512xf32>
    %cst_84 = arith.constant 1.000000e+00 : f32
    %173 = vector.broadcast %cst_84 : f32 to vector<18x512xf32>
    %174 = arith.addf %173, %172 : vector<18x512xf32>
    %175 = arith.mulf %169, %174 : vector<18x512xf32>
    %176 = arith.truncf %175 : vector<18x512xf32> to vector<18x512xbf16>
    %cst_85 = arith.constant dense<0.000000e+00> : vector<18x128xf32>
    %177 = tpu.matmul %176, %35, %cst_85 {dimension_numbers = #tpu.dot_dimension_numbers<[1], [0], [0], [1], [0, 0, 1, 1], [], []>} : vector<18x512xbf16>, vector<512x128xbf16>, vector<18x128xf32> -> vector<18x128xf32>
    %178 = vector.broadcast %37 : vector<1x128xf32> to vector<18x128xf32>
    %179 = arith.addf %177, %178 : vector<18x128xf32>
    %180 = vector.broadcast %39 : vector<1x128xf32> to vector<18x128xf32>
    %181 = arith.mulf %179, %180 : vector<18x128xf32>
    %182 = arith.addf %143, %181 : vector<18x128xf32>
    %c1 = arith.constant 1 : index
    %c0_86 = arith.constant 0 : index
    %c0_87 = arith.constant 0 : index
    %183 = vector.load %arg6[%c1, %c0_86, %c0_87] : memref<3x1x128xf32, #tpu.memory_space<vmem>>, vector<1x1x128xf32>
    %184 = vector.shape_cast %183 : vector<1x1x128xf32> to vector<1x128xf32>
    %c1_88 = arith.constant 1 : index
    %c0_89 = arith.constant 0 : index
    %c0_90 = arith.constant 0 : index
    %185 = vector.load %arg7[%c1_88, %c0_89, %c0_90] : memref<3x1x128xf32, #tpu.memory_space<vmem>>, vector<1x1x128xf32>
    %186 = vector.shape_cast %185 : vector<1x1x128xf32> to vector<1x128xf32>
    %c1_91 = arith.constant 1 : index
    %c0_92 = arith.constant 0 : index
    %c0_93 = arith.constant 0 : index
    %187 = vector.load %arg8[%c1_91, %c0_92, %c0_93] : memref<3x128x384xbf16, #tpu.memory_space<vmem>>, vector<1x128x384xbf16>
    %188 = vector.shape_cast %187 : vector<1x128x384xbf16> to vector<128x384xbf16>
    %c1_94 = arith.constant 1 : index
    %c0_95 = arith.constant 0 : index
    %c0_96 = arith.constant 0 : index
    %189 = vector.load %arg9[%c1_94, %c0_95, %c0_96] : memref<3x1x384xf32, #tpu.memory_space<vmem>>, vector<1x1x384xf32>
    %190 = vector.shape_cast %189 : vector<1x1x384xf32> to vector<1x384xf32>
    %c1_97 = arith.constant 1 : index
    %c0_98 = arith.constant 0 : index
    %c0_99 = arith.constant 0 : index
    %191 = vector.load %arg10[%c1_97, %c0_98, %c0_99] : memref<3x128x128xbf16, #tpu.memory_space<vmem>>, vector<1x128x128xbf16>
    %192 = vector.shape_cast %191 : vector<1x128x128xbf16> to vector<128x128xbf16>
    %c1_100 = arith.constant 1 : index
    %c0_101 = arith.constant 0 : index
    %c0_102 = arith.constant 0 : index
    %193 = vector.load %arg11[%c1_100, %c0_101, %c0_102] : memref<3x1x128xf32, #tpu.memory_space<vmem>>, vector<1x1x128xf32>
    %194 = vector.shape_cast %193 : vector<1x1x128xf32> to vector<1x128xf32>
    %c1_103 = arith.constant 1 : index
    %c0_104 = arith.constant 0 : index
    %c0_105 = arith.constant 0 : index
    %195 = vector.load %arg12[%c1_103, %c0_104, %c0_105] : memref<3x1x128xf32, #tpu.memory_space<vmem>>, vector<1x1x128xf32>
    %196 = vector.shape_cast %195 : vector<1x1x128xf32> to vector<1x128xf32>
    %c1_106 = arith.constant 1 : index
    %c0_107 = arith.constant 0 : index
    %c0_108 = arith.constant 0 : index
    %197 = vector.load %arg13[%c1_106, %c0_107, %c0_108] : memref<3x1x128xf32, #tpu.memory_space<vmem>>, vector<1x1x128xf32>
    %198 = vector.shape_cast %197 : vector<1x1x128xf32> to vector<1x128xf32>
    %c1_109 = arith.constant 1 : index
    %c0_110 = arith.constant 0 : index
    %c0_111 = arith.constant 0 : index
    %199 = vector.load %arg14[%c1_109, %c0_110, %c0_111] : memref<3x1x128xf32, #tpu.memory_space<vmem>>, vector<1x1x128xf32>
    %200 = vector.shape_cast %199 : vector<1x1x128xf32> to vector<1x128xf32>
    %c1_112 = arith.constant 1 : index
    %c0_113 = arith.constant 0 : index
    %c0_114 = arith.constant 0 : index
    %201 = vector.load %arg15[%c1_112, %c0_113, %c0_114] : memref<3x128x512xbf16, #tpu.memory_space<vmem>>, vector<1x128x512xbf16>
    %202 = vector.shape_cast %201 : vector<1x128x512xbf16> to vector<128x512xbf16>
    %c1_115 = arith.constant 1 : index
    %c0_116 = arith.constant 0 : index
    %c0_117 = arith.constant 0 : index
    %203 = vector.load %arg16[%c1_115, %c0_116, %c0_117] : memref<3x1x512xf32, #tpu.memory_space<vmem>>, vector<1x1x512xf32>
    %204 = vector.shape_cast %203 : vector<1x1x512xf32> to vector<1x512xf32>
    %c1_118 = arith.constant 1 : index
    %c0_119 = arith.constant 0 : index
    %c0_120 = arith.constant 0 : index
    %205 = vector.load %arg17[%c1_118, %c0_119, %c0_120] : memref<3x512x128xbf16, #tpu.memory_space<vmem>>, vector<1x512x128xbf16>
    %206 = vector.shape_cast %205 : vector<1x512x128xbf16> to vector<512x128xbf16>
    %c1_121 = arith.constant 1 : index
    %c0_122 = arith.constant 0 : index
    %c0_123 = arith.constant 0 : index
    %207 = vector.load %arg18[%c1_121, %c0_122, %c0_123] : memref<3x1x128xf32, #tpu.memory_space<vmem>>, vector<1x1x128xf32>
    %208 = vector.shape_cast %207 : vector<1x1x128xf32> to vector<1x128xf32>
    %c1_124 = arith.constant 1 : index
    %c0_125 = arith.constant 0 : index
    %c0_126 = arith.constant 0 : index
    %209 = vector.load %arg19[%c1_124, %c0_125, %c0_126] : memref<3x1x128xf32, #tpu.memory_space<vmem>>, vector<1x1x128xf32>
    %210 = vector.shape_cast %209 : vector<1x1x128xf32> to vector<1x128xf32>
    %cst_127 = arith.constant dense<0.000000e+00> : vector<18xf32>
    %211 = vector.multi_reduction <add>, %182, %cst_127 [1] : vector<18x128xf32> to vector<18xf32>
    %212 = vector.shape_cast %211 : vector<18xf32> to vector<18x1xf32>
    %cst_128 = arith.constant 1.280000e+02 : f32
    %213 = vector.broadcast %cst_128 : f32 to vector<18x1xf32>
    %214 = arith.divf %212, %213 : vector<18x1xf32>
    %215 = vector.broadcast %214 : vector<18x1xf32> to vector<18x128xf32>
    %216 = arith.subf %182, %215 : vector<18x128xf32>
    %217 = arith.mulf %216, %216 : vector<18x128xf32>
    %cst_129 = arith.constant dense<0.000000e+00> : vector<18xf32>
    %218 = vector.multi_reduction <add>, %217, %cst_129 [1] : vector<18x128xf32> to vector<18xf32>
    %219 = vector.shape_cast %218 : vector<18xf32> to vector<18x1xf32>
    %cst_130 = arith.constant 1.280000e+02 : f32
    %220 = vector.broadcast %cst_130 : f32 to vector<18x1xf32>
    %221 = arith.divf %219, %220 : vector<18x1xf32>
    %cst_131 = arith.constant 9.99999997E-7 : f32
    %222 = vector.broadcast %cst_131 : f32 to vector<18x1xf32>
    %223 = arith.addf %221, %222 : vector<18x1xf32>
    %224 = math.rsqrt %223 : vector<18x1xf32>
    %225 = vector.broadcast %224 : vector<18x1xf32> to vector<18x128xf32>
    %226 = arith.mulf %216, %225 : vector<18x128xf32>
    %227 = vector.broadcast %184 : vector<1x128xf32> to vector<18x128xf32>
    %228 = arith.mulf %226, %227 : vector<18x128xf32>
    %229 = vector.broadcast %186 : vector<1x128xf32> to vector<18x128xf32>
    %230 = arith.addf %228, %229 : vector<18x128xf32>
    %231 = arith.truncf %230 : vector<18x128xf32> to vector<18x128xbf16>
    %cst_132 = arith.constant dense<0.000000e+00> : vector<18x384xf32>
    %232 = tpu.matmul %231, %188, %cst_132 {dimension_numbers = #tpu.dot_dimension_numbers<[1], [0], [0], [1], [0, 0, 1, 1], [], []>} : vector<18x128xbf16>, vector<128x384xbf16>, vector<18x384xf32> -> vector<18x384xf32>
    %233 = vector.broadcast %190 : vector<1x384xf32> to vector<18x384xf32>
    %234 = arith.addf %232, %233 : vector<18x384xf32>
    %235 = arith.truncf %234 : vector<18x384xf32> to vector<18x384xbf16>
    %236 = vector.extract_strided_slice %235 {offsets = [0, 0], sizes = [18, 128], strides = [1, 1]} : vector<18x384xbf16> to vector<18x128xbf16>
    %237 = vector.extract_strided_slice %235 {offsets = [0, 128], sizes = [18, 128], strides = [1, 1]} : vector<18x384xbf16> to vector<18x128xbf16>
    %238 = vector.extract_strided_slice %235 {offsets = [0, 256], sizes = [18, 128], strides = [1, 1]} : vector<18x384xbf16> to vector<18x128xbf16>
    %239 = vector.extract_strided_slice %236 {offsets = [0, 0], sizes = [18, 32], strides = [1, 1]} : vector<18x128xbf16> to vector<18x32xbf16>
    %240 = vector.extract_strided_slice %237 {offsets = [0, 0], sizes = [18, 32], strides = [1, 1]} : vector<18x128xbf16> to vector<18x32xbf16>
    %241 = vector.extract_strided_slice %238 {offsets = [0, 0], sizes = [18, 32], strides = [1, 1]} : vector<18x128xbf16> to vector<18x32xbf16>
    %cst_133 = arith.constant dense<0.000000e+00> : vector<18x18xf32>
    %242 = tpu.matmul %239, %240, %cst_133 {dimension_numbers = #tpu.dot_dimension_numbers<[1], [1], [0], [0], [0, 0, 1, 0], [], []>} : vector<18x32xbf16>, vector<18x32xbf16>, vector<18x18xf32> -> vector<18x18xf32>
    %243 = arith.addf %242, %11 : vector<18x18xf32>
    %cst_134 = arith.constant dense<0xFF800000> : vector<18xf32>
    %244 = vector.multi_reduction <maximumf>, %243, %cst_134 [1] : vector<18x18xf32> to vector<18xf32>
    %245 = vector.shape_cast %244 : vector<18xf32> to vector<18x1xf32>
    %246 = vector.broadcast %245 : vector<18x1xf32> to vector<18x18xf32>
    %247 = arith.subf %243, %246 : vector<18x18xf32>
    %248 = math.exp %247 : vector<18x18xf32>
    %cst_135 = arith.constant dense<0.000000e+00> : vector<18xf32>
    %249 = vector.multi_reduction <add>, %248, %cst_135 [1] : vector<18x18xf32> to vector<18xf32>
    %250 = vector.shape_cast %249 : vector<18xf32> to vector<18x1xf32>
    %251 = tpu.reciprocal %250 {approx = true} : vector<18x1xf32> -> vector<18x1xf32>
    %252 = vector.broadcast %251 : vector<18x1xf32> to vector<18x18xf32>
    %253 = arith.mulf %248, %252 : vector<18x18xf32>
    %254 = arith.truncf %253 : vector<18x18xf32> to vector<18x18xbf16>
    %cst_136 = arith.constant dense<0.000000e+00> : vector<18x32xf32>
    %255 = tpu.matmul %254, %241, %cst_136 {dimension_numbers = #tpu.dot_dimension_numbers<[1], [0], [0], [1], [0, 0, 1, 1], [], []>} : vector<18x18xbf16>, vector<18x32xbf16>, vector<18x32xf32> -> vector<18x32xf32>
    %256 = vector.extract_strided_slice %236 {offsets = [0, 32], sizes = [18, 32], strides = [1, 1]} : vector<18x128xbf16> to vector<18x32xbf16>
    %257 = vector.extract_strided_slice %237 {offsets = [0, 32], sizes = [18, 32], strides = [1, 1]} : vector<18x128xbf16> to vector<18x32xbf16>
    %258 = vector.extract_strided_slice %238 {offsets = [0, 32], sizes = [18, 32], strides = [1, 1]} : vector<18x128xbf16> to vector<18x32xbf16>
    %cst_137 = arith.constant dense<0.000000e+00> : vector<18x18xf32>
    %259 = tpu.matmul %256, %257, %cst_137 {dimension_numbers = #tpu.dot_dimension_numbers<[1], [1], [0], [0], [0, 0, 1, 0], [], []>} : vector<18x32xbf16>, vector<18x32xbf16>, vector<18x18xf32> -> vector<18x18xf32>
    %260 = arith.addf %259, %11 : vector<18x18xf32>
    %cst_138 = arith.constant dense<0xFF800000> : vector<18xf32>
    %261 = vector.multi_reduction <maximumf>, %260, %cst_138 [1] : vector<18x18xf32> to vector<18xf32>
    %262 = vector.shape_cast %261 : vector<18xf32> to vector<18x1xf32>
    %263 = vector.broadcast %262 : vector<18x1xf32> to vector<18x18xf32>
    %264 = arith.subf %260, %263 : vector<18x18xf32>
    %265 = math.exp %264 : vector<18x18xf32>
    %cst_139 = arith.constant dense<0.000000e+00> : vector<18xf32>
    %266 = vector.multi_reduction <add>, %265, %cst_139 [1] : vector<18x18xf32> to vector<18xf32>
    %267 = vector.shape_cast %266 : vector<18xf32> to vector<18x1xf32>
    %268 = tpu.reciprocal %267 {approx = true} : vector<18x1xf32> -> vector<18x1xf32>
    %269 = vector.broadcast %268 : vector<18x1xf32> to vector<18x18xf32>
    %270 = arith.mulf %265, %269 : vector<18x18xf32>
    %271 = arith.truncf %270 : vector<18x18xf32> to vector<18x18xbf16>
    %cst_140 = arith.constant dense<0.000000e+00> : vector<18x32xf32>
    %272 = tpu.matmul %271, %258, %cst_140 {dimension_numbers = #tpu.dot_dimension_numbers<[1], [0], [0], [1], [0, 0, 1, 1], [], []>} : vector<18x18xbf16>, vector<18x32xbf16>, vector<18x32xf32> -> vector<18x32xf32>
    %273 = vector.extract_strided_slice %236 {offsets = [0, 64], sizes = [18, 32], strides = [1, 1]} : vector<18x128xbf16> to vector<18x32xbf16>
    %274 = vector.extract_strided_slice %237 {offsets = [0, 64], sizes = [18, 32], strides = [1, 1]} : vector<18x128xbf16> to vector<18x32xbf16>
    %275 = vector.extract_strided_slice %238 {offsets = [0, 64], sizes = [18, 32], strides = [1, 1]} : vector<18x128xbf16> to vector<18x32xbf16>
    %cst_141 = arith.constant dense<0.000000e+00> : vector<18x18xf32>
    %276 = tpu.matmul %273, %274, %cst_141 {dimension_numbers = #tpu.dot_dimension_numbers<[1], [1], [0], [0], [0, 0, 1, 0], [], []>} : vector<18x32xbf16>, vector<18x32xbf16>, vector<18x18xf32> -> vector<18x18xf32>
    %277 = arith.addf %276, %11 : vector<18x18xf32>
    %cst_142 = arith.constant dense<0xFF800000> : vector<18xf32>
    %278 = vector.multi_reduction <maximumf>, %277, %cst_142 [1] : vector<18x18xf32> to vector<18xf32>
    %279 = vector.shape_cast %278 : vector<18xf32> to vector<18x1xf32>
    %280 = vector.broadcast %279 : vector<18x1xf32> to vector<18x18xf32>
    %281 = arith.subf %277, %280 : vector<18x18xf32>
    %282 = math.exp %281 : vector<18x18xf32>
    %cst_143 = arith.constant dense<0.000000e+00> : vector<18xf32>
    %283 = vector.multi_reduction <add>, %282, %cst_143 [1] : vector<18x18xf32> to vector<18xf32>
    %284 = vector.shape_cast %283 : vector<18xf32> to vector<18x1xf32>
    %285 = tpu.reciprocal %284 {approx = true} : vector<18x1xf32> -> vector<18x1xf32>
    %286 = vector.broadcast %285 : vector<18x1xf32> to vector<18x18xf32>
    %287 = arith.mulf %282, %286 : vector<18x18xf32>
    %288 = arith.truncf %287 : vector<18x18xf32> to vector<18x18xbf16>
    %cst_144 = arith.constant dense<0.000000e+00> : vector<18x32xf32>
    %289 = tpu.matmul %288, %275, %cst_144 {dimension_numbers = #tpu.dot_dimension_numbers<[1], [0], [0], [1], [0, 0, 1, 1], [], []>} : vector<18x18xbf16>, vector<18x32xbf16>, vector<18x32xf32> -> vector<18x32xf32>
    %290 = vector.extract_strided_slice %236 {offsets = [0, 96], sizes = [18, 32], strides = [1, 1]} : vector<18x128xbf16> to vector<18x32xbf16>
    %291 = vector.extract_strided_slice %237 {offsets = [0, 96], sizes = [18, 32], strides = [1, 1]} : vector<18x128xbf16> to vector<18x32xbf16>
    %292 = vector.extract_strided_slice %238 {offsets = [0, 96], sizes = [18, 32], strides = [1, 1]} : vector<18x128xbf16> to vector<18x32xbf16>
    %cst_145 = arith.constant dense<0.000000e+00> : vector<18x18xf32>
    %293 = tpu.matmul %290, %291, %cst_145 {dimension_numbers = #tpu.dot_dimension_numbers<[1], [1], [0], [0], [0, 0, 1, 0], [], []>} : vector<18x32xbf16>, vector<18x32xbf16>, vector<18x18xf32> -> vector<18x18xf32>
    %294 = arith.addf %293, %11 : vector<18x18xf32>
    %cst_146 = arith.constant dense<0xFF800000> : vector<18xf32>
    %295 = vector.multi_reduction <maximumf>, %294, %cst_146 [1] : vector<18x18xf32> to vector<18xf32>
    %296 = vector.shape_cast %295 : vector<18xf32> to vector<18x1xf32>
    %297 = vector.broadcast %296 : vector<18x1xf32> to vector<18x18xf32>
    %298 = arith.subf %294, %297 : vector<18x18xf32>
    %299 = math.exp %298 : vector<18x18xf32>
    %cst_147 = arith.constant dense<0.000000e+00> : vector<18xf32>
    %300 = vector.multi_reduction <add>, %299, %cst_147 [1] : vector<18x18xf32> to vector<18xf32>
    %301 = vector.shape_cast %300 : vector<18xf32> to vector<18x1xf32>
    %302 = tpu.reciprocal %301 {approx = true} : vector<18x1xf32> -> vector<18x1xf32>
    %303 = vector.broadcast %302 : vector<18x1xf32> to vector<18x18xf32>
    %304 = arith.mulf %299, %303 : vector<18x18xf32>
    %305 = arith.truncf %304 : vector<18x18xf32> to vector<18x18xbf16>
    %cst_148 = arith.constant dense<0.000000e+00> : vector<18x32xf32>
    %306 = tpu.matmul %305, %292, %cst_148 {dimension_numbers = #tpu.dot_dimension_numbers<[1], [0], [0], [1], [0, 0, 1, 1], [], []>} : vector<18x18xbf16>, vector<18x32xbf16>, vector<18x32xf32> -> vector<18x32xf32>
    %307 = tpu.concatenate %255, %272, %289, %306 in 1 : vector<18x32xf32>, vector<18x32xf32>, vector<18x32xf32>, vector<18x32xf32> -> vector<18x128xf32>
    %308 = arith.truncf %307 : vector<18x128xf32> to vector<18x128xbf16>
    %cst_149 = arith.constant dense<0.000000e+00> : vector<18x128xf32>
    %309 = tpu.matmul %308, %192, %cst_149 {dimension_numbers = #tpu.dot_dimension_numbers<[1], [0], [0], [1], [0, 0, 1, 1], [], []>} : vector<18x128xbf16>, vector<128x128xbf16>, vector<18x128xf32> -> vector<18x128xf32>
    %310 = vector.broadcast %194 : vector<1x128xf32> to vector<18x128xf32>
    %311 = arith.addf %309, %310 : vector<18x128xf32>
    %312 = vector.broadcast %196 : vector<1x128xf32> to vector<18x128xf32>
    %313 = arith.mulf %311, %312 : vector<18x128xf32>
    %314 = arith.addf %182, %313 : vector<18x128xf32>
    %cst_150 = arith.constant dense<0.000000e+00> : vector<18xf32>
    %315 = vector.multi_reduction <add>, %314, %cst_150 [1] : vector<18x128xf32> to vector<18xf32>
    %316 = vector.shape_cast %315 : vector<18xf32> to vector<18x1xf32>
    %cst_151 = arith.constant 1.280000e+02 : f32
    %317 = vector.broadcast %cst_151 : f32 to vector<18x1xf32>
    %318 = arith.divf %316, %317 : vector<18x1xf32>
    %319 = vector.broadcast %318 : vector<18x1xf32> to vector<18x128xf32>
    %320 = arith.subf %314, %319 : vector<18x128xf32>
    %321 = arith.mulf %320, %320 : vector<18x128xf32>
    %cst_152 = arith.constant dense<0.000000e+00> : vector<18xf32>
    %322 = vector.multi_reduction <add>, %321, %cst_152 [1] : vector<18x128xf32> to vector<18xf32>
    %323 = vector.shape_cast %322 : vector<18xf32> to vector<18x1xf32>
    %cst_153 = arith.constant 1.280000e+02 : f32
    %324 = vector.broadcast %cst_153 : f32 to vector<18x1xf32>
    %325 = arith.divf %323, %324 : vector<18x1xf32>
    %cst_154 = arith.constant 9.99999997E-7 : f32
    %326 = vector.broadcast %cst_154 : f32 to vector<18x1xf32>
    %327 = arith.addf %325, %326 : vector<18x1xf32>
    %328 = math.rsqrt %327 : vector<18x1xf32>
    %329 = vector.broadcast %328 : vector<18x1xf32> to vector<18x128xf32>
    %330 = arith.mulf %320, %329 : vector<18x128xf32>
    %331 = vector.broadcast %198 : vector<1x128xf32> to vector<18x128xf32>
    %332 = arith.mulf %330, %331 : vector<18x128xf32>
    %333 = vector.broadcast %200 : vector<1x128xf32> to vector<18x128xf32>
    %334 = arith.addf %332, %333 : vector<18x128xf32>
    %335 = arith.truncf %334 : vector<18x128xf32> to vector<18x128xbf16>
    %cst_155 = arith.constant dense<0.000000e+00> : vector<18x512xf32>
    %336 = tpu.matmul %335, %202, %cst_155 {dimension_numbers = #tpu.dot_dimension_numbers<[1], [0], [0], [1], [0, 0, 1, 1], [], []>} : vector<18x128xbf16>, vector<128x512xbf16>, vector<18x512xf32> -> vector<18x512xf32>
    %337 = vector.broadcast %204 : vector<1x512xf32> to vector<18x512xf32>
    %338 = arith.addf %336, %337 : vector<18x512xf32>
    %cst_156 = arith.constant 5.000000e-01 : f32
    %339 = vector.broadcast %cst_156 : f32 to vector<18x512xf32>
    %340 = arith.mulf %339, %338 : vector<18x512xf32>
    %cst_157 = arith.constant 0.707106769 : f32
    %341 = vector.broadcast %cst_157 : f32 to vector<18x512xf32>
    %342 = arith.mulf %338, %341 : vector<18x512xf32>
    %343 = math.erf %342 : vector<18x512xf32>
    %cst_158 = arith.constant 1.000000e+00 : f32
    %344 = vector.broadcast %cst_158 : f32 to vector<18x512xf32>
    %345 = arith.addf %344, %343 : vector<18x512xf32>
    %346 = arith.mulf %340, %345 : vector<18x512xf32>
    %347 = arith.truncf %346 : vector<18x512xf32> to vector<18x512xbf16>
    %cst_159 = arith.constant dense<0.000000e+00> : vector<18x128xf32>
    %348 = tpu.matmul %347, %206, %cst_159 {dimension_numbers = #tpu.dot_dimension_numbers<[1], [0], [0], [1], [0, 0, 1, 1], [], []>} : vector<18x512xbf16>, vector<512x128xbf16>, vector<18x128xf32> -> vector<18x128xf32>
    %349 = vector.broadcast %208 : vector<1x128xf32> to vector<18x128xf32>
    %350 = arith.addf %348, %349 : vector<18x128xf32>
    %351 = vector.broadcast %210 : vector<1x128xf32> to vector<18x128xf32>
    %352 = arith.mulf %350, %351 : vector<18x128xf32>
    %353 = arith.addf %314, %352 : vector<18x128xf32>
    %c2 = arith.constant 2 : index
    %c0_160 = arith.constant 0 : index
    %c0_161 = arith.constant 0 : index
    %354 = vector.load %arg6[%c2, %c0_160, %c0_161] : memref<3x1x128xf32, #tpu.memory_space<vmem>>, vector<1x1x128xf32>
    %355 = vector.shape_cast %354 : vector<1x1x128xf32> to vector<1x128xf32>
    %c2_162 = arith.constant 2 : index
    %c0_163 = arith.constant 0 : index
    %c0_164 = arith.constant 0 : index
    %356 = vector.load %arg7[%c2_162, %c0_163, %c0_164] : memref<3x1x128xf32, #tpu.memory_space<vmem>>, vector<1x1x128xf32>
    %357 = vector.shape_cast %356 : vector<1x1x128xf32> to vector<1x128xf32>
    %c2_165 = arith.constant 2 : index
    %c0_166 = arith.constant 0 : index
    %c0_167 = arith.constant 0 : index
    %358 = vector.load %arg8[%c2_165, %c0_166, %c0_167] : memref<3x128x384xbf16, #tpu.memory_space<vmem>>, vector<1x128x384xbf16>
    %359 = vector.shape_cast %358 : vector<1x128x384xbf16> to vector<128x384xbf16>
    %c2_168 = arith.constant 2 : index
    %c0_169 = arith.constant 0 : index
    %c0_170 = arith.constant 0 : index
    %360 = vector.load %arg9[%c2_168, %c0_169, %c0_170] : memref<3x1x384xf32, #tpu.memory_space<vmem>>, vector<1x1x384xf32>
    %361 = vector.shape_cast %360 : vector<1x1x384xf32> to vector<1x384xf32>
    %c2_171 = arith.constant 2 : index
    %c0_172 = arith.constant 0 : index
    %c0_173 = arith.constant 0 : index
    %362 = vector.load %arg10[%c2_171, %c0_172, %c0_173] : memref<3x128x128xbf16, #tpu.memory_space<vmem>>, vector<1x128x128xbf16>
    %363 = vector.shape_cast %362 : vector<1x128x128xbf16> to vector<128x128xbf16>
    %c2_174 = arith.constant 2 : index
    %c0_175 = arith.constant 0 : index
    %c0_176 = arith.constant 0 : index
    %364 = vector.load %arg11[%c2_174, %c0_175, %c0_176] : memref<3x1x128xf32, #tpu.memory_space<vmem>>, vector<1x1x128xf32>
    %365 = vector.shape_cast %364 : vector<1x1x128xf32> to vector<1x128xf32>
    %c2_177 = arith.constant 2 : index
    %c0_178 = arith.constant 0 : index
    %c0_179 = arith.constant 0 : index
    %366 = vector.load %arg12[%c2_177, %c0_178, %c0_179] : memref<3x1x128xf32, #tpu.memory_space<vmem>>, vector<1x1x128xf32>
    %367 = vector.shape_cast %366 : vector<1x1x128xf32> to vector<1x128xf32>
    %c2_180 = arith.constant 2 : index
    %c0_181 = arith.constant 0 : index
    %c0_182 = arith.constant 0 : index
    %368 = vector.load %arg13[%c2_180, %c0_181, %c0_182] : memref<3x1x128xf32, #tpu.memory_space<vmem>>, vector<1x1x128xf32>
    %369 = vector.shape_cast %368 : vector<1x1x128xf32> to vector<1x128xf32>
    %c2_183 = arith.constant 2 : index
    %c0_184 = arith.constant 0 : index
    %c0_185 = arith.constant 0 : index
    %370 = vector.load %arg14[%c2_183, %c0_184, %c0_185] : memref<3x1x128xf32, #tpu.memory_space<vmem>>, vector<1x1x128xf32>
    %371 = vector.shape_cast %370 : vector<1x1x128xf32> to vector<1x128xf32>
    %c2_186 = arith.constant 2 : index
    %c0_187 = arith.constant 0 : index
    %c0_188 = arith.constant 0 : index
    %372 = vector.load %arg15[%c2_186, %c0_187, %c0_188] : memref<3x128x512xbf16, #tpu.memory_space<vmem>>, vector<1x128x512xbf16>
    %373 = vector.shape_cast %372 : vector<1x128x512xbf16> to vector<128x512xbf16>
    %c2_189 = arith.constant 2 : index
    %c0_190 = arith.constant 0 : index
    %c0_191 = arith.constant 0 : index
    %374 = vector.load %arg16[%c2_189, %c0_190, %c0_191] : memref<3x1x512xf32, #tpu.memory_space<vmem>>, vector<1x1x512xf32>
    %375 = vector.shape_cast %374 : vector<1x1x512xf32> to vector<1x512xf32>
    %c2_192 = arith.constant 2 : index
    %c0_193 = arith.constant 0 : index
    %c0_194 = arith.constant 0 : index
    %376 = vector.load %arg17[%c2_192, %c0_193, %c0_194] : memref<3x512x128xbf16, #tpu.memory_space<vmem>>, vector<1x512x128xbf16>
    %377 = vector.shape_cast %376 : vector<1x512x128xbf16> to vector<512x128xbf16>
    %c2_195 = arith.constant 2 : index
    %c0_196 = arith.constant 0 : index
    %c0_197 = arith.constant 0 : index
    %378 = vector.load %arg18[%c2_195, %c0_196, %c0_197] : memref<3x1x128xf32, #tpu.memory_space<vmem>>, vector<1x1x128xf32>
    %379 = vector.shape_cast %378 : vector<1x1x128xf32> to vector<1x128xf32>
    %c2_198 = arith.constant 2 : index
    %c0_199 = arith.constant 0 : index
    %c0_200 = arith.constant 0 : index
    %380 = vector.load %arg19[%c2_198, %c0_199, %c0_200] : memref<3x1x128xf32, #tpu.memory_space<vmem>>, vector<1x1x128xf32>
    %381 = vector.shape_cast %380 : vector<1x1x128xf32> to vector<1x128xf32>
    %cst_201 = arith.constant dense<0.000000e+00> : vector<18xf32>
    %382 = vector.multi_reduction <add>, %353, %cst_201 [1] : vector<18x128xf32> to vector<18xf32>
    %383 = vector.shape_cast %382 : vector<18xf32> to vector<18x1xf32>
    %cst_202 = arith.constant 1.280000e+02 : f32
    %384 = vector.broadcast %cst_202 : f32 to vector<18x1xf32>
    %385 = arith.divf %383, %384 : vector<18x1xf32>
    %386 = vector.broadcast %385 : vector<18x1xf32> to vector<18x128xf32>
    %387 = arith.subf %353, %386 : vector<18x128xf32>
    %388 = arith.mulf %387, %387 : vector<18x128xf32>
    %cst_203 = arith.constant dense<0.000000e+00> : vector<18xf32>
    %389 = vector.multi_reduction <add>, %388, %cst_203 [1] : vector<18x128xf32> to vector<18xf32>
    %390 = vector.shape_cast %389 : vector<18xf32> to vector<18x1xf32>
    %cst_204 = arith.constant 1.280000e+02 : f32
    %391 = vector.broadcast %cst_204 : f32 to vector<18x1xf32>
    %392 = arith.divf %390, %391 : vector<18x1xf32>
    %cst_205 = arith.constant 9.99999997E-7 : f32
    %393 = vector.broadcast %cst_205 : f32 to vector<18x1xf32>
    %394 = arith.addf %392, %393 : vector<18x1xf32>
    %395 = math.rsqrt %394 : vector<18x1xf32>
    %396 = vector.broadcast %395 : vector<18x1xf32> to vector<18x128xf32>
    %397 = arith.mulf %387, %396 : vector<18x128xf32>
    %398 = vector.broadcast %355 : vector<1x128xf32> to vector<18x128xf32>
    %399 = arith.mulf %397, %398 : vector<18x128xf32>
    %400 = vector.broadcast %357 : vector<1x128xf32> to vector<18x128xf32>
    %401 = arith.addf %399, %400 : vector<18x128xf32>
    %402 = arith.truncf %401 : vector<18x128xf32> to vector<18x128xbf16>
    %cst_206 = arith.constant dense<0.000000e+00> : vector<18x384xf32>
    %403 = tpu.matmul %402, %359, %cst_206 {dimension_numbers = #tpu.dot_dimension_numbers<[1], [0], [0], [1], [0, 0, 1, 1], [], []>} : vector<18x128xbf16>, vector<128x384xbf16>, vector<18x384xf32> -> vector<18x384xf32>
    %404 = vector.broadcast %361 : vector<1x384xf32> to vector<18x384xf32>
    %405 = arith.addf %403, %404 : vector<18x384xf32>
    %406 = arith.truncf %405 : vector<18x384xf32> to vector<18x384xbf16>
    %407 = vector.extract_strided_slice %406 {offsets = [0, 0], sizes = [18, 128], strides = [1, 1]} : vector<18x384xbf16> to vector<18x128xbf16>
    %408 = vector.extract_strided_slice %406 {offsets = [0, 128], sizes = [18, 128], strides = [1, 1]} : vector<18x384xbf16> to vector<18x128xbf16>
    %409 = vector.extract_strided_slice %406 {offsets = [0, 256], sizes = [18, 128], strides = [1, 1]} : vector<18x384xbf16> to vector<18x128xbf16>
    %410 = vector.extract_strided_slice %407 {offsets = [0, 0], sizes = [18, 32], strides = [1, 1]} : vector<18x128xbf16> to vector<18x32xbf16>
    %411 = vector.extract_strided_slice %408 {offsets = [0, 0], sizes = [18, 32], strides = [1, 1]} : vector<18x128xbf16> to vector<18x32xbf16>
    %412 = vector.extract_strided_slice %409 {offsets = [0, 0], sizes = [18, 32], strides = [1, 1]} : vector<18x128xbf16> to vector<18x32xbf16>
    %cst_207 = arith.constant dense<0.000000e+00> : vector<18x18xf32>
    %413 = tpu.matmul %410, %411, %cst_207 {dimension_numbers = #tpu.dot_dimension_numbers<[1], [1], [0], [0], [0, 0, 1, 0], [], []>} : vector<18x32xbf16>, vector<18x32xbf16>, vector<18x18xf32> -> vector<18x18xf32>
    %414 = arith.addf %413, %11 : vector<18x18xf32>
    %cst_208 = arith.constant dense<0xFF800000> : vector<18xf32>
    %415 = vector.multi_reduction <maximumf>, %414, %cst_208 [1] : vector<18x18xf32> to vector<18xf32>
    %416 = vector.shape_cast %415 : vector<18xf32> to vector<18x1xf32>
    %417 = vector.broadcast %416 : vector<18x1xf32> to vector<18x18xf32>
    %418 = arith.subf %414, %417 : vector<18x18xf32>
    %419 = math.exp %418 : vector<18x18xf32>
    %cst_209 = arith.constant dense<0.000000e+00> : vector<18xf32>
    %420 = vector.multi_reduction <add>, %419, %cst_209 [1] : vector<18x18xf32> to vector<18xf32>
    %421 = vector.shape_cast %420 : vector<18xf32> to vector<18x1xf32>
    %422 = tpu.reciprocal %421 {approx = true} : vector<18x1xf32> -> vector<18x1xf32>
    %423 = vector.broadcast %422 : vector<18x1xf32> to vector<18x18xf32>
    %424 = arith.mulf %419, %423 : vector<18x18xf32>
    %425 = arith.truncf %424 : vector<18x18xf32> to vector<18x18xbf16>
    %cst_210 = arith.constant dense<0.000000e+00> : vector<18x32xf32>
    %426 = tpu.matmul %425, %412, %cst_210 {dimension_numbers = #tpu.dot_dimension_numbers<[1], [0], [0], [1], [0, 0, 1, 1], [], []>} : vector<18x18xbf16>, vector<18x32xbf16>, vector<18x32xf32> -> vector<18x32xf32>
    %427 = vector.extract_strided_slice %407 {offsets = [0, 32], sizes = [18, 32], strides = [1, 1]} : vector<18x128xbf16> to vector<18x32xbf16>
    %428 = vector.extract_strided_slice %408 {offsets = [0, 32], sizes = [18, 32], strides = [1, 1]} : vector<18x128xbf16> to vector<18x32xbf16>
    %429 = vector.extract_strided_slice %409 {offsets = [0, 32], sizes = [18, 32], strides = [1, 1]} : vector<18x128xbf16> to vector<18x32xbf16>
    %cst_211 = arith.constant dense<0.000000e+00> : vector<18x18xf32>
    %430 = tpu.matmul %427, %428, %cst_211 {dimension_numbers = #tpu.dot_dimension_numbers<[1], [1], [0], [0], [0, 0, 1, 0], [], []>} : vector<18x32xbf16>, vector<18x32xbf16>, vector<18x18xf32> -> vector<18x18xf32>
    %431 = arith.addf %430, %11 : vector<18x18xf32>
    %cst_212 = arith.constant dense<0xFF800000> : vector<18xf32>
    %432 = vector.multi_reduction <maximumf>, %431, %cst_212 [1] : vector<18x18xf32> to vector<18xf32>
    %433 = vector.shape_cast %432 : vector<18xf32> to vector<18x1xf32>
    %434 = vector.broadcast %433 : vector<18x1xf32> to vector<18x18xf32>
    %435 = arith.subf %431, %434 : vector<18x18xf32>
    %436 = math.exp %435 : vector<18x18xf32>
    %cst_213 = arith.constant dense<0.000000e+00> : vector<18xf32>
    %437 = vector.multi_reduction <add>, %436, %cst_213 [1] : vector<18x18xf32> to vector<18xf32>
    %438 = vector.shape_cast %437 : vector<18xf32> to vector<18x1xf32>
    %439 = tpu.reciprocal %438 {approx = true} : vector<18x1xf32> -> vector<18x1xf32>
    %440 = vector.broadcast %439 : vector<18x1xf32> to vector<18x18xf32>
    %441 = arith.mulf %436, %440 : vector<18x18xf32>
    %442 = arith.truncf %441 : vector<18x18xf32> to vector<18x18xbf16>
    %cst_214 = arith.constant dense<0.000000e+00> : vector<18x32xf32>
    %443 = tpu.matmul %442, %429, %cst_214 {dimension_numbers = #tpu.dot_dimension_numbers<[1], [0], [0], [1], [0, 0, 1, 1], [], []>} : vector<18x18xbf16>, vector<18x32xbf16>, vector<18x32xf32> -> vector<18x32xf32>
    %444 = vector.extract_strided_slice %407 {offsets = [0, 64], sizes = [18, 32], strides = [1, 1]} : vector<18x128xbf16> to vector<18x32xbf16>
    %445 = vector.extract_strided_slice %408 {offsets = [0, 64], sizes = [18, 32], strides = [1, 1]} : vector<18x128xbf16> to vector<18x32xbf16>
    %446 = vector.extract_strided_slice %409 {offsets = [0, 64], sizes = [18, 32], strides = [1, 1]} : vector<18x128xbf16> to vector<18x32xbf16>
    %cst_215 = arith.constant dense<0.000000e+00> : vector<18x18xf32>
    %447 = tpu.matmul %444, %445, %cst_215 {dimension_numbers = #tpu.dot_dimension_numbers<[1], [1], [0], [0], [0, 0, 1, 0], [], []>} : vector<18x32xbf16>, vector<18x32xbf16>, vector<18x18xf32> -> vector<18x18xf32>
    %448 = arith.addf %447, %11 : vector<18x18xf32>
    %cst_216 = arith.constant dense<0xFF800000> : vector<18xf32>
    %449 = vector.multi_reduction <maximumf>, %448, %cst_216 [1] : vector<18x18xf32> to vector<18xf32>
    %450 = vector.shape_cast %449 : vector<18xf32> to vector<18x1xf32>
    %451 = vector.broadcast %450 : vector<18x1xf32> to vector<18x18xf32>
    %452 = arith.subf %448, %451 : vector<18x18xf32>
    %453 = math.exp %452 : vector<18x18xf32>
    %cst_217 = arith.constant dense<0.000000e+00> : vector<18xf32>
    %454 = vector.multi_reduction <add>, %453, %cst_217 [1] : vector<18x18xf32> to vector<18xf32>
    %455 = vector.shape_cast %454 : vector<18xf32> to vector<18x1xf32>
    %456 = tpu.reciprocal %455 {approx = true} : vector<18x1xf32> -> vector<18x1xf32>
    %457 = vector.broadcast %456 : vector<18x1xf32> to vector<18x18xf32>
    %458 = arith.mulf %453, %457 : vector<18x18xf32>
    %459 = arith.truncf %458 : vector<18x18xf32> to vector<18x18xbf16>
    %cst_218 = arith.constant dense<0.000000e+00> : vector<18x32xf32>
    %460 = tpu.matmul %459, %446, %cst_218 {dimension_numbers = #tpu.dot_dimension_numbers<[1], [0], [0], [1], [0, 0, 1, 1], [], []>} : vector<18x18xbf16>, vector<18x32xbf16>, vector<18x32xf32> -> vector<18x32xf32>
    %461 = vector.extract_strided_slice %407 {offsets = [0, 96], sizes = [18, 32], strides = [1, 1]} : vector<18x128xbf16> to vector<18x32xbf16>
    %462 = vector.extract_strided_slice %408 {offsets = [0, 96], sizes = [18, 32], strides = [1, 1]} : vector<18x128xbf16> to vector<18x32xbf16>
    %463 = vector.extract_strided_slice %409 {offsets = [0, 96], sizes = [18, 32], strides = [1, 1]} : vector<18x128xbf16> to vector<18x32xbf16>
    %cst_219 = arith.constant dense<0.000000e+00> : vector<18x18xf32>
    %464 = tpu.matmul %461, %462, %cst_219 {dimension_numbers = #tpu.dot_dimension_numbers<[1], [1], [0], [0], [0, 0, 1, 0], [], []>} : vector<18x32xbf16>, vector<18x32xbf16>, vector<18x18xf32> -> vector<18x18xf32>
    %465 = arith.addf %464, %11 : vector<18x18xf32>
    %cst_220 = arith.constant dense<0xFF800000> : vector<18xf32>
    %466 = vector.multi_reduction <maximumf>, %465, %cst_220 [1] : vector<18x18xf32> to vector<18xf32>
    %467 = vector.shape_cast %466 : vector<18xf32> to vector<18x1xf32>
    %468 = vector.broadcast %467 : vector<18x1xf32> to vector<18x18xf32>
    %469 = arith.subf %465, %468 : vector<18x18xf32>
    %470 = math.exp %469 : vector<18x18xf32>
    %cst_221 = arith.constant dense<0.000000e+00> : vector<18xf32>
    %471 = vector.multi_reduction <add>, %470, %cst_221 [1] : vector<18x18xf32> to vector<18xf32>
    %472 = vector.shape_cast %471 : vector<18xf32> to vector<18x1xf32>
    %473 = tpu.reciprocal %472 {approx = true} : vector<18x1xf32> -> vector<18x1xf32>
    %474 = vector.broadcast %473 : vector<18x1xf32> to vector<18x18xf32>
    %475 = arith.mulf %470, %474 : vector<18x18xf32>
    %476 = arith.truncf %475 : vector<18x18xf32> to vector<18x18xbf16>
    %cst_222 = arith.constant dense<0.000000e+00> : vector<18x32xf32>
    %477 = tpu.matmul %476, %463, %cst_222 {dimension_numbers = #tpu.dot_dimension_numbers<[1], [0], [0], [1], [0, 0, 1, 1], [], []>} : vector<18x18xbf16>, vector<18x32xbf16>, vector<18x32xf32> -> vector<18x32xf32>
    %478 = tpu.concatenate %426, %443, %460, %477 in 1 : vector<18x32xf32>, vector<18x32xf32>, vector<18x32xf32>, vector<18x32xf32> -> vector<18x128xf32>
    %479 = arith.truncf %478 : vector<18x128xf32> to vector<18x128xbf16>
    %cst_223 = arith.constant dense<0.000000e+00> : vector<18x128xf32>
    %480 = tpu.matmul %479, %363, %cst_223 {dimension_numbers = #tpu.dot_dimension_numbers<[1], [0], [0], [1], [0, 0, 1, 1], [], []>} : vector<18x128xbf16>, vector<128x128xbf16>, vector<18x128xf32> -> vector<18x128xf32>
    %481 = vector.broadcast %365 : vector<1x128xf32> to vector<18x128xf32>
    %482 = arith.addf %480, %481 : vector<18x128xf32>
    %483 = vector.broadcast %367 : vector<1x128xf32> to vector<18x128xf32>
    %484 = arith.mulf %482, %483 : vector<18x128xf32>
    %485 = arith.addf %353, %484 : vector<18x128xf32>
    %cst_224 = arith.constant dense<0.000000e+00> : vector<18xf32>
    %486 = vector.multi_reduction <add>, %485, %cst_224 [1] : vector<18x128xf32> to vector<18xf32>
    %487 = vector.shape_cast %486 : vector<18xf32> to vector<18x1xf32>
    %cst_225 = arith.constant 1.280000e+02 : f32
    %488 = vector.broadcast %cst_225 : f32 to vector<18x1xf32>
    %489 = arith.divf %487, %488 : vector<18x1xf32>
    %490 = vector.broadcast %489 : vector<18x1xf32> to vector<18x128xf32>
    %491 = arith.subf %485, %490 : vector<18x128xf32>
    %492 = arith.mulf %491, %491 : vector<18x128xf32>
    %cst_226 = arith.constant dense<0.000000e+00> : vector<18xf32>
    %493 = vector.multi_reduction <add>, %492, %cst_226 [1] : vector<18x128xf32> to vector<18xf32>
    %494 = vector.shape_cast %493 : vector<18xf32> to vector<18x1xf32>
    %cst_227 = arith.constant 1.280000e+02 : f32
    %495 = vector.broadcast %cst_227 : f32 to vector<18x1xf32>
    %496 = arith.divf %494, %495 : vector<18x1xf32>
    %cst_228 = arith.constant 9.99999997E-7 : f32
    %497 = vector.broadcast %cst_228 : f32 to vector<18x1xf32>
    %498 = arith.addf %496, %497 : vector<18x1xf32>
    %499 = math.rsqrt %498 : vector<18x1xf32>
    %500 = vector.broadcast %499 : vector<18x1xf32> to vector<18x128xf32>
    %501 = arith.mulf %491, %500 : vector<18x128xf32>
    %502 = vector.broadcast %369 : vector<1x128xf32> to vector<18x128xf32>
    %503 = arith.mulf %501, %502 : vector<18x128xf32>
    %504 = vector.broadcast %371 : vector<1x128xf32> to vector<18x128xf32>
    %505 = arith.addf %503, %504 : vector<18x128xf32>
    %506 = arith.truncf %505 : vector<18x128xf32> to vector<18x128xbf16>
    %cst_229 = arith.constant dense<0.000000e+00> : vector<18x512xf32>
    %507 = tpu.matmul %506, %373, %cst_229 {dimension_numbers = #tpu.dot_dimension_numbers<[1], [0], [0], [1], [0, 0, 1, 1], [], []>} : vector<18x128xbf16>, vector<128x512xbf16>, vector<18x512xf32> -> vector<18x512xf32>
    %508 = vector.broadcast %375 : vector<1x512xf32> to vector<18x512xf32>
    %509 = arith.addf %507, %508 : vector<18x512xf32>
    %cst_230 = arith.constant 5.000000e-01 : f32
    %510 = vector.broadcast %cst_230 : f32 to vector<18x512xf32>
    %511 = arith.mulf %510, %509 : vector<18x512xf32>
    %cst_231 = arith.constant 0.707106769 : f32
    %512 = vector.broadcast %cst_231 : f32 to vector<18x512xf32>
    %513 = arith.mulf %509, %512 : vector<18x512xf32>
    %514 = math.erf %513 : vector<18x512xf32>
    %cst_232 = arith.constant 1.000000e+00 : f32
    %515 = vector.broadcast %cst_232 : f32 to vector<18x512xf32>
    %516 = arith.addf %515, %514 : vector<18x512xf32>
    %517 = arith.mulf %511, %516 : vector<18x512xf32>
    %518 = arith.truncf %517 : vector<18x512xf32> to vector<18x512xbf16>
    %cst_233 = arith.constant dense<0.000000e+00> : vector<18x128xf32>
    %519 = tpu.matmul %518, %377, %cst_233 {dimension_numbers = #tpu.dot_dimension_numbers<[1], [0], [0], [1], [0, 0, 1, 1], [], []>} : vector<18x512xbf16>, vector<512x128xbf16>, vector<18x128xf32> -> vector<18x128xf32>
    %520 = vector.broadcast %379 : vector<1x128xf32> to vector<18x128xf32>
    %521 = arith.addf %519, %520 : vector<18x128xf32>
    %522 = vector.broadcast %381 : vector<1x128xf32> to vector<18x128xf32>
    %523 = arith.mulf %521, %522 : vector<18x128xf32>
    %524 = arith.addf %485, %523 : vector<18x128xf32>
    %525 = vector.extract_strided_slice %524 {offsets = [10, 0], sizes = [8, 128], strides = [1, 1]} : vector<18x128xf32> to vector<8x128xf32>
    %c0_234 = arith.constant 0 : index
    %c0_235 = arith.constant 0 : index
    %526 = vector.load %arg20[%c0_234, %c0_235] : memref<8x128xf32, #tpu.memory_space<vmem>>, vector<8x128xf32>
    tpu.vector_store %arg20[%c0_234, %c0_235], %525 {strides = array<i32>} : memref<8x128xf32, #tpu.memory_space<vmem>>, vector<8x128xf32>,
    return
  }
}

</mosaic_0001>

<llo_original>
// kernel: timm_dinov2_vision_encoder_forward.1
$region0: #{timm_dinov2_vision_encoder_forward.1}
  #allocation0 [shape = 'u32[]', space=smem, size = 0x4, offset = 0x4, fixed_abs, tag = 'smem constant byte address 0x4 - core index']
  #allocation1 [shape = 'u32[144,128]{1,0:T(1,128)}', space=vmem, size = 0x12000, scoped, tag = 'internal scratch']
  %s0 = inlined_call_operand.vmem [shape: f32[8,640], index: 0, kind: input, shape index: {}]
  %s1 = inlined_call_operand.hbm [shape: bf16[640,128], index: 1, kind: input, shape index: {}]
  %s2 = inlined_call_operand.hbm [shape: f32[1,128], index: 2, kind: input, shape index: {}]
  %s3 = inlined_call_operand.vmem [shape: f32[8,128], index: 3, kind: input, shape index: {}]
  %s4 = inlined_call_operand.vmem [shape: f32[10,128], index: 4, kind: input, shape index: {}]
  %s5 = inlined_call_operand.hbm [shape: f32[18,18], index: 5, kind: input, shape index: {}]
  %s6 = inlined_call_operand.vmem [shape: f32[3,1,128], index: 6, kind: input, shape index: {}]
  %s7 = inlined_call_operand.hbm [shape: f32[3,1,128], index: 7, kind: input, shape index: {}]
  %s8 = inlined_call_operand.hbm [shape: bf16[3,128,384], index: 8, kind: input, shape index: {}]
  %s9 = inlined_call_operand.vmem [shape: f32[3,1,384], index: 9, kind: input, shape index: {}]
  %s10 = inlined_call_operand.vmem [shape: bf16[3,128,128], index: 10, kind: input, shape index: {}]
  %s11 = inlined_call_operand.vmem [shape: f32[3,1,128], index: 11, kind: input, shape index: {}]
  %s12 = inlined_call_operand.hbm [shape: f32[3,1,128], index: 12, kind: input, shape index: {}]
  %s13 = inlined_call_operand.hbm [shape: f32[3,1,128], index: 13, kind: input, shape index: {}]
  %s14 = inlined_call_operand.hbm [shape: f32[3,1,128], index: 14, kind: input, shape index: {}]
  %s15 = inlined_call_operand.vmem [shape: bf16[3,128,512], index: 15, kind: input, shape index: {}]
  %s16 = inlined_call_operand.hbm [shape: f32[3,1,512], index: 16, kind: input, shape index: {}]
  %s17 = inlined_call_operand.vmem [shape: bf16[3,512,128], index: 17, kind: input, shape index: {}]
  %s18 = inlined_call_operand.hbm [shape: f32[3,1,128], index: 18, kind: input, shape index: {}]
  %s19 = inlined_call_operand.hbm [shape: f32[3,1,128], index: 19, kind: input, shape index: {}]
  %s20 = inlined_call_operand.hbm [shape: f32[8,128], index: 20, kind: output, shape index: {}]
  %s21 = sld [smem:[#allocation0]]
  $region134: #{timm_dinov2_vision_encoder_forward.1} parent=0
    _
  %s23 = ssub.s32 1, %s21
  %s24 = scalar_select 0, %s23, %s21
  $region1: #{timm_dinov2_vision_encoder_forward.1} parent=0
    #allocation2 [shape = 'u8[163840]{0}', space=vmem, size = 0x28000, scoped, tag = 'input window, operand 1, single buffered']
    #allocation3 [shape = 's32[1]{0}', space=sflag, size = 0x4, scoped, tag = 'scoped memory for timm_dinov2_vision_encoder_forward.1']
    #allocation4 [shape = 's32[1]{0}', space=sflag, size = 0x4, scoped, tag = 'scoped memory for timm_dinov2_vision_encoder_forward.1']
    #allocation5 [shape = 'u8[512]{0}', space=vmem, size = 0x400, scoped, tag = 'input window, operand 2, single buffered']
    #allocation6 [shape = 's32[1]{0}', space=sflag, size = 0x4, scoped, tag = 'scoped memory for timm_dinov2_vision_encoder_forward.1']
    #allocation7 [shape = 'u8[12288]{0}', space=vmem, size = 0x3000, scoped, tag = 'input window, operand 5, single buffered']
    #allocation8 [shape = 'u8[1536]{0}', space=vmem, size = 0x800, scoped, tag = 'input window, operand 7, single buffered']
    #allocation9 [shape = 's32[1]{0}', space=sflag, size = 0x4, scoped, tag = 'scoped memory for timm_dinov2_vision_encoder_forward.1']
    #allocation10 [shape = 'u8[294912]{0}', space=vmem, size = 0x48000, scoped, tag = 'input window, operand 8, single buffered']
    #allocation11 [shape = 'u8[1536]{0}', space=vmem, size = 0x800, scoped, tag = 'input window, operand 12, single buffered']
    #allocation12 [shape = 's32[1]{0}', space=sflag, size = 0x4, scoped, tag = 'scoped memory for timm_dinov2_vision_encoder_forward.1']
    #allocation13 [shape = 'u8[1536]{0}', space=vmem, size = 0x800, scoped, tag = 'input window, operand 13, single buffered']
    #allocation14 [shape = 'u8[1536]{0}', space=vmem, size = 0x800, scoped, tag = 'input window, operand 14, single buffered']
    #allocation15 [shape = 's32[1]{0}', space=sflag, size = 0x4, scoped, tag = 'scoped memory for timm_dinov2_vision_encoder_forward.1']
    #allocation16 [shape = 'u8[6144]{0}', space=vmem, size = 0x1800, scoped, tag = 'input window, operand 16, single buffered']
    #allocation17 [shape = 'u8[1536]{0}', space=vmem, size = 0x800, scoped, tag = 'input window, operand 18, single buffered']
    #allocation18 [shape = 's32[1]{0}', space=sflag, size = 0x4, scoped, tag = 'scoped memory for timm_dinov2_vision_encoder_forward.1']
    #allocation19 [shape = 'u8[1536]{0}', space=vmem, size = 0x800, scoped, tag = 'input window, operand 19, single buffered']
    #allocation20 [shape = 'u8[4096]{0}', space=vmem, size = 0x1000, scoped, tag = 'output window, operand 0, single buffered']
    %25 = vsyncpa [#allocation3], 0
    %26 = vsyncpa [#allocation6], 0
    %27 = vsyncpa [#allocation9], 0
    %28 = vsyncpa [#allocation12], 0
    %29 = vsyncpa [#allocation15], 0
    %30 = vsyncpa [#allocation18], 0
    %31 = vsyncpa [#allocation4], 0
    // Predicated region
    $region2: #{timm_dinov2_vision_encoder_forward.1} parent=1 // pred_check
      _
    $region3: #{timm_dinov2_vision_encoder_forward.1} parent=1 // pred_check_branch
      %33 = sbr.rel (0) target = $region5
    $region4: #{timm_dinov2_vision_encoder_forward.1} parent=1 // pred_region
      _
    $region5: #{timm_dinov2_vision_encoder_forward.1} parent=1 // pred_fallthru
      _
    // Predicated region
    $region6: #{timm_dinov2_vision_encoder_forward.1} parent=1 // pred_check
      _
    $region7: #{timm_dinov2_vision_encoder_forward.1} parent=1 // pred_check_branch
      %35 = sbr.rel (0) target = $region9
    $region8: #{timm_dinov2_vision_encoder_forward.1} parent=1 // pred_region
      %s37 = ssub.s32 5120, 5120
      %38 = vsyncadd [#allocation3], %s37
      %s39 = sshll.u32 [#allocation2], 4
      %s40 = int_to_ptr.vmem [resolvable:$true] %s39
      %45 = dma.hbm_to_vmem [thread:$0]  %s1, 5120, %s40, [#allocation3], 64, 64, 4
    $region9: #{timm_dinov2_vision_encoder_forward.1} parent=1 // pred_fallthru
      _
    // Predicated region
    $region10: #{timm_dinov2_vision_encoder_forward.1} parent=1 // pred_check
      _
    $region11: #{timm_dinov2_vision_encoder_forward.1} parent=1 // pred_check_branch
      %47 = sbr.rel (0) target = $region13
    $region12: #{timm_dinov2_vision_encoder_forward.1} parent=1 // pred_region
      %s49 = ssub.s32 16, 16
      %50 = vsyncadd [#allocation6], %s49
      %s52 = sshll.u32 [#allocation5], 4
      %s53 = int_to_ptr.vmem [resolvable:$true] %s52
      %55 = dma.hbm_to_vmem [thread:$0]  %s2, 16, %s53, [#allocation6]
    $region13: #{timm_dinov2_vision_encoder_forward.1} parent=1 // pred_fallthru
      _
    // Predicated region
    $region14: #{timm_dinov2_vision_encoder_forward.1} parent=1 // pred_check
      _
    $region15: #{timm_dinov2_vision_encoder_forward.1} parent=1 // pred_check_branch
      %57 = sbr.rel (0) target = $region17
    $region16: #{timm_dinov2_vision_encoder_forward.1} parent=1 // pred_region
      _
    $region17: #{timm_dinov2_vision_encoder_forward.1} parent=1 // pred_fallthru
      _
    // Predicated region
    $region18: #{timm_dinov2_vision_encoder_forward.1} parent=1 // pred_check
      _
    $region19: #{timm_dinov2_vision_encoder_forward.1} parent=1 // pred_check_branch
      %59 = sbr.rel (0) target = $region21
    $region20: #{timm_dinov2_vision_encoder_forward.1} parent=1 // pred_region
      _
    $region21: #{timm_dinov2_vision_encoder_forward.1} parent=1 // pred_fallthru
      _
    // Predicated region
    $region22: #{timm_dinov2_vision_encoder_forward.1} parent=1 // pred_check
      _
    $region23: #{timm_dinov2_vision_encoder_forward.1} parent=1 // pred_check_branch
      %61 = sbr.rel (0) target = $region25
    $region24: #{timm_dinov2_vision_encoder_forward.1} parent=1 // pred_region
      %s63 = ssub.s32 384, 384
      %64 = vsyncadd [#allocation6], %s63
      %s65 = sshll.u32 [#allocation7], 4
      %s66 = int_to_ptr.vmem [resolvable:$true] %s65
      %71 = dma.hbm_to_vmem [thread:$0]  %s5, 384, %s66, [#allocation6], 128, 128, 8
    $region25: #{timm_dinov2_vision_encoder_forward.1} parent=1 // pred_fallthru
      _
    // Predicated region
    $region26: #{timm_dinov2_vision_encoder_forward.1} parent=1 // pred_check
      _
    $region27: #{timm_dinov2_vision_encoder_forward.1} parent=1 // pred_check_branch
      %73 = sbr.rel (0) target = $region29
    $region28: #{timm_dinov2_vision_encoder_forward.1} parent=1 // pred_region
      _
    $region29: #{timm_dinov2_vision_encoder_forward.1} parent=1 // pred_fallthru
      _
    // Predicated region
    $region30: #{timm_dinov2_vision_encoder_forward.1} parent=1 // pred_check
      _
    $region31: #{timm_dinov2_vision_encoder_forward.1} parent=1 // pred_check_branch
      %75 = sbr.rel (0) target = $region33
    $region32: #{timm_dinov2_vision_encoder_forward.1} parent=1 // pred_region
      %s77 = ssub.s32 48, 48
      %78 = vsyncadd [#allocation9], %s77
      %s79 = sshll.u32 [#allocation8], 4
      %s80 = int_to_ptr.vmem [resolvable:$true] %s79
      %85 = dma.hbm_to_vmem [thread:$0]  %s7, 48, %s80, [#allocation9], 16, 16, 1
    $region33: #{timm_dinov2_vision_encoder_forward.1} parent=1 // pred_fallthru
      _
    // Predicated region
    $region34: #{timm_dinov2_vision_encoder_forward.1} parent=1 // pred_check
      _
    $region35: #{timm_dinov2_vision_encoder_forward.1} parent=1 // pred_check_branch
      %87 = sbr.rel (0) target = $region37
    $region36: #{timm_dinov2_vision_encoder_forward.1} parent=1 // pred_region
      %s89 = ssub.s32 9216, 9216
      %90 = vsyncadd [#allocation9], %s89
      %s91 = sshll.u32 [#allocation10], 4
      %s92 = int_to_ptr.vmem [resolvable:$true] %s91
      %97 = dma.hbm_to_vmem [thread:$0]  %s8, 9216, %s92, [#allocation9], 192, 192, 12
    $region37: #{timm_dinov2_vision_encoder_forward.1} parent=1 // pred_fallthru
      _
    // Predicated region
    $region38: #{timm_dinov2_vision_encoder_forward.1} parent=1 // pred_check
      _
    $region39: #{timm_dinov2_vision_encoder_forward.1} parent=1 // pred_check_branch
      %99 = sbr.rel (0) target = $region41
    $region40: #{timm_dinov2_vision_encoder_forward.1} parent=1 // pred_region
      _
    $region41: #{timm_dinov2_vision_encoder_forward.1} parent=1 // pred_fallthru
      _
    // Predicated region
    $region42: #{timm_dinov2_vision_encoder_forward.1} parent=1 // pred_check
      _
    $region43: #{timm_dinov2_vision_encoder_forward.1} parent=1 // pred_check_branch
      %101 = sbr.rel (0) target = $region45
    $region44: #{timm_dinov2_vision_encoder_forward.1} parent=1 // pred_region
      _
    $region45: #{timm_dinov2_vision_encoder_forward.1} parent=1 // pred_fallthru
      _
    // Predicated region
    $region46: #{timm_dinov2_vision_encoder_forward.1} parent=1 // pred_check
      _
    $region47: #{timm_dinov2_vision_encoder_forward.1} parent=1 // pred_check_branch
      %103 = sbr.rel (0) target = $region49
    $region48: #{timm_dinov2_vision_encoder_forward.1} parent=1 // pred_region
      _
    $region49: #{timm_dinov2_vision_encoder_forward.1} parent=1 // pred_fallthru
      _
    // Predicated region
    $region50: #{timm_dinov2_vision_encoder_forward.1} parent=1 // pred_check
      _
    $region51: #{timm_dinov2_vision_encoder_forward.1} parent=1 // pred_check_branch
      %105 = sbr.rel (0) target = $region53
    $region52: #{timm_dinov2_vision_encoder_forward.1} parent=1 // pred_region
      %s107 = ssub.s32 48, 48
      %108 = vsyncadd [#allocation12], %s107
      %s109 = sshll.u32 [#allocation11], 4
      %s110 = int_to_ptr.vmem [resolvable:$true] %s109
      %115 = dma.hbm_to_vmem [thread:$0]  %s12, 48, %s110, [#allocation12], 16, 16, 1
    $region53: #{timm_dinov2_vision_encoder_forward.1} parent=1 // pred_fallthru
      _
    // Predicated region
    $region54: #{timm_dinov2_vision_encoder_forward.1} parent=1 // pred_check
      _
    $region55: #{timm_dinov2_vision_encoder_forward.1} parent=1 // pred_check_branch
      %117 = sbr.rel (0) target = $region57
    $region56: #{timm_dinov2_vision_encoder_forward.1} parent=1 // pred_region
      %s119 = ssub.s32 48, 48
      %120 = vsyncadd [#allocation12], %s119
      %s121 = sshll.u32 [#allocation13], 4
      %s122 = int_to_ptr.vmem [resolvable:$true] %s121
      %127 = dma.hbm_to_vmem [thread:$0]  %s13, 48, %s122, [#allocation12], 16, 16, 1
    $region57: #{timm_dinov2_vision_encoder_forward.1} parent=1 // pred_fallthru
      _
    // Predicated region
    $region58: #{timm_dinov2_vision_encoder_forward.1} parent=1 // pred_check
      _
    $region59: #{timm_dinov2_vision_encoder_forward.1} parent=1 // pred_check_branch
      %129 = sbr.rel (0) target = $region61
    $region60: #{timm_dinov2_vision_encoder_forward.1} parent=1 // pred_region
      %s131 = ssub.s32 48, 48
      %132 = vsyncadd [#allocation15], %s131
      %s133 = sshll.u32 [#allocation14], 4
      %s134 = int_to_ptr.vmem [resolvable:$true] %s133
      %139 = dma.hbm_to_vmem [thread:$0]  %s14, 48, %s134, [#allocation15], 16, 16, 1
    $region61: #{timm_dinov2_vision_encoder_forward.1} parent=1 // pred_fallthru
      _
    // Predicated region
    $region62: #{timm_dinov2_vision_encoder_forward.1} parent=1 // pred_check
      _
    $region63: #{timm_dinov2_vision_encoder_forward.1} parent=1 // pred_check_branch
      %141 = sbr.rel (0) target = $region65
    $region64: #{timm_dinov2_vision_encoder_forward.1} parent=1 // pred_region
      _
    $region65: #{timm_dinov2_vision_encoder_forward.1} parent=1 // pred_fallthru
      _
    // Predicated region
    $region66: #{timm_dinov2_vision_encoder_forward.1} parent=1 // pred_check
      _
    $region67: #{timm_dinov2_vision_encoder_forward.1} parent=1 // pred_check_branch
      %143 = sbr.rel (0) target = $region69
    $region68: #{timm_dinov2_vision_encoder_forward.1} parent=1 // pred_region
      %s145 = ssub.s32 192, 192
      %146 = vsyncadd [#allocation15], %s145
      %s147 = sshll.u32 [#allocation16], 4
      %s148 = int_to_ptr.vmem [resolvable:$true] %s147
      %153 = dma.hbm_to_vmem [thread:$0]  %s16, 192, %s148, [#allocation15], 64, 64, 4
    $region69: #{timm_dinov2_vision_encoder_forward.1} parent=1 // pred_fallthru
      _
    // Predicated region
    $region70: #{timm_dinov2_vision_encoder_forward.1} parent=1 // pred_check
      _
    $region71: #{timm_dinov2_vision_encoder_forward.1} parent=1 // pred_check_branch
      %155 = sbr.rel (0) target = $region73
    $region72: #{timm_dinov2_vision_encoder_forward.1} parent=1 // pred_region
      _
    $region73: #{timm_dinov2_vision_encoder_forward.1} parent=1 // pred_fallthru
      _
    // Predicated region
    $region74: #{timm_dinov2_vision_encoder_forward.1} parent=1 // pred_check
      _
    $region75: #{timm_dinov2_vision_encoder_forward.1} parent=1 // pred_check_branch
      %157 = sbr.rel (0) target = $region77
    $region76: #{timm_dinov2_vision_encoder_forward.1} parent=1 // pred_region
      %s159 = ssub.s32 48, 48
      %160 = vsyncadd [#allocation18], %s159
      %s161 = sshll.u32 [#allocation17], 4
      %s162 = int_to_ptr.vmem [resolvable:$true] %s161
      %167 = dma.hbm_to_vmem [thread:$0]  %s18, 48, %s162, [#allocation18], 16, 16, 1
    $region77: #{timm_dinov2_vision_encoder_forward.1} parent=1 // pred_fallthru
      _
    // Predicated region
    $region78: #{timm_dinov2_vision_encoder_forward.1} parent=1 // pred_check
      _
    $region79: #{timm_dinov2_vision_encoder_forward.1} parent=1 // pred_check_branch
      %169 = sbr.rel (0) target = $region81
    $region80: #{timm_dinov2_vision_encoder_forward.1} parent=1 // pred_region
      %s171 = ssub.s32 48, 48
      %172 = vsyncadd [#allocation18], %s171
      %s173 = sshll.u32 [#allocation19], 4
      %s174 = int_to_ptr.vmem [resolvable:$true] %s173
      %179 = dma.hbm_to_vmem [thread:$0]  %s19, 48, %s174, [#allocation18], 16, 16, 1
    $region81: #{timm_dinov2_vision_encoder_forward.1} parent=1 // pred_fallthru
      _
    // Predicated region
    $region82: #{timm_dinov2_vision_encoder_forward.1} parent=1 // pred_check
      _
    $region83: #{timm_dinov2_vision_encoder_forward.1} parent=1 // pred_check_branch
      %181 = sbr.rel (0) target = $region85
    $region84: #{timm_dinov2_vision_encoder_forward.1} parent=1 // pred_region
      %182 = dma.done [#allocation3], 5120
    $region85: #{timm_dinov2_vision_encoder_forward.1} parent=1 // pred_fallthru
      _
    // Predicated region
    $region86: #{timm_dinov2_vision_encoder_forward.1} parent=1 // pred_check
      _
    $region87: #{timm_dinov2_vision_encoder_forward.1} parent=1 // pred_check_branch
      %184 = sbr.rel (0) target = $region89
    $region88: #{timm_dinov2_vision_encoder_forward.1} parent=1 // pred_region
      %185 = dma.done [#allocation6], 16
    $region89: #{timm_dinov2_vision_encoder_forward.1} parent=1 // pred_fallthru
      _
    // Predicated region
    $region90: #{timm_dinov2_vision_encoder_forward.1} parent=1 // pred_check
      _
    $region91: #{timm_dinov2_vision_encoder_forward.1} parent=1 // pred_check_branch
      %187 = sbr.rel (0) target = $region93
    $region92: #{timm_dinov2_vision_encoder_forward.1} parent=1 // pred_region
      %188 = dma.done [#allocation6], 384
    $region93: #{timm_dinov2_vision_encoder_forward.1} parent=1 // pred_fallthru
      _
    // Predicated region
    $region94: #{timm_dinov2_vision_encoder_forward.1} parent=1 // pred_check
      _
    $region95: #{timm_dinov2_vision_encoder_forward.1} parent=1 // pred_check_branch
      %190 = sbr.rel (0) target = $region97
    $region96: #{timm_dinov2_vision_encoder_forward.1} parent=1 // pred_region
      %191 = dma.done [#allocation9], 48
    $region97: #{timm_dinov2_vision_encoder_forward.1} parent=1 // pred_fallthru
      _
    // Predicated region
    $region98: #{timm_dinov2_vision_encoder_forward.1} parent=1 // pred_check
      _
    $region99: #{timm_dinov2_vision_encoder_forward.1} parent=1 // pred_check_branch
      %193 = sbr.rel (0) target = $region101
    $region100: #{timm_dinov2_vision_encoder_forward.1} parent=1 // pred_region
      %194 = dma.done [#allocation9], 9216
    $region101: #{timm_dinov2_vision_encoder_forward.1} parent=1 // pred_fallthru
      _
    // Predicated region
    $region102: #{timm_dinov2_vision_encoder_forward.1} parent=1 // pred_check
      _
    $region103: #{timm_dinov2_vision_encoder_forward.1} parent=1 // pred_check_branch
      %196 = sbr.rel (0) target = $region105
    $region104: #{timm_dinov2_vision_encoder_forward.1} parent=1 // pred_region
      %197 = dma.done [#allocation12], 48
    $region105: #{timm_dinov2_vision_encoder_forward.1} parent=1 // pred_fallthru
      _
    // Predicated region
    $region106: #{timm_dinov2_vision_encoder_forward.1} parent=1 // pred_check
      _
    $region107: #{timm_dinov2_vision_encoder_forward.1} parent=1 // pred_check_branch
      %199 = sbr.rel (0) target = $region109
    $region108: #{timm_dinov2_vision_encoder_forward.1} parent=1 // pred_region
      %200 = dma.done [#allocation12], 48
    $region109: #{timm_dinov2_vision_encoder_forward.1} parent=1 // pred_fallthru
      _
    // Predicated region
    $region110: #{timm_dinov2_vision_encoder_forward.1} parent=1 // pred_check
      _
    $region111: #{timm_dinov2_vision_encoder_forward.1} parent=1 // pred_check_branch
      %202 = sbr.rel (0) target = $region113
    $region112: #{timm_dinov2_vision_encoder_forward.1} parent=1 // pred_region
      %203 = dma.done [#allocation15], 48
    $region113: #{timm_dinov2_vision_encoder_forward.1} parent=1 // pred_fallthru
      _
    // Predicated region
    $region114: #{timm_dinov2_vision_encoder_forward.1} parent=1 // pred_check
      _
    $region115: #{timm_dinov2_vision_encoder_forward.1} parent=1 // pred_check_branch
      %205 = sbr.rel (0) target = $region117
    $region116: #{timm_dinov2_vision_encoder_forward.1} parent=1 // pred_region
      %206 = dma.done [#allocation15], 192
    $region117: #{timm_dinov2_vision_encoder_forward.1} parent=1 // pred_fallthru
      _
    // Predicated region
    $region118: #{timm_dinov2_vision_encoder_forward.1} parent=1 // pred_check
      _
    $region119: #{timm_dinov2_vision_encoder_forward.1} parent=1 // pred_check_branch
      %208 = sbr.rel (0) target = $region121
    $region120: #{timm_dinov2_vision_encoder_forward.1} parent=1 // pred_region
      %209 = dma.done [#allocation18], 48
    $region121: #{timm_dinov2_vision_encoder_forward.1} parent=1 // pred_fallthru
      _
    // Predicated region
    $region122: #{timm_dinov2_vision_encoder_forward.1} parent=1 // pred_check
      _
    $region123: #{timm_dinov2_vision_encoder_forward.1} parent=1 // pred_check_branch
      %211 = sbr.rel (0) target = $region125
    $region124: #{timm_dinov2_vision_encoder_forward.1} parent=1 // pred_region
      %212 = dma.done [#allocation18], 48
    $region125: #{timm_dinov2_vision_encoder_forward.1} parent=1 // pred_fallthru
      _
    %v214 = vld [vmem:[%s0] sm:$0xff]
    %v215 = vld [vmem:[%s0 + $0x8] sm:$0xff]
    %v216 = vld [vmem:[%s0 + $0x10] sm:$0xff]
    %v217 = vld [vmem:[%s0 + $0x18] sm:$0xff]
    %v218 = vld [vmem:[%s0 + $0x20] sm:$0xff]
    %v219 = vld [vmem:[#allocation2] sm:$0xf]
    %v220 = vld [vmem:[#allocation2 + $0x4] sm:$0xf]
    %v221 = vld [vmem:[#allocation2 + $0x8] sm:$0xf]
    %v222 = vld [vmem:[#allocation2 + $0xc] sm:$0xf]
    %v223 = vld [vmem:[#allocation2 + $0x10] sm:$0xf]
    %v224 = vld [vmem:[#allocation2 + $0x14] sm:$0xf]
    %v225 = vld [vmem:[#allocation2 + $0x18] sm:$0xf]
    %v226 = vld [vmem:[#allocation2 + $0x1c] sm:$0xf]
    %v227 = vld [vmem:[#allocation2 + $0x20] sm:$0xf]
    %v228 = vld [vmem:[#allocation2 + $0x24] sm:$0xf]
    %v229 = vld [vmem:[#allocation2 + $0x28] sm:$0xf]
    %v230 = vld [vmem:[#allocation2 + $0x2c] sm:$0xf]
    %v231 = vld [vmem:[#allocation2 + $0x30] sm:$0xf]
    %v232 = vld [vmem:[#allocation2 + $0x34] sm:$0xf]
    %v233 = vld [vmem:[#allocation2 + $0x38] sm:$0xf]
    %v234 = vld [vmem:[#allocation2 + $0x3c] sm:$0xf]
    %v235 = vld [vmem:[#allocation2 + $0x40] sm:$0xf]
    %v236 = vld [vmem:[#allocation2 + $0x44] sm:$0xf]
    %v237 = vld [vmem:[#allocation2 + $0x48] sm:$0xf]
    %v238 = vld [vmem:[#allocation2 + $0x4c] sm:$0xf]
    %v239 = vld [vmem:[#allocation2 + $0x50] sm:$0xf]
    %v240 = vld [vmem:[#allocation2 + $0x54] sm:$0xf]
    %v241 = vld [vmem:[#allocation2 + $0x58] sm:$0xf]
    %v242 = vld [vmem:[#allocation2 + $0x5c] sm:$0xf]
    %v243 = vld [vmem:[#allocation2 + $0x60] sm:$0xf]
    %v244 = vld [vmem:[#allocation2 + $0x64] sm:$0xf]
    %v245 = vld [vmem:[#allocation2 + $0x68] sm:$0xf]
    %v246 = vld [vmem:[#allocation2 + $0x6c] sm:$0xf]
    %v247 = vld [vmem:[#allocation2 + $0x70] sm:$0xf]
    %v248 = vld [vmem:[#allocation2 + $0x74] sm:$0xf]
    %v249 = vld [vmem:[#allocation2 + $0x78] sm:$0xf]
    %v250 = vld [vmem:[#allocation2 + $0x7c] sm:$0xf]
    %v251 = vld [vmem:[#allocation2 + $0x80] sm:$0xf]
    %v252 = vld [vmem:[#allocation2 + $0x84] sm:$0xf]
    %v253 = vld [vmem:[#allocation2 + $0x88] sm:$0xf]
    %v254 = vld [vmem:[#allocation2 + $0x8c] sm:$0xf]
    %v255 = vld [vmem:[#allocation2 + $0x90] sm:$0xf]
    %v256 = vld [vmem:[#allocation2 + $0x94] sm:$0xf]
    %v257 = vld [vmem:[#allocation2 + $0x98] sm:$0xf]
    %v258 = vld [vmem:[#allocation2 + $0x9c] sm:$0xf]
    %v259 = vld [vmem:[#allocation2 + $0xa0] sm:$0xf]
    %v260 = vld [vmem:[#allocation2 + $0xa4] sm:$0xf]
    %v261 = vld [vmem:[#allocation2 + $0xa8] sm:$0xf]
    %v262 = vld [vmem:[#allocation2 + $0xac] sm:$0xf]
    %v263 = vld [vmem:[#allocation2 + $0xb0] sm:$0xf]
    %v264 = vld [vmem:[#allocation2 + $0xb4] sm:$0xf]
    %v265 = vld [vmem:[#allocation2 + $0xb8] sm:$0xf]
    %v266 = vld [vmem:[#allocation2 + $0xbc] sm:$0xf]
    %v267 = vld [vmem:[#allocation2 + $0xc0] sm:$0xf]
    %v268 = vld [vmem:[#allocation2 + $0xc4] sm:$0xf]
    %v269 = vld [vmem:[#allocation2 + $0xc8] sm:$0xf]
    %v270 = vld [vmem:[#allocation2 + $0xcc] sm:$0xf]
    %v271 = vld [vmem:[#allocation2 + $0xd0] sm:$0xf]
    %v272 = vld [vmem:[#allocation2 + $0xd4] sm:$0xf]
    %v273 = vld [vmem:[#allocation2 + $0xd8] sm:$0xf]
    %v274 = vld [vmem:[#allocation2 + $0xdc] sm:$0xf]
    %v275 = vld [vmem:[#allocation2 + $0xe0] sm:$0xf]
    %v276 = vld [vmem:[#allocation2 + $0xe4] sm:$0xf]
    %v277 = vld [vmem:[#allocation2 + $0xe8] sm:$0xf]
    %v278 = vld [vmem:[#allocation2 + $0xec] sm:$0xf]
    %v279 = vld [vmem:[#allocation2 + $0xf0] sm:$0xf]
    %v280 = vld [vmem:[#allocation2 + $0xf4] sm:$0xf]
    %v281 = vld [vmem:[#allocation2 + $0xf8] sm:$0xf]
    %v282 = vld [vmem:[#allocation2 + $0xfc] sm:$0xf]
    %v283 = vld [vmem:[#allocation2 + $0x100] sm:$0xf]
    %v284 = vld [vmem:[#allocation2 + $0x104] sm:$0xf]
    %v285 = vld [vmem:[#allocation2 + $0x108] sm:$0xf]
    %v286 = vld [vmem:[#allocation2 + $0x10c] sm:$0xf]
    %v287 = vld [vmem:[#allocation2 + $0x110] sm:$0xf]
    %v288 = vld [vmem:[#allocation2 + $0x114] sm:$0xf]
    %v289 = vld [vmem:[#allocation2 + $0x118] sm:$0xf]
    %v290 = vld [vmem:[#allocation2 + $0x11c] sm:$0xf]
    %v291 = vld [vmem:[#allocation2 + $0x120] sm:$0xf]
    %v292 = vld [vmem:[#allocation2 + $0x124] sm:$0xf]
    %v293 = vld [vmem:[#allocation2 + $0x128] sm:$0xf]
    %v294 = vld [vmem:[#allocation2 + $0x12c] sm:$0xf]
    %v295 = vld [vmem:[#allocation2 + $0x130] sm:$0xf]
    %v296 = vld [vmem:[#allocation2 + $0x134] sm:$0xf]
    %v297 = vld [vmem:[#allocation2 + $0x138] sm:$0xf]
    %v298 = vld [vmem:[#allocation2 + $0x13c] sm:$0xf]
    %v299 = vpack.c.bf16 %v214, %v214
    %v300 = vpack.c.bf16 %v215, %v215
    %v301 = vpack.c.bf16 %v216, %v216
    %v302 = vpack.c.bf16 %v217, %v217
    %v303 = vpack.c.bf16 %v218, %v218
    %v304 = vld [vmem:[#allocation5] sm:$0x1]
    %v306 = vlaneseq
    %v307 = vshrl.u32 %v306, 7
    %v308 = vsub.s32 0, %v307
    %v309 = vrot.slane %v304, %v308
    %v391 = vunpack.c.l.b16 %v219
    %v392 = vunpack.c.l.b16 %v220
    %v393 = vunpack.c.l.b16 %v221
    %v394 = vunpack.c.l.b16 %v222
    %v395 = vunpack.c.l.b16 %v223
    %v396 = vunpack.c.l.b16 %v224
    %v397 = vunpack.c.l.b16 %v225
    %v398 = vunpack.c.l.b16 %v226
    %v399 = vunpack.c.l.b16 %v227
    %v400 = vunpack.c.l.b16 %v228
    %v401 = vunpack.c.l.b16 %v229
    %v402 = vunpack.c.l.b16 %v230
    %v403 = vunpack.c.l.b16 %v231
    %v404 = vunpack.c.l.b16 %v232
    %v405 = vunpack.c.l.b16 %v233
    %v406 = vunpack.c.l.b16 %v234
    %v407 = vunpack.c.l.b16 %v235
    %v408 = vunpack.c.l.b16 %v236
    %v409 = vunpack.c.l.b16 %v237
    %v410 = vunpack.c.l.b16 %v238
    %v411 = vunpack.c.l.b16 %v239
    %v412 = vunpack.c.l.b16 %v240
    %v413 = vunpack.c.l.b16 %v241
    %v414 = vunpack.c.l.b16 %v242
    %v415 = vunpack.c.l.b16 %v243
    %v416 = vunpack.c.l.b16 %v244
    %v417 = vunpack.c.l.b16 %v245
    %v418 = vunpack.c.l.b16 %v246
    %v419 = vunpack.c.l.b16 %v247
    %v420 = vunpack.c.l.b16 %v248
    %v421 = vunpack.c.l.b16 %v249
    %v422 = vunpack.c.l.b16 %v250
    %v423 = vunpack.c.l.b16 %v251
    %v424 = vunpack.c.l.b16 %v252
    %v425 = vunpack.c.l.b16 %v253
    %v426 = vunpack.c.l.b16 %v254
    %v427 = vunpack.c.l.b16 %v255
    %v428 = vunpack.c.l.b16 %v256
    %v429 = vunpack.c.l.b16 %v257
    %v430 = vunpack.c.l.b16 %v258
    %v431 = vunpack.c.l.b16 %v259
    %v432 = vunpack.c.l.b16 %v260
    %v433 = vunpack.c.l.b16 %v261
    %v434 = vunpack.c.l.b16 %v262
    %v435 = vunpack.c.l.b16 %v263
    %v436 = vunpack.c.l.b16 %v264
    %v437 = vunpack.c.l.b16 %v265
    %v438 = vunpack.c.l.b16 %v266
    %v439 = vunpack.c.l.b16 %v267
    %v440 = vunpack.c.l.b16 %v268
    %v441 = vunpack.c.l.b16 %v269
    %v442 = vunpack.c.l.b16 %v270
    %v443 = vunpack.c.l.b16 %v271
    %v444 = vunpack.c.l.b16 %v272
    %v445 = vunpack.c.l.b16 %v273
    %v446 = vunpack.c.l.b16 %v274
    %v447 = vunpack.c.l.b16 %v275
    %v448 = vunpack.c.l.b16 %v276
    %v449 = vunpack.c.l.b16 %v277
    %v450 = vunpack.c.l.b16 %v278
    %v451 = vunpack.c.l.b16 %v279
    %v452 = vunpack.c.l.b16 %v280
    %v453 = vunpack.c.l.b16 %v281
    %v454 = vunpack.c.l.b16 %v282
    %v455 = vunpack.c.l.b16 %v283
    %v456 = vunpack.c.l.b16 %v284
    %v457 = vunpack.c.l.b16 %v285
    %v458 = vunpack.c.l.b16 %v286
    %v459 = vunpack.c.l.b16 %v287
    %v460 = vunpack.c.l.b16 %v288
    %v461 = vunpack.c.l.b16 %v289
    %v462 = vunpack.c.l.b16 %v290
    %v463 = vunpack.c.l.b16 %v291
    %v464 = vunpack.c.l.b16 %v292
    %v465 = vunpack.c.l.b16 %v293
    %v466 = vunpack.c.l.b16 %v294
    %v467 = vunpack.c.l.b16 %v295
    %v468 = vunpack.c.l.b16 %v296
    %v469 = vunpack.c.l.b16 %v297
    %v470 = vunpack.c.l.b16 %v298
    %v471 = vpack.c.b16 %v392, %v391
    %v472 = vpack.c.b16 %v394, %v393
    %v473 = vpack.c.b16 %v396, %v395
    %v474 = vpack.c.b16 %v398, %v397
    %v475 = vpack.c.b16 %v400, %v399
    %v476 = vpack.c.b16 %v402, %v401
    %v477 = vpack.c.b16 %v404, %v403
    %v478 = vpack.c.b16 %v406, %v405
    %v479 = vpack.c.b16 %v408, %v407
    %v480 = vpack.c.b16 %v410, %v409
    %v481 = vpack.c.b16 %v412, %v411
    %v482 = vpack.c.b16 %v414, %v413
    %v483 = vpack.c.b16 %v416, %v415
    %v484 = vpack.c.b16 %v418, %v417
    %v485 = vpack.c.b16 %v420, %v419
    %v486 = vpack.c.b16 %v422, %v421
    %v487 = vpack.c.b16 %v424, %v423
    %v488 = vpack.c.b16 %v426, %v425
    %v489 = vpack.c.b16 %v428, %v427
    %v490 = vpack.c.b16 %v430, %v429
    %v491 = vpack.c.b16 %v432, %v431
    %v492 = vpack.c.b16 %v434, %v433
    %v493 = vpack.c.b16 %v436, %v435
    %v494 = vpack.c.b16 %v438, %v437
    %v495 = vpack.c.b16 %v440, %v439
    %v496 = vpack.c.b16 %v442, %v441
    %v497 = vpack.c.b16 %v444, %v443
    %v498 = vpack.c.b16 %v446, %v445
    %v499 = vpack.c.b16 %v448, %v447
    %v500 = vpack.c.b16 %v450, %v449
    %v501 = vpack.c.b16 %v452, %v451
    %v502 = vpack.c.b16 %v454, %v453
    %v503 = vpack.c.b16 %v456, %v455
    %v504 = vpack.c.b16 %v458, %v457
    %v505 = vpack.c.b16 %v460, %v459
    %v506 = vpack.c.b16 %v462, %v461
    %v507 = vpack.c.b16 %v464, %v463
    %v508 = vpack.c.b16 %v466, %v465
    %v509 = vpack.c.b16 %v468, %v467
    %v510 = vpack.c.b16 %v470, %v469
    %551 = vmatprep.subr.bf16.mxu0 0
    %552 = vmatpush1.bf16.msra.mxu0 %v471
    %553 = vmatprep.subr.bf16.mxu0 0
    %554 = vmatpush1.bf16.msra.mxu0 %v472
    %555 = vmatprep.subr.bf16.mxu0 0
    %556 = vmatpush1.bf16.msra.mxu0 %v473
    %557 = vmatprep.subr.bf16.mxu0 0
    %558 = vmatpush1.bf16.msra.mxu0 %v474
    %559 = vmatprep.subr.bf16.mxu0 0
    %560 = vmatpush1.bf16.msra.mxu0 %v475
    %561 = vmatprep.subr.bf16.mxu0 0
    %562 = vmatpush1.bf16.msra.mxu0 %v476
    %563 = vmatprep.subr.bf16.mxu0 0
    %564 = vmatpush1.bf16.msra.mxu0 %v477
    %565 = vmatprep.subr.bf16.mxu0 0
    %566 = vmatpush1.bf16.msra.mxu0 %v478
    %567 = vmatprep.subr.bf16.mxu0 0
    %568 = vmatpush1.bf16.msra.mxu0 %v479
    %569 = vmatprep.subr.bf16.mxu0 0
    %570 = vmatpush1.bf16.msra.mxu0 %v480
    %571 = vmatprep.subr.bf16.mxu0 0
    %572 = vmatpush1.bf16.msra.mxu0 %v481
    %573 = vmatprep.subr.bf16.mxu0 0
    %574 = vmatpush1.bf16.msra.mxu0 %v482
    %575 = vmatprep.subr.bf16.mxu0 0
    %576 = vmatpush1.bf16.msra.mxu0 %v483
    %577 = vmatprep.subr.bf16.mxu0 0
    %578 = vmatpush1.bf16.msra.mxu0 %v484
    %579 = vmatprep.subr.bf16.mxu0 0
    %580 = vmatpush1.bf16.msra.mxu0 %v485
    %581 = vmatprep.subr.bf16.mxu0 0
    %582 = vmatpush1.bf16.msra.mxu0 %v486
    %583 = vmatprep.mubr.bf16.mxu0 %v300
    %584 = vmatmul.mubr.bf16.gmra.mrb[0].mxu0 %v299
    %v585 = vpop.f32.mrb[0].mxu0
    %v586 = vadd.f32 %v309, %v585
    %v587 = vpop.f32.mrb[0].mxu0
    %v588 = vpop.f32.mrb[0].mxu0
    %v589 = vpop.f32.mrb[0].mxu0
    %590 = vdwg.mxu0
    %591 = vmatprep.subr.bf16.mxu0 0
    %592 = vmatpush1.bf16.msra.mxu0 %v487
    %593 = vmatprep.subr.bf16.mxu0 0
    %594 = vmatpush1.bf16.msra.mxu0 %v488
    %595 = vmatprep.subr.bf16.mxu0 0
    %596 = vmatpush1.bf16.msra.mxu0 %v489
    %597 = vmatprep.subr.bf16.mxu0 0
    %598 = vmatpush1.bf16.msra.mxu0 %v490
    %599 = vmatprep.subr.bf16.mxu0 0
    %600 = vmatpush1.bf16.msra.mxu0 %v491
    %601 = vmatprep.subr.bf16.mxu0 0
    %602 = vmatpush1.bf16.msra.mxu0 %v492
    %603 = vmatprep.subr.bf16.mxu0 0
    %604 = vmatpush1.bf16.msra.mxu0 %v493
    %605 = vmatprep.subr.bf16.mxu0 0
    %606 = vmatpush1.bf16.msra.mxu0 %v494
    %607 = vmatprep.subr.bf16.mxu0 0
    %608 = vmatpush1.bf16.msra.mxu0 %v495
    %609 = vmatprep.subr.bf16.mxu0 0
    %610 = vmatpush1.bf16.msra.mxu0 %v496
    %611 = vmatprep.subr.bf16.mxu0 0
    %612 = vmatpush1.bf16.msra.mxu0 %v497
    %613 = vmatprep.subr.bf16.mxu0 0
    %614 = vmatpush1.bf16.msra.mxu0 %v498
    %615 = vmatprep.subr.bf16.mxu0 0
    %616 = vmatpush1.bf16.msra.mxu0 %v499
    %617 = vmatprep.subr.bf16.mxu0 0
    %618 = vmatpush1.bf16.msra.mxu0 %v500
    %619 = vmatprep.subr.bf16.mxu0 0
    %620 = vmatpush1.bf16.msra.mxu0 %v501
    %621 = vmatprep.subr.bf16.mxu0 0
    %622 = vmatpush1.bf16.msra.mxu0 %v502
    %623 = vmatprep.mubr.bf16.mxu0 %v302
    %624 = vmatmul.mubr.bf16.gmra.mrb[0].mxu0 %v301
    %v625 = vpop.f32.mrb[0].mxu0
    %v626 = vadd.f32 %v586, %v625
    %v627 = vpop.f32.mrb[0].mxu0
    %v628 = vpop.f32.mrb[0].mxu0
    %v629 = vpop.f32.mrb[0].mxu0
    %630 = vdwg.mxu0
    %631 = vmatprep.subr.bf16.mxu0 0
    %632 = vmatpush1.bf16.msra.mxu0 %v503
    %633 = vmatprep.subr.bf16.mxu0 0
    %634 = vmatpush1.bf16.msra.mxu0 %v504
    %635 = vmatprep.subr.bf16.mxu0 0
    %636 = vmatpush1.bf16.msra.mxu0 %v505
    %637 = vmatprep.subr.bf16.mxu0 0
    %638 = vmatpush1.bf16.msra.mxu0 %v506
    %639 = vmatprep.subr.bf16.mxu0 0
    %640 = vmatpush1.bf16.msra.mxu0 %v507
    %641 = vmatprep.subr.bf16.mxu0 0
    %642 = vmatpush1.bf16.msra.mxu0 %v508
    %643 = vmatprep.subr.bf16.mxu0 0
    %644 = vmatpush1.bf16.msra.mxu0 %v509
    %645 = vmatprep.subr.bf16.mxu0 0
    %646 = vmatpush1.bf16.msra.mxu0 %v510
    %647 = vmatprep.subr.bf16.mxu0 0
    %648 = vmatpush1.bf16.msra.mxu0 0
    %649 = vmatprep.subr.bf16.mxu0 0
    %650 = vmatpush1.bf16.msra.mxu0 0
    %651 = vmatprep.subr.bf16.mxu0 0
    %652 = vmatpush1.bf16.msra.mxu0 0
    %653 = vmatprep.subr.bf16.mxu0 0
    %654 = vmatpush1.bf16.msra.mxu0 0
    %655 = vmatprep.subr.bf16.mxu0 0
    %656 = vmatpush1.bf16.msra.mxu0 0
    %657 = vmatprep.subr.bf16.mxu0 0
    %658 = vmatpush1.bf16.msra.mxu0 0
    %659 = vmatprep.subr.bf16.mxu0 0
    %660 = vmatpush1.bf16.msra.mxu0 0
    %661 = vmatprep.subr.bf16.mxu0 0
    %662 = vmatpush1.bf16.msra.mxu0 0
    %663 = vmatprep.mubr.bf16.mxu0 0
    %664 = vmatmul.mubr.bf16.gmra.mrb[0].mxu0 %v303
    %v665 = vpop.f32.mrb[0].mxu0
    %v666 = vadd.f32 %v626, %v665
    %v667 = vpop.f32.mrb[0].mxu0
    %v668 = vpop.f32.mrb[0].mxu0
    %v669 = vpop.f32.mrb[0].mxu0
    %670 = vdwg.mxu0
    %v671 = vld [vmem:[%s4] sm:$0xff]
    %v672 = vld [vmem:[%s4 + $0x8] sm:$0x3]
    %v673 = vld [vmem:[%s3] sm:$0xff]
    %v674 = vadd.f32 %v666, %v673
    %v676 = vrot.slane %v674, 6
    %vm678 = vcmask 1041408
    %v679 = vsel %vm678, %v672, %v676
    %v680 = vld [vmem:[#allocation7] sm:$0xff]
    %v681 = vld [vmem:[#allocation7 + $0x8] sm:$0xff]
    %v682 = vld [vmem:[#allocation7 + $0x10] sm:$0x3]
    %v683 = vld [vmem:[%s6] sm:$0x1]
    %v684 = vld [vmem:[#allocation8] sm:$0x1]
    %v685 = vld [vmem:[#allocation10] sm:$0xff]
    %v686 = vld [vmem:[#allocation10 + $0x8] sm:$0xf]
    %v687 = vld [vmem:[#allocation10 + $0xc] sm:$0xff]
    %v688 = vld [vmem:[#allocation10 + $0x14] sm:$0xf]
    %v689 = vld [vmem:[#allocation10 + $0x18] sm:$0xff]
    %v690 = vld [vmem:[#allocation10 + $0x20] sm:$0xf]
    %v691 = vld [vmem:[#allocation10 + $0x24] sm:$0xff]
    %v692 = vld [vmem:[#allocation10 + $0x2c] sm:$0xf]
    %v693 = vld [vmem:[#allocation10 + $0x30] sm:$0xff]
    %v694 = vld [vmem:[#allocation10 + $0x38] sm:$0xf]
    %v695 = vld [vmem:[#allocation10 + $0x3c] sm:$0xff]
    %v696 = vld [vmem:[#allocation10 + $0x44] sm:$0xf]
    %v697 = vld [vmem:[#allocation10 + $0x48] sm:$0xff]
    %v698 = vld [vmem:[#allocation10 + $0x50] sm:$0xf]
    %v699 = vld [vmem:[#allocation10 + $0x54] sm:$0xff]
    %v700 = vld [vmem:[#allocation10 + $0x5c] sm:$0xf]
    %v701 = vld [vmem:[#allocation10 + $0x60] sm:$0xff]
    %v702 = vld [vmem:[#allocation10 + $0x68] sm:$0xf]
    %v703 = vld [vmem:[#allocation10 + $0x6c] sm:$0xff]
    %v704 = vld [vmem:[#allocation10 + $0x74] sm:$0xf]
    %v705 = vld [vmem:[#allocation10 + $0x78] sm:$0xff]
    %v706 = vld [vmem:[#allocation10 + $0x80] sm:$0xf]
    %v707 = vld [vmem:[#allocation10 + $0x84] sm:$0xff]
    %v708 = vld [vmem:[#allocation10 + $0x8c] sm:$0xf]
    %v709 = vld [vmem:[#allocation10 + $0x90] sm:$0xff]
    %v710 = vld [vmem:[#allocation10 + $0x98] sm:$0xf]
    %v711 = vld [vmem:[#allocation10 + $0x9c] sm:$0xff]
    %v712 = vld [vmem:[#allocation10 + $0xa4] sm:$0xf]
    %v713 = vld [vmem:[#allocation10 + $0xa8] sm:$0xff]
    %v714 = vld [vmem:[#allocation10 + $0xb0] sm:$0xf]
    %v715 = vld [vmem:[#allocation10 + $0xb4] sm:$0xff]
    %v716 = vld [vmem:[#allocation10 + $0xbc] sm:$0xf]
    %v717 = vld [vmem:[%s9] sm:$0x7]
    %v718 = vld [vmem:[%s10] sm:$0xf]
    %v719 = vld [vmem:[%s10 + $0x4] sm:$0xf]
    %v720 = vld [vmem:[%s10 + $0x8] sm:$0xf]
    %v721 = vld [vmem:[%s10 + $0xc] sm:$0xf]
    %v722 = vld [vmem:[%s10 + $0x10] sm:$0xf]
    %v723 = vld [vmem:[%s10 + $0x14] sm:$0xf]
    %v724 = vld [vmem:[%s10 + $0x18] sm:$0xf]
    %v725 = vld [vmem:[%s10 + $0x1c] sm:$0xf]
    %v726 = vld [vmem:[%s10 + $0x20] sm:$0xf]
    %v727 = vld [vmem:[%s10 + $0x24] sm:$0xf]
    %v728 = vld [vmem:[%s10 + $0x28] sm:$0xf]
    %v729 = vld [vmem:[%s10 + $0x2c] sm:$0xf]
    %v730 = vld [vmem:[%s10 + $0x30] sm:$0xf]
    %v731 = vld [vmem:[%s10 + $0x34] sm:$0xf]
    %v732 = vld [vmem:[%s10 + $0x38] sm:$0xf]
    %v733 = vld [vmem:[%s10 + $0x3c] sm:$0xf]
    %v734 = vld [vmem:[%s11] sm:$0x1]
    %v735 = vld [vmem:[#allocation11] sm:$0x1]
    %v736 = vld [vmem:[#allocation13] sm:$0x1]
    %v737 = vld [vmem:[#allocation14] sm:$0x1]
    %v738 = vld [vmem:[%s15] sm:$0xff]
    %v739 = vld [vmem:[%s15 + $0x8] sm:$0xff]
    %v740 = vld [vmem:[%s15 + $0x10] sm:$0xff]
    %v741 = vld [vmem:[%s15 + $0x18] sm:$0xff]
    %v742 = vld [vmem:[%s15 + $0x20] sm:$0xff]
    %v743 = vld [vmem:[%s15 + $0x28] sm:$0xff]
    %v744 = vld [vmem:[%s15 + $0x30] sm:$0xff]
    %v745 = vld [vmem:[%s15 + $0x38] sm:$0xff]
    %v746 = vld [vmem:[%s15 + $0x40] sm:$0xff]
    %v747 = vld [vmem:[%s15 + $0x48] sm:$0xff]
    %v748 = vld [vmem:[%s15 + $0x50] sm:$0xff]
    %v749 = vld [vmem:[%s15 + $0x58] sm:$0xff]
    %v750 = vld [vmem:[%s15 + $0x60] sm:$0xff]
    %v751 = vld [vmem:[%s15 + $0x68] sm:$0xff]
    %v752 = vld [vmem:[%s15 + $0x70] sm:$0xff]
    %v753 = vld [vmem:[%s15 + $0x78] sm:$0xff]
    %v754 = vld [vmem:[%s15 + $0x80] sm:$0xff]
    %v755 = vld [vmem:[%s15 + $0x88] sm:$0xff]
    %v756 = vld [vmem:[%s15 + $0x90] sm:$0xff]
    %v757 = vld [vmem:[%s15 + $0x98] sm:$0xff]
    %v758 = vld [vmem:[%s15 + $0xa0] sm:$0xff]
    %v759 = vld [vmem:[%s15 + $0xa8] sm:$0xff]
    %v760 = vld [vmem:[%s15 + $0xb0] sm:$0xff]
    %v761 = vld [vmem:[%s15 + $0xb8] sm:$0xff]
    %v762 = vld [vmem:[%s15 + $0xc0] sm:$0xff]
    %v763 = vld [vmem:[%s15 + $0xc8] sm:$0xff]
    %v764 = vld [vmem:[%s15 + $0xd0] sm:$0xff]
    %v765 = vld [vmem:[%s15 + $0xd8] sm:$0xff]
    %v766 = vld [vmem:[%s15 + $0xe0] sm:$0xff]
    %v767 = vld [vmem:[%s15 + $0xe8] sm:$0xff]
    %v768 = vld [vmem:[%s15 + $0xf0] sm:$0xff]
    %v769 = vld [vmem:[%s15 + $0xf8] sm:$0xff]
    %v770 = vld [vmem:[#allocation16] sm:$0xf]
    %v771 = vld [vmem:[%s17] sm:$0xf]
    %v772 = vld [vmem:[%s17 + $0x4] sm:$0xf]
    %v773 = vld [vmem:[%s17 + $0x8] sm:$0xf]
    %v774 = vld [vmem:[%s17 + $0xc] sm:$0xf]
    %v775 = vld [vmem:[%s17 + $0x10] sm:$0xf]
    %v776 = vld [vmem:[%s17 + $0x14] sm:$0xf]
    %v777 = vld [vmem:[%s17 + $0x18] sm:$0xf]
    %v778 = vld [vmem:[%s17 + $0x1c] sm:$0xf]
    %v779 = vld [vmem:[%s17 + $0x20] sm:$0xf]
    %v780 = vld [vmem:[%s17 + $0x24] sm:$0xf]
    %v781 = vld [vmem:[%s17 + $0x28] sm:$0xf]
    %v782 = vld [vmem:[%s17 + $0x2c] sm:$0xf]
    %v783 = vld [vmem:[%s17 + $0x30] sm:$0xf]
    %v784 = vld [vmem:[%s17 + $0x34] sm:$0xf]
    %v785 = vld [vmem:[%s17 + $0x38] sm:$0xf]
    %v786 = vld [vmem:[%s17 + $0x3c] sm:$0xf]
    %v787 = vld [vmem:[%s17 + $0x40] sm:$0xf]
    %v788 = vld [vmem:[%s17 + $0x44] sm:$0xf]
    %v789 = vld [vmem:[%s17 + $0x48] sm:$0xf]
    %v790 = vld [vmem:[%s17 + $0x4c] sm:$0xf]
    %v791 = vld [vmem:[%s17 + $0x50] sm:$0xf]
    %v792 = vld [vmem:[%s17 + $0x54] sm:$0xf]
    %v793 = vld [vmem:[%s17 + $0x58] sm:$0xf]
    %v794 = vld [vmem:[%s17 + $0x5c] sm:$0xf]
    %v795 = vld [vmem:[%s17 + $0x60] sm:$0xf]
    %v796 = vld [vmem:[%s17 + $0x64] sm:$0xf]
    %v797 = vld [vmem:[%s17 + $0x68] sm:$0xf]
    %v798 = vld [vmem:[%s17 + $0x6c] sm:$0xf]
    %v799 = vld [vmem:[%s17 + $0x70] sm:$0xf]
    %v800 = vld [vmem:[%s17 + $0x74] sm:$0xf]
    %v801 = vld [vmem:[%s17 + $0x78] sm:$0xf]
    %v802 = vld [vmem:[%s17 + $0x7c] sm:$0xf]
    %v803 = vld [vmem:[%s17 + $0x80] sm:$0xf]
    %v804 = vld [vmem:[%s17 + $0x84] sm:$0xf]
    %v805 = vld [vmem:[%s17 + $0x88] sm:$0xf]
    %v806 = vld [vmem:[%s17 + $0x8c] sm:$0xf]
    %v807 = vld [vmem:[%s17 + $0x90] sm:$0xf]
    %v808 = vld [vmem:[%s17 + $0x94] sm:$0xf]
    %v809 = vld [vmem:[%s17 + $0x98] sm:$0xf]
    %v810 = vld [vmem:[%s17 + $0x9c] sm:$0xf]
    %v811 = vld [vmem:[%s17 + $0xa0] sm:$0xf]
    %v812 = vld [vmem:[%s17 + $0xa4] sm:$0xf]
    %v813 = vld [vmem:[%s17 + $0xa8] sm:$0xf]
    %v814 = vld [vmem:[%s17 + $0xac] sm:$0xf]
    %v815 = vld [vmem:[%s17 + $0xb0] sm:$0xf]
    %v816 = vld [vmem:[%s17 + $0xb4] sm:$0xf]
    %v817 = vld [vmem:[%s17 + $0xb8] sm:$0xf]
    %v818 = vld [vmem:[%s17 + $0xbc] sm:$0xf]
    %v819 = vld [vmem:[%s17 + $0xc0] sm:$0xf]
    %v820 = vld [vmem:[%s17 + $0xc4] sm:$0xf]
    %v821 = vld [vmem:[%s17 + $0xc8] sm:$0xf]
    %v822 = vld [vmem:[%s17 + $0xcc] sm:$0xf]
    %v823 = vld [vmem:[%s17 + $0xd0] sm:$0xf]
    %v824 = vld [vmem:[%s17 + $0xd4] sm:$0xf]
    %v825 = vld [vmem:[%s17 + $0xd8] sm:$0xf]
    %v826 = vld [vmem:[%s17 + $0xdc] sm:$0xf]
    %v827 = vld [vmem:[%s17 + $0xe0] sm:$0xf]
    %v828 = vld [vmem:[%s17 + $0xe4] sm:$0xf]
    %v829 = vld [vmem:[%s17 + $0xe8] sm:$0xf]
    %v830 = vld [vmem:[%s17 + $0xec] sm:$0xf]
    %v831 = vld [vmem:[%s17 + $0xf0] sm:$0xf]
    %v832 = vld [vmem:[%s17 + $0xf4] sm:$0xf]
    %v833 = vld [vmem:[%s17 + $0xf8] sm:$0xf]
    %v834 = vld [vmem:[%s17 + $0xfc] sm:$0xf]
    %v835 = vld [vmem:[#allocation17] sm:$0x1]
    %v836 = vld [vmem:[#allocation19] sm:$0x1]
    %837 = vadd.xlane.f32.xlu0 %v671
    %v838 = vpop.xlane.xlu0 %837
    %839 = vadd.xlane.f32.xlu0 %v679
    %v840 = vpop.xlane.xlu0 %839
    %v841 = vsel %vm678, %v676, 0.0
    %842 = vadd.xlane.f32.xlu0 %v841
    %v843 = vpop.xlane.xlu0 %842
    %v844 = vrcp.pop 128.0
    %v845 = vmul.f32 %v838, %v844
    %v846 = vmul.f32 %v840, %v844
    %v847 = vmul.f32 %v843, %v844
    %v848 = vsub.f32 %v671, %v845
    %v849 = vsub.f32 %v679, %v846
    %v850 = vsub.f32 %v676, %v847
    %v851 = vmul.f32 %v848, %v848
    %v852 = vmul.f32 %v849, %v849
    %v853 = vmul.f32 %v850, %v850
    %854 = vadd.xlane.f32.xlu0 %v851
    %v855 = vpop.xlane.xlu0 %854
    %856 = vadd.xlane.f32.xlu0 %v852
    %v857 = vpop.xlane.xlu0 %856
    %v858 = vsel %vm678, %v853, 0.0
    %859 = vadd.xlane.f32.xlu0 %v858
    %v860 = vpop.xlane.xlu0 %859
    %v861 = vmul.f32 %v855, %v844
    %v862 = vmul.f32 %v857, %v844
    %v863 = vmul.f32 %v860, %v844
    %v864 = vadd.f32 %v861, 1e-06
    %v865 = vadd.f32 %v862, 1e-06
    %v866 = vadd.f32 %v863, 1e-06
    %v867 = vrsqrt.pop %v864
    %v868 = vrsqrt.pop %v865
    %v869 = vrsqrt.pop %v866
    %v870 = vmul.f32 %v848, %v867
    %v871 = vmul.f32 %v849, %v868
    %v872 = vmul.f32 %v850, %v869
    %v874 = vlaneseq
    %v875 = vshrl.u32 %v874, 7
    %v876 = vsub.s32 0, %v875
    %v877 = vrot.slane %v683, %v876
    %v879 = vmul.f32 %v870, %v877
    %v880 = vmul.f32 %v871, %v877
    %v881 = vmul.f32 %v872, %v877
    %v883 = vlaneseq
    %v884 = vshrl.u32 %v883, 7
    %v885 = vsub.s32 0, %v884
    %v886 = vrot.slane %v684, %v885
    %v888 = vadd.f32 %v879, %v886
    %v889 = vadd.f32 %v880, %v886
    %v890 = vadd.f32 %v881, %v886
    %v891 = vpack.c.bf16 %v889, %v888
    %v892 = vpack.c.bf16 %v890, %v890
    %v894 = vlaneseq
    %v895 = vshrl.u32 %v894, 7
    %v896 = vsub.s32 0, %v895
    %v897 = vrot.slane %v717, %v896
    %v898 = vlaneseq
    %v899 = vshrl.u32 %v898, 7
    %v900 = vsub.s32 1, %v899
    %v901 = vrot.slane %v717, %v900
    %v902 = vlaneseq
    %v903 = vshrl.u32 %v902, 7
    %v904 = vsub.s32 2, %v903
    %v905 = vrot.slane %v717, %v904
    %v941 = vunpack.c.l.b16 %v685
    %v942 = vunpack.c.h.b16 %v685
    %v943 = vunpack.c.l.b16 %v686
    %v944 = vunpack.c.l.b16 %v687
    %v945 = vunpack.c.h.b16 %v687
    %v946 = vunpack.c.l.b16 %v688
    %v947 = vunpack.c.l.b16 %v689
    %v948 = vunpack.c.h.b16 %v689
    %v949 = vunpack.c.l.b16 %v690
    %v950 = vunpack.c.l.b16 %v691
    %v951 = vunpack.c.h.b16 %v691
    %v952 = vunpack.c.l.b16 %v692
    %v953 = vunpack.c.l.b16 %v693
    %v954 = vunpack.c.h.b16 %v693
    %v955 = vunpack.c.l.b16 %v694
    %v956 = vunpack.c.l.b16 %v695
    %v957 = vunpack.c.h.b16 %v695
    %v958 = vunpack.c.l.b16 %v696
    %v959 = vunpack.c.l.b16 %v697
    %v960 = vunpack.c.h.b16 %v697
    %v961 = vunpack.c.l.b16 %v698
    %v962 = vunpack.c.l.b16 %v699
    %v963 = vunpack.c.h.b16 %v699
    %v964 = vunpack.c.l.b16 %v700
    %v965 = vunpack.c.l.b16 %v701
    %v966 = vunpack.c.h.b16 %v701
    %v967 = vunpack.c.l.b16 %v702
    %v968 = vunpack.c.l.b16 %v703
    %v969 = vunpack.c.h.b16 %v703
    %v970 = vunpack.c.l.b16 %v704
    %v971 = vunpack.c.l.b16 %v705
    %v972 = vunpack.c.h.b16 %v705
    %v973 = vunpack.c.l.b16 %v706
    %v974 = vunpack.c.l.b16 %v707
    %v975 = vunpack.c.h.b16 %v707
    %v976 = vunpack.c.l.b16 %v708
    %v977 = vunpack.c.l.b16 %v709
    %v978 = vunpack.c.h.b16 %v709
    %v979 = vunpack.c.l.b16 %v710
    %v980 = vunpack.c.l.b16 %v711
    %v981 = vunpack.c.h.b16 %v711
    %v982 = vunpack.c.l.b16 %v712
    %v983 = vunpack.c.l.b16 %v713
    %v984 = vunpack.c.h.b16 %v713
    %v985 = vunpack.c.l.b16 %v714
    %v986 = vunpack.c.l.b16 %v715
    %v987 = vunpack.c.h.b16 %v715
    %v988 = vunpack.c.l.b16 %v716
    %v989 = vpack.c.b16 %v944, %v941
    %v990 = vpack.c.b16 %v945, %v942
    %v991 = vpack.c.b16 %v946, %v943
    %v992 = vpack.c.b16 %v950, %v947
    %v993 = vpack.c.b16 %v951, %v948
    %v994 = vpack.c.b16 %v952, %v949
    %v995 = vpack.c.b16 %v956, %v953
    %v996 = vpack.c.b16 %v957, %v954
    %v997 = vpack.c.b16 %v958, %v955
    %v998 = vpack.c.b16 %v962, %v959
    %v999 = vpack.c.b16 %v963, %v960
    %v1000 = vpack.c.b16 %v964, %v961
    %v1001 = vpack.c.b16 %v968, %v965
    %v1002 = vpack.c.b16 %v969, %v966
    %v1003 = vpack.c.b16 %v970, %v967
    %v1004 = vpack.c.b16 %v974, %v971
    %v1005 = vpack.c.b16 %v975, %v972
    %v1006 = vpack.c.b16 %v976, %v973
    %v1007 = vpack.c.b16 %v980, %v977
    %v1008 = vpack.c.b16 %v981, %v978
    %v1009 = vpack.c.b16 %v982, %v979
    %v1010 = vpack.c.b16 %v986, %v983
    %v1011 = vpack.c.b16 %v987, %v984
    %v1012 = vpack.c.b16 %v988, %v985
    %1037 = vmatprep.subr.bf16.mxu0 %v990
    %1038 = vmatpush1.bf16.msra.mxu0 %v989
    %1039 = vmatprep.subr.bf16.mxu0 %v993
    %1040 = vmatpush1.bf16.msra.mxu0 %v992
    %1041 = vmatprep.subr.bf16.mxu0 %v996
    %1042 = vmatpush1.bf16.msra.mxu0 %v995
    %1043 = vmatprep.subr.bf16.mxu0 %v999
    %1044 = vmatpush1.bf16.msra.mxu0 %v998
    %1045 = vmatprep.subr.bf16.mxu0 %v1002
    %1046 = vmatpush1.bf16.msra.mxu0 %v1001
    %1047 = vmatprep.subr.bf16.mxu0 %v1005
    %1048 = vmatpush1.bf16.msra.mxu0 %v1004
    %1049 = vmatprep.subr.bf16.mxu0 %v1008
    %1050 = vmatpush1.bf16.msra.mxu0 %v1007
    %1051 = vmatprep.subr.bf16.mxu0 %v1011
    %1052 = vmatpush1.bf16.msra.mxu0 %v1010
    %1053 = vmatprep.subr.bf16.mxu0 0
    %1054 = vmatpush1.bf16.msra.mxu0 0
    %1055 = vmatprep.subr.bf16.mxu0 0
    %1056 = vmatpush1.bf16.msra.mxu0 0
    %1057 = vmatprep.subr.bf16.mxu0 0
    %1058 = vmatpush1.bf16.msra.mxu0 0
    %1059 = vmatprep.subr.bf16.mxu0 0
    %1060 = vmatpush1.bf16.msra.mxu0 0
    %1061 = vmatprep.subr.bf16.mxu0 0
    %1062 = vmatpush1.bf16.msra.mxu0 0
    %1063 = vmatprep.subr.bf16.mxu0 0
    %1064 = vmatpush1.bf16.msra.mxu0 0
    %1065 = vmatprep.subr.bf16.mxu0 0
    %1066 = vmatpush1.bf16.msra.mxu0 0
    %1067 = vmatprep.subr.bf16.mxu0 0
    %1068 = vmatpush1.bf16.msra.mxu0 0
    %1069 = vmatprep.mubr.bf16.mxu0 0
    %1070 = vmatmul.mubr.bf16.gmra.mrb[0].mxu0 %v891
    %v1071 = vpop.f32.mrb[0].mxu0
    %v1072 = vadd.f32 %v897, %v1071
    %v1073 = vpop.f32.mrb[0].mxu0
    %v1074 = vadd.f32 %v901, %v1073
    %v1075 = vpop.f32.mrb[0].mxu0
    %v1076 = vadd.f32 %v897, %v1075
    %v1077 = vpop.f32.mrb[0].mxu0
    %v1078 = vadd.f32 %v901, %v1077
    %1079 = vmatprep.mubr.bf16.mxu0 0
    %1080 = vmatmul.mubr.bf16.gmra.mrb[0].mxu0 %v892
    %v1081 = vpop.f32.mrb[0].mxu0
    %v1082 = vadd.f32 %v897, %v1081
    %v1083 = vpop.f32.mrb[0].mxu0
    %v1084 = vadd.f32 %v901, %v1083
    %v1085 = vpop.f32.mrb[0].mxu0
    %v1086 = vpop.f32.mrb[0].mxu0
    %1087 = vdwg.mxu0
    %1088 = vmatprep.subr.bf16.mxu0 0
    %1089 = vmatpush1.bf16.msra.mxu0 %v991
    %1090 = vmatprep.subr.bf16.mxu0 0
    %1091 = vmatpush1.bf16.msra.mxu0 %v994
    %1092 = vmatprep.subr.bf16.mxu0 0
    %1093 = vmatpush1.bf16.msra.mxu0 %v997
    %1094 = vmatprep.subr.bf16.mxu0 0
    %1095 = vmatpush1.bf16.msra.mxu0 %v1000
    %1096 = vmatprep.subr.bf16.mxu0 0
    %1097 = vmatpush1.bf16.msra.mxu0 %v1003
    %1098 = vmatprep.subr.bf16.mxu0 0
    %1099 = vmatpush1.bf16.msra.mxu0 %v1006
    %1100 = vmatprep.subr.bf16.mxu0 0
    %1101 = vmatpush1.bf16.msra.mxu0 %v1009
    %1102 = vmatprep.subr.bf16.mxu0 0
    %1103 = vmatpush1.bf16.msra.mxu0 %v1012
    %1104 = vmatprep.subr.bf16.mxu0 0
    %1105 = vmatpush1.bf16.msra.mxu0 0
    %1106 = vmatprep.subr.bf16.mxu0 0
    %1107 = vmatpush1.bf16.msra.mxu0 0
    %1108 = vmatprep.subr.bf16.mxu0 0
    %1109 = vmatpush1.bf16.msra.mxu0 0
    %1110 = vmatprep.subr.bf16.mxu0 0
    %1111 = vmatpush1.bf16.msra.mxu0 0
    %1112 = vmatprep.subr.bf16.mxu0 0
    %1113 = vmatpush1.bf16.msra.mxu0 0
    %1114 = vmatprep.subr.bf16.mxu0 0
    %1115 = vmatpush1.bf16.msra.mxu0 0
    %1116 = vmatprep.subr.bf16.mxu0 0
    %1117 = vmatpush1.bf16.msra.mxu0 0
    %1118 = vmatprep.subr.bf16.mxu0 0
    %1119 = vmatpush1.bf16.msra.mxu0 0
    %1120 = vmatprep.mubr.bf16.mxu0 0
    %1121 = vmatmul.mubr.bf16.gmra.mrb[0].mxu0 %v891
    %v1122 = vpop.f32.mrb[0].mxu0
    %v1123 = vadd.f32 %v905, %v1122
    %v1124 = vpop.f32.mrb[0].mxu0
    %v1125 = vpop.f32.mrb[0].mxu0
    %v1126 = vadd.f32 %v905, %v1125
    %v1127 = vpop.f32.mrb[0].mxu0
    %1128 = vmatprep.mubr.bf16.mxu0 0
    %1129 = vmatmul.mubr.bf16.gmra.mrb[0].mxu0 %v892
    %v1130 = vpop.f32.mrb[0].mxu0
    %v1131 = vadd.f32 %v905, %v1130
    %v1132 = vpop.f32.mrb[0].mxu0
    %v1133 = vpop.f32.mrb[0].mxu0
    %v1134 = vpop.f32.mrb[0].mxu0
    %1135 = vdwg.mxu0
    %v1136 = vpack.c.bf16 %v1076, %v1072
    %v1137 = vpack.c.bf16 %v1078, %v1074
    %v1138 = vpack.c.bf16 %v1126, %v1123
    %v1139 = vpack.c.bf16 %v1082, %v1082
    %v1140 = vpack.c.bf16 %v1084, %v1084
    %v1141 = vpack.c.bf16 %v1131, %v1131
    %vm1142 = vcmask 261120
    %v1144 = vsel %vm1142, %v1136, 0
    %v1147 = vsel %vm1142, %v1139, 0
    %v1150 = vsel %vm1142, %v1137, 0
    %v1153 = vsel %vm1142, %v1140, 0
    %1155 = vmatprep.subr.bf16.mxu0 0
    %1156 = vmatpush1.bf16.xpose.msra.mxu0 %v1150
    %1157 = vmatprep.subr.bf16.mxu0 0
    %1158 = vmatpush1.bf16.xpose.msra.mxu0 %v1153
    %1159 = vmatprep.subr.bf16.mxu0 0
    %1160 = vmatpush1.bf16.xpose.msra.mxu0 0
    %1161 = vmatprep.subr.bf16.mxu0 0
    %1162 = vmatpush1.bf16.xpose.msra.mxu0 0
    %1163 = vmatprep.subr.bf16.mxu0 0
    %1164 = vmatpush1.bf16.xpose.msra.mxu0 0
    %1165 = vmatprep.subr.bf16.mxu0 0
    %1166 = vmatpush1.bf16.xpose.msra.mxu0 0
    %1167 = vmatprep.subr.bf16.mxu0 0
    %1168 = vmatpush1.bf16.xpose.msra.mxu0 0
    %1169 = vmatprep.subr.bf16.mxu0 0
    %1170 = vmatpush1.bf16.xpose.msra.mxu0 0
    %1171 = vmatprep.subr.bf16.mxu0 0
    %1172 = vmatpush1.bf16.xpose.msra.mxu0 0
    %1173 = vmatprep.subr.bf16.mxu0 0
    %1174 = vmatpush1.bf16.xpose.msra.mxu0 0
    %1175 = vmatprep.subr.bf16.mxu0 0
    %1176 = vmatpush1.bf16.xpose.msra.mxu0 0
    %1177 = vmatprep.subr.bf16.mxu0 0
    %1178 = vmatpush1.bf16.xpose.msra.mxu0 0
    %1179 = vmatprep.subr.bf16.mxu0 0
    %1180 = vmatpush1.bf16.xpose.msra.mxu0 0
    %1181 = vmatprep.subr.bf16.mxu0 0
    %1182 = vmatpush1.bf16.xpose.msra.mxu0 0
    %1183 = vmatprep.subr.bf16.mxu0 0
    %1184 = vmatpush1.bf16.xpose.msra.mxu0 0
    %1185 = vmatprep.subr.bf16.mxu0 0
    %1186 = vmatpush1.bf16.xpose.msra.mxu0 0
    %1187 = vmatprep.mubr.bf16.mxu0 0
    %1188 = vmatmul.mubr.bf16.gmra.mrb[0].mxu0 %v1144
    %v1189 = vpop.f32.mrb[0].mxu0
    %v1190 = vadd.f32 %v680, %v1189
    %v1191 = vpop.f32.mrb[0].mxu0
    %v1192 = vpop.f32.mrb[0].mxu0
    %v1193 = vadd.f32 %v681, %v1192
    %v1194 = vpop.f32.mrb[0].mxu0
    %1195 = vmatprep.mubr.bf16.mxu0 0
    %1196 = vmatmul.mubr.bf16.gmra.mrb[0].mxu0 %v1147
    %v1197 = vpop.f32.mrb[0].mxu0
    %v1198 = vadd.f32 %v682, %v1197
    %v1199 = vpop.f32.mrb[0].mxu0
    %v1200 = vpop.f32.mrb[0].mxu0
    %v1201 = vpop.f32.mrb[0].mxu0
    %1202 = vdwg.mxu0
    %vm1203 = vcmask 146432
    %v1204 = vsel %vm1203, %v1190, -inf
    %1205 = vmax.xlane.f32.xlu0 %v1204
    %v1206 = vpop.xlane.xlu0 %1205
    %v1207 = vsel %vm1203, %v1193, -inf
    %1208 = vmax.xlane.f32.xlu0 %v1207
    %v1209 = vpop.xlane.xlu0 %1208
    %vm1210 = vcmask 140288
    %v1211 = vsel %vm1210, %v1198, -inf
    %1212 = vmax.xlane.f32.xlu0 %v1211
    %v1213 = vpop.xlane.xlu0 %1212
    %v1214 = vsub.f32 %v1190, %v1206
    %v1215 = vsub.f32 %v1193, %v1209
    %v1216 = vsub.f32 %v1198, %v1213
    %v1217 = vmul.f32 %v1214, 1.442695
    %v1218 = vpow.pop %v1217
    %v1219 = vmul.f32 %v1215, 1.442695
    %v1220 = vpow.pop %v1219
    %v1221 = vmul.f32 %v1216, 1.442695
    %v1222 = vpow.pop %v1221
    %v1223 = vsel %vm1203, %v1218, 0.0
    %1224 = vadd.xlane.f32.xlu0 %v1223
    %v1225 = vpop.xlane.xlu0 %1224
    %v1226 = vsel %vm1203, %v1220, 0.0
    %1227 = vadd.xlane.f32.xlu0 %v1226
    %v1228 = vpop.xlane.xlu0 %1227
    %v1229 = vsel %vm1210, %v1222, 0.0
    %1230 = vadd.xlane.f32.xlu0 %v1229
    %v1231 = vpop.xlane.xlu0 %1230
    %v1232 = vrcp.pop %v1225
    %v1233 = vrcp.pop %v1228
    %v1234 = vrcp.pop %v1231
    %v1235 = vmul.f32 %v1218, %v1232
    %v1236 = vmul.f32 %v1220, %v1233
    %v1237 = vmul.f32 %v1222, %v1234
    %v1238 = vpack.c.bf16 %v1236, %v1235
    %v1239 = vpack.c.bf16 %v1237, %v1237
    %v1241 = vsel %vm1203, %v1238, 0
    %v1244 = vsel %vm1203, %v1239, 0
    %vm1246 = vcmask 1040384
    %v1248 = vsel %vm1246, %v1141, 0
    %1250 = vmatprep.subr.bf16.mxu0 0
    %1251 = vmatpush1.bf16.msra.mxu0 %v1138
    %1252 = vmatprep.subr.bf16.mxu0 0
    %1253 = vmatpush1.bf16.msra.mxu0 %v1248
    %1254 = vmatprep.subr.bf16.mxu0 0
    %1255 = vmatpush1.bf16.msra.mxu0 0
    %1256 = vmatprep.subr.bf16.mxu0 0
    %1257 = vmatpush1.bf16.msra.mxu0 0
    %1258 = vmatprep.subr.bf16.mxu0 0
    %1259 = vmatpush1.bf16.msra.mxu0 0
    %1260 = vmatprep.subr.bf16.mxu0 0
    %1261 = vmatpush1.bf16.msra.mxu0 0
    %1262 = vmatprep.subr.bf16.mxu0 0
    %1263 = vmatpush1.bf16.msra.mxu0 0
    %1264 = vmatprep.subr.bf16.mxu0 0
    %1265 = vmatpush1.bf16.msra.mxu0 0
    %1266 = vmatprep.subr.bf16.mxu0 0
    %1267 = vmatpush1.bf16.msra.mxu0 0
    %1268 = vmatprep.subr.bf16.mxu0 0
    %1269 = vmatpush1.bf16.msra.mxu0 0
    %1270 = vmatprep.subr.bf16.mxu0 0
    %1271 = vmatpush1.bf16.msra.mxu0 0
    %1272 = vmatprep.subr.bf16.mxu0 0
    %1273 = vmatpush1.bf16.msra.mxu0 0
    %1274 = vmatprep.subr.bf16.mxu0 0
    %1275 = vmatpush1.bf16.msra.mxu0 0
    %1276 = vmatprep.subr.bf16.mxu0 0
    %1277 = vmatpush1.bf16.msra.mxu0 0
    %1278 = vmatprep.subr.bf16.mxu0 0
    %1279 = vmatpush1.bf16.msra.mxu0 0
    %1280 = vmatprep.subr.bf16.mxu0 0
    %1281 = vmatpush1.bf16.msra.mxu0 0
    %1282 = vmatprep.mubr.bf16.mxu0 0
    %1283 = vmatmul.mubr.bf16.gmra.mrb[0].mxu0 %v1241
    %v1284 = vpop.f32.mrb[0].mxu0
    %v1285 = vadd.f32 0.0, %v1284
    %v1286 = vpop.f32.mrb[0].mxu0
    %v1287 = vpop.f32.mrb[0].mxu0
    %v1288 = vadd.f32 0.0, %v1287
    %v1289 = vpop.f32.mrb[0].mxu0
    %1290 = vmatprep.mubr.bf16.mxu0 0
    %1291 = vmatmul.mubr.bf16.gmra.mrb[0].mxu0 %v1244
    %v1292 = vpop.f32.mrb[0].mxu0
    %v1293 = vadd.f32 0.0, %v1292
    %v1294 = vpop.f32.mrb[0].mxu0
    %v1295 = vpop.f32.mrb[0].mxu0
    %v1296 = vpop.f32.mrb[0].mxu0
    %1297 = vdwg.mxu0
    %1300 = vrot.lane.b32.xlu0 %v1136, 96
    %v1301 = vpop.permute.xlu0 %1300
    %1302 = vrot.lane.b32.xlu0 %v1139, 96
    %v1303 = vpop.permute.xlu0 %1302
    %1306 = vrot.lane.b32.xlu0 %v1137, 96
    %v1307 = vpop.permute.xlu0 %1306
    %1308 = vrot.lane.b32.xlu0 %v1140, 96
    %v1309 = vpop.permute.xlu0 %1308
    %v1311 = vsel %vm1142, %v1301, 0
    %v1314 = vsel %vm1142, %v1303, 0
    %v1317 = vsel %vm1142, %v1307, 0
    %v1320 = vsel %vm1142, %v1309, 0
    %1322 = vmatprep.subr.bf16.mxu0 0
    %1323 = vmatpush1.bf16.xpose.msra.mxu0 %v1317
    %1324 = vmatprep.subr.bf16.mxu0 0
    %1325 = vmatpush1.bf16.xpose.msra.mxu0 %v1320
    %1326 = vmatprep.subr.bf16.mxu0 0
    %1327 = vmatpush1.bf16.xpose.msra.mxu0 0
    %1328 = vmatprep.subr.bf16.mxu0 0
    %1329 = vmatpush1.bf16.xpose.msra.mxu0 0
    %1330 = vmatprep.subr.bf16.mxu0 0
    %1331 = vmatpush1.bf16.xpose.msra.mxu0 0
    %1332 = vmatprep.subr.bf16.mxu0 0
    %1333 = vmatpush1.bf16.xpose.msra.mxu0 0
    %1334 = vmatprep.subr.bf16.mxu0 0
    %1335 = vmatpush1.bf16.xpose.msra.mxu0 0
    %1336 = vmatprep.subr.bf16.mxu0 0
    %1337 = vmatpush1.bf16.xpose.msra.mxu0 0
    %1338 = vmatprep.subr.bf16.mxu0 0
    %1339 = vmatpush1.bf16.xpose.msra.mxu0 0
    %1340 = vmatprep.subr.bf16.mxu0 0
    %1341 = vmatpush1.bf16.xpose.msra.mxu0 0
    %1342 = vmatprep.subr.bf16.mxu0 0
    %1343 = vmatpush1.bf16.xpose.msra.mxu0 0
    %1344 = vmatprep.subr.bf16.mxu0 0
    %1345 = vmatpush1.bf16.xpose.msra.mxu0 0
    %1346 = vmatprep.subr.bf16.mxu0 0
    %1347 = vmatpush1.bf16.xpose.msra.mxu0 0
    %1348 = vmatprep.subr.bf16.mxu0 0
    %1349 = vmatpush1.bf16.xpose.msra.mxu0 0
    %1350 = vmatprep.subr.bf16.mxu0 0
    %1351 = vmatpush1.bf16.xpose.msra.mxu0 0
    %1352 = vmatprep.subr.bf16.mxu0 0
    %1353 = vmatpush1.bf16.xpose.msra.mxu0 0
    %1354 = vmatprep.mubr.bf16.mxu0 0
    %1355 = vmatmul.mubr.bf16.gmra.mrb[0].mxu0 %v1311
    %v1356 = vpop.f32.mrb[0].mxu0
    %v1357 = vadd.f32 %v680, %v1356
    %v1358 = vpop.f32.mrb[0].mxu0
    %v1359 = vpop.f32.mrb[0].mxu0
    %v1360 = vadd.f32 %v681, %v1359
    %v1361 = vpop.f32.mrb[0].mxu0
    %1362 = vmatprep.mubr.bf16.mxu0 0
    %1363 = vmatmul.mubr.bf16.gmra.mrb[0].mxu0 %v1314
    %v1364 = vpop.f32.mrb[0].mxu0
    %v1365 = vadd.f32 %v682, %v1364
    %v1366 = vpop.f32.mrb[0].mxu0
    %v1367 = vpop.f32.mrb[0].mxu0
    %v1368 = vpop.f32.mrb[0].mxu0
    %1369 = vdwg.mxu0
    %v1370 = vsel %vm1203, %v1357, -inf
    %1371 = vmax.xlane.f32.xlu0 %v1370
    %v1372 = vpop.xlane.xlu0 %1371
    %v1373 = vsel %vm1203, %v1360, -inf
    %1374 = vmax.xlane.f32.xlu0 %v1373
    %v1375 = vpop.xlane.xlu0 %1374
    %v1376 = vsel %vm1210, %v1365, -inf
    %1377 = vmax.xlane.f32.xlu0 %v1376
    %v1378 = vpop.xlane.xlu0 %1377
    %v1379 = vsub.f32 %v1357, %v1372
    %v1380 = vsub.f32 %v1360, %v1375
    %v1381 = vsub.f32 %v1365, %v1378
    %v1382 = vmul.f32 %v1379, 1.442695
    %v1383 = vpow.pop %v1382
    %v1384 = vmul.f32 %v1380, 1.442695
    %v1385 = vpow.pop %v1384
    %v1386 = vmul.f32 %v1381, 1.442695
    %v1387 = vpow.pop %v1386
    %v1388 = vsel %vm1203, %v1383, 0.0
    %1389 = vadd.xlane.f32.xlu0 %v1388
    %v1390 = vpop.xlane.xlu0 %1389
    %v1391 = vsel %vm1203, %v1385, 0.0
    %1392 = vadd.xlane.f32.xlu0 %v1391
    %v1393 = vpop.xlane.xlu0 %1392
    %v1394 = vsel %vm1210, %v1387, 0.0
    %1395 = vadd.xlane.f32.xlu0 %v1394
    %v1396 = vpop.xlane.xlu0 %1395
    %v1397 = vrcp.pop %v1390
    %v1398 = vrcp.pop %v1393
    %v1399 = vrcp.pop %v1396
    %v1400 = vmul.f32 %v1383, %v1397
    %v1401 = vmul.f32 %v1385, %v1398
    %v1402 = vmul.f32 %v1387, %v1399
    %v1403 = vpack.c.bf16 %v1401, %v1400
    %v1404 = vpack.c.bf16 %v1402, %v1402
    %1407 = vrot.lane.b32.xlu0 %v1138, 96
    %v1408 = vpop.permute.xlu0 %1407
    %1409 = vrot.lane.b32.xlu0 %v1141, 96
    %v1410 = vpop.permute.xlu0 %1409
    %v1413 = vsel %vm1203, %v1403, 0
    %v1416 = vsel %vm1203, %v1404, 0
    %v1419 = vsel %vm1246, %v1410, 0
    %1421 = vmatprep.subr.bf16.mxu0 0
    %1422 = vmatpush1.bf16.msra.mxu0 %v1408
    %1423 = vmatprep.subr.bf16.mxu0 0
    %1424 = vmatpush1.bf16.msra.mxu0 %v1419
    %1425 = vmatprep.subr.bf16.mxu0 0
    %1426 = vmatpush1.bf16.msra.mxu0 0
    %1427 = vmatprep.subr.bf16.mxu0 0
    %1428 = vmatpush1.bf16.msra.mxu0 0
    %1429 = vmatprep.subr.bf16.mxu0 0
    %1430 = vmatpush1.bf16.msra.mxu0 0
    %1431 = vmatprep.subr.bf16.mxu0 0
    %1432 = vmatpush1.bf16.msra.mxu0 0
    %1433 = vmatprep.subr.bf16.mxu0 0
    %1434 = vmatpush1.bf16.msra.mxu0 0
    %1435 = vmatprep.subr.bf16.mxu0 0
    %1436 = vmatpush1.bf16.msra.mxu0 0
    %1437 = vmatprep.subr.bf16.mxu0 0
    %1438 = vmatpush1.bf16.msra.mxu0 0
    %1439 = vmatprep.subr.bf16.mxu0 0
    %1440 = vmatpush1.bf16.msra.mxu0 0
    %1441 = vmatprep.subr.bf16.mxu0 0
    %1442 = vmatpush1.bf16.msra.mxu0 0
    %1443 = vmatprep.subr.bf16.mxu0 0
    %1444 = vmatpush1.bf16.msra.mxu0 0
    %1445 = vmatprep.subr.bf16.mxu0 0
    %1446 = vmatpush1.bf16.msra.mxu0 0
    %1447 = vmatprep.subr.bf16.mxu0 0
    %1448 = vmatpush1.bf16.msra.mxu0 0
    %1449 = vmatprep.subr.bf16.mxu0 0
    %1450 = vmatpush1.bf16.msra.mxu0 0
    %1451 = vmatprep.subr.bf16.mxu0 0
    %1452 = vmatpush1.bf16.msra.mxu0 0
    %1453 = vmatprep.mubr.bf16.mxu0 0
    %1454 = vmatmul.mubr.bf16.gmra.mrb[0].mxu0 %v1413
    %v1455 = vpop.f32.mrb[0].mxu0
    %v1456 = vadd.f32 0.0, %v1455
    %v1457 = vpop.f32.mrb[0].mxu0
    %v1458 = vpop.f32.mrb[0].mxu0
    %v1459 = vadd.f32 0.0, %v1458
    %v1460 = vpop.f32.mrb[0].mxu0
    %1461 = vmatprep.mubr.bf16.mxu0 0
    %1462 = vmatmul.mubr.bf16.gmra.mrb[0].mxu0 %v1416
    %v1463 = vpop.f32.mrb[0].mxu0
    %v1464 = vadd.f32 0.0, %v1463
    %v1465 = vpop.f32.mrb[0].mxu0
    %v1466 = vpop.f32.mrb[0].mxu0
    %v1467 = vpop.f32.mrb[0].mxu0
    %1468 = vdwg.mxu0
    %1469 = vrot.lane.b32.xlu0 %v1136, 64
    %v1470 = vpop.permute.xlu0 %1469
    %1471 = vrot.lane.b32.xlu0 %v1139, 64
    %v1472 = vpop.permute.xlu0 %1471
    %1473 = vrot.lane.b32.xlu0 %v1137, 64
    %v1474 = vpop.permute.xlu0 %1473
    %1475 = vrot.lane.b32.xlu0 %v1140, 64
    %v1476 = vpop.permute.xlu0 %1475
    %v1478 = vsel %vm1142, %v1470, 0
    %v1481 = vsel %vm1142, %v1472, 0
    %v1484 = vsel %vm1142, %v1474, 0
    %v1487 = vsel %vm1142, %v1476, 0
    %1489 = vmatprep.subr.bf16.mxu0 0
    %1490 = vmatpush1.bf16.xpose.msra.mxu0 %v1484
    %1491 = vmatprep.subr.bf16.mxu0 0
    %1492 = vmatpush1.bf16.xpose.msra.mxu0 %v1487
    %1493 = vmatprep.subr.bf16.mxu0 0
    %1494 = vmatpush1.bf16.xpose.msra.mxu0 0
    %1495 = vmatprep.subr.bf16.mxu0 0
    %1496 = vmatpush1.bf16.xpose.msra.mxu0 0
    %1497 = vmatprep.subr.bf16.mxu0 0
    %1498 = vmatpush1.bf16.xpose.msra.mxu0 0
    %1499 = vmatprep.subr.bf16.mxu0 0
    %1500 = vmatpush1.bf16.xpose.msra.mxu0 0
    %1501 = vmatprep.subr.bf16.mxu0 0
    %1502 = vmatpush1.bf16.xpose.msra.mxu0 0
    %1503 = vmatprep.subr.bf16.mxu0 0
    %1504 = vmatpush1.bf16.xpose.msra.mxu0 0
    %1505 = vmatprep.subr.bf16.mxu0 0
    %1506 = vmatpush1.bf16.xpose.msra.mxu0 0
    %1507 = vmatprep.subr.bf16.mxu0 0
    %1508 = vmatpush1.bf16.xpose.msra.mxu0 0
    %1509 = vmatprep.subr.bf16.mxu0 0
    %1510 = vmatpush1.bf16.xpose.msra.mxu0 0
    %1511 = vmatprep.subr.bf16.mxu0 0
    %1512 = vmatpush1.bf16.xpose.msra.mxu0 0
    %1513 = vmatprep.subr.bf16.mxu0 0
    %1514 = vmatpush1.bf16.xpose.msra.mxu0 0
    %1515 = vmatprep.subr.bf16.mxu0 0
    %1516 = vmatpush1.bf16.xpose.msra.mxu0 0
    %1517 = vmatprep.subr.bf16.mxu0 0
    %1518 = vmatpush1.bf16.xpose.msra.mxu0 0
    %1519 = vmatprep.subr.bf16.mxu0 0
    %1520 = vmatpush1.bf16.xpose.msra.mxu0 0
    %1521 = vmatprep.mubr.bf16.mxu0 0
    %1522 = vmatmul.mubr.bf16.gmra.mrb[0].mxu0 %v1478
    %v1523 = vpop.f32.mrb[0].mxu0
    %v1524 = vadd.f32 %v680, %v1523
    %v1525 = vpop.f32.mrb[0].mxu0
    %v1526 = vpop.f32.mrb[0].mxu0
    %v1527 = vadd.f32 %v681, %v1526
    %v1528 = vpop.f32.mrb[0].mxu0
    %1529 = vmatprep.mubr.bf16.mxu0 0
    %1530 = vmatmul.mubr.bf16.gmra.mrb[0].mxu0 %v1481
    %v1531 = vpop.f32.mrb[0].mxu0
    %v1532 = vadd.f32 %v682, %v1531
    %v1533 = vpop.f32.mrb[0].mxu0
    %v1534 = vpop.f32.mrb[0].mxu0
    %v1535 = vpop.f32.mrb[0].mxu0
    %1536 = vdwg.mxu0
    %v1537 = vsel %vm1203, %v1524, -inf
    %1538 = vmax.xlane.f32.xlu0 %v1537
    %v1539 = vpop.xlane.xlu0 %1538
    %v1540 = vsel %vm1203, %v1527, -inf
    %1541 = vmax.xlane.f32.xlu0 %v1540
    %v1542 = vpop.xlane.xlu0 %1541
    %v1543 = vsel %vm1210, %v1532, -inf
    %1544 = vmax.xlane.f32.xlu0 %v1543
    %v1545 = vpop.xlane.xlu0 %1544
    %v1546 = vsub.f32 %v1524, %v1539
    %v1547 = vsub.f32 %v1527, %v1542
    %v1548 = vsub.f32 %v1532, %v1545
    %v1549 = vmul.f32 %v1546, 1.442695
    %v1550 = vpow.pop %v1549
    %v1551 = vmul.f32 %v1547, 1.442695
    %v1552 = vpow.pop %v1551
    %v1553 = vmul.f32 %v1548, 1.442695
    %v1554 = vpow.pop %v1553
    %v1555 = vsel %vm1203, %v1550, 0.0
    %1556 = vadd.xlane.f32.xlu0 %v1555
    %v1557 = vpop.xlane.xlu0 %1556
    %v1558 = vsel %vm1203, %v1552, 0.0
    %1559 = vadd.xlane.f32.xlu0 %v1558
    %v1560 = vpop.xlane.xlu0 %1559
    %v1561 = vsel %vm1210, %v1554, 0.0
    %1562 = vadd.xlane.f32.xlu0 %v1561
    %v1563 = vpop.xlane.xlu0 %1562
    %v1564 = vrcp.pop %v1557
    %v1565 = vrcp.pop %v1560
    %v1566 = vrcp.pop %v1563
    %v1567 = vmul.f32 %v1550, %v1564
    %v1568 = vmul.f32 %v1552, %v1565
    %v1569 = vmul.f32 %v1554, %v1566
    %v1570 = vpack.c.bf16 %v1568, %v1567
    %v1571 = vpack.c.bf16 %v1569, %v1569
    %1572 = vrot.lane.b32.xlu0 %v1138, 64
    %v1573 = vpop.permute.xlu0 %1572
    %1574 = vrot.lane.b32.xlu0 %v1141, 64
    %v1575 = vpop.permute.xlu0 %1574
    %v1578 = vsel %vm1203, %v1570, 0
    %v1581 = vsel %vm1203, %v1571, 0
    %v1584 = vsel %vm1246, %v1575, 0
    %1586 = vmatprep.subr.bf16.mxu0 0
    %1587 = vmatpush1.bf16.msra.mxu0 %v1573
    %1588 = vmatprep.subr.bf16.mxu0 0
    %1589 = vmatpush1.bf16.msra.mxu0 %v1584
    %1590 = vmatprep.subr.bf16.mxu0 0
    %1591 = vmatpush1.bf16.msra.mxu0 0
    %1592 = vmatprep.subr.bf16.mxu0 0
    %1593 = vmatpush1.bf16.msra.mxu0 0
    %1594 = vmatprep.subr.bf16.mxu0 0
    %1595 = vmatpush1.bf16.msra.mxu0 0
    %1596 = vmatprep.subr.bf16.mxu0 0
    %1597 = vmatpush1.bf16.msra.mxu0 0
    %1598 = vmatprep.subr.bf16.mxu0 0
    %1599 = vmatpush1.bf16.msra.mxu0 0
    %1600 = vmatprep.subr.bf16.mxu0 0
    %1601 = vmatpush1.bf16.msra.mxu0 0
    %1602 = vmatprep.subr.bf16.mxu0 0
    %1603 = vmatpush1.bf16.msra.mxu0 0
    %1604 = vmatprep.subr.bf16.mxu0 0
    %1605 = vmatpush1.bf16.msra.mxu0 0
    %1606 = vmatprep.subr.bf16.mxu0 0
    %1607 = vmatpush1.bf16.msra.mxu0 0
    %1608 = vmatprep.subr.bf16.mxu0 0
    %1609 = vmatpush1.bf16.msra.mxu0 0
    %1610 = vmatprep.subr.bf16.mxu0 0
    %1611 = vmatpush1.bf16.msra.mxu0 0
    %1612 = vmatprep.subr.bf16.mxu0 0
    %1613 = vmatpush1.bf16.msra.mxu0 0
    %1614 = vmatprep.subr.bf16.mxu0 0
    %1615 = vmatpush1.bf16.msra.mxu0 0
    %1616 = vmatprep.subr.bf16.mxu0 0
    %1617 = vmatpush1.bf16.msra.mxu0 0
    %1618 = vmatprep.mubr.bf16.mxu0 0
    %1619 = vmatmul.mubr.bf16.gmra.mrb[0].mxu0 %v1578
    %v1620 = vpop.f32.mrb[0].mxu0
    %v1621 = vadd.f32 0.0, %v1620
    %v1622 = vpop.f32.mrb[0].mxu0
    %v1623 = vpop.f32.mrb[0].mxu0
    %v1624 = vadd.f32 0.0, %v1623
    %v1625 = vpop.f32.mrb[0].mxu0
    %1626 = vmatprep.mubr.bf16.mxu0 0
    %1627 = vmatmul.mubr.bf16.gmra.mrb[0].mxu0 %v1581
    %v1628 = vpop.f32.mrb[0].mxu0
    %v1629 = vadd.f32 0.0, %v1628
    %v1630 = vpop.f32.mrb[0].mxu0
    %v1631 = vpop.f32.mrb[0].mxu0
    %v1632 = vpop.f32.mrb[0].mxu0
    %1633 = vdwg.mxu0
    %1634 = vrot.lane.b32.xlu0 %v1136, 32
    %v1635 = vpop.permute.xlu0 %1634
    %1636 = vrot.lane.b32.xlu0 %v1139, 32
    %v1637 = vpop.permute.xlu0 %1636
    %1638 = vrot.lane.b32.xlu0 %v1137, 32
    %v1639 = vpop.permute.xlu0 %1638
    %1640 = vrot.lane.b32.xlu0 %v1140, 32
    %v1641 = vpop.permute.xlu0 %1640
    %v1643 = vsel %vm1142, %v1635, 0
    %v1646 = vsel %vm1142, %v1637, 0
    %v1649 = vsel %vm1142, %v1639, 0
    %v1652 = vsel %vm1142, %v1641, 0
    %1654 = vmatprep.subr.bf16.mxu0 0
    %1655 = vmatpush1.bf16.xpose.msra.mxu0 %v1649
    %1656 = vmatprep.subr.bf16.mxu0 0
    %1657 = vmatpush1.bf16.xpose.msra.mxu0 %v1652
    %1658 = vmatprep.subr.bf16.mxu0 0
    %1659 = vmatpush1.bf16.xpose.msra.mxu0 0
    %1660 = vmatprep.subr.bf16.mxu0 0
    %1661 = vmatpush1.bf16.xpose.msra.mxu0 0
    %1662 = vmatprep.subr.bf16.mxu0 0
    %1663 = vmatpush1.bf16.xpose.msra.mxu0 0
    %1664 = vmatprep.subr.bf16.mxu0 0
    %1665 = vmatpush1.bf16.xpose.msra.mxu0 0
    %1666 = vmatprep.subr.bf16.mxu0 0
    %1667 = vmatpush1.bf16.xpose.msra.mxu0 0
    %1668 = vmatprep.subr.bf16.mxu0 0
    %1669 = vmatpush1.bf16.xpose.msra.mxu0 0
    %1670 = vmatprep.subr.bf16.mxu0 0
    %1671 = vmatpush1.bf16.xpose.msra.mxu0 0
    %1672 = vmatprep.subr.bf16.mxu0 0
    %1673 = vmatpush1.bf16.xpose.msra.mxu0 0
    %1674 = vmatprep.subr.bf16.mxu0 0
    %1675 = vmatpush1.bf16.xpose.msra.mxu0 0
    %1676 = vmatprep.subr.bf16.mxu0 0
    %1677 = vmatpush1.bf16.xpose.msra.mxu0 0
    %1678 = vmatprep.subr.bf16.mxu0 0
    %1679 = vmatpush1.bf16.xpose.msra.mxu0 0
    %1680 = vmatprep.subr.bf16.mxu0 0
    %1681 = vmatpush1.bf16.xpose.msra.mxu0 0
    %1682 = vmatprep.subr.bf16.mxu0 0
    %1683 = vmatpush1.bf16.xpose.msra.mxu0 0
    %1684 = vmatprep.subr.bf16.mxu0 0
    %1685 = vmatpush1.bf16.xpose.msra.mxu0 0
    %1686 = vmatprep.mubr.bf16.mxu0 0
    %1687 = vmatmul.mubr.bf16.gmra.mrb[0].mxu0 %v1643
    %v1688 = vpop.f32.mrb[0].mxu0
    %v1689 = vadd.f32 %v680, %v1688
    %v1690 = vpop.f32.mrb[0].mxu0
    %v1691 = vpop.f32.mrb[0].mxu0
    %v1692 = vadd.f32 %v681, %v1691
    %v1693 = vpop.f32.mrb[0].mxu0
    %1694 = vmatprep.mubr.bf16.mxu0 0
    %1695 = vmatmul.mubr.bf16.gmra.mrb[0].mxu0 %v1646
    %v1696 = vpop.f32.mrb[0].mxu0
    %v1697 = vadd.f32 %v682, %v1696
    %v1698 = vpop.f32.mrb[0].mxu0
    %v1699 = vpop.f32.mrb[0].mxu0
    %v1700 = vpop.f32.mrb[0].mxu0
    %1701 = vdwg.mxu0
    %v1702 = vsel %vm1203, %v1689, -inf
    %1703 = vmax.xlane.f32.xlu0 %v1702
    %v1704 = vpop.xlane.xlu0 %1703
    %v1705 = vsel %vm1203, %v1692, -inf
    %1706 = vmax.xlane.f32.xlu0 %v1705
    %v1707 = vpop.xlane.xlu0 %1706
    %v1708 = vsel %vm1210, %v1697, -inf
    %1709 = vmax.xlane.f32.xlu0 %v1708
    %v1710 = vpop.xlane.xlu0 %1709
    %v1711 = vsub.f32 %v1689, %v1704
    %v1712 = vsub.f32 %v1692, %v1707
    %v1713 = vsub.f32 %v1697, %v1710
    %v1714 = vmul.f32 %v1711, 1.442695
    %v1715 = vpow.pop %v1714
    %v1716 = vmul.f32 %v1712, 1.442695
    %v1717 = vpow.pop %v1716
    %v1718 = vmul.f32 %v1713, 1.442695
    %v1719 = vpow.pop %v1718
    %v1720 = vsel %vm1203, %v1715, 0.0
    %1721 = vadd.xlane.f32.xlu0 %v1720
    %v1722 = vpop.xlane.xlu0 %1721
    %v1723 = vsel %vm1203, %v1717, 0.0
    %1724 = vadd.xlane.f32.xlu0 %v1723
    %v1725 = vpop.xlane.xlu0 %1724
    %v1726 = vsel %vm1210, %v1719, 0.0
    %1727 = vadd.xlane.f32.xlu0 %v1726
    %v1728 = vpop.xlane.xlu0 %1727
    %v1729 = vrcp.pop %v1722
    %v1730 = vrcp.pop %v1725
    %v1731 = vrcp.pop %v1728
    %v1732 = vmul.f32 %v1715, %v1729
    %v1733 = vmul.f32 %v1717, %v1730
    %v1734 = vmul.f32 %v1719, %v1731
    %v1735 = vpack.c.bf16 %v1733, %v1732
    %v1736 = vpack.c.bf16 %v1734, %v1734
    %1737 = vrot.lane.b32.xlu0 %v1138, 32
    %v1738 = vpop.permute.xlu0 %1737
    %1739 = vrot.lane.b32.xlu0 %v1141, 32
    %v1740 = vpop.permute.xlu0 %1739
    %v1743 = vsel %vm1203, %v1735, 0
    %v1746 = vsel %vm1203, %v1736, 0
    %v1749 = vsel %vm1246, %v1740, 0
    %1751 = vmatprep.subr.bf16.mxu0 0
    %1752 = vmatpush1.bf16.msra.mxu0 %v1738
    %1753 = vmatprep.subr.bf16.mxu0 0
    %1754 = vmatpush1.bf16.msra.mxu0 %v1749
    %1755 = vmatprep.subr.bf16.mxu0 0
    %1756 = vmatpush1.bf16.msra.mxu0 0
    %1757 = vmatprep.subr.bf16.mxu0 0
    %1758 = vmatpush1.bf16.msra.mxu0 0
    %1759 = vmatprep.subr.bf16.mxu0 0
    %1760 = vmatpush1.bf16.msra.mxu0 0
    %1761 = vmatprep.subr.bf16.mxu0 0
    %1762 = vmatpush1.bf16.msra.mxu0 0
    %1763 = vmatprep.subr.bf16.mxu0 0
    %1764 = vmatpush1.bf16.msra.mxu0 0
    %1765 = vmatprep.subr.bf16.mxu0 0
    %1766 = vmatpush1.bf16.msra.mxu0 0
    %1767 = vmatprep.subr.bf16.mxu0 0
    %1768 = vmatpush1.bf16.msra.mxu0 0
    %1769 = vmatprep.subr.bf16.mxu0 0
    %1770 = vmatpush1.bf16.msra.mxu0 0
    %1771 = vmatprep.subr.bf16.mxu0 0
    %1772 = vmatpush1.bf16.msra.mxu0 0
    %1773 = vmatprep.subr.bf16.mxu0 0
    %1774 = vmatpush1.bf16.msra.mxu0 0
    %1775 = vmatprep.subr.bf16.mxu0 0
    %1776 = vmatpush1.bf16.msra.mxu0 0
    %1777 = vmatprep.subr.bf16.mxu0 0
    %1778 = vmatpush1.bf16.msra.mxu0 0
    %1779 = vmatprep.subr.bf16.mxu0 0
    %1780 = vmatpush1.bf16.msra.mxu0 0
    %1781 = vmatprep.subr.bf16.mxu0 0
    %1782 = vmatpush1.bf16.msra.mxu0 0
    %1783 = vmatprep.mubr.bf16.mxu0 0
    %1784 = vmatmul.mubr.bf16.gmra.mrb[0].mxu0 %v1743
    %v1785 = vpop.f32.mrb[0].mxu0
    %v1786 = vadd.f32 0.0, %v1785
    %v1787 = vpop.f32.mrb[0].mxu0
    %v1788 = vpop.f32.mrb[0].mxu0
    %v1789 = vadd.f32 0.0, %v1788
    %v1790 = vpop.f32.mrb[0].mxu0
    %1791 = vmatprep.mubr.bf16.mxu0 0
    %1792 = vmatmul.mubr.bf16.gmra.mrb[0].mxu0 %v1746
    %v1793 = vpop.f32.mrb[0].mxu0
    %v1794 = vadd.f32 0.0, %v1793
    %v1795 = vpop.f32.mrb[0].mxu0
    %v1796 = vpop.f32.mrb[0].mxu0
    %v1797 = vpop.f32.mrb[0].mxu0
    %1798 = vdwg.mxu0
    %1802 = vrot.lane.b32.xlu0 %v1456, 32
    %v1803 = vpop.permute.xlu0 %1802
    %1804 = vrot.lane.b32.xlu0 %v1459, 32
    %v1805 = vpop.permute.xlu0 %1804
    %1806 = vrot.lane.b32.xlu0 %v1464, 32
    %v1807 = vpop.permute.xlu0 %1806
    %1814 = vrot.lane.b32.xlu0 %v1621, 64
    %v1815 = vpop.permute.xlu0 %1814
    %1816 = vrot.lane.b32.xlu0 %v1624, 64
    %v1817 = vpop.permute.xlu0 %1816
    %1818 = vrot.lane.b32.xlu0 %v1629, 64
    %v1819 = vpop.permute.xlu0 %1818
    %1826 = vrot.lane.b32.xlu0 %v1786, 96
    %v1827 = vpop.permute.xlu0 %1826
    %1828 = vrot.lane.b32.xlu0 %v1789, 96
    %v1829 = vpop.permute.xlu0 %1828
    %1830 = vrot.lane.b32.xlu0 %v1794, 96
    %v1831 = vpop.permute.xlu0 %1830
    %v1835 = vsel %vm1142, %v1285, %v1803
    %v1836 = vsel %vm1142, %v1288, %v1805
    %v1837 = vsel %vm1142, %v1293, %v1807
    %vm1838 = vcmask 523264
    %v1839 = vsel %vm1838, %v1835, %v1815
    %v1840 = vsel %vm1838, %v1836, %v1817
    %v1841 = vsel %vm1838, %v1837, %v1819
    %vm1842 = vcmask 785408
    %v1843 = vsel %vm1842, %v1839, %v1827
    %v1844 = vsel %vm1842, %v1840, %v1829
    %v1845 = vsel %vm1842, %v1841, %v1831
    %v1846 = vpack.c.bf16 %v1844, %v1843
    %v1847 = vpack.c.bf16 %v1845, %v1845
    %v1849 = vlaneseq
    %v1850 = vshrl.u32 %v1849, 7
    %v1851 = vsub.s32 0, %v1850
    %v1852 = vrot.slane %v734, %v1851
    %v1870 = vunpack.c.l.b16 %v718
    %v1871 = vunpack.c.l.b16 %v719
    %v1872 = vunpack.c.l.b16 %v720
    %v1873 = vunpack.c.l.b16 %v721
    %v1874 = vunpack.c.l.b16 %v722
    %v1875 = vunpack.c.l.b16 %v723
    %v1876 = vunpack.c.l.b16 %v724
    %v1877 = vunpack.c.l.b16 %v725
    %v1878 = vunpack.c.l.b16 %v726
    %v1879 = vunpack.c.l.b16 %v727
    %v1880 = vunpack.c.l.b16 %v728
    %v1881 = vunpack.c.l.b16 %v729
    %v1882 = vunpack.c.l.b16 %v730
    %v1883 = vunpack.c.l.b16 %v731
    %v1884 = vunpack.c.l.b16 %v732
    %v1885 = vunpack.c.l.b16 %v733
    %v1886 = vpack.c.b16 %v1871, %v1870
    %v1887 = vpack.c.b16 %v1873, %v1872
    %v1888 = vpack.c.b16 %v1875, %v1874
    %v1889 = vpack.c.b16 %v1877, %v1876
    %v1890 = vpack.c.b16 %v1879, %v1878
    %v1891 = vpack.c.b16 %v1881, %v1880
    %v1892 = vpack.c.b16 %v1883, %v1882
    %v1893 = vpack.c.b16 %v1885, %v1884
    %1902 = vmatprep.subr.bf16.mxu0 0
    %1903 = vmatpush1.bf16.msra.mxu0 %v1886
    %1904 = vmatprep.subr.bf16.mxu0 0
    %1905 = vmatpush1.bf16.msra.mxu0 %v1887
    %1906 = vmatprep.subr.bf16.mxu0 0
    %1907 = vmatpush1.bf16.msra.mxu0 %v1888
    %1908 = vmatprep.subr.bf16.mxu0 0
    %1909 = vmatpush1.bf16.msra.mxu0 %v1889
    %1910 = vmatprep.subr.bf16.mxu0 0
    %1911 = vmatpush1.bf16.msra.mxu0 %v1890
    %1912 = vmatprep.subr.bf16.mxu0 0
    %1913 = vmatpush1.bf16.msra.mxu0 %v1891
    %1914 = vmatprep.subr.bf16.mxu0 0
    %1915 = vmatpush1.bf16.msra.mxu0 %v1892
    %1916 = vmatprep.subr.bf16.mxu0 0
    %1917 = vmatpush1.bf16.msra.mxu0 %v1893
    %1918 = vmatprep.subr.bf16.mxu0 0
    %1919 = vmatpush1.bf16.msra.mxu0 0
    %1920 = vmatprep.subr.bf16.mxu0 0
    %1921 = vmatpush1.bf16.msra.mxu0 0
    %1922 = vmatprep.subr.bf16.mxu0 0
    %1923 = vmatpush1.bf16.msra.mxu0 0
    %1924 = vmatprep.subr.bf16.mxu0 0
    %1925 = vmatpush1.bf16.msra.mxu0 0
    %1926 = vmatprep.subr.bf16.mxu0 0
    %1927 = vmatpush1.bf16.msra.mxu0 0
    %1928 = vmatprep.subr.bf16.mxu0 0
    %1929 = vmatpush1.bf16.msra.mxu0 0
    %1930 = vmatprep.subr.bf16.mxu0 0
    %1931 = vmatpush1.bf16.msra.mxu0 0
    %1932 = vmatprep.subr.bf16.mxu0 0
    %1933 = vmatpush1.bf16.msra.mxu0 0
    %1934 = vmatprep.mubr.bf16.mxu0 0
    %1935 = vmatmul.mubr.bf16.gmra.mrb[0].mxu0 %v1846
    %v1936 = vpop.f32.mrb[0].mxu0
    %v1937 = vadd.f32 %v1852, %v1936
    %v1938 = vpop.f32.mrb[0].mxu0
    %v1939 = vpop.f32.mrb[0].mxu0
    %v1940 = vadd.f32 %v1852, %v1939
    %v1941 = vpop.f32.mrb[0].mxu0
    %1942 = vmatprep.mubr.bf16.mxu0 0
    %1943 = vmatmul.mubr.bf16.gmra.mrb[0].mxu0 %v1847
    %v1944 = vpop.f32.mrb[0].mxu0
    %v1945 = vadd.f32 %v1852, %v1944
    %v1946 = vpop.f32.mrb[0].mxu0
    %v1947 = vpop.f32.mrb[0].mxu0
    %v1948 = vpop.f32.mrb[0].mxu0
    %1949 = vdwg.mxu0
    %v1951 = vlaneseq
    %v1952 = vshrl.u32 %v1951, 7
    %v1953 = vsub.s32 0, %v1952
    %v1954 = vrot.slane %v735, %v1953
    %v1956 = vmul.f32 %v1937, %v1954
    %v1957 = vmul.f32 %v1940, %v1954
    %v1958 = vmul.f32 %v1945, %v1954
    %v1959 = vadd.f32 %v671, %v1956
    %v1960 = vadd.f32 %v679, %v1957
    %v1961 = vadd.f32 %v676, %v1958
    %1962 = vadd.xlane.f32.xlu0 %v1959
    %v1963 = vpop.xlane.xlu0 %1962
    %1964 = vadd.xlane.f32.xlu0 %v1960
    %v1965 = vpop.xlane.xlu0 %1964
    %v1966 = vsel %vm678, %v1961, 0.0
    %1967 = vadd.xlane.f32.xlu0 %v1966
    %v1968 = vpop.xlane.xlu0 %1967
    %v1969 = vmul.f32 %v1963, %v844
    %v1970 = vmul.f32 %v1965, %v844
    %v1971 = vmul.f32 %v1968, %v844
    %v1972 = vsub.f32 %v1959, %v1969
    %v1973 = vsub.f32 %v1960, %v1970
    %v1974 = vsub.f32 %v1961, %v1971
    %v1975 = vmul.f32 %v1972, %v1972
    %v1976 = vmul.f32 %v1973, %v1973
    %v1977 = vmul.f32 %v1974, %v1974
    %1978 = vadd.xlane.f32.xlu0 %v1975
    %v1979 = vpop.xlane.xlu0 %1978
    %1980 = vadd.xlane.f32.xlu0 %v1976
    %v1981 = vpop.xlane.xlu0 %1980
    %v1982 = vsel %vm678, %v1977, 0.0
    %1983 = vadd.xlane.f32.xlu0 %v1982
    %v1984 = vpop.xlane.xlu0 %1983
    %v1985 = vmul.f32 %v1979, %v844
    %v1986 = vmul.f32 %v1981, %v844
    %v1987 = vmul.f32 %v1984, %v844
    %v1988 = vadd.f32 %v1985, 1e-06
    %v1989 = vadd.f32 %v1986, 1e-06
    %v1990 = vadd.f32 %v1987, 1e-06
    %v1991 = vrsqrt.pop %v1988
    %v1992 = vrsqrt.pop %v1989
    %v1993 = vrsqrt.pop %v1990
    %v1994 = vmul.f32 %v1972, %v1991
    %v1995 = vmul.f32 %v1973, %v1992
    %v1996 = vmul.f32 %v1974, %v1993
    %v1998 = vlaneseq
    %v1999 = vshrl.u32 %v1998, 7
    %v2000 = vsub.s32 0, %v1999
    %v2001 = vrot.slane %v736, %v2000
    %v2003 = vmul.f32 %v1994, %v2001
    %v2004 = vmul.f32 %v1995, %v2001
    %v2005 = vmul.f32 %v1996, %v2001
    %v2007 = vlaneseq
    %v2008 = vshrl.u32 %v2007, 7
    %v2009 = vsub.s32 0, %v2008
    %v2010 = vrot.slane %v737, %v2009
    %v2012 = vadd.f32 %v2003, %v2010
    %v2013 = vadd.f32 %v2004, %v2010
    %v2014 = vadd.f32 %v2005, %v2010
    %v2015 = vpack.c.bf16 %v2013, %v2012
    %v2016 = vpack.c.bf16 %v2014, %v2014
    %v2018 = vlaneseq
    %v2019 = vshrl.u32 %v2018, 7
    %v2020 = vsub.s32 0, %v2019
    %v2021 = vrot.slane %v770, %v2020
    %v2022 = vlaneseq
    %v2023 = vshrl.u32 %v2022, 7
    %v2024 = vsub.s32 1, %v2023
    %v2025 = vrot.slane %v770, %v2024
    %v2026 = vlaneseq
    %v2027 = vshrl.u32 %v2026, 7
    %v2028 = vsub.s32 2, %v2027
    %v2029 = vrot.slane %v770, %v2028
    %v2030 = vlaneseq
    %v2031 = vshrl.u32 %v2030, 7
    %v2032 = vsub.s32 3, %v2031
    %v2033 = vrot.slane %v770, %v2032
    %v2070 = vunpack.c.l.b16 %v738
    %v2071 = vunpack.c.h.b16 %v738
    %v2072 = vunpack.c.l.b16 %v739
    %v2073 = vunpack.c.h.b16 %v739
    %v2074 = vunpack.c.l.b16 %v740
    %v2075 = vunpack.c.h.b16 %v740
    %v2076 = vunpack.c.l.b16 %v741
    %v2077 = vunpack.c.h.b16 %v741
    %v2078 = vunpack.c.l.b16 %v742
    %v2079 = vunpack.c.h.b16 %v742
    %v2080 = vunpack.c.l.b16 %v743
    %v2081 = vunpack.c.h.b16 %v743
    %v2082 = vunpack.c.l.b16 %v744
    %v2083 = vunpack.c.h.b16 %v744
    %v2084 = vunpack.c.l.b16 %v745
    %v2085 = vunpack.c.h.b16 %v745
    %v2086 = vunpack.c.l.b16 %v746
    %v2087 = vunpack.c.h.b16 %v746
    %v2088 = vunpack.c.l.b16 %v747
    %v2089 = vunpack.c.h.b16 %v747
    %v2090 = vunpack.c.l.b16 %v748
    %v2091 = vunpack.c.h.b16 %v748
    %v2092 = vunpack.c.l.b16 %v749
    %v2093 = vunpack.c.h.b16 %v749
    %v2094 = vunpack.c.l.b16 %v750
    %v2095 = vunpack.c.h.b16 %v750
    %v2096 = vunpack.c.l.b16 %v751
    %v2097 = vunpack.c.h.b16 %v751
    %v2098 = vunpack.c.l.b16 %v752
    %v2099 = vunpack.c.h.b16 %v752
    %v2100 = vunpack.c.l.b16 %v753
    %v2101 = vunpack.c.h.b16 %v753
    %v2102 = vunpack.c.l.b16 %v754
    %v2103 = vunpack.c.h.b16 %v754
    %v2104 = vunpack.c.l.b16 %v755
    %v2105 = vunpack.c.h.b16 %v755
    %v2106 = vunpack.c.l.b16 %v756
    %v2107 = vunpack.c.h.b16 %v756
    %v2108 = vunpack.c.l.b16 %v757
    %v2109 = vunpack.c.h.b16 %v757
    %v2110 = vunpack.c.l.b16 %v758
    %v2111 = vunpack.c.h.b16 %v758
    %v2112 = vunpack.c.l.b16 %v759
    %v2113 = vunpack.c.h.b16 %v759
    %v2114 = vunpack.c.l.b16 %v760
    %v2115 = vunpack.c.h.b16 %v760
    %v2116 = vunpack.c.l.b16 %v761
    %v2117 = vunpack.c.h.b16 %v761
    %v2118 = vunpack.c.l.b16 %v762
    %v2119 = vunpack.c.h.b16 %v762
    %v2120 = vunpack.c.l.b16 %v763
    %v2121 = vunpack.c.h.b16 %v763
    %v2122 = vunpack.c.l.b16 %v764
    %v2123 = vunpack.c.h.b16 %v764
    %v2124 = vunpack.c.l.b16 %v765
    %v2125 = vunpack.c.h.b16 %v765
    %v2126 = vunpack.c.l.b16 %v766
    %v2127 = vunpack.c.h.b16 %v766
    %v2128 = vunpack.c.l.b16 %v767
    %v2129 = vunpack.c.h.b16 %v767
    %v2130 = vunpack.c.l.b16 %v768
    %v2131 = vunpack.c.h.b16 %v768
    %v2132 = vunpack.c.l.b16 %v769
    %v2133 = vunpack.c.h.b16 %v769
    %v2134 = vpack.c.b16 %v2074, %v2070
    %v2135 = vpack.c.b16 %v2075, %v2071
    %v2136 = vpack.c.b16 %v2076, %v2072
    %v2137 = vpack.c.b16 %v2077, %v2073
    %v2138 = vpack.c.b16 %v2082, %v2078
    %v2139 = vpack.c.b16 %v2083, %v2079
    %v2140 = vpack.c.b16 %v2084, %v2080
    %v2141 = vpack.c.b16 %v2085, %v2081
    %v2142 = vpack.c.b16 %v2090, %v2086
    %v2143 = vpack.c.b16 %v2091, %v2087
    %v2144 = vpack.c.b16 %v2092, %v2088
    %v2145 = vpack.c.b16 %v2093, %v2089
    %v2146 = vpack.c.b16 %v2098, %v2094
    %v2147 = vpack.c.b16 %v2099, %v2095
    %v2148 = vpack.c.b16 %v2100, %v2096
    %v2149 = vpack.c.b16 %v2101, %v2097
    %v2150 = vpack.c.b16 %v2106, %v2102
    %v2151 = vpack.c.b16 %v2107, %v2103
    %v2152 = vpack.c.b16 %v2108, %v2104
    %v2153 = vpack.c.b16 %v2109, %v2105
    %v2154 = vpack.c.b16 %v2114, %v2110
    %v2155 = vpack.c.b16 %v2115, %v2111
    %v2156 = vpack.c.b16 %v2116, %v2112
    %v2157 = vpack.c.b16 %v2117, %v2113
    %v2158 = vpack.c.b16 %v2122, %v2118
    %v2159 = vpack.c.b16 %v2123, %v2119
    %v2160 = vpack.c.b16 %v2124, %v2120
    %v2161 = vpack.c.b16 %v2125, %v2121
    %v2162 = vpack.c.b16 %v2130, %v2126
    %v2163 = vpack.c.b16 %v2131, %v2127
    %v2164 = vpack.c.b16 %v2132, %v2128
    %v2165 = vpack.c.b16 %v2133, %v2129
    %2198 = vmatprep.subr.bf16.mxu0 %v2135
    %2199 = vmatpush1.bf16.msra.mxu0 %v2134
    %2200 = vmatprep.subr.bf16.mxu0 %v2139
    %2201 = vmatpush1.bf16.msra.mxu0 %v2138
    %2202 = vmatprep.subr.bf16.mxu0 %v2143
    %2203 = vmatpush1.bf16.msra.mxu0 %v2142
    %2204 = vmatprep.subr.bf16.mxu0 %v2147
    %2205 = vmatpush1.bf16.msra.mxu0 %v2146
    %2206 = vmatprep.subr.bf16.mxu0 %v2151
    %2207 = vmatpush1.bf16.msra.mxu0 %v2150
    %2208 = vmatprep.subr.bf16.mxu0 %v2155
    %2209 = vmatpush1.bf16.msra.mxu0 %v2154
    %2210 = vmatprep.subr.bf16.mxu0 %v2159
    %2211 = vmatpush1.bf16.msra.mxu0 %v2158
    %2212 = vmatprep.subr.bf16.mxu0 %v2163
    %2213 = vmatpush1.bf16.msra.mxu0 %v2162
    %2214 = vmatprep.subr.bf16.mxu0 0
    %2215 = vmatpush1.bf16.msra.mxu0 0
    %2216 = vmatprep.subr.bf16.mxu0 0
    %2217 = vmatpush1.bf16.msra.mxu0 0
    %2218 = vmatprep.subr.bf16.mxu0 0
    %2219 = vmatpush1.bf16.msra.mxu0 0
    %2220 = vmatprep.subr.bf16.mxu0 0
    %2221 = vmatpush1.bf16.msra.mxu0 0
    %2222 = vmatprep.subr.bf16.mxu0 0
    %2223 = vmatpush1.bf16.msra.mxu0 0
    %2224 = vmatprep.subr.bf16.mxu0 0
    %2225 = vmatpush1.bf16.msra.mxu0 0
    %2226 = vmatprep.subr.bf16.mxu0 0
    %2227 = vmatpush1.bf16.msra.mxu0 0
    %2228 = vmatprep.subr.bf16.mxu0 0
    %2229 = vmatpush1.bf16.msra.mxu0 0
    %2230 = vmatprep.mubr.bf16.mxu0 0
    %2231 = vmatmul.mubr.bf16.gmra.mrb[0].mxu0 %v2015
    %v2232 = vpop.f32.mrb[0].mxu0
    %v2233 = vadd.f32 %v2021, %v2232
    %v2234 = vpop.f32.mrb[0].mxu0
    %v2235 = vadd.f32 %v2025, %v2234
    %v2236 = vpop.f32.mrb[0].mxu0
    %v2237 = vadd.f32 %v2021, %v2236
    %v2238 = vpop.f32.mrb[0].mxu0
    %v2239 = vadd.f32 %v2025, %v2238
    %2240 = vmatprep.mubr.bf16.mxu0 0
    %2241 = vmatmul.mubr.bf16.gmra.mrb[0].mxu0 %v2016
    %v2242 = vpop.f32.mrb[0].mxu0
    %v2243 = vadd.f32 %v2021, %v2242
    %v2244 = vpop.f32.mrb[0].mxu0
    %v2245 = vadd.f32 %v2025, %v2244
    %v2246 = vpop.f32.mrb[0].mxu0
    %v2247 = vpop.f32.mrb[0].mxu0
    %2248 = vdwg.mxu0
    %2249 = vmatprep.subr.bf16.mxu0 %v2137
    %2250 = vmatpush1.bf16.msra.mxu0 %v2136
    %2251 = vmatprep.subr.bf16.mxu0 %v2141
    %2252 = vmatpush1.bf16.msra.mxu0 %v2140
    %2253 = vmatprep.subr.bf16.mxu0 %v2145
    %2254 = vmatpush1.bf16.msra.mxu0 %v2144
    %2255 = vmatprep.subr.bf16.mxu0 %v2149
    %2256 = vmatpush1.bf16.msra.mxu0 %v2148
    %2257 = vmatprep.subr.bf16.mxu0 %v2153
    %2258 = vmatpush1.bf16.msra.mxu0 %v2152
    %2259 = vmatprep.subr.bf16.mxu0 %v2157
    %2260 = vmatpush1.bf16.msra.mxu0 %v2156
    %2261 = vmatprep.subr.bf16.mxu0 %v2161
    %2262 = vmatpush1.bf16.msra.mxu0 %v2160
    %2263 = vmatprep.subr.bf16.mxu0 %v2165
    %2264 = vmatpush1.bf16.msra.mxu0 %v2164
    %2265 = vmatprep.subr.bf16.mxu0 0
    %2266 = vmatpush1.bf16.msra.mxu0 0
    %2267 = vmatprep.subr.bf16.mxu0 0
    %2268 = vmatpush1.bf16.msra.mxu0 0
    %2269 = vmatprep.subr.bf16.mxu0 0
    %2270 = vmatpush1.bf16.msra.mxu0 0
    %2271 = vmatprep.subr.bf16.mxu0 0
    %2272 = vmatpush1.bf16.msra.mxu0 0
    %2273 = vmatprep.subr.bf16.mxu0 0
    %2274 = vmatpush1.bf16.msra.mxu0 0
    %2275 = vmatprep.subr.bf16.mxu0 0
    %2276 = vmatpush1.bf16.msra.mxu0 0
    %2277 = vmatprep.subr.bf16.mxu0 0
    %2278 = vmatpush1.bf16.msra.mxu0 0
    %2279 = vmatprep.subr.bf16.mxu0 0
    %2280 = vmatpush1.bf16.msra.mxu0 0
    %2281 = vmatprep.mubr.bf16.mxu0 0
    %2282 = vmatmul.mubr.bf16.gmra.mrb[0].mxu0 %v2015
    %v2283 = vpop.f32.mrb[0].mxu0
    %v2284 = vadd.f32 %v2029, %v2283
    %v2285 = vpop.f32.mrb[0].mxu0
    %v2286 = vadd.f32 %v2033, %v2285
    %v2287 = vpop.f32.mrb[0].mxu0
    %v2288 = vadd.f32 %v2029, %v2287
    %v2289 = vpop.f32.mrb[0].mxu0
    %v2290 = vadd.f32 %v2033, %v2289
    %2291 = vmatprep.mubr.bf16.mxu0 0
    %2292 = vmatmul.mubr.bf16.gmra.mrb[0].mxu0 %v2016
    %v2293 = vpop.f32.mrb[0].mxu0
    %v2294 = vadd.f32 %v2029, %v2293
    %v2295 = vpop.f32.mrb[0].mxu0
    %v2296 = vadd.f32 %v2033, %v2295
    %v2297 = vpop.f32.mrb[0].mxu0
    %v2298 = vpop.f32.mrb[0].mxu0
    %2299 = vdwg.mxu0
    %v2300 = vmul.f32 %v2233, 0.5
    %v2301 = vmul.f32 %v2235, 0.5
    %v2302 = vmul.f32 %v2284, 0.5
    %v2303 = vmul.f32 %v2286, 0.5
    %v2304 = vmul.f32 %v2237, 0.5
    %v2305 = vmul.f32 %v2239, 0.5
    %v2306 = vmul.f32 %v2288, 0.5
    %v2307 = vmul.f32 %v2290, 0.5
    %v2308 = vmul.f32 %v2243, 0.5
    %v2309 = vmul.f32 %v2245, 0.5
    %v2310 = vmul.f32 %v2294, 0.5
    %v2311 = vmul.f32 %v2296, 0.5
    %v2312 = vmul.f32 %v2233, 0.70710677
    %v2313 = vmul.f32 %v2235, 0.70710677
    %v2314 = vmul.f32 %v2284, 0.70710677
    %v2315 = vmul.f32 %v2286, 0.70710677
    %v2316 = vmul.f32 %v2237, 0.70710677
    %v2317 = vmul.f32 %v2239, 0.70710677
    %v2318 = vmul.f32 %v2288, 0.70710677
    %v2319 = vmul.f32 %v2290, 0.70710677
    %v2320 = vmul.f32 %v2243, 0.70710677
    %v2321 = vmul.f32 %v2245, 0.70710677
    %v2322 = vmul.f32 %v2294, 0.70710677
    %v2323 = vmul.f32 %v2296, 0.70710677
    %v2324 = verf.f32.pop %v2312
    %v2325 = verf.f32.pop %v2313
    %v2326 = verf.f32.pop %v2314
    %v2327 = verf.f32.pop %v2315
    %v2328 = verf.f32.pop %v2316
    %v2329 = verf.f32.pop %v2317
    %v2330 = verf.f32.pop %v2318
    %v2331 = verf.f32.pop %v2319
    %v2332 = verf.f32.pop %v2320
    %v2333 = verf.f32.pop %v2321
    %v2334 = verf.f32.pop %v2322
    %v2335 = verf.f32.pop %v2323
    %v2336 = vadd.f32 %v2324, 1.0
    %v2337 = vadd.f32 %v2325, 1.0
    %v2338 = vadd.f32 %v2326, 1.0
    %v2339 = vadd.f32 %v2327, 1.0
    %v2340 = vadd.f32 %v2328, 1.0
    %v2341 = vadd.f32 %v2329, 1.0
    %v2342 = vadd.f32 %v2330, 1.0
    %v2343 = vadd.f32 %v2331, 1.0
    %v2344 = vadd.f32 %v2332, 1.0
    %v2345 = vadd.f32 %v2333, 1.0
    %v2346 = vadd.f32 %v2334, 1.0
    %v2347 = vadd.f32 %v2335, 1.0
    %v2348 = vmul.f32 %v2300, %v2336
    %v2349 = vmul.f32 %v2301, %v2337
    %v2350 = vmul.f32 %v2302, %v2338
    %v2351 = vmul.f32 %v2303, %v2339
    %v2352 = vmul.f32 %v2304, %v2340
    %v2353 = vmul.f32 %v2305, %v2341
    %v2354 = vmul.f32 %v2306, %v2342
    %v2355 = vmul.f32 %v2307, %v2343
    %v2356 = vmul.f32 %v2308, %v2344
    %v2357 = vmul.f32 %v2309, %v2345
    %v2358 = vmul.f32 %v2310, %v2346
    %v2359 = vmul.f32 %v2311, %v2347
    %v2360 = vpack.c.bf16 %v2352, %v2348
    %v2361 = vpack.c.bf16 %v2353, %v2349
    %v2362 = vpack.c.bf16 %v2354, %v2350
    %v2363 = vpack.c.bf16 %v2355, %v2351
    %v2364 = vpack.c.bf16 %v2356, %v2356
    %v2365 = vpack.c.bf16 %v2357, %v2357
    %v2366 = vpack.c.bf16 %v2358, %v2358
    %v2367 = vpack.c.bf16 %v2359, %v2359
    %v2369 = vlaneseq
    %v2370 = vshrl.u32 %v2369, 7
    %v2371 = vsub.s32 0, %v2370
    %v2372 = vrot.slane %v835, %v2371
    %v2438 = vunpack.c.l.b16 %v771
    %v2439 = vunpack.c.l.b16 %v772
    %v2440 = vunpack.c.l.b16 %v773
    %v2441 = vunpack.c.l.b16 %v774
    %v2442 = vunpack.c.l.b16 %v775
    %v2443 = vunpack.c.l.b16 %v776
    %v2444 = vunpack.c.l.b16 %v777
    %v2445 = vunpack.c.l.b16 %v778
    %v2446 = vunpack.c.l.b16 %v779
    %v2447 = vunpack.c.l.b16 %v780
    %v2448 = vunpack.c.l.b16 %v781
    %v2449 = vunpack.c.l.b16 %v782
    %v2450 = vunpack.c.l.b16 %v783
    %v2451 = vunpack.c.l.b16 %v784
    %v2452 = vunpack.c.l.b16 %v785
    %v2453 = vunpack.c.l.b16 %v786
    %v2454 = vunpack.c.l.b16 %v787
    %v2455 = vunpack.c.l.b16 %v788
    %v2456 = vunpack.c.l.b16 %v789
    %v2457 = vunpack.c.l.b16 %v790
    %v2458 = vunpack.c.l.b16 %v791
    %v2459 = vunpack.c.l.b16 %v792
    %v2460 = vunpack.c.l.b16 %v793
    %v2461 = vunpack.c.l.b16 %v794
    %v2462 = vunpack.c.l.b16 %v795
    %v2463 = vunpack.c.l.b16 %v796
    %v2464 = vunpack.c.l.b16 %v797
    %v2465 = vunpack.c.l.b16 %v798
    %v2466 = vunpack.c.l.b16 %v799
    %v2467 = vunpack.c.l.b16 %v800
    %v2468 = vunpack.c.l.b16 %v801
    %v2469 = vunpack.c.l.b16 %v802
    %v2470 = vunpack.c.l.b16 %v803
    %v2471 = vunpack.c.l.b16 %v804
    %v2472 = vunpack.c.l.b16 %v805
    %v2473 = vunpack.c.l.b16 %v806
    %v2474 = vunpack.c.l.b16 %v807
    %v2475 = vunpack.c.l.b16 %v808
    %v2476 = vunpack.c.l.b16 %v809
    %v2477 = vunpack.c.l.b16 %v810
    %v2478 = vunpack.c.l.b16 %v811
    %v2479 = vunpack.c.l.b16 %v812
    %v2480 = vunpack.c.l.b16 %v813
    %v2481 = vunpack.c.l.b16 %v814
    %v2482 = vunpack.c.l.b16 %v815
    %v2483 = vunpack.c.l.b16 %v816
    %v2484 = vunpack.c.l.b16 %v817
    %v2485 = vunpack.c.l.b16 %v818
    %v2486 = vunpack.c.l.b16 %v819
    %v2487 = vunpack.c.l.b16 %v820
    %v2488 = vunpack.c.l.b16 %v821
    %v2489 = vunpack.c.l.b16 %v822
    %v2490 = vunpack.c.l.b16 %v823
    %v2491 = vunpack.c.l.b16 %v824
    %v2492 = vunpack.c.l.b16 %v825
    %v2493 = vunpack.c.l.b16 %v826
    %v2494 = vunpack.c.l.b16 %v827
    %v2495 = vunpack.c.l.b16 %v828
    %v2496 = vunpack.c.l.b16 %v829
    %v2497 = vunpack.c.l.b16 %v830
    %v2498 = vunpack.c.l.b16 %v831
    %v2499 = vunpack.c.l.b16 %v832
    %v2500 = vunpack.c.l.b16 %v833
    %v2501 = vunpack.c.l.b16 %v834
    %v2502 = vpack.c.b16 %v2439, %v2438
    %v2503 = vpack.c.b16 %v2441, %v2440
    %v2504 = vpack.c.b16 %v2443, %v2442
    %v2505 = vpack.c.b16 %v2445, %v2444
    %v2506 = vpack.c.b16 %v2447, %v2446
    %v2507 = vpack.c.b16 %v2449, %v2448
    %v2508 = vpack.c.b16 %v2451, %v2450
    %v2509 = vpack.c.b16 %v2453, %v2452
    %v2510 = vpack.c.b16 %v2455, %v2454
    %v2511 = vpack.c.b16 %v2457, %v2456
    %v2512 = vpack.c.b16 %v2459, %v2458
    %v2513 = vpack.c.b16 %v2461, %v2460
    %v2514 = vpack.c.b16 %v2463, %v2462
    %v2515 = vpack.c.b16 %v2465, %v2464
    %v2516 = vpack.c.b16 %v2467, %v2466
    %v2517 = vpack.c.b16 %v2469, %v2468
    %v2518 = vpack.c.b16 %v2471, %v2470
    %v2519 = vpack.c.b16 %v2473, %v2472
    %v2520 = vpack.c.b16 %v2475, %v2474
    %v2521 = vpack.c.b16 %v2477, %v2476
    %v2522 = vpack.c.b16 %v2479, %v2478
    %v2523 = vpack.c.b16 %v2481, %v2480
    %v2524 = vpack.c.b16 %v2483, %v2482
    %v2525 = vpack.c.b16 %v2485, %v2484
    %v2526 = vpack.c.b16 %v2487, %v2486
    %v2527 = vpack.c.b16 %v2489, %v2488
    %v2528 = vpack.c.b16 %v2491, %v2490
    %v2529 = vpack.c.b16 %v2493, %v2492
    %v2530 = vpack.c.b16 %v2495, %v2494
    %v2531 = vpack.c.b16 %v2497, %v2496
    %v2532 = vpack.c.b16 %v2499, %v2498
    %v2533 = vpack.c.b16 %v2501, %v2500
    %2566 = vmatprep.subr.bf16.mxu0 0
    %2567 = vmatpush1.bf16.msra.mxu0 %v2502
    %2568 = vmatprep.subr.bf16.mxu0 0
    %2569 = vmatpush1.bf16.msra.mxu0 %v2503
    %2570 = vmatprep.subr.bf16.mxu0 0
    %2571 = vmatpush1.bf16.msra.mxu0 %v2504
    %2572 = vmatprep.subr.bf16.mxu0 0
    %2573 = vmatpush1.bf16.msra.mxu0 %v2505
    %2574 = vmatprep.subr.bf16.mxu0 0
    %2575 = vmatpush1.bf16.msra.mxu0 %v2506
    %2576 = vmatprep.subr.bf16.mxu0 0
    %2577 = vmatpush1.bf16.msra.mxu0 %v2507
    %2578 = vmatprep.subr.bf16.mxu0 0
    %2579 = vmatpush1.bf16.msra.mxu0 %v2508
    %2580 = vmatprep.subr.bf16.mxu0 0
    %2581 = vmatpush1.bf16.msra.mxu0 %v2509
    %2582 = vmatprep.subr.bf16.mxu0 0
    %2583 = vmatpush1.bf16.msra.mxu0 %v2510
    %2584 = vmatprep.subr.bf16.mxu0 0
    %2585 = vmatpush1.bf16.msra.mxu0 %v2511
    %2586 = vmatprep.subr.bf16.mxu0 0
    %2587 = vmatpush1.bf16.msra.mxu0 %v2512
    %2588 = vmatprep.subr.bf16.mxu0 0
    %2589 = vmatpush1.bf16.msra.mxu0 %v2513
    %2590 = vmatprep.subr.bf16.mxu0 0
    %2591 = vmatpush1.bf16.msra.mxu0 %v2514
    %2592 = vmatprep.subr.bf16.mxu0 0
    %2593 = vmatpush1.bf16.msra.mxu0 %v2515
    %2594 = vmatprep.subr.bf16.mxu0 0
    %2595 = vmatpush1.bf16.msra.mxu0 %v2516
    %2596 = vmatprep.subr.bf16.mxu0 0
    %2597 = vmatpush1.bf16.msra.mxu0 %v2517
    %2598 = vmatprep.mubr.bf16.mxu0 %v2361
    %2599 = vmatmul.mubr.bf16.gmra.mrb[0].mxu0 %v2360
    %v2600 = vpop.f32.mrb[0].mxu0
    %v2601 = vadd.f32 %v2372, %v2600
    %v2602 = vpop.f32.mrb[0].mxu0
    %v2603 = vpop.f32.mrb[0].mxu0
    %v2604 = vadd.f32 %v2372, %v2603
    %v2605 = vpop.f32.mrb[0].mxu0
    %2606 = vmatprep.mubr.bf16.mxu0 %v2365
    %2607 = vmatmul.mubr.bf16.gmra.mrb[0].mxu0 %v2364
    %v2608 = vpop.f32.mrb[0].mxu0
    %v2609 = vadd.f32 %v2372, %v2608
    %v2610 = vpop.f32.mrb[0].mxu0
    %v2611 = vpop.f32.mrb[0].mxu0
    %v2612 = vpop.f32.mrb[0].mxu0
    %2613 = vdwg.mxu0
    %2614 = vmatprep.subr.bf16.mxu0 0
    %2615 = vmatpush1.bf16.msra.mxu0 %v2518
    %2616 = vmatprep.subr.bf16.mxu0 0
    %2617 = vmatpush1.bf16.msra.mxu0 %v2519
    %2618 = vmatprep.subr.bf16.mxu0 0
    %2619 = vmatpush1.bf16.msra.mxu0 %v2520
    %2620 = vmatprep.subr.bf16.mxu0 0
    %2621 = vmatpush1.bf16.msra.mxu0 %v2521
    %2622 = vmatprep.subr.bf16.mxu0 0
    %2623 = vmatpush1.bf16.msra.mxu0 %v2522
    %2624 = vmatprep.subr.bf16.mxu0 0
    %2625 = vmatpush1.bf16.msra.mxu0 %v2523
    %2626 = vmatprep.subr.bf16.mxu0 0
    %2627 = vmatpush1.bf16.msra.mxu0 %v2524
    %2628 = vmatprep.subr.bf16.mxu0 0
    %2629 = vmatpush1.bf16.msra.mxu0 %v2525
    %2630 = vmatprep.subr.bf16.mxu0 0
    %2631 = vmatpush1.bf16.msra.mxu0 %v2526
    %2632 = vmatprep.subr.bf16.mxu0 0
    %2633 = vmatpush1.bf16.msra.mxu0 %v2527
    %2634 = vmatprep.subr.bf16.mxu0 0
    %2635 = vmatpush1.bf16.msra.mxu0 %v2528
    %2636 = vmatprep.subr.bf16.mxu0 0
    %2637 = vmatpush1.bf16.msra.mxu0 %v2529
    %2638 = vmatprep.subr.bf16.mxu0 0
    %2639 = vmatpush1.bf16.msra.mxu0 %v2530
    %2640 = vmatprep.subr.bf16.mxu0 0
    %2641 = vmatpush1.bf16.msra.mxu0 %v2531
    %2642 = vmatprep.subr.bf16.mxu0 0
    %2643 = vmatpush1.bf16.msra.mxu0 %v2532
    %2644 = vmatprep.subr.bf16.mxu0 0
    %2645 = vmatpush1.bf16.msra.mxu0 %v2533
    %2646 = vmatprep.mubr.bf16.mxu0 %v2363
    %2647 = vmatmul.mubr.bf16.gmra.mrb[0].mxu0 %v2362
    %v2648 = vpop.f32.mrb[0].mxu0
    %v2649 = vadd.f32 %v2601, %v2648
    %v2650 = vpop.f32.mrb[0].mxu0
    %v2651 = vpop.f32.mrb[0].mxu0
    %v2652 = vadd.f32 %v2604, %v2651
    %v2653 = vpop.f32.mrb[0].mxu0
    %2654 = vmatprep.mubr.bf16.mxu0 %v2367
    %2655 = vmatmul.mubr.bf16.gmra.mrb[0].mxu0 %v2366
    %v2656 = vpop.f32.mrb[0].mxu0
    %v2657 = vadd.f32 %v2609, %v2656
    %v2658 = vpop.f32.mrb[0].mxu0
    %v2659 = vpop.f32.mrb[0].mxu0
    %v2660 = vpop.f32.mrb[0].mxu0
    %2661 = vdwg.mxu0
    %v2663 = vlaneseq
    %v2664 = vshrl.u32 %v2663, 7
    %v2665 = vsub.s32 0, %v2664
    %v2666 = vrot.slane %v836, %v2665
    %v2668 = vmul.f32 %v2649, %v2666
    %v2669 = vmul.f32 %v2652, %v2666
    %v2670 = vmul.f32 %v2657, %v2666
    %v2671 = vadd.f32 %v1959, %v2668
    %v2672 = vadd.f32 %v1960, %v2669
    %v2673 = vadd.f32 %v1961, %v2670
    %s2674 = scalar_lea.vmem %s6, 1
    %v2675 = vld [vmem:[%s2674] sm:$0x1]
    %s2676 = scalar_lea.vmem [#allocation8], 1
    %v2677 = vld [vmem:[%s2676] sm:$0x1]
    %s2678 = scalar_lea.vmem [#allocation10], 192
    %v2679 = vld [vmem:[%s2678] sm:$0xff]
    %v2680 = vld [vmem:[%s2678 + $0x8] sm:$0xf]
    %v2681 = vld [vmem:[%s2678 + $0xc] sm:$0xff]
    %v2682 = vld [vmem:[%s2678 + $0x14] sm:$0xf]
    %v2683 = vld [vmem:[%s2678 + $0x18] sm:$0xff]
    %v2684 = vld [vmem:[%s2678 + $0x20] sm:$0xf]
    %v2685 = vld [vmem:[%s2678 + $0x24] sm:$0xff]
    %v2686 = vld [vmem:[%s2678 + $0x2c] sm:$0xf]
    %v2687 = vld [vmem:[%s2678 + $0x30] sm:$0xff]
    %v2688 = vld [vmem:[%s2678 + $0x38] sm:$0xf]
    %v2689 = vld [vmem:[%s2678 + $0x3c] sm:$0xff]
    %v2690 = vld [vmem:[%s2678 + $0x44] sm:$0xf]
    %v2691 = vld [vmem:[%s2678 + $0x48] sm:$0xff]
    %v2692 = vld [vmem:[%s2678 + $0x50] sm:$0xf]
    %v2693 = vld [vmem:[%s2678 + $0x54] sm:$0xff]
    %v2694 = vld [vmem:[%s2678 + $0x5c] sm:$0xf]
    %v2695 = vld [vmem:[%s2678 + $0x60] sm:$0xff]
    %v2696 = vld [vmem:[%s2678 + $0x68] sm:$0xf]
    %v2697 = vld [vmem:[%s2678 + $0x6c] sm:$0xff]
    %v2698 = vld [vmem:[%s2678 + $0x74] sm:$0xf]
    %v2699 = vld [vmem:[%s2678 + $0x78] sm:$0xff]
    %v2700 = vld [vmem:[%s2678 + $0x80] sm:$0xf]
    %v2701 = vld [vmem:[%s2678 + $0x84] sm:$0xff]
    %v2702 = vld [vmem:[%s2678 + $0x8c] sm:$0xf]
    %v2703 = vld [vmem:[%s2678 + $0x90] sm:$0xff]
    %v2704 = vld [vmem:[%s2678 + $0x98] sm:$0xf]
    %v2705 = vld [vmem:[%s2678 + $0x9c] sm:$0xff]
    %v2706 = vld [vmem:[%s2678 + $0xa4] sm:$0xf]
    %v2707 = vld [vmem:[%s2678 + $0xa8] sm:$0xff]
    %v2708 = vld [vmem:[%s2678 + $0xb0] sm:$0xf]
    %v2709 = vld [vmem:[%s2678 + $0xb4] sm:$0xff]
    %v2710 = vld [vmem:[%s2678 + $0xbc] sm:$0xf]
    %s2711 = scalar_lea.vmem %s9, 3
    %v2712 = vld [vmem:[%s2711] sm:$0x7]
    %s2713 = scalar_lea.vmem %s10, 64
    %v2714 = vld [vmem:[%s2713] sm:$0xf]
    %v2715 = vld [vmem:[%s2713 + $0x4] sm:$0xf]
    %v2716 = vld [vmem:[%s2713 + $0x8] sm:$0xf]
    %v2717 = vld [vmem:[%s2713 + $0xc] sm:$0xf]
    %v2718 = vld [vmem:[%s2713 + $0x10] sm:$0xf]
    %v2719 = vld [vmem:[%s2713 + $0x14] sm:$0xf]
    %v2720 = vld [vmem:[%s2713 + $0x18] sm:$0xf]
    %v2721 = vld [vmem:[%s2713 + $0x1c] sm:$0xf]
    %v2722 = vld [vmem:[%s2713 + $0x20] sm:$0xf]
    %v2723 = vld [vmem:[%s2713 + $0x24] sm:$0xf]
    %v2724 = vld [vmem:[%s2713 + $0x28] sm:$0xf]
    %v2725 = vld [vmem:[%s2713 + $0x2c] sm:$0xf]
    %v2726 = vld [vmem:[%s2713 + $0x30] sm:$0xf]
    %v2727 = vld [vmem:[%s2713 + $0x34] sm:$0xf]
    %v2728 = vld [vmem:[%s2713 + $0x38] sm:$0xf]
    %v2729 = vld [vmem:[%s2713 + $0x3c] sm:$0xf]
    %s2730 = scalar_lea.vmem %s11, 1
    %v2731 = vld [vmem:[%s2730] sm:$0x1]
    %s2732 = scalar_lea.vmem [#allocation11], 1
    %v2733 = vld [vmem:[%s2732] sm:$0x1]
    %s2734 = scalar_lea.vmem [#allocation13], 1
    %v2735 = vld [vmem:[%s2734] sm:$0x1]
    %s2736 = scalar_lea.vmem [#allocation14], 1
    %v2737 = vld [vmem:[%s2736] sm:$0x1]
    %s2738 = scalar_lea.vmem %s15, 256
    %v2739 = vld [vmem:[%s2738] sm:$0xff]
    %v2740 = vld [vmem:[%s2738 + $0x8] sm:$0xff]
    %v2741 = vld [vmem:[%s2738 + $0x10] sm:$0xff]
    %v2742 = vld [vmem:[%s2738 + $0x18] sm:$0xff]
    %v2743 = vld [vmem:[%s2738 + $0x20] sm:$0xff]
    %v2744 = vld [vmem:[%s2738 + $0x28] sm:$0xff]
    %v2745 = vld [vmem:[%s2738 + $0x30] sm:$0xff]
    %v2746 = vld [vmem:[%s2738 + $0x38] sm:$0xff]
    %v2747 = vld [vmem:[%s2738 + $0x40] sm:$0xff]
    %v2748 = vld [vmem:[%s2738 + $0x48] sm:$0xff]
    %v2749 = vld [vmem:[%s2738 + $0x50] sm:$0xff]
    %v2750 = vld [vmem:[%s2738 + $0x58] sm:$0xff]
    %v2751 = vld [vmem:[%s2738 + $0x60] sm:$0xff]
    %v2752 = vld [vmem:[%s2738 + $0x68] sm:$0xff]
    %v2753 = vld [vmem:[%s2738 + $0x70] sm:$0xff]
    %v2754 = vld [vmem:[%s2738 + $0x78] sm:$0xff]
    %v2755 = vld [vmem:[%s2738 + $0x80] sm:$0xff]
    %v2756 = vld [vmem:[%s2738 + $0x88] sm:$0xff]
    %v2757 = vld [vmem:[%s2738 + $0x90] sm:$0xff]
    %v2758 = vld [vmem:[%s2738 + $0x98] sm:$0xff]
    %v2759 = vld [vmem:[%s2738 + $0xa0] sm:$0xff]
    %v2760 = vld [vmem:[%s2738 + $0xa8] sm:$0xff]
    %v2761 = vld [vmem:[%s2738 + $0xb0] sm:$0xff]
    %v2762 = vld [vmem:[%s2738 + $0xb8] sm:$0xff]
    %v2763 = vld [vmem:[%s2738 + $0xc0] sm:$0xff]
    %v2764 = vld [vmem:[%s2738 + $0xc8] sm:$0xff]
    %v2765 = vld [vmem:[%s2738 + $0xd0] sm:$0xff]
    %v2766 = vld [vmem:[%s2738 + $0xd8] sm:$0xff]
    %v2767 = vld [vmem:[%s2738 + $0xe0] sm:$0xff]
    %v2768 = vld [vmem:[%s2738 + $0xe8] sm:$0xff]
    %v2769 = vld [vmem:[%s2738 + $0xf0] sm:$0xff]
    %v2770 = vld [vmem:[%s2738 + $0xf8] sm:$0xff]
    %s2771 = scalar_lea.vmem [#allocation16], 4
    %v2772 = vld [vmem:[%s2771] sm:$0xf]
    %s2773 = scalar_lea.vmem %s17, 256
    %v2774 = vld [vmem:[%s2773] sm:$0xf]
    %v2775 = vld [vmem:[%s2773 + $0x4] sm:$0xf]
    %v2776 = vld [vmem:[%s2773 + $0x8] sm:$0xf]
    %v2777 = vld [vmem:[%s2773 + $0xc] sm:$0xf]
    %v2778 = vld [vmem:[%s2773 + $0x10] sm:$0xf]
    %v2779 = vld [vmem:[%s2773 + $0x14] sm:$0xf]
    %v2780 = vld [vmem:[%s2773 + $0x18] sm:$0xf]
    %v2781 = vld [vmem:[%s2773 + $0x1c] sm:$0xf]
    %v2782 = vld [vmem:[%s2773 + $0x20] sm:$0xf]
    %v2783 = vld [vmem:[%s2773 + $0x24] sm:$0xf]
    %v2784 = vld [vmem:[%s2773 + $0x28] sm:$0xf]
    %v2785 = vld [vmem:[%s2773 + $0x2c] sm:$0xf]
    %v2786 = vld [vmem:[%s2773 + $0x30] sm:$0xf]
    %v2787 = vld [vmem:[%s2773 + $0x34] sm:$0xf]
    %v2788 = vld [vmem:[%s2773 + $0x38] sm:$0xf]
    %v2789 = vld [vmem:[%s2773 + $0x3c] sm:$0xf]
    %v2790 = vld [vmem:[%s2773 + $0x40] sm:$0xf]
    %v2791 = vld [vmem:[%s2773 + $0x44] sm:$0xf]
    %v2792 = vld [vmem:[%s2773 + $0x48] sm:$0xf]
    %v2793 = vld [vmem:[%s2773 + $0x4c] sm:$0xf]
    %v2794 = vld [vmem:[%s2773 + $0x50] sm:$0xf]
    %v2795 = vld [vmem:[%s2773 + $0x54] sm:$0xf]
    %v2796 = vld [vmem:[%s2773 + $0x58] sm:$0xf]
    %v2797 = vld [vmem:[%s2773 + $0x5c] sm:$0xf]
    %v2798 = vld [vmem:[%s2773 + $0x60] sm:$0xf]
    %v2799 = vld [vmem:[%s2773 + $0x64] sm:$0xf]
    %v2800 = vld [vmem:[%s2773 + $0x68] sm:$0xf]
    %v2801 = vld [vmem:[%s2773 + $0x6c] sm:$0xf]
    %v2802 = vld [vmem:[%s2773 + $0x70] sm:$0xf]
    %v2803 = vld [vmem:[%s2773 + $0x74] sm:$0xf]
    %v2804 = vld [vmem:[%s2773 + $0x78] sm:$0xf]
    %v2805 = vld [vmem:[%s2773 + $0x7c] sm:$0xf]
    %v2806 = vld [vmem:[%s2773 + $0x80] sm:$0xf]
    %v2807 = vld [vmem:[%s2773 + $0x84] sm:$0xf]
    %v2808 = vld [vmem:[%s2773 + $0x88] sm:$0xf]
    %v2809 = vld [vmem:[%s2773 + $0x8c] sm:$0xf]
    %v2810 = vld [vmem:[%s2773 + $0x90] sm:$0xf]
    %v2811 = vld [vmem:[%s2773 + $0x94] sm:$0xf]
    %v2812 = vld [vmem:[%s2773 + $0x98] sm:$0xf]
    %v2813 = vld [vmem:[%s2773 + $0x9c] sm:$0xf]
    %v2814 = vld [vmem:[%s2773 + $0xa0] sm:$0xf]
    %v2815 = vld [vmem:[%s2773 + $0xa4] sm:$0xf]
    %v2816 = vld [vmem:[%s2773 + $0xa8] sm:$0xf]
    %v2817 = vld [vmem:[%s2773 + $0xac] sm:$0xf]
    %v2818 = vld [vmem:[%s2773 + $0xb0] sm:$0xf]
    %v2819 = vld [vmem:[%s2773 + $0xb4] sm:$0xf]
    %v2820 = vld [vmem:[%s2773 + $0xb8] sm:$0xf]
    %v2821 = vld [vmem:[%s2773 + $0xbc] sm:$0xf]
    %v2822 = vld [vmem:[%s2773 + $0xc0] sm:$0xf]
    %v2823 = vld [vmem:[%s2773 + $0xc4] sm:$0xf]
    %v2824 = vld [vmem:[%s2773 + $0xc8] sm:$0xf]
    %v2825 = vld [vmem:[%s2773 + $0xcc] sm:$0xf]
    %v2826 = vld [vmem:[%s2773 + $0xd0] sm:$0xf]
    %v2827 = vld [vmem:[%s2773 + $0xd4] sm:$0xf]
    %v2828 = vld [vmem:[%s2773 + $0xd8] sm:$0xf]
    %v2829 = vld [vmem:[%s2773 + $0xdc] sm:$0xf]
    %v2830 = vld [vmem:[%s2773 + $0xe0] sm:$0xf]
    %v2831 = vld [vmem:[%s2773 + $0xe4] sm:$0xf]
    %v2832 = vld [vmem:[%s2773 + $0xe8] sm:$0xf]
    %v2833 = vld [vmem:[%s2773 + $0xec] sm:$0xf]
    %v2834 = vld [vmem:[%s2773 + $0xf0] sm:$0xf]
    %v2835 = vld [vmem:[%s2773 + $0xf4] sm:$0xf]
    %v2836 = vld [vmem:[%s2773 + $0xf8] sm:$0xf]
    %v2837 = vld [vmem:[%s2773 + $0xfc] sm:$0xf]
    %s2838 = scalar_lea.vmem [#allocation17], 1
    %v2839 = vld [vmem:[%s2838] sm:$0x1]
    %s2840 = scalar_lea.vmem [#allocation19], 1
    %v2841 = vld [vmem:[%s2840] sm:$0x1]
    %2842 = vadd.xlane.f32.xlu0 %v2671
    %v2843 = vpop.xlane.xlu0 %2842
    %2844 = vadd.xlane.f32.xlu0 %v2672
    %v2845 = vpop.xlane.xlu0 %2844
    %v2846 = vsel %vm678, %v2673, 0.0
    %2847 = vadd.xlane.f32.xlu0 %v2846
    %v2848 = vpop.xlane.xlu0 %2847
    %v2849 = vmul.f32 %v2843, %v844
    %v2850 = vmul.f32 %v2845, %v844
    %v2851 = vmul.f32 %v2848, %v844
    %v2852 = vsub.f32 %v2671, %v2849
    %v2853 = vsub.f32 %v2672, %v2850
    %v2854 = vsub.f32 %v2673, %v2851
    %v2855 = vmul.f32 %v2852, %v2852
    %v2856 = vmul.f32 %v2853, %v2853
    %v2857 = vmul.f32 %v2854, %v2854
    %2858 = vadd.xlane.f32.xlu0 %v2855
    %v2859 = vpop.xlane.xlu0 %2858
    %2860 = vadd.xlane.f32.xlu0 %v2856
    %v2861 = vpop.xlane.xlu0 %2860
    %v2862 = vsel %vm678, %v2857, 0.0
    %2863 = vadd.xlane.f32.xlu0 %v2862
    %v2864 = vpop.xlane.xlu0 %2863
    %v2865 = vmul.f32 %v2859, %v844
    %v2866 = vmul.f32 %v2861, %v844
    %v2867 = vmul.f32 %v2864, %v844
    %v2868 = vadd.f32 %v2865, 1e-06
    %v2869 = vadd.f32 %v2866, 1e-06
    %v2870 = vadd.f32 %v2867, 1e-06
    %v2871 = vrsqrt.pop %v2868
    %v2872 = vrsqrt.pop %v2869
    %v2873 = vrsqrt.pop %v2870
    %v2874 = vmul.f32 %v2852, %v2871
    %v2875 = vmul.f32 %v2853, %v2872
    %v2876 = vmul.f32 %v2854, %v2873
    %v2878 = vlaneseq
    %v2879 = vshrl.u32 %v2878, 7
    %v2880 = vsub.s32 0, %v2879
    %v2881 = vrot.slane %v2675, %v2880
    %v2883 = vmul.f32 %v2874, %v2881
    %v2884 = vmul.f32 %v2875, %v2881
    %v2885 = vmul.f32 %v2876, %v2881
    %v2887 = vlaneseq
    %v2888 = vshrl.u32 %v2887, 7
    %v2889 = vsub.s32 0, %v2888
    %v2890 = vrot.slane %v2677, %v2889
    %v2892 = vadd.f32 %v2883, %v2890
    %v2893 = vadd.f32 %v2884, %v2890
    %v2894 = vadd.f32 %v2885, %v2890
    %v2895 = vpack.c.bf16 %v2893, %v2892
    %v2896 = vpack.c.bf16 %v2894, %v2894
    %v2898 = vlaneseq
    %v2899 = vshrl.u32 %v2898, 7
    %v2900 = vsub.s32 0, %v2899
    %v2901 = vrot.slane %v2712, %v2900
    %v2902 = vlaneseq
    %v2903 = vshrl.u32 %v2902, 7
    %v2904 = vsub.s32 1, %v2903
    %v2905 = vrot.slane %v2712, %v2904
    %v2906 = vlaneseq
    %v2907 = vshrl.u32 %v2906, 7
    %v2908 = vsub.s32 2, %v2907
    %v2909 = vrot.slane %v2712, %v2908
    %v2945 = vunpack.c.l.b16 %v2679
    %v2946 = vunpack.c.h.b16 %v2679
    %v2947 = vunpack.c.l.b16 %v2680
    %v2948 = vunpack.c.l.b16 %v2681
    %v2949 = vunpack.c.h.b16 %v2681
    %v2950 = vunpack.c.l.b16 %v2682
    %v2951 = vunpack.c.l.b16 %v2683
    %v2952 = vunpack.c.h.b16 %v2683
    %v2953 = vunpack.c.l.b16 %v2684
    %v2954 = vunpack.c.l.b16 %v2685
    %v2955 = vunpack.c.h.b16 %v2685
    %v2956 = vunpack.c.l.b16 %v2686
    %v2957 = vunpack.c.l.b16 %v2687
    %v2958 = vunpack.c.h.b16 %v2687
    %v2959 = vunpack.c.l.b16 %v2688
    %v2960 = vunpack.c.l.b16 %v2689
    %v2961 = vunpack.c.h.b16 %v2689
    %v2962 = vunpack.c.l.b16 %v2690
    %v2963 = vunpack.c.l.b16 %v2691
    %v2964 = vunpack.c.h.b16 %v2691
    %v2965 = vunpack.c.l.b16 %v2692
    %v2966 = vunpack.c.l.b16 %v2693
    %v2967 = vunpack.c.h.b16 %v2693
    %v2968 = vunpack.c.l.b16 %v2694
    %v2969 = vunpack.c.l.b16 %v2695
    %v2970 = vunpack.c.h.b16 %v2695
    %v2971 = vunpack.c.l.b16 %v2696
    %v2972 = vunpack.c.l.b16 %v2697
    %v2973 = vunpack.c.h.b16 %v2697
    %v2974 = vunpack.c.l.b16 %v2698
    %v2975 = vunpack.c.l.b16 %v2699
    %v2976 = vunpack.c.h.b16 %v2699
    %v2977 = vunpack.c.l.b16 %v2700
    %v2978 = vunpack.c.l.b16 %v2701
    %v2979 = vunpack.c.h.b16 %v2701
    %v2980 = vunpack.c.l.b16 %v2702
    %v2981 = vunpack.c.l.b16 %v2703
    %v2982 = vunpack.c.h.b16 %v2703
    %v2983 = vunpack.c.l.b16 %v2704
    %v2984 = vunpack.c.l.b16 %v2705
    %v2985 = vunpack.c.h.b16 %v2705
    %v2986 = vunpack.c.l.b16 %v2706
    %v2987 = vunpack.c.l.b16 %v2707
    %v2988 = vunpack.c.h.b16 %v2707
    %v2989 = vunpack.c.l.b16 %v2708
    %v2990 = vunpack.c.l.b16 %v2709
    %v2991 = vunpack.c.h.b16 %v2709
    %v2992 = vunpack.c.l.b16 %v2710
    %v2993 = vpack.c.b16 %v2948, %v2945
    %v2994 = vpack.c.b16 %v2949, %v2946
    %v2995 = vpack.c.b16 %v2950, %v2947
    %v2996 = vpack.c.b16 %v2954, %v2951
    %v2997 = vpack.c.b16 %v2955, %v2952
    %v2998 = vpack.c.b16 %v2956, %v2953
    %v2999 = vpack.c.b16 %v2960, %v2957
    %v3000 = vpack.c.b16 %v2961, %v2958
    %v3001 = vpack.c.b16 %v2962, %v2959
    %v3002 = vpack.c.b16 %v2966, %v2963
    %v3003 = vpack.c.b16 %v2967, %v2964
    %v3004 = vpack.c.b16 %v2968, %v2965
    %v3005 = vpack.c.b16 %v2972, %v2969
    %v3006 = vpack.c.b16 %v2973, %v2970
    %v3007 = vpack.c.b16 %v2974, %v2971
    %v3008 = vpack.c.b16 %v2978, %v2975
    %v3009 = vpack.c.b16 %v2979, %v2976
    %v3010 = vpack.c.b16 %v2980, %v2977
    %v3011 = vpack.c.b16 %v2984, %v2981
    %v3012 = vpack.c.b16 %v2985, %v2982
    %v3013 = vpack.c.b16 %v2986, %v2983
    %v3014 = vpack.c.b16 %v2990, %v2987
    %v3015 = vpack.c.b16 %v2991, %v2988
    %v3016 = vpack.c.b16 %v2992, %v2989
    %3041 = vmatprep.subr.bf16.mxu0 %v2994
    %3042 = vmatpush1.bf16.msra.mxu0 %v2993
    %3043 = vmatprep.subr.bf16.mxu0 %v2997
    %3044 = vmatpush1.bf16.msra.mxu0 %v2996
    %3045 = vmatprep.subr.bf16.mxu0 %v3000
    %3046 = vmatpush1.bf16.msra.mxu0 %v2999
    %3047 = vmatprep.subr.bf16.mxu0 %v3003
    %3048 = vmatpush1.bf16.msra.mxu0 %v3002
    %3049 = vmatprep.subr.bf16.mxu0 %v3006
    %3050 = vmatpush1.bf16.msra.mxu0 %v3005
    %3051 = vmatprep.subr.bf16.mxu0 %v3009
    %3052 = vmatpush1.bf16.msra.mxu0 %v3008
    %3053 = vmatprep.subr.bf16.mxu0 %v3012
    %3054 = vmatpush1.bf16.msra.mxu0 %v3011
    %3055 = vmatprep.subr.bf16.mxu0 %v3015
    %3056 = vmatpush1.bf16.msra.mxu0 %v3014
    %3057 = vmatprep.subr.bf16.mxu0 0
    %3058 = vmatpush1.bf16.msra.mxu0 0
    %3059 = vmatprep.subr.bf16.mxu0 0
    %3060 = vmatpush1.bf16.msra.mxu0 0
    %3061 = vmatprep.subr.bf16.mxu0 0
    %3062 = vmatpush1.bf16.msra.mxu0 0
    %3063 = vmatprep.subr.bf16.mxu0 0
    %3064 = vmatpush1.bf16.msra.mxu0 0
    %3065 = vmatprep.subr.bf16.mxu0 0
    %3066 = vmatpush1.bf16.msra.mxu0 0
    %3067 = vmatprep.subr.bf16.mxu0 0
    %3068 = vmatpush1.bf16.msra.mxu0 0
    %3069 = vmatprep.subr.bf16.mxu0 0
    %3070 = vmatpush1.bf16.msra.mxu0 0
    %3071 = vmatprep.subr.bf16.mxu0 0
    %3072 = vmatpush1.bf16.msra.mxu0 0
    %3073 = vmatprep.mubr.bf16.mxu0 0
    %3074 = vmatmul.mubr.bf16.gmra.mrb[0].mxu0 %v2895
    %v3075 = vpop.f32.mrb[0].mxu0
    %v3076 = vadd.f32 %v2901, %v3075
    %v3077 = vpop.f32.mrb[0].mxu0
    %v3078 = vadd.f32 %v2905, %v3077
    %v3079 = vpop.f32.mrb[0].mxu0
    %v3080 = vadd.f32 %v2901, %v3079
    %v3081 = vpop.f32.mrb[0].mxu0
    %v3082 = vadd.f32 %v2905, %v3081
    %3083 = vmatprep.mubr.bf16.mxu0 0
    %3084 = vmatmul.mubr.bf16.gmra.mrb[0].mxu0 %v2896
    %v3085 = vpop.f32.mrb[0].mxu0
    %v3086 = vadd.f32 %v2901, %v3085
    %v3087 = vpop.f32.mrb[0].mxu0
    %v3088 = vadd.f32 %v2905, %v3087
    %v3089 = vpop.f32.mrb[0].mxu0
    %v3090 = vpop.f32.mrb[0].mxu0
    %3091 = vdwg.mxu0
    %3092 = vmatprep.subr.bf16.mxu0 0
    %3093 = vmatpush1.bf16.msra.mxu0 %v2995
    %3094 = vmatprep.subr.bf16.mxu0 0
    %3095 = vmatpush1.bf16.msra.mxu0 %v2998
    %3096 = vmatprep.subr.bf16.mxu0 0
    %3097 = vmatpush1.bf16.msra.mxu0 %v3001
    %3098 = vmatprep.subr.bf16.mxu0 0
    %3099 = vmatpush1.bf16.msra.mxu0 %v3004
    %3100 = vmatprep.subr.bf16.mxu0 0
    %3101 = vmatpush1.bf16.msra.mxu0 %v3007
    %3102 = vmatprep.subr.bf16.mxu0 0
    %3103 = vmatpush1.bf16.msra.mxu0 %v3010
    %3104 = vmatprep.subr.bf16.mxu0 0
    %3105 = vmatpush1.bf16.msra.mxu0 %v3013
    %3106 = vmatprep.subr.bf16.mxu0 0
    %3107 = vmatpush1.bf16.msra.mxu0 %v3016
    %3108 = vmatprep.subr.bf16.mxu0 0
    %3109 = vmatpush1.bf16.msra.mxu0 0
    %3110 = vmatprep.subr.bf16.mxu0 0
    %3111 = vmatpush1.bf16.msra.mxu0 0
    %3112 = vmatprep.subr.bf16.mxu0 0
    %3113 = vmatpush1.bf16.msra.mxu0 0
    %3114 = vmatprep.subr.bf16.mxu0 0
    %3115 = vmatpush1.bf16.msra.mxu0 0
    %3116 = vmatprep.subr.bf16.mxu0 0
    %3117 = vmatpush1.bf16.msra.mxu0 0
    %3118 = vmatprep.subr.bf16.mxu0 0
    %3119 = vmatpush1.bf16.msra.mxu0 0
    %3120 = vmatprep.subr.bf16.mxu0 0
    %3121 = vmatpush1.bf16.msra.mxu0 0
    %3122 = vmatprep.subr.bf16.mxu0 0
    %3123 = vmatpush1.bf16.msra.mxu0 0
    %3124 = vmatprep.mubr.bf16.mxu0 0
    %3125 = vmatmul.mubr.bf16.gmra.mrb[0].mxu0 %v2895
    %v3126 = vpop.f32.mrb[0].mxu0
    %v3127 = vadd.f32 %v2909, %v3126
    %v3128 = vpop.f32.mrb[0].mxu0
    %v3129 = vpop.f32.mrb[0].mxu0
    %v3130 = vadd.f32 %v2909, %v3129
    %v3131 = vpop.f32.mrb[0].mxu0
    %3132 = vmatprep.mubr.bf16.mxu0 0
    %3133 = vmatmul.mubr.bf16.gmra.mrb[0].mxu0 %v2896
    %v3134 = vpop.f32.mrb[0].mxu0
    %v3135 = vadd.f32 %v2909, %v3134
    %v3136 = vpop.f32.mrb[0].mxu0
    %v3137 = vpop.f32.mrb[0].mxu0
    %v3138 = vpop.f32.mrb[0].mxu0
    %3139 = vdwg.mxu0
    %v3140 = vpack.c.bf16 %v3080, %v3076
    %v3141 = vpack.c.bf16 %v3082, %v3078
    %v3142 = vpack.c.bf16 %v3130, %v3127
    %v3143 = vpack.c.bf16 %v3086, %v3086
    %v3144 = vpack.c.bf16 %v3088, %v3088
    %v3145 = vpack.c.bf16 %v3135, %v3135
    %v3147 = vsel %vm1142, %v3140, 0
    %v3150 = vsel %vm1142, %v3143, 0
    %v3153 = vsel %vm1142, %v3141, 0
    %v3156 = vsel %vm1142, %v3144, 0
    %3158 = vmatprep.subr.bf16.mxu0 0
    %3159 = vmatpush1.bf16.xpose.msra.mxu0 %v3153
    %3160 = vmatprep.subr.bf16.mxu0 0
    %3161 = vmatpush1.bf16.xpose.msra.mxu0 %v3156
    %3162 = vmatprep.subr.bf16.mxu0 0
    %3163 = vmatpush1.bf16.xpose.msra.mxu0 0
    %3164 = vmatprep.subr.bf16.mxu0 0
    %3165 = vmatpush1.bf16.xpose.msra.mxu0 0
    %3166 = vmatprep.subr.bf16.mxu0 0
    %3167 = vmatpush1.bf16.xpose.msra.mxu0 0
    %3168 = vmatprep.subr.bf16.mxu0 0
    %3169 = vmatpush1.bf16.xpose.msra.mxu0 0
    %3170 = vmatprep.subr.bf16.mxu0 0
    %3171 = vmatpush1.bf16.xpose.msra.mxu0 0
    %3172 = vmatprep.subr.bf16.mxu0 0
    %3173 = vmatpush1.bf16.xpose.msra.mxu0 0
    %3174 = vmatprep.subr.bf16.mxu0 0
    %3175 = vmatpush1.bf16.xpose.msra.mxu0 0
    %3176 = vmatprep.subr.bf16.mxu0 0
    %3177 = vmatpush1.bf16.xpose.msra.mxu0 0
    %3178 = vmatprep.subr.bf16.mxu0 0
    %3179 = vmatpush1.bf16.xpose.msra.mxu0 0
    %3180 = vmatprep.subr.bf16.mxu0 0
    %3181 = vmatpush1.bf16.xpose.msra.mxu0 0
    %3182 = vmatprep.subr.bf16.mxu0 0
    %3183 = vmatpush1.bf16.xpose.msra.mxu0 0
    %3184 = vmatprep.subr.bf16.mxu0 0
    %3185 = vmatpush1.bf16.xpose.msra.mxu0 0
    %3186 = vmatprep.subr.bf16.mxu0 0
    %3187 = vmatpush1.bf16.xpose.msra.mxu0 0
    %3188 = vmatprep.subr.bf16.mxu0 0
    %3189 = vmatpush1.bf16.xpose.msra.mxu0 0
    %3190 = vmatprep.mubr.bf16.mxu0 0
    %3191 = vmatmul.mubr.bf16.gmra.mrb[0].mxu0 %v3147
    %v3192 = vpop.f32.mrb[0].mxu0
    %v3193 = vadd.f32 %v680, %v3192
    %v3194 = vpop.f32.mrb[0].mxu0
    %v3195 = vpop.f32.mrb[0].mxu0
    %v3196 = vadd.f32 %v681, %v3195
    %v3197 = vpop.f32.mrb[0].mxu0
    %3198 = vmatprep.mubr.bf16.mxu0 0
    %3199 = vmatmul.mubr.bf16.gmra.mrb[0].mxu0 %v3150
    %v3200 = vpop.f32.mrb[0].mxu0
    %v3201 = vadd.f32 %v682, %v3200
    %v3202 = vpop.f32.mrb[0].mxu0
    %v3203 = vpop.f32.mrb[0].mxu0
    %v3204 = vpop.f32.mrb[0].mxu0
    %3205 = vdwg.mxu0
    %v3206 = vsel %vm1203, %v3193, -inf
    %3207 = vmax.xlane.f32.xlu0 %v3206
    %v3208 = vpop.xlane.xlu0 %3207
    %v3209 = vsel %vm1203, %v3196, -inf
    %3210 = vmax.xlane.f32.xlu0 %v3209
    %v3211 = vpop.xlane.xlu0 %3210
    %v3212 = vsel %vm1210, %v3201, -inf
    %3213 = vmax.xlane.f32.xlu0 %v3212
    %v3214 = vpop.xlane.xlu0 %3213
    %v3215 = vsub.f32 %v3193, %v3208
    %v3216 = vsub.f32 %v3196, %v3211
    %v3217 = vsub.f32 %v3201, %v3214
    %v3218 = vmul.f32 %v3215, 1.442695
    %v3219 = vpow.pop %v3218
    %v3220 = vmul.f32 %v3216, 1.442695
    %v3221 = vpow.pop %v3220
    %v3222 = vmul.f32 %v3217, 1.442695
    %v3223 = vpow.pop %v3222
    %v3224 = vsel %vm1203, %v3219, 0.0
    %3225 = vadd.xlane.f32.xlu0 %v3224
    %v3226 = vpop.xlane.xlu0 %3225
    %v3227 = vsel %vm1203, %v3221, 0.0
    %3228 = vadd.xlane.f32.xlu0 %v3227
    %v3229 = vpop.xlane.xlu0 %3228
    %v3230 = vsel %vm1210, %v3223, 0.0
    %3231 = vadd.xlane.f32.xlu0 %v3230
    %v3232 = vpop.xlane.xlu0 %3231
    %v3233 = vrcp.pop %v3226
    %v3234 = vrcp.pop %v3229
    %v3235 = vrcp.pop %v3232
    %v3236 = vmul.f32 %v3219, %v3233
    %v3237 = vmul.f32 %v3221, %v3234
    %v3238 = vmul.f32 %v3223, %v3235
    %v3239 = vpack.c.bf16 %v3237, %v3236
    %v3240 = vpack.c.bf16 %v3238, %v3238
    %v3242 = vsel %vm1203, %v3239, 0
    %v3245 = vsel %vm1203, %v3240, 0
    %v3248 = vsel %vm1246, %v3145, 0
    %3250 = vmatprep.subr.bf16.mxu0 0
    %3251 = vmatpush1.bf16.msra.mxu0 %v3142
    %3252 = vmatprep.subr.bf16.mxu0 0
    %3253 = vmatpush1.bf16.msra.mxu0 %v3248
    %3254 = vmatprep.subr.bf16.mxu0 0
    %3255 = vmatpush1.bf16.msra.mxu0 0
    %3256 = vmatprep.subr.bf16.mxu0 0
    %3257 = vmatpush1.bf16.msra.mxu0 0
    %3258 = vmatprep.subr.bf16.mxu0 0
    %3259 = vmatpush1.bf16.msra.mxu0 0
    %3260 = vmatprep.subr.bf16.mxu0 0
    %3261 = vmatpush1.bf16.msra.mxu0 0
    %3262 = vmatprep.subr.bf16.mxu0 0
    %3263 = vmatpush1.bf16.msra.mxu0 0
    %3264 = vmatprep.subr.bf16.mxu0 0
    %3265 = vmatpush1.bf16.msra.mxu0 0
    %3266 = vmatprep.subr.bf16.mxu0 0
    %3267 = vmatpush1.bf16.msra.mxu0 0
    %3268 = vmatprep.subr.bf16.mxu0 0
    %3269 = vmatpush1.bf16.msra.mxu0 0
    %3270 = vmatprep.subr.bf16.mxu0 0
    %3271 = vmatpush1.bf16.msra.mxu0 0
    %3272 = vmatprep.subr.bf16.mxu0 0
    %3273 = vmatpush1.bf16.msra.mxu0 0
    %3274 = vmatprep.subr.bf16.mxu0 0
    %3275 = vmatpush1.bf16.msra.mxu0 0
    %3276 = vmatprep.subr.bf16.mxu0 0
    %3277 = vmatpush1.bf16.msra.mxu0 0
    %3278 = vmatprep.subr.bf16.mxu0 0
    %3279 = vmatpush1.bf16.msra.mxu0 0
    %3280 = vmatprep.subr.bf16.mxu0 0
    %3281 = vmatpush1.bf16.msra.mxu0 0
    %3282 = vmatprep.mubr.bf16.mxu0 0
    %3283 = vmatmul.mubr.bf16.gmra.mrb[0].mxu0 %v3242
    %v3284 = vpop.f32.mrb[0].mxu0
    %v3285 = vadd.f32 0.0, %v3284
    %v3286 = vpop.f32.mrb[0].mxu0
    %v3287 = vpop.f32.mrb[0].mxu0
    %v3288 = vadd.f32 0.0, %v3287
    %v3289 = vpop.f32.mrb[0].mxu0
    %3290 = vmatprep.mubr.bf16.mxu0 0
    %3291 = vmatmul.mubr.bf16.gmra.mrb[0].mxu0 %v3245
    %v3292 = vpop.f32.mrb[0].mxu0
    %v3293 = vadd.f32 0.0, %v3292
    %v3294 = vpop.f32.mrb[0].mxu0
    %v3295 = vpop.f32.mrb[0].mxu0
    %v3296 = vpop.f32.mrb[0].mxu0
    %3297 = vdwg.mxu0
    %3300 = vrot.lane.b32.xlu0 %v3140, 96
    %v3301 = vpop.permute.xlu0 %3300
    %3302 = vrot.lane.b32.xlu0 %v3143, 96
    %v3303 = vpop.permute.xlu0 %3302
    %3306 = vrot.lane.b32.xlu0 %v3141, 96
    %v3307 = vpop.permute.xlu0 %3306
    %3308 = vrot.lane.b32.xlu0 %v3144, 96
    %v3309 = vpop.permute.xlu0 %3308
    %v3311 = vsel %vm1142, %v3301, 0
    %v3314 = vsel %vm1142, %v3303, 0
    %v3317 = vsel %vm1142, %v3307, 0
    %v3320 = vsel %vm1142, %v3309, 0
    %3322 = vmatprep.subr.bf16.mxu0 0
    %3323 = vmatpush1.bf16.xpose.msra.mxu0 %v3317
    %3324 = vmatprep.subr.bf16.mxu0 0
    %3325 = vmatpush1.bf16.xpose.msra.mxu0 %v3320
    %3326 = vmatprep.subr.bf16.mxu0 0
    %3327 = vmatpush1.bf16.xpose.msra.mxu0 0
    %3328 = vmatprep.subr.bf16.mxu0 0
    %3329 = vmatpush1.bf16.xpose.msra.mxu0 0
    %3330 = vmatprep.subr.bf16.mxu0 0
    %3331 = vmatpush1.bf16.xpose.msra.mxu0 0
    %3332 = vmatprep.subr.bf16.mxu0 0
    %3333 = vmatpush1.bf16.xpose.msra.mxu0 0
    %3334 = vmatprep.subr.bf16.mxu0 0
    %3335 = vmatpush1.bf16.xpose.msra.mxu0 0
    %3336 = vmatprep.subr.bf16.mxu0 0
    %3337 = vmatpush1.bf16.xpose.msra.mxu0 0
    %3338 = vmatprep.subr.bf16.mxu0 0
    %3339 = vmatpush1.bf16.xpose.msra.mxu0 0
    %3340 = vmatprep.subr.bf16.mxu0 0
    %3341 = vmatpush1.bf16.xpose.msra.mxu0 0
    %3342 = vmatprep.subr.bf16.mxu0 0
    %3343 = vmatpush1.bf16.xpose.msra.mxu0 0
    %3344 = vmatprep.subr.bf16.mxu0 0
    %3345 = vmatpush1.bf16.xpose.msra.mxu0 0
    %3346 = vmatprep.subr.bf16.mxu0 0
    %3347 = vmatpush1.bf16.xpose.msra.mxu0 0
    %3348 = vmatprep.subr.bf16.mxu0 0
    %3349 = vmatpush1.bf16.xpose.msra.mxu0 0
    %3350 = vmatprep.subr.bf16.mxu0 0
    %3351 = vmatpush1.bf16.xpose.msra.mxu0 0
    %3352 = vmatprep.subr.bf16.mxu0 0
    %3353 = vmatpush1.bf16.xpose.msra.mxu0 0
    %3354 = vmatprep.mubr.bf16.mxu0 0
    %3355 = vmatmul.mubr.bf16.gmra.mrb[0].mxu0 %v3311
    %v3356 = vpop.f32.mrb[0].mxu0
    %v3357 = vadd.f32 %v680, %v3356
    %v3358 = vpop.f32.mrb[0].mxu0
    %v3359 = vpop.f32.mrb[0].mxu0
    %v3360 = vadd.f32 %v681, %v3359
    %v3361 = vpop.f32.mrb[0].mxu0
    %3362 = vmatprep.mubr.bf16.mxu0 0
    %3363 = vmatmul.mubr.bf16.gmra.mrb[0].mxu0 %v3314
    %v3364 = vpop.f32.mrb[0].mxu0
    %v3365 = vadd.f32 %v682, %v3364
    %v3366 = vpop.f32.mrb[0].mxu0
    %v3367 = vpop.f32.mrb[0].mxu0
    %v3368 = vpop.f32.mrb[0].mxu0
    %3369 = vdwg.mxu0
    %v3370 = vsel %vm1203, %v3357, -inf
    %3371 = vmax.xlane.f32.xlu0 %v3370
    %v3372 = vpop.xlane.xlu0 %3371
    %v3373 = vsel %vm1203, %v3360, -inf
    %3374 = vmax.xlane.f32.xlu0 %v3373
    %v3375 = vpop.xlane.xlu0 %3374
    %v3376 = vsel %vm1210, %v3365, -inf
    %3377 = vmax.xlane.f32.xlu0 %v3376
    %v3378 = vpop.xlane.xlu0 %3377
    %v3379 = vsub.f32 %v3357, %v3372
    %v3380 = vsub.f32 %v3360, %v3375
    %v3381 = vsub.f32 %v3365, %v3378
    %v3382 = vmul.f32 %v3379, 1.442695
    %v3383 = vpow.pop %v3382
    %v3384 = vmul.f32 %v3380, 1.442695
    %v3385 = vpow.pop %v3384
    %v3386 = vmul.f32 %v3381, 1.442695
    %v3387 = vpow.pop %v3386
    %v3388 = vsel %vm1203, %v3383, 0.0
    %3389 = vadd.xlane.f32.xlu0 %v3388
    %v3390 = vpop.xlane.xlu0 %3389
    %v3391 = vsel %vm1203, %v3385, 0.0
    %3392 = vadd.xlane.f32.xlu0 %v3391
    %v3393 = vpop.xlane.xlu0 %3392
    %v3394 = vsel %vm1210, %v3387, 0.0
    %3395 = vadd.xlane.f32.xlu0 %v3394
    %v3396 = vpop.xlane.xlu0 %3395
    %v3397 = vrcp.pop %v3390
    %v3398 = vrcp.pop %v3393
    %v3399 = vrcp.pop %v3396
    %v3400 = vmul.f32 %v3383, %v3397
    %v3401 = vmul.f32 %v3385, %v3398
    %v3402 = vmul.f32 %v3387, %v3399
    %v3403 = vpack.c.bf16 %v3401, %v3400
    %v3404 = vpack.c.bf16 %v3402, %v3402
    %3407 = vrot.lane.b32.xlu0 %v3142, 96
    %v3408 = vpop.permute.xlu0 %3407
    %3409 = vrot.lane.b32.xlu0 %v3145, 96
    %v3410 = vpop.permute.xlu0 %3409
    %v3413 = vsel %vm1203, %v3403, 0
    %v3416 = vsel %vm1203, %v3404, 0
    %v3419 = vsel %vm1246, %v3410, 0
    %3421 = vmatprep.subr.bf16.mxu0 0
    %3422 = vmatpush1.bf16.msra.mxu0 %v3408
    %3423 = vmatprep.subr.bf16.mxu0 0
    %3424 = vmatpush1.bf16.msra.mxu0 %v3419
    %3425 = vmatprep.subr.bf16.mxu0 0
    %3426 = vmatpush1.bf16.msra.mxu0 0
    %3427 = vmatprep.subr.bf16.mxu0 0
    %3428 = vmatpush1.bf16.msra.mxu0 0
    %3429 = vmatprep.subr.bf16.mxu0 0
    %3430 = vmatpush1.bf16.msra.mxu0 0
    %3431 = vmatprep.subr.bf16.mxu0 0
    %3432 = vmatpush1.bf16.msra.mxu0 0
    %3433 = vmatprep.subr.bf16.mxu0 0
    %3434 = vmatpush1.bf16.msra.mxu0 0
    %3435 = vmatprep.subr.bf16.mxu0 0
    %3436 = vmatpush1.bf16.msra.mxu0 0
    %3437 = vmatprep.subr.bf16.mxu0 0
    %3438 = vmatpush1.bf16.msra.mxu0 0
    %3439 = vmatprep.subr.bf16.mxu0 0
    %3440 = vmatpush1.bf16.msra.mxu0 0
    %3441 = vmatprep.subr.bf16.mxu0 0
    %3442 = vmatpush1.bf16.msra.mxu0 0
    %3443 = vmatprep.subr.bf16.mxu0 0
    %3444 = vmatpush1.bf16.msra.mxu0 0
    %3445 = vmatprep.subr.bf16.mxu0 0
    %3446 = vmatpush1.bf16.msra.mxu0 0
    %3447 = vmatprep.subr.bf16.mxu0 0
    %3448 = vmatpush1.bf16.msra.mxu0 0
    %3449 = vmatprep.subr.bf16.mxu0 0
    %3450 = vmatpush1.bf16.msra.mxu0 0
    %3451 = vmatprep.subr.bf16.mxu0 0
    %3452 = vmatpush1.bf16.msra.mxu0 0
    %3453 = vmatprep.mubr.bf16.mxu0 0
    %3454 = vmatmul.mubr.bf16.gmra.mrb[0].mxu0 %v3413
    %v3455 = vpop.f32.mrb[0].mxu0
    %v3456 = vadd.f32 0.0, %v3455
    %v3457 = vpop.f32.mrb[0].mxu0
    %v3458 = vpop.f32.mrb[0].mxu0
    %v3459 = vadd.f32 0.0, %v3458
    %v3460 = vpop.f32.mrb[0].mxu0
    %3461 = vmatprep.mubr.bf16.mxu0 0
    %3462 = vmatmul.mubr.bf16.gmra.mrb[0].mxu0 %v3416
    %v3463 = vpop.f32.mrb[0].mxu0
    %v3464 = vadd.f32 0.0, %v3463
    %v3465 = vpop.f32.mrb[0].mxu0
    %v3466 = vpop.f32.mrb[0].mxu0
    %v3467 = vpop.f32.mrb[0].mxu0
    %3468 = vdwg.mxu0
    %3469 = vrot.lane.b32.xlu0 %v3140, 64
    %v3470 = vpop.permute.xlu0 %3469
    %3471 = vrot.lane.b32.xlu0 %v3143, 64
    %v3472 = vpop.permute.xlu0 %3471
    %3473 = vrot.lane.b32.xlu0 %v3141, 64
    %v3474 = vpop.permute.xlu0 %3473
    %3475 = vrot.lane.b32.xlu0 %v3144, 64
    %v3476 = vpop.permute.xlu0 %3475
    %v3478 = vsel %vm1142, %v3470, 0
    %v3481 = vsel %vm1142, %v3472, 0
    %v3484 = vsel %vm1142, %v3474, 0
    %v3487 = vsel %vm1142, %v3476, 0
    %3489 = vmatprep.subr.bf16.mxu0 0
    %3490 = vmatpush1.bf16.xpose.msra.mxu0 %v3484
    %3491 = vmatprep.subr.bf16.mxu0 0
    %3492 = vmatpush1.bf16.xpose.msra.mxu0 %v3487
    %3493 = vmatprep.subr.bf16.mxu0 0
    %3494 = vmatpush1.bf16.xpose.msra.mxu0 0
    %3495 = vmatprep.subr.bf16.mxu0 0
    %3496 = vmatpush1.bf16.xpose.msra.mxu0 0
    %3497 = vmatprep.subr.bf16.mxu0 0
    %3498 = vmatpush1.bf16.xpose.msra.mxu0 0
    %3499 = vmatprep.subr.bf16.mxu0 0
    %3500 = vmatpush1.bf16.xpose.msra.mxu0 0
    %3501 = vmatprep.subr.bf16.mxu0 0
    %3502 = vmatpush1.bf16.xpose.msra.mxu0 0
    %3503 = vmatprep.subr.bf16.mxu0 0
    %3504 = vmatpush1.bf16.xpose.msra.mxu0 0
    %3505 = vmatprep.subr.bf16.mxu0 0
    %3506 = vmatpush1.bf16.xpose.msra.mxu0 0
    %3507 = vmatprep.subr.bf16.mxu0 0
    %3508 = vmatpush1.bf16.xpose.msra.mxu0 0
    %3509 = vmatprep.subr.bf16.mxu0 0
    %3510 = vmatpush1.bf16.xpose.msra.mxu0 0
    %3511 = vmatprep.subr.bf16.mxu0 0
    %3512 = vmatpush1.bf16.xpose.msra.mxu0 0
    %3513 = vmatprep.subr.bf16.mxu0 0
    %3514 = vmatpush1.bf16.xpose.msra.mxu0 0
    %3515 = vmatprep.subr.bf16.mxu0 0
    %3516 = vmatpush1.bf16.xpose.msra.mxu0 0
    %3517 = vmatprep.subr.bf16.mxu0 0
    %3518 = vmatpush1.bf16.xpose.msra.mxu0 0
    %3519 = vmatprep.subr.bf16.mxu0 0
    %3520 = vmatpush1.bf16.xpose.msra.mxu0 0
    %3521 = vmatprep.mubr.bf16.mxu0 0
    %3522 = vmatmul.mubr.bf16.gmra.mrb[0].mxu0 %v3478
    %v3523 = vpop.f32.mrb[0].mxu0
    %v3524 = vadd.f32 %v680, %v3523
    %v3525 = vpop.f32.mrb[0].mxu0
    %v3526 = vpop.f32.mrb[0].mxu0
    %v3527 = vadd.f32 %v681, %v3526
    %v3528 = vpop.f32.mrb[0].mxu0
    %3529 = vmatprep.mubr.bf16.mxu0 0
    %3530 = vmatmul.mubr.bf16.gmra.mrb[0].mxu0 %v3481
    %v3531 = vpop.f32.mrb[0].mxu0
    %v3532 = vadd.f32 %v682, %v3531
    %v3533 = vpop.f32.mrb[0].mxu0
    %v3534 = vpop.f32.mrb[0].mxu0
    %v3535 = vpop.f32.mrb[0].mxu0
    %3536 = vdwg.mxu0
    %v3537 = vsel %vm1203, %v3524, -inf
    %3538 = vmax.xlane.f32.xlu0 %v3537
    %v3539 = vpop.xlane.xlu0 %3538
    %v3540 = vsel %vm1203, %v3527, -inf
    %3541 = vmax.xlane.f32.xlu0 %v3540
    %v3542 = vpop.xlane.xlu0 %3541
    %v3543 = vsel %vm1210, %v3532, -inf
    %3544 = vmax.xlane.f32.xlu0 %v3543
    %v3545 = vpop.xlane.xlu0 %3544
    %v3546 = vsub.f32 %v3524, %v3539
    %v3547 = vsub.f32 %v3527, %v3542
    %v3548 = vsub.f32 %v3532, %v3545
    %v3549 = vmul.f32 %v3546, 1.442695
    %v3550 = vpow.pop %v3549
    %v3551 = vmul.f32 %v3547, 1.442695
    %v3552 = vpow.pop %v3551
    %v3553 = vmul.f32 %v3548, 1.442695
    %v3554 = vpow.pop %v3553
    %v3555 = vsel %vm1203, %v3550, 0.0
    %3556 = vadd.xlane.f32.xlu0 %v3555
    %v3557 = vpop.xlane.xlu0 %3556
    %v3558 = vsel %vm1203, %v3552, 0.0
    %3559 = vadd.xlane.f32.xlu0 %v3558
    %v3560 = vpop.xlane.xlu0 %3559
    %v3561 = vsel %vm1210, %v3554, 0.0
    %3562 = vadd.xlane.f32.xlu0 %v3561
    %v3563 = vpop.xlane.xlu0 %3562
    %v3564 = vrcp.pop %v3557
    %v3565 = vrcp.pop %v3560
    %v3566 = vrcp.pop %v3563
    %v3567 = vmul.f32 %v3550, %v3564
    %v3568 = vmul.f32 %v3552, %v3565
    %v3569 = vmul.f32 %v3554, %v3566
    %v3570 = vpack.c.bf16 %v3568, %v3567
    %v3571 = vpack.c.bf16 %v3569, %v3569
    %3572 = vrot.lane.b32.xlu0 %v3142, 64
    %v3573 = vpop.permute.xlu0 %3572
    %3574 = vrot.lane.b32.xlu0 %v3145, 64
    %v3575 = vpop.permute.xlu0 %3574
    %v3578 = vsel %vm1203, %v3570, 0
    %v3581 = vsel %vm1203, %v3571, 0
    %v3584 = vsel %vm1246, %v3575, 0
    %3586 = vmatprep.subr.bf16.mxu0 0
    %3587 = vmatpush1.bf16.msra.mxu0 %v3573
    %3588 = vmatprep.subr.bf16.mxu0 0
    %3589 = vmatpush1.bf16.msra.mxu0 %v3584
    %3590 = vmatprep.subr.bf16.mxu0 0
    %3591 = vmatpush1.bf16.msra.mxu0 0
    %3592 = vmatprep.subr.bf16.mxu0 0
    %3593 = vmatpush1.bf16.msra.mxu0 0
    %3594 = vmatprep.subr.bf16.mxu0 0
    %3595 = vmatpush1.bf16.msra.mxu0 0
    %3596 = vmatprep.subr.bf16.mxu0 0
    %3597 = vmatpush1.bf16.msra.mxu0 0
    %3598 = vmatprep.subr.bf16.mxu0 0
    %3599 = vmatpush1.bf16.msra.mxu0 0
    %3600 = vmatprep.subr.bf16.mxu0 0
    %3601 = vmatpush1.bf16.msra.mxu0 0
    %3602 = vmatprep.subr.bf16.mxu0 0
    %3603 = vmatpush1.bf16.msra.mxu0 0
    %3604 = vmatprep.subr.bf16.mxu0 0
    %3605 = vmatpush1.bf16.msra.mxu0 0
    %3606 = vmatprep.subr.bf16.mxu0 0
    %3607 = vmatpush1.bf16.msra.mxu0 0
    %3608 = vmatprep.subr.bf16.mxu0 0
    %3609 = vmatpush1.bf16.msra.mxu0 0
    %3610 = vmatprep.subr.bf16.mxu0 0
    %3611 = vmatpush1.bf16.msra.mxu0 0
    %3612 = vmatprep.subr.bf16.mxu0 0
    %3613 = vmatpush1.bf16.msra.mxu0 0
    %3614 = vmatprep.subr.bf16.mxu0 0
    %3615 = vmatpush1.bf16.msra.mxu0 0
    %3616 = vmatprep.subr.bf16.mxu0 0
    %3617 = vmatpush1.bf16.msra.mxu0 0
    %3618 = vmatprep.mubr.bf16.mxu0 0
    %3619 = vmatmul.mubr.bf16.gmra.mrb[0].mxu0 %v3578
    %v3620 = vpop.f32.mrb[0].mxu0
    %v3621 = vadd.f32 0.0, %v3620
    %v3622 = vpop.f32.mrb[0].mxu0
    %v3623 = vpop.f32.mrb[0].mxu0
    %v3624 = vadd.f32 0.0, %v3623
    %v3625 = vpop.f32.mrb[0].mxu0
    %3626 = vmatprep.mubr.bf16.mxu0 0
    %3627 = vmatmul.mubr.bf16.gmra.mrb[0].mxu0 %v3581
    %v3628 = vpop.f32.mrb[0].mxu0
    %v3629 = vadd.f32 0.0, %v3628
    %v3630 = vpop.f32.mrb[0].mxu0
    %v3631 = vpop.f32.mrb[0].mxu0
    %v3632 = vpop.f32.mrb[0].mxu0
    %3633 = vdwg.mxu0
    %3634 = vrot.lane.b32.xlu0 %v3140, 32
    %v3635 = vpop.permute.xlu0 %3634
    %3636 = vrot.lane.b32.xlu0 %v3143, 32
    %v3637 = vpop.permute.xlu0 %3636
    %3638 = vrot.lane.b32.xlu0 %v3141, 32
    %v3639 = vpop.permute.xlu0 %3638
    %3640 = vrot.lane.b32.xlu0 %v3144, 32
    %v3641 = vpop.permute.xlu0 %3640
    %v3643 = vsel %vm1142, %v3635, 0
    %v3646 = vsel %vm1142, %v3637, 0
    %v3649 = vsel %vm1142, %v3639, 0
    %v3652 = vsel %vm1142, %v3641, 0
    %3654 = vmatprep.subr.bf16.mxu0 0
    %3655 = vmatpush1.bf16.xpose.msra.mxu0 %v3649
    %3656 = vmatprep.subr.bf16.mxu0 0
    %3657 = vmatpush1.bf16.xpose.msra.mxu0 %v3652
    %3658 = vmatprep.subr.bf16.mxu0 0
    %3659 = vmatpush1.bf16.xpose.msra.mxu0 0
    %3660 = vmatprep.subr.bf16.mxu0 0
    %3661 = vmatpush1.bf16.xpose.msra.mxu0 0
    %3662 = vmatprep.subr.bf16.mxu0 0
    %3663 = vmatpush1.bf16.xpose.msra.mxu0 0
    %3664 = vmatprep.subr.bf16.mxu0 0
    %3665 = vmatpush1.bf16.xpose.msra.mxu0 0
    %3666 = vmatprep.subr.bf16.mxu0 0
    %3667 = vmatpush1.bf16.xpose.msra.mxu0 0
    %3668 = vmatprep.subr.bf16.mxu0 0
    %3669 = vmatpush1.bf16.xpose.msra.mxu0 0
    %3670 = vmatprep.subr.bf16.mxu0 0
    %3671 = vmatpush1.bf16.xpose.msra.mxu0 0
    %3672 = vmatprep.subr.bf16.mxu0 0
    %3673 = vmatpush1.bf16.xpose.msra.mxu0 0
    %3674 = vmatprep.subr.bf16.mxu0 0
    %3675 = vmatpush1.bf16.xpose.msra.mxu0 0
    %3676 = vmatprep.subr.bf16.mxu0 0
    %3677 = vmatpush1.bf16.xpose.msra.mxu0 0
    %3678 = vmatprep.subr.bf16.mxu0 0
    %3679 = vmatpush1.bf16.xpose.msra.mxu0 0
    %3680 = vmatprep.subr.bf16.mxu0 0
    %3681 = vmatpush1.bf16.xpose.msra.mxu0 0
    %3682 = vmatprep.subr.bf16.mxu0 0
    %3683 = vmatpush1.bf16.xpose.msra.mxu0 0
    %3684 = vmatprep.subr.bf16.mxu0 0
    %3685 = vmatpush1.bf16.xpose.msra.mxu0 0
    %3686 = vmatprep.mubr.bf16.mxu0 0
    %3687 = vmatmul.mubr.bf16.gmra.mrb[0].mxu0 %v3643
    %v3688 = vpop.f32.mrb[0].mxu0
    %v3689 = vadd.f32 %v680, %v3688
    %v3690 = vpop.f32.mrb[0].mxu0
    %v3691 = vpop.f32.mrb[0].mxu0
    %v3692 = vadd.f32 %v681, %v3691
    %v3693 = vpop.f32.mrb[0].mxu0
    %3694 = vmatprep.mubr.bf16.mxu0 0
    %3695 = vmatmul.mubr.bf16.gmra.mrb[0].mxu0 %v3646
    %v3696 = vpop.f32.mrb[0].mxu0
    %v3697 = vadd.f32 %v682, %v3696
    %v3698 = vpop.f32.mrb[0].mxu0
    %v3699 = vpop.f32.mrb[0].mxu0
    %v3700 = vpop.f32.mrb[0].mxu0
    %3701 = vdwg.mxu0
    %v3702 = vsel %vm1203, %v3689, -inf
    %3703 = vmax.xlane.f32.xlu0 %v3702
    %v3704 = vpop.xlane.xlu0 %3703
    %v3705 = vsel %vm1203, %v3692, -inf
    %3706 = vmax.xlane.f32.xlu0 %v3705
    %v3707 = vpop.xlane.xlu0 %3706
    %v3708 = vsel %vm1210, %v3697, -inf
    %3709 = vmax.xlane.f32.xlu0 %v3708
    %v3710 = vpop.xlane.xlu0 %3709
    %v3711 = vsub.f32 %v3689, %v3704
    %v3712 = vsub.f32 %v3692, %v3707
    %v3713 = vsub.f32 %v3697, %v3710
    %v3714 = vmul.f32 %v3711, 1.442695
    %v3715 = vpow.pop %v3714
    %v3716 = vmul.f32 %v3712, 1.442695
    %v3717 = vpow.pop %v3716
    %v3718 = vmul.f32 %v3713, 1.442695
    %v3719 = vpow.pop %v3718
    %v3720 = vsel %vm1203, %v3715, 0.0
    %3721 = vadd.xlane.f32.xlu0 %v3720
    %v3722 = vpop.xlane.xlu0 %3721
    %v3723 = vsel %vm1203, %v3717, 0.0
    %3724 = vadd.xlane.f32.xlu0 %v3723
    %v3725 = vpop.xlane.xlu0 %3724
    %v3726 = vsel %vm1210, %v3719, 0.0
    %3727 = vadd.xlane.f32.xlu0 %v3726
    %v3728 = vpop.xlane.xlu0 %3727
    %v3729 = vrcp.pop %v3722
    %v3730 = vrcp.pop %v3725
    %v3731 = vrcp.pop %v3728
    %v3732 = vmul.f32 %v3715, %v3729
    %v3733 = vmul.f32 %v3717, %v3730
    %v3734 = vmul.f32 %v3719, %v3731
    %v3735 = vpack.c.bf16 %v3733, %v3732
    %v3736 = vpack.c.bf16 %v3734, %v3734
    %3737 = vrot.lane.b32.xlu0 %v3142, 32
    %v3738 = vpop.permute.xlu0 %3737
    %3739 = vrot.lane.b32.xlu0 %v3145, 32
    %v3740 = vpop.permute.xlu0 %3739
    %v3743 = vsel %vm1203, %v3735, 0
    %v3746 = vsel %vm1203, %v3736, 0
    %v3749 = vsel %vm1246, %v3740, 0
    %3751 = vmatprep.subr.bf16.mxu0 0
    %3752 = vmatpush1.bf16.msra.mxu0 %v3738
    %3753 = vmatprep.subr.bf16.mxu0 0
    %3754 = vmatpush1.bf16.msra.mxu0 %v3749
    %3755 = vmatprep.subr.bf16.mxu0 0
    %3756 = vmatpush1.bf16.msra.mxu0 0
    %3757 = vmatprep.subr.bf16.mxu0 0
    %3758 = vmatpush1.bf16.msra.mxu0 0
    %3759 = vmatprep.subr.bf16.mxu0 0
    %3760 = vmatpush1.bf16.msra.mxu0 0
    %3761 = vmatprep.subr.bf16.mxu0 0
    %3762 = vmatpush1.bf16.msra.mxu0 0
    %3763 = vmatprep.subr.bf16.mxu0 0
    %3764 = vmatpush1.bf16.msra.mxu0 0
    %3765 = vmatprep.subr.bf16.mxu0 0
    %3766 = vmatpush1.bf16.msra.mxu0 0
    %3767 = vmatprep.subr.bf16.mxu0 0
    %3768 = vmatpush1.bf16.msra.mxu0 0
    %3769 = vmatprep.subr.bf16.mxu0 0
    %3770 = vmatpush1.bf16.msra.mxu0 0
    %3771 = vmatprep.subr.bf16.mxu0 0
    %3772 = vmatpush1.bf16.msra.mxu0 0
    %3773 = vmatprep.subr.bf16.mxu0 0
    %3774 = vmatpush1.bf16.msra.mxu0 0
    %3775 = vmatprep.subr.bf16.mxu0 0
    %3776 = vmatpush1.bf16.msra.mxu0 0
    %3777 = vmatprep.subr.bf16.mxu0 0
    %3778 = vmatpush1.bf16.msra.mxu0 0
    %3779 = vmatprep.subr.bf16.mxu0 0
    %3780 = vmatpush1.bf16.msra.mxu0 0
    %3781 = vmatprep.subr.bf16.mxu0 0
    %3782 = vmatpush1.bf16.msra.mxu0 0
    %3783 = vmatprep.mubr.bf16.mxu0 0
    %3784 = vmatmul.mubr.bf16.gmra.mrb[0].mxu0 %v3743
    %v3785 = vpop.f32.mrb[0].mxu0
    %v3786 = vadd.f32 0.0, %v3785
    %v3787 = vpop.f32.mrb[0].mxu0
    %v3788 = vpop.f32.mrb[0].mxu0
    %v3789 = vadd.f32 0.0, %v3788
    %v3790 = vpop.f32.mrb[0].mxu0
    %3791 = vmatprep.mubr.bf16.mxu0 0
    %3792 = vmatmul.mubr.bf16.gmra.mrb[0].mxu0 %v3746
    %v3793 = vpop.f32.mrb[0].mxu0
    %v3794 = vadd.f32 0.0, %v3793
    %v3795 = vpop.f32.mrb[0].mxu0
    %v3796 = vpop.f32.mrb[0].mxu0
    %v3797 = vpop.f32.mrb[0].mxu0
    %3798 = vdwg.mxu0
    %3802 = vrot.lane.b32.xlu0 %v3456, 32
    %v3803 = vpop.permute.xlu0 %3802
    %3804 = vrot.lane.b32.xlu0 %v3459, 32
    %v3805 = vpop.permute.xlu0 %3804
    %3806 = vrot.lane.b32.xlu0 %v3464, 32
    %v3807 = vpop.permute.xlu0 %3806
    %3814 = vrot.lane.b32.xlu0 %v3621, 64
    %v3815 = vpop.permute.xlu0 %3814
    %3816 = vrot.lane.b32.xlu0 %v3624, 64
    %v3817 = vpop.permute.xlu0 %3816
    %3818 = vrot.lane.b32.xlu0 %v3629, 64
    %v3819 = vpop.permute.xlu0 %3818
    %3826 = vrot.lane.b32.xlu0 %v3786, 96
    %v3827 = vpop.permute.xlu0 %3826
    %3828 = vrot.lane.b32.xlu0 %v3789, 96
    %v3829 = vpop.permute.xlu0 %3828
    %3830 = vrot.lane.b32.xlu0 %v3794, 96
    %v3831 = vpop.permute.xlu0 %3830
    %v3835 = vsel %vm1142, %v3285, %v3803
    %v3836 = vsel %vm1142, %v3288, %v3805
    %v3837 = vsel %vm1142, %v3293, %v3807
    %v3838 = vsel %vm1838, %v3835, %v3815
    %v3839 = vsel %vm1838, %v3836, %v3817
    %v3840 = vsel %vm1838, %v3837, %v3819
    %v3841 = vsel %vm1842, %v3838, %v3827
    %v3842 = vsel %vm1842, %v3839, %v3829
    %v3843 = vsel %vm1842, %v3840, %v3831
    %v3844 = vpack.c.bf16 %v3842, %v3841
    %v3845 = vpack.c.bf16 %v3843, %v3843
    %v3847 = vlaneseq
    %v3848 = vshrl.u32 %v3847, 7
    %v3849 = vsub.s32 0, %v3848
    %v3850 = vrot.slane %v2731, %v3849
    %v3868 = vunpack.c.l.b16 %v2714
    %v3869 = vunpack.c.l.b16 %v2715
    %v3870 = vunpack.c.l.b16 %v2716
    %v3871 = vunpack.c.l.b16 %v2717
    %v3872 = vunpack.c.l.b16 %v2718
    %v3873 = vunpack.c.l.b16 %v2719
    %v3874 = vunpack.c.l.b16 %v2720
    %v3875 = vunpack.c.l.b16 %v2721
    %v3876 = vunpack.c.l.b16 %v2722
    %v3877 = vunpack.c.l.b16 %v2723
    %v3878 = vunpack.c.l.b16 %v2724
    %v3879 = vunpack.c.l.b16 %v2725
    %v3880 = vunpack.c.l.b16 %v2726
    %v3881 = vunpack.c.l.b16 %v2727
    %v3882 = vunpack.c.l.b16 %v2728
    %v3883 = vunpack.c.l.b16 %v2729
    %v3884 = vpack.c.b16 %v3869, %v3868
    %v3885 = vpack.c.b16 %v3871, %v3870
    %v3886 = vpack.c.b16 %v3873, %v3872
    %v3887 = vpack.c.b16 %v3875, %v3874
    %v3888 = vpack.c.b16 %v3877, %v3876
    %v3889 = vpack.c.b16 %v3879, %v3878
    %v3890 = vpack.c.b16 %v3881, %v3880
    %v3891 = vpack.c.b16 %v3883, %v3882
    %3900 = vmatprep.subr.bf16.mxu0 0
    %3901 = vmatpush1.bf16.msra.mxu0 %v3884
    %3902 = vmatprep.subr.bf16.mxu0 0
    %3903 = vmatpush1.bf16.msra.mxu0 %v3885
    %3904 = vmatprep.subr.bf16.mxu0 0
    %3905 = vmatpush1.bf16.msra.mxu0 %v3886
    %3906 = vmatprep.subr.bf16.mxu0 0
    %3907 = vmatpush1.bf16.msra.mxu0 %v3887
    %3908 = vmatprep.subr.bf16.mxu0 0
    %3909 = vmatpush1.bf16.msra.mxu0 %v3888
    %3910 = vmatprep.subr.bf16.mxu0 0
    %3911 = vmatpush1.bf16.msra.mxu0 %v3889
    %3912 = vmatprep.subr.bf16.mxu0 0
    %3913 = vmatpush1.bf16.msra.mxu0 %v3890
    %3914 = vmatprep.subr.bf16.mxu0 0
    %3915 = vmatpush1.bf16.msra.mxu0 %v3891
    %3916 = vmatprep.subr.bf16.mxu0 0
    %3917 = vmatpush1.bf16.msra.mxu0 0
    %3918 = vmatprep.subr.bf16.mxu0 0
    %3919 = vmatpush1.bf16.msra.mxu0 0
    %3920 = vmatprep.subr.bf16.mxu0 0
    %3921 = vmatpush1.bf16.msra.mxu0 0
    %3922 = vmatprep.subr.bf16.mxu0 0
    %3923 = vmatpush1.bf16.msra.mxu0 0
    %3924 = vmatprep.subr.bf16.mxu0 0
    %3925 = vmatpush1.bf16.msra.mxu0 0
    %3926 = vmatprep.subr.bf16.mxu0 0
    %3927 = vmatpush1.bf16.msra.mxu0 0
    %3928 = vmatprep.subr.bf16.mxu0 0
    %3929 = vmatpush1.bf16.msra.mxu0 0
    %3930 = vmatprep.subr.bf16.mxu0 0
    %3931 = vmatpush1.bf16.msra.mxu0 0
    %3932 = vmatprep.mubr.bf16.mxu0 0
    %3933 = vmatmul.mubr.bf16.gmra.mrb[0].mxu0 %v3844
    %v3934 = vpop.f32.mrb[0].mxu0
    %v3935 = vadd.f32 %v3850, %v3934
    %v3936 = vpop.f32.mrb[0].mxu0
    %v3937 = vpop.f32.mrb[0].mxu0
    %v3938 = vadd.f32 %v3850, %v3937
    %v3939 = vpop.f32.mrb[0].mxu0
    %3940 = vmatprep.mubr.bf16.mxu0 0
    %3941 = vmatmul.mubr.bf16.gmra.mrb[0].mxu0 %v3845
    %v3942 = vpop.f32.mrb[0].mxu0
    %v3943 = vadd.f32 %v3850, %v3942
    %v3944 = vpop.f32.mrb[0].mxu0
    %v3945 = vpop.f32.mrb[0].mxu0
    %v3946 = vpop.f32.mrb[0].mxu0
    %3947 = vdwg.mxu0
    %v3949 = vlaneseq
    %v3950 = vshrl.u32 %v3949, 7
    %v3951 = vsub.s32 0, %v3950
    %v3952 = vrot.slane %v2733, %v3951
    %v3954 = vmul.f32 %v3935, %v3952
    %v3955 = vmul.f32 %v3938, %v3952
    %v3956 = vmul.f32 %v3943, %v3952
    %v3957 = vadd.f32 %v2671, %v3954
    %v3958 = vadd.f32 %v2672, %v3955
    %v3959 = vadd.f32 %v2673, %v3956
    %3960 = vadd.xlane.f32.xlu0 %v3957
    %v3961 = vpop.xlane.xlu0 %3960
    %3962 = vadd.xlane.f32.xlu0 %v3958
    %v3963 = vpop.xlane.xlu0 %3962
    %v3964 = vsel %vm678, %v3959, 0.0
    %3965 = vadd.xlane.f32.xlu0 %v3964
    %v3966 = vpop.xlane.xlu0 %3965
    %v3967 = vmul.f32 %v3961, %v844
    %v3968 = vmul.f32 %v3963, %v844
    %v3969 = vmul.f32 %v3966, %v844
    %v3970 = vsub.f32 %v3957, %v3967
    %v3971 = vsub.f32 %v3958, %v3968
    %v3972 = vsub.f32 %v3959, %v3969
    %v3973 = vmul.f32 %v3970, %v3970
    %v3974 = vmul.f32 %v3971, %v3971
    %v3975 = vmul.f32 %v3972, %v3972
    %3976 = vadd.xlane.f32.xlu0 %v3973
    %v3977 = vpop.xlane.xlu0 %3976
    %3978 = vadd.xlane.f32.xlu0 %v3974
    %v3979 = vpop.xlane.xlu0 %3978
    %v3980 = vsel %vm678, %v3975, 0.0
    %3981 = vadd.xlane.f32.xlu0 %v3980
    %v3982 = vpop.xlane.xlu0 %3981
    %v3983 = vmul.f32 %v3977, %v844
    %v3984 = vmul.f32 %v3979, %v844
    %v3985 = vmul.f32 %v3982, %v844
    %v3986 = vadd.f32 %v3983, 1e-06
    %v3987 = vadd.f32 %v3984, 1e-06
    %v3988 = vadd.f32 %v3985, 1e-06
    %v3989 = vrsqrt.pop %v3986
    %v3990 = vrsqrt.pop %v3987
    %v3991 = vrsqrt.pop %v3988
    %v3992 = vmul.f32 %v3970, %v3989
    %v3993 = vmul.f32 %v3971, %v3990
    %v3994 = vmul.f32 %v3972, %v3991
    %v3996 = vlaneseq
    %v3997 = vshrl.u32 %v3996, 7
    %v3998 = vsub.s32 0, %v3997
    %v3999 = vrot.slane %v2735, %v3998
    %v4001 = vmul.f32 %v3992, %v3999
    %v4002 = vmul.f32 %v3993, %v3999
    %v4003 = vmul.f32 %v3994, %v3999
    %v4005 = vlaneseq
    %v4006 = vshrl.u32 %v4005, 7
    %v4007 = vsub.s32 0, %v4006
    %v4008 = vrot.slane %v2737, %v4007
    %v4010 = vadd.f32 %v4001, %v4008
    %v4011 = vadd.f32 %v4002, %v4008
    %v4012 = vadd.f32 %v4003, %v4008
    %v4013 = vpack.c.bf16 %v4011, %v4010
    %v4014 = vpack.c.bf16 %v4012, %v4012
    %v4016 = vlaneseq
    %v4017 = vshrl.u32 %v4016, 7
    %v4018 = vsub.s32 0, %v4017
    %v4019 = vrot.slane %v2772, %v4018
    %v4020 = vlaneseq
    %v4021 = vshrl.u32 %v4020, 7
    %v4022 = vsub.s32 1, %v4021
    %v4023 = vrot.slane %v2772, %v4022
    %v4024 = vlaneseq
    %v4025 = vshrl.u32 %v4024, 7
    %v4026 = vsub.s32 2, %v4025
    %v4027 = vrot.slane %v2772, %v4026
    %v4028 = vlaneseq
    %v4029 = vshrl.u32 %v4028, 7
    %v4030 = vsub.s32 3, %v4029
    %v4031 = vrot.slane %v2772, %v4030
    %v4068 = vunpack.c.l.b16 %v2739
    %v4069 = vunpack.c.h.b16 %v2739
    %v4070 = vunpack.c.l.b16 %v2740
    %v4071 = vunpack.c.h.b16 %v2740
    %v4072 = vunpack.c.l.b16 %v2741
    %v4073 = vunpack.c.h.b16 %v2741
    %v4074 = vunpack.c.l.b16 %v2742
    %v4075 = vunpack.c.h.b16 %v2742
    %v4076 = vunpack.c.l.b16 %v2743
    %v4077 = vunpack.c.h.b16 %v2743
    %v4078 = vunpack.c.l.b16 %v2744
    %v4079 = vunpack.c.h.b16 %v2744
    %v4080 = vunpack.c.l.b16 %v2745
    %v4081 = vunpack.c.h.b16 %v2745
    %v4082 = vunpack.c.l.b16 %v2746
    %v4083 = vunpack.c.h.b16 %v2746
    %v4084 = vunpack.c.l.b16 %v2747
    %v4085 = vunpack.c.h.b16 %v2747
    %v4086 = vunpack.c.l.b16 %v2748
    %v4087 = vunpack.c.h.b16 %v2748
    %v4088 = vunpack.c.l.b16 %v2749
    %v4089 = vunpack.c.h.b16 %v2749
    %v4090 = vunpack.c.l.b16 %v2750
    %v4091 = vunpack.c.h.b16 %v2750
    %v4092 = vunpack.c.l.b16 %v2751
    %v4093 = vunpack.c.h.b16 %v2751
    %v4094 = vunpack.c.l.b16 %v2752
    %v4095 = vunpack.c.h.b16 %v2752
    %v4096 = vunpack.c.l.b16 %v2753
    %v4097 = vunpack.c.h.b16 %v2753
    %v4098 = vunpack.c.l.b16 %v2754
    %v4099 = vunpack.c.h.b16 %v2754
    %v4100 = vunpack.c.l.b16 %v2755
    %v4101 = vunpack.c.h.b16 %v2755
    %v4102 = vunpack.c.l.b16 %v2756
    %v4103 = vunpack.c.h.b16 %v2756
    %v4104 = vunpack.c.l.b16 %v2757
    %v4105 = vunpack.c.h.b16 %v2757
    %v4106 = vunpack.c.l.b16 %v2758
    %v4107 = vunpack.c.h.b16 %v2758
    %v4108 = vunpack.c.l.b16 %v2759
    %v4109 = vunpack.c.h.b16 %v2759
    %v4110 = vunpack.c.l.b16 %v2760
    %v4111 = vunpack.c.h.b16 %v2760
    %v4112 = vunpack.c.l.b16 %v2761
    %v4113 = vunpack.c.h.b16 %v2761
    %v4114 = vunpack.c.l.b16 %v2762
    %v4115 = vunpack.c.h.b16 %v2762
    %v4116 = vunpack.c.l.b16 %v2763
    %v4117 = vunpack.c.h.b16 %v2763
    %v4118 = vunpack.c.l.b16 %v2764
    %v4119 = vunpack.c.h.b16 %v2764
    %v4120 = vunpack.c.l.b16 %v2765
    %v4121 = vunpack.c.h.b16 %v2765
    %v4122 = vunpack.c.l.b16 %v2766
    %v4123 = vunpack.c.h.b16 %v2766
    %v4124 = vunpack.c.l.b16 %v2767
    %v4125 = vunpack.c.h.b16 %v2767
    %v4126 = vunpack.c.l.b16 %v2768
    %v4127 = vunpack.c.h.b16 %v2768
    %v4128 = vunpack.c.l.b16 %v2769
    %v4129 = vunpack.c.h.b16 %v2769
    %v4130 = vunpack.c.l.b16 %v2770
    %v4131 = vunpack.c.h.b16 %v2770
    %v4132 = vpack.c.b16 %v4072, %v4068
    %v4133 = vpack.c.b16 %v4073, %v4069
    %v4134 = vpack.c.b16 %v4074, %v4070
    %v4135 = vpack.c.b16 %v4075, %v4071
    %v4136 = vpack.c.b16 %v4080, %v4076
    %v4137 = vpack.c.b16 %v4081, %v4077
    %v4138 = vpack.c.b16 %v4082, %v4078
    %v4139 = vpack.c.b16 %v4083, %v4079
    %v4140 = vpack.c.b16 %v4088, %v4084
    %v4141 = vpack.c.b16 %v4089, %v4085
    %v4142 = vpack.c.b16 %v4090, %v4086
    %v4143 = vpack.c.b16 %v4091, %v4087
    %v4144 = vpack.c.b16 %v4096, %v4092
    %v4145 = vpack.c.b16 %v4097, %v4093
    %v4146 = vpack.c.b16 %v4098, %v4094
    %v4147 = vpack.c.b16 %v4099, %v4095
    %v4148 = vpack.c.b16 %v4104, %v4100
    %v4149 = vpack.c.b16 %v4105, %v4101
    %v4150 = vpack.c.b16 %v4106, %v4102
    %v4151 = vpack.c.b16 %v4107, %v4103
    %v4152 = vpack.c.b16 %v4112, %v4108
    %v4153 = vpack.c.b16 %v4113, %v4109
    %v4154 = vpack.c.b16 %v4114, %v4110
    %v4155 = vpack.c.b16 %v4115, %v4111
    %v4156 = vpack.c.b16 %v4120, %v4116
    %v4157 = vpack.c.b16 %v4121, %v4117
    %v4158 = vpack.c.b16 %v4122, %v4118
    %v4159 = vpack.c.b16 %v4123, %v4119
    %v4160 = vpack.c.b16 %v4128, %v4124
    %v4161 = vpack.c.b16 %v4129, %v4125
    %v4162 = vpack.c.b16 %v4130, %v4126
    %v4163 = vpack.c.b16 %v4131, %v4127
    %4196 = vmatprep.subr.bf16.mxu0 %v4133
    %4197 = vmatpush1.bf16.msra.mxu0 %v4132
    %4198 = vmatprep.subr.bf16.mxu0 %v4137
    %4199 = vmatpush1.bf16.msra.mxu0 %v4136
    %4200 = vmatprep.subr.bf16.mxu0 %v4141
    %4201 = vmatpush1.bf16.msra.mxu0 %v4140
    %4202 = vmatprep.subr.bf16.mxu0 %v4145
    %4203 = vmatpush1.bf16.msra.mxu0 %v4144
    %4204 = vmatprep.subr.bf16.mxu0 %v4149
    %4205 = vmatpush1.bf16.msra.mxu0 %v4148
    %4206 = vmatprep.subr.bf16.mxu0 %v4153
    %4207 = vmatpush1.bf16.msra.mxu0 %v4152
    %4208 = vmatprep.subr.bf16.mxu0 %v4157
    %4209 = vmatpush1.bf16.msra.mxu0 %v4156
    %4210 = vmatprep.subr.bf16.mxu0 %v4161
    %4211 = vmatpush1.bf16.msra.mxu0 %v4160
    %4212 = vmatprep.subr.bf16.mxu0 0
    %4213 = vmatpush1.bf16.msra.mxu0 0
    %4214 = vmatprep.subr.bf16.mxu0 0
    %4215 = vmatpush1.bf16.msra.mxu0 0
    %4216 = vmatprep.subr.bf16.mxu0 0
    %4217 = vmatpush1.bf16.msra.mxu0 0
    %4218 = vmatprep.subr.bf16.mxu0 0
    %4219 = vmatpush1.bf16.msra.mxu0 0
    %4220 = vmatprep.subr.bf16.mxu0 0
    %4221 = vmatpush1.bf16.msra.mxu0 0
    %4222 = vmatprep.subr.bf16.mxu0 0
    %4223 = vmatpush1.bf16.msra.mxu0 0
    %4224 = vmatprep.subr.bf16.mxu0 0
    %4225 = vmatpush1.bf16.msra.mxu0 0
    %4226 = vmatprep.subr.bf16.mxu0 0
    %4227 = vmatpush1.bf16.msra.mxu0 0
    %4228 = vmatprep.mubr.bf16.mxu0 0
    %4229 = vmatmul.mubr.bf16.gmra.mrb[0].mxu0 %v4013
    %v4230 = vpop.f32.mrb[0].mxu0
    %v4231 = vadd.f32 %v4019, %v4230
    %v4232 = vpop.f32.mrb[0].mxu0
    %v4233 = vadd.f32 %v4023, %v4232
    %v4234 = vpop.f32.mrb[0].mxu0
    %v4235 = vadd.f32 %v4019, %v4234
    %v4236 = vpop.f32.mrb[0].mxu0
    %v4237 = vadd.f32 %v4023, %v4236
    %4238 = vmatprep.mubr.bf16.mxu0 0
    %4239 = vmatmul.mubr.bf16.gmra.mrb[0].mxu0 %v4014
    %v4240 = vpop.f32.mrb[0].mxu0
    %v4241 = vadd.f32 %v4019, %v4240
    %v4242 = vpop.f32.mrb[0].mxu0
    %v4243 = vadd.f32 %v4023, %v4242
    %v4244 = vpop.f32.mrb[0].mxu0
    %v4245 = vpop.f32.mrb[0].mxu0
    %4246 = vdwg.mxu0
    %4247 = vmatprep.subr.bf16.mxu0 %v4135
    %4248 = vmatpush1.bf16.msra.mxu0 %v4134
    %4249 = vmatprep.subr.bf16.mxu0 %v4139
    %4250 = vmatpush1.bf16.msra.mxu0 %v4138
    %4251 = vmatprep.subr.bf16.mxu0 %v4143
    %4252 = vmatpush1.bf16.msra.mxu0 %v4142
    %4253 = vmatprep.subr.bf16.mxu0 %v4147
    %4254 = vmatpush1.bf16.msra.mxu0 %v4146
    %4255 = vmatprep.subr.bf16.mxu0 %v4151
    %4256 = vmatpush1.bf16.msra.mxu0 %v4150
    %4257 = vmatprep.subr.bf16.mxu0 %v4155
    %4258 = vmatpush1.bf16.msra.mxu0 %v4154
    %4259 = vmatprep.subr.bf16.mxu0 %v4159
    %4260 = vmatpush1.bf16.msra.mxu0 %v4158
    %4261 = vmatprep.subr.bf16.mxu0 %v4163
    %4262 = vmatpush1.bf16.msra.mxu0 %v4162
    %4263 = vmatprep.subr.bf16.mxu0 0
    %4264 = vmatpush1.bf16.msra.mxu0 0
    %4265 = vmatprep.subr.bf16.mxu0 0
    %4266 = vmatpush1.bf16.msra.mxu0 0
    %4267 = vmatprep.subr.bf16.mxu0 0
    %4268 = vmatpush1.bf16.msra.mxu0 0
    %4269 = vmatprep.subr.bf16.mxu0 0
    %4270 = vmatpush1.bf16.msra.mxu0 0
    %4271 = vmatprep.subr.bf16.mxu0 0
    %4272 = vmatpush1.bf16.msra.mxu0 0
    %4273 = vmatprep.subr.bf16.mxu0 0
    %4274 = vmatpush1.bf16.msra.mxu0 0
    %4275 = vmatprep.subr.bf16.mxu0 0
    %4276 = vmatpush1.bf16.msra.mxu0 0
    %4277 = vmatprep.subr.bf16.mxu0 0
    %4278 = vmatpush1.bf16.msra.mxu0 0
    %4279 = vmatprep.mubr.bf16.mxu0 0
    %4280 = vmatmul.mubr.bf16.gmra.mrb[0].mxu0 %v4013
    %v4281 = vpop.f32.mrb[0].mxu0
    %v4282 = vadd.f32 %v4027, %v4281
    %v4283 = vpop.f32.mrb[0].mxu0
    %v4284 = vadd.f32 %v4031, %v4283
    %v4285 = vpop.f32.mrb[0].mxu0
    %v4286 = vadd.f32 %v4027, %v4285
    %v4287 = vpop.f32.mrb[0].mxu0
    %v4288 = vadd.f32 %v4031, %v4287
    %4289 = vmatprep.mubr.bf16.mxu0 0
    %4290 = vmatmul.mubr.bf16.gmra.mrb[0].mxu0 %v4014
    %v4291 = vpop.f32.mrb[0].mxu0
    %v4292 = vadd.f32 %v4027, %v4291
    %v4293 = vpop.f32.mrb[0].mxu0
    %v4294 = vadd.f32 %v4031, %v4293
    %v4295 = vpop.f32.mrb[0].mxu0
    %v4296 = vpop.f32.mrb[0].mxu0
    %4297 = vdwg.mxu0
    %v4298 = vmul.f32 %v4231, 0.5
    %v4299 = vmul.f32 %v4233, 0.5
    %v4300 = vmul.f32 %v4282, 0.5
    %v4301 = vmul.f32 %v4284, 0.5
    %v4302 = vmul.f32 %v4235, 0.5
    %v4303 = vmul.f32 %v4237, 0.5
    %v4304 = vmul.f32 %v4286, 0.5
    %v4305 = vmul.f32 %v4288, 0.5
    %v4306 = vmul.f32 %v4241, 0.5
    %v4307 = vmul.f32 %v4243, 0.5
    %v4308 = vmul.f32 %v4292, 0.5
    %v4309 = vmul.f32 %v4294, 0.5
    %v4310 = vmul.f32 %v4231, 0.70710677
    %v4311 = vmul.f32 %v4233, 0.70710677
    %v4312 = vmul.f32 %v4282, 0.70710677
    %v4313 = vmul.f32 %v4284, 0.70710677
    %v4314 = vmul.f32 %v4235, 0.70710677
    %v4315 = vmul.f32 %v4237, 0.70710677
    %v4316 = vmul.f32 %v4286, 0.70710677
    %v4317 = vmul.f32 %v4288, 0.70710677
    %v4318 = vmul.f32 %v4241, 0.70710677
    %v4319 = vmul.f32 %v4243, 0.70710677
    %v4320 = vmul.f32 %v4292, 0.70710677
    %v4321 = vmul.f32 %v4294, 0.70710677
    %v4322 = verf.f32.pop %v4310
    %v4323 = verf.f32.pop %v4311
    %v4324 = verf.f32.pop %v4312
    %v4325 = verf.f32.pop %v4313
    %v4326 = verf.f32.pop %v4314
    %v4327 = verf.f32.pop %v4315
    %v4328 = verf.f32.pop %v4316
    %v4329 = verf.f32.pop %v4317
    %v4330 = verf.f32.pop %v4318
    %v4331 = verf.f32.pop %v4319
    %v4332 = verf.f32.pop %v4320
    %v4333 = verf.f32.pop %v4321
    %v4334 = vadd.f32 %v4322, 1.0
    %v4335 = vadd.f32 %v4323, 1.0
    %v4336 = vadd.f32 %v4324, 1.0
    %v4337 = vadd.f32 %v4325, 1.0
    %v4338 = vadd.f32 %v4326, 1.0
    %v4339 = vadd.f32 %v4327, 1.0
    %v4340 = vadd.f32 %v4328, 1.0
    %v4341 = vadd.f32 %v4329, 1.0
    %v4342 = vadd.f32 %v4330, 1.0
    %v4343 = vadd.f32 %v4331, 1.0
    %v4344 = vadd.f32 %v4332, 1.0
    %v4345 = vadd.f32 %v4333, 1.0
    %v4346 = vmul.f32 %v4298, %v4334
    %v4347 = vmul.f32 %v4299, %v4335
    %v4348 = vmul.f32 %v4300, %v4336
    %v4349 = vmul.f32 %v4301, %v4337
    %v4350 = vmul.f32 %v4302, %v4338
    %v4351 = vmul.f32 %v4303, %v4339
    %v4352 = vmul.f32 %v4304, %v4340
    %v4353 = vmul.f32 %v4305, %v4341
    %v4354 = vmul.f32 %v4306, %v4342
    %v4355 = vmul.f32 %v4307, %v4343
    %v4356 = vmul.f32 %v4308, %v4344
    %v4357 = vmul.f32 %v4309, %v4345
    %v4358 = vpack.c.bf16 %v4350, %v4346
    %v4359 = vpack.c.bf16 %v4351, %v4347
    %v4360 = vpack.c.bf16 %v4352, %v4348
    %v4361 = vpack.c.bf16 %v4353, %v4349
    %v4362 = vpack.c.bf16 %v4354, %v4354
    %v4363 = vpack.c.bf16 %v4355, %v4355
    %v4364 = vpack.c.bf16 %v4356, %v4356
    %v4365 = vpack.c.bf16 %v4357, %v4357
    %v4367 = vlaneseq
    %v4368 = vshrl.u32 %v4367, 7
    %v4369 = vsub.s32 0, %v4368
    %v4370 = vrot.slane %v2839, %v4369
    %v4436 = vunpack.c.l.b16 %v2774
    %v4437 = vunpack.c.l.b16 %v2775
    %v4438 = vunpack.c.l.b16 %v2776
    %v4439 = vunpack.c.l.b16 %v2777
    %v4440 = vunpack.c.l.b16 %v2778
    %v4441 = vunpack.c.l.b16 %v2779
    %v4442 = vunpack.c.l.b16 %v2780
    %v4443 = vunpack.c.l.b16 %v2781
    %v4444 = vunpack.c.l.b16 %v2782
    %v4445 = vunpack.c.l.b16 %v2783
    %v4446 = vunpack.c.l.b16 %v2784
    %v4447 = vunpack.c.l.b16 %v2785
    %v4448 = vunpack.c.l.b16 %v2786
    %v4449 = vunpack.c.l.b16 %v2787
    %v4450 = vunpack.c.l.b16 %v2788
    %v4451 = vunpack.c.l.b16 %v2789
    %v4452 = vunpack.c.l.b16 %v2790
    %v4453 = vunpack.c.l.b16 %v2791
    %v4454 = vunpack.c.l.b16 %v2792
    %v4455 = vunpack.c.l.b16 %v2793
    %v4456 = vunpack.c.l.b16 %v2794
    %v4457 = vunpack.c.l.b16 %v2795
    %v4458 = vunpack.c.l.b16 %v2796
    %v4459 = vunpack.c.l.b16 %v2797
    %v4460 = vunpack.c.l.b16 %v2798
    %v4461 = vunpack.c.l.b16 %v2799
    %v4462 = vunpack.c.l.b16 %v2800
    %v4463 = vunpack.c.l.b16 %v2801
    %v4464 = vunpack.c.l.b16 %v2802
    %v4465 = vunpack.c.l.b16 %v2803
    %v4466 = vunpack.c.l.b16 %v2804
    %v4467 = vunpack.c.l.b16 %v2805
    %v4468 = vunpack.c.l.b16 %v2806
    %v4469 = vunpack.c.l.b16 %v2807
    %v4470 = vunpack.c.l.b16 %v2808
    %v4471 = vunpack.c.l.b16 %v2809
    %v4472 = vunpack.c.l.b16 %v2810
    %v4473 = vunpack.c.l.b16 %v2811
    %v4474 = vunpack.c.l.b16 %v2812
    %v4475 = vunpack.c.l.b16 %v2813
    %v4476 = vunpack.c.l.b16 %v2814
    %v4477 = vunpack.c.l.b16 %v2815
    %v4478 = vunpack.c.l.b16 %v2816
    %v4479 = vunpack.c.l.b16 %v2817
    %v4480 = vunpack.c.l.b16 %v2818
    %v4481 = vunpack.c.l.b16 %v2819
    %v4482 = vunpack.c.l.b16 %v2820
    %v4483 = vunpack.c.l.b16 %v2821
    %v4484 = vunpack.c.l.b16 %v2822
    %v4485 = vunpack.c.l.b16 %v2823
    %v4486 = vunpack.c.l.b16 %v2824
    %v4487 = vunpack.c.l.b16 %v2825
    %v4488 = vunpack.c.l.b16 %v2826
    %v4489 = vunpack.c.l.b16 %v2827
    %v4490 = vunpack.c.l.b16 %v2828
    %v4491 = vunpack.c.l.b16 %v2829
    %v4492 = vunpack.c.l.b16 %v2830
    %v4493 = vunpack.c.l.b16 %v2831
    %v4494 = vunpack.c.l.b16 %v2832
    %v4495 = vunpack.c.l.b16 %v2833
    %v4496 = vunpack.c.l.b16 %v2834
    %v4497 = vunpack.c.l.b16 %v2835
    %v4498 = vunpack.c.l.b16 %v2836
    %v4499 = vunpack.c.l.b16 %v2837
    %v4500 = vpack.c.b16 %v4437, %v4436
    %v4501 = vpack.c.b16 %v4439, %v4438
    %v4502 = vpack.c.b16 %v4441, %v4440
    %v4503 = vpack.c.b16 %v4443, %v4442
    %v4504 = vpack.c.b16 %v4445, %v4444
    %v4505 = vpack.c.b16 %v4447, %v4446
    %v4506 = vpack.c.b16 %v4449, %v4448
    %v4507 = vpack.c.b16 %v4451, %v4450
    %v4508 = vpack.c.b16 %v4453, %v4452
    %v4509 = vpack.c.b16 %v4455, %v4454
    %v4510 = vpack.c.b16 %v4457, %v4456
    %v4511 = vpack.c.b16 %v4459, %v4458
    %v4512 = vpack.c.b16 %v4461, %v4460
    %v4513 = vpack.c.b16 %v4463, %v4462
    %v4514 = vpack.c.b16 %v4465, %v4464
    %v4515 = vpack.c.b16 %v4467, %v4466
    %v4516 = vpack.c.b16 %v4469, %v4468
    %v4517 = vpack.c.b16 %v4471, %v4470
    %v4518 = vpack.c.b16 %v4473, %v4472
    %v4519 = vpack.c.b16 %v4475, %v4474
    %v4520 = vpack.c.b16 %v4477, %v4476
    %v4521 = vpack.c.b16 %v4479, %v4478
    %v4522 = vpack.c.b16 %v4481, %v4480
    %v4523 = vpack.c.b16 %v4483, %v4482
    %v4524 = vpack.c.b16 %v4485, %v4484
    %v4525 = vpack.c.b16 %v4487, %v4486
    %v4526 = vpack.c.b16 %v4489, %v4488
    %v4527 = vpack.c.b16 %v4491, %v4490
    %v4528 = vpack.c.b16 %v4493, %v4492
    %v4529 = vpack.c.b16 %v4495, %v4494
    %v4530 = vpack.c.b16 %v4497, %v4496
    %v4531 = vpack.c.b16 %v4499, %v4498
    %4564 = vmatprep.subr.bf16.mxu0 0
    %4565 = vmatpush1.bf16.msra.mxu0 %v4500
    %4566 = vmatprep.subr.bf16.mxu0 0
    %4567 = vmatpush1.bf16.msra.mxu0 %v4501
    %4568 = vmatprep.subr.bf16.mxu0 0
    %4569 = vmatpush1.bf16.msra.mxu0 %v4502
    %4570 = vmatprep.subr.bf16.mxu0 0
    %4571 = vmatpush1.bf16.msra.mxu0 %v4503
    %4572 = vmatprep.subr.bf16.mxu0 0
    %4573 = vmatpush1.bf16.msra.mxu0 %v4504
    %4574 = vmatprep.subr.bf16.mxu0 0
    %4575 = vmatpush1.bf16.msra.mxu0 %v4505
    %4576 = vmatprep.subr.bf16.mxu0 0
    %4577 = vmatpush1.bf16.msra.mxu0 %v4506
    %4578 = vmatprep.subr.bf16.mxu0 0
    %4579 = vmatpush1.bf16.msra.mxu0 %v4507
    %4580 = vmatprep.subr.bf16.mxu0 0
    %4581 = vmatpush1.bf16.msra.mxu0 %v4508
    %4582 = vmatprep.subr.bf16.mxu0 0
    %4583 = vmatpush1.bf16.msra.mxu0 %v4509
    %4584 = vmatprep.subr.bf16.mxu0 0
    %4585 = vmatpush1.bf16.msra.mxu0 %v4510
    %4586 = vmatprep.subr.bf16.mxu0 0
    %4587 = vmatpush1.bf16.msra.mxu0 %v4511
    %4588 = vmatprep.subr.bf16.mxu0 0
    %4589 = vmatpush1.bf16.msra.mxu0 %v4512
    %4590 = vmatprep.subr.bf16.mxu0 0
    %4591 = vmatpush1.bf16.msra.mxu0 %v4513
    %4592 = vmatprep.subr.bf16.mxu0 0
    %4593 = vmatpush1.bf16.msra.mxu0 %v4514
    %4594 = vmatprep.subr.bf16.mxu0 0
    %4595 = vmatpush1.bf16.msra.mxu0 %v4515
    %4596 = vmatprep.mubr.bf16.mxu0 %v4359
    %4597 = vmatmul.mubr.bf16.gmra.mrb[0].mxu0 %v4358
    %v4598 = vpop.f32.mrb[0].mxu0
    %v4599 = vadd.f32 %v4370, %v4598
    %v4600 = vpop.f32.mrb[0].mxu0
    %v4601 = vpop.f32.mrb[0].mxu0
    %v4602 = vadd.f32 %v4370, %v4601
    %v4603 = vpop.f32.mrb[0].mxu0
    %4604 = vmatprep.mubr.bf16.mxu0 %v4363
    %4605 = vmatmul.mubr.bf16.gmra.mrb[0].mxu0 %v4362
    %v4606 = vpop.f32.mrb[0].mxu0
    %v4607 = vadd.f32 %v4370, %v4606
    %v4608 = vpop.f32.mrb[0].mxu0
    %v4609 = vpop.f32.mrb[0].mxu0
    %v4610 = vpop.f32.mrb[0].mxu0
    %4611 = vdwg.mxu0
    %4612 = vmatprep.subr.bf16.mxu0 0
    %4613 = vmatpush1.bf16.msra.mxu0 %v4516
    %4614 = vmatprep.subr.bf16.mxu0 0
    %4615 = vmatpush1.bf16.msra.mxu0 %v4517
    %4616 = vmatprep.subr.bf16.mxu0 0
    %4617 = vmatpush1.bf16.msra.mxu0 %v4518
    %4618 = vmatprep.subr.bf16.mxu0 0
    %4619 = vmatpush1.bf16.msra.mxu0 %v4519
    %4620 = vmatprep.subr.bf16.mxu0 0
    %4621 = vmatpush1.bf16.msra.mxu0 %v4520
    %4622 = vmatprep.subr.bf16.mxu0 0
    %4623 = vmatpush1.bf16.msra.mxu0 %v4521
    %4624 = vmatprep.subr.bf16.mxu0 0
    %4625 = vmatpush1.bf16.msra.mxu0 %v4522
    %4626 = vmatprep.subr.bf16.mxu0 0
    %4627 = vmatpush1.bf16.msra.mxu0 %v4523
    %4628 = vmatprep.subr.bf16.mxu0 0
    %4629 = vmatpush1.bf16.msra.mxu0 %v4524
    %4630 = vmatprep.subr.bf16.mxu0 0
    %4631 = vmatpush1.bf16.msra.mxu0 %v4525
    %4632 = vmatprep.subr.bf16.mxu0 0
    %4633 = vmatpush1.bf16.msra.mxu0 %v4526
    %4634 = vmatprep.subr.bf16.mxu0 0
    %4635 = vmatpush1.bf16.msra.mxu0 %v4527
    %4636 = vmatprep.subr.bf16.mxu0 0
    %4637 = vmatpush1.bf16.msra.mxu0 %v4528
    %4638 = vmatprep.subr.bf16.mxu0 0
    %4639 = vmatpush1.bf16.msra.mxu0 %v4529
    %4640 = vmatprep.subr.bf16.mxu0 0
    %4641 = vmatpush1.bf16.msra.mxu0 %v4530
    %4642 = vmatprep.subr.bf16.mxu0 0
    %4643 = vmatpush1.bf16.msra.mxu0 %v4531
    %4644 = vmatprep.mubr.bf16.mxu0 %v4361
    %4645 = vmatmul.mubr.bf16.gmra.mrb[0].mxu0 %v4360
    %v4646 = vpop.f32.mrb[0].mxu0
    %v4647 = vadd.f32 %v4599, %v4646
    %v4648 = vpop.f32.mrb[0].mxu0
    %v4649 = vpop.f32.mrb[0].mxu0
    %v4650 = vadd.f32 %v4602, %v4649
    %v4651 = vpop.f32.mrb[0].mxu0
    %4652 = vmatprep.mubr.bf16.mxu0 %v4365
    %4653 = vmatmul.mubr.bf16.gmra.mrb[0].mxu0 %v4364
    %v4654 = vpop.f32.mrb[0].mxu0
    %v4655 = vadd.f32 %v4607, %v4654
    %v4656 = vpop.f32.mrb[0].mxu0
    %v4657 = vpop.f32.mrb[0].mxu0
    %v4658 = vpop.f32.mrb[0].mxu0
    %4659 = vdwg.mxu0
    %v4661 = vlaneseq
    %v4662 = vshrl.u32 %v4661, 7
    %v4663 = vsub.s32 0, %v4662
    %v4664 = vrot.slane %v2841, %v4663
    %v4666 = vmul.f32 %v4647, %v4664
    %v4667 = vmul.f32 %v4650, %v4664
    %v4668 = vmul.f32 %v4655, %v4664
    %v4669 = vadd.f32 %v3957, %v4666
    %v4670 = vadd.f32 %v3958, %v4667
    %v4671 = vadd.f32 %v3959, %v4668
    %s4672 = scalar_lea.vmem %s6, 2
    %v4673 = vld [vmem:[%s4672] sm:$0x1]
    %s4674 = scalar_lea.vmem [#allocation8], 2
    %v4675 = vld [vmem:[%s4674] sm:$0x1]
    %s4676 = scalar_lea.vmem [#allocation10], 384
    %v4677 = vld [vmem:[%s4676] sm:$0xff]
    %v4678 = vld [vmem:[%s4676 + $0x8] sm:$0xf]
    %v4679 = vld [vmem:[%s4676 + $0xc] sm:$0xff]
    %v4680 = vld [vmem:[%s4676 + $0x14] sm:$0xf]
    %v4681 = vld [vmem:[%s4676 + $0x18] sm:$0xff]
    %v4682 = vld [vmem:[%s4676 + $0x20] sm:$0xf]
    %v4683 = vld [vmem:[%s4676 + $0x24] sm:$0xff]
    %v4684 = vld [vmem:[%s4676 + $0x2c] sm:$0xf]
    %v4685 = vld [vmem:[%s4676 + $0x30] sm:$0xff]
    %v4686 = vld [vmem:[%s4676 + $0x38] sm:$0xf]
    %v4687 = vld [vmem:[%s4676 + $0x3c] sm:$0xff]
    %v4688 = vld [vmem:[%s4676 + $0x44] sm:$0xf]
    %v4689 = vld [vmem:[%s4676 + $0x48] sm:$0xff]
    %v4690 = vld [vmem:[%s4676 + $0x50] sm:$0xf]
    %v4691 = vld [vmem:[%s4676 + $0x54] sm:$0xff]
    %v4692 = vld [vmem:[%s4676 + $0x5c] sm:$0xf]
    %v4693 = vld [vmem:[%s4676 + $0x60] sm:$0xff]
    %v4694 = vld [vmem:[%s4676 + $0x68] sm:$0xf]
    %v4695 = vld [vmem:[%s4676 + $0x6c] sm:$0xff]
    %v4696 = vld [vmem:[%s4676 + $0x74] sm:$0xf]
    %v4697 = vld [vmem:[%s4676 + $0x78] sm:$0xff]
    %v4698 = vld [vmem:[%s4676 + $0x80] sm:$0xf]
    %v4699 = vld [vmem:[%s4676 + $0x84] sm:$0xff]
    %v4700 = vld [vmem:[%s4676 + $0x8c] sm:$0xf]
    %v4701 = vld [vmem:[%s4676 + $0x90] sm:$0xff]
    %v4702 = vld [vmem:[%s4676 + $0x98] sm:$0xf]
    %v4703 = vld [vmem:[%s4676 + $0x9c] sm:$0xff]
    %v4704 = vld [vmem:[%s4676 + $0xa4] sm:$0xf]
    %v4705 = vld [vmem:[%s4676 + $0xa8] sm:$0xff]
    %v4706 = vld [vmem:[%s4676 + $0xb0] sm:$0xf]
    %v4707 = vld [vmem:[%s4676 + $0xb4] sm:$0xff]
    %v4708 = vld [vmem:[%s4676 + $0xbc] sm:$0xf]
    %s4709 = scalar_lea.vmem %s9, 6
    %v4710 = vld [vmem:[%s4709] sm:$0x7]
    %s4711 = scalar_lea.vmem %s10, 128
    %v4712 = vld [vmem:[%s4711] sm:$0xf]
    %v4713 = vld [vmem:[%s4711 + $0x4] sm:$0xf]
    %v4714 = vld [vmem:[%s4711 + $0x8] sm:$0xf]
    %v4715 = vld [vmem:[%s4711 + $0xc] sm:$0xf]
    %v4716 = vld [vmem:[%s4711 + $0x10] sm:$0xf]
    %v4717 = vld [vmem:[%s4711 + $0x14] sm:$0xf]
    %v4718 = vld [vmem:[%s4711 + $0x18] sm:$0xf]
    %v4719 = vld [vmem:[%s4711 + $0x1c] sm:$0xf]
    %v4720 = vld [vmem:[%s4711 + $0x20] sm:$0xf]
    %v4721 = vld [vmem:[%s4711 + $0x24] sm:$0xf]
    %v4722 = vld [vmem:[%s4711 + $0x28] sm:$0xf]
    %v4723 = vld [vmem:[%s4711 + $0x2c] sm:$0xf]
    %v4724 = vld [vmem:[%s4711 + $0x30] sm:$0xf]
    %v4725 = vld [vmem:[%s4711 + $0x34] sm:$0xf]
    %v4726 = vld [vmem:[%s4711 + $0x38] sm:$0xf]
    %v4727 = vld [vmem:[%s4711 + $0x3c] sm:$0xf]
    %s4728 = scalar_lea.vmem %s11, 2
    %v4729 = vld [vmem:[%s4728] sm:$0x1]
    %s4730 = scalar_lea.vmem [#allocation11], 2
    %v4731 = vld [vmem:[%s4730] sm:$0x1]
    %s4732 = scalar_lea.vmem [#allocation13], 2
    %v4733 = vld [vmem:[%s4732] sm:$0x1]
    %s4734 = scalar_lea.vmem [#allocation14], 2
    %v4735 = vld [vmem:[%s4734] sm:$0x1]
    %s4736 = scalar_lea.vmem %s15, 512
    %v4737 = vld [vmem:[%s4736] sm:$0xff]
    %v4738 = vld [vmem:[%s4736 + $0x8] sm:$0xff]
    %v4739 = vld [vmem:[%s4736 + $0x10] sm:$0xff]
    %v4740 = vld [vmem:[%s4736 + $0x18] sm:$0xff]
    %v4741 = vld [vmem:[%s4736 + $0x20] sm:$0xff]
    %v4742 = vld [vmem:[%s4736 + $0x28] sm:$0xff]
    %v4743 = vld [vmem:[%s4736 + $0x30] sm:$0xff]
    %v4744 = vld [vmem:[%s4736 + $0x38] sm:$0xff]
    %v4745 = vld [vmem:[%s4736 + $0x40] sm:$0xff]
    %v4746 = vld [vmem:[%s4736 + $0x48] sm:$0xff]
    %v4747 = vld [vmem:[%s4736 + $0x50] sm:$0xff]
    %v4748 = vld [vmem:[%s4736 + $0x58] sm:$0xff]
    %v4749 = vld [vmem:[%s4736 + $0x60] sm:$0xff]
    %v4750 = vld [vmem:[%s4736 + $0x68] sm:$0xff]
    %v4751 = vld [vmem:[%s4736 + $0x70] sm:$0xff]
    %v4752 = vld [vmem:[%s4736 + $0x78] sm:$0xff]
    %v4753 = vld [vmem:[%s4736 + $0x80] sm:$0xff]
    %v4754 = vld [vmem:[%s4736 + $0x88] sm:$0xff]
    %v4755 = vld [vmem:[%s4736 + $0x90] sm:$0xff]
    %v4756 = vld [vmem:[%s4736 + $0x98] sm:$0xff]
    %v4757 = vld [vmem:[%s4736 + $0xa0] sm:$0xff]
    %v4758 = vld [vmem:[%s4736 + $0xa8] sm:$0xff]
    %v4759 = vld [vmem:[%s4736 + $0xb0] sm:$0xff]
    %v4760 = vld [vmem:[%s4736 + $0xb8] sm:$0xff]
    %v4761 = vld [vmem:[%s4736 + $0xc0] sm:$0xff]
    %v4762 = vld [vmem:[%s4736 + $0xc8] sm:$0xff]
    %v4763 = vld [vmem:[%s4736 + $0xd0] sm:$0xff]
    %v4764 = vld [vmem:[%s4736 + $0xd8] sm:$0xff]
    %v4765 = vld [vmem:[%s4736 + $0xe0] sm:$0xff]
    %v4766 = vld [vmem:[%s4736 + $0xe8] sm:$0xff]
    %v4767 = vld [vmem:[%s4736 + $0xf0] sm:$0xff]
    %v4768 = vld [vmem:[%s4736 + $0xf8] sm:$0xff]
    %s4769 = scalar_lea.vmem [#allocation16], 8
    %v4770 = vld [vmem:[%s4769] sm:$0xf]
    %s4771 = scalar_lea.vmem %s17, 512
    %v4772 = vld [vmem:[%s4771] sm:$0xf]
    %v4773 = vld [vmem:[%s4771 + $0x4] sm:$0xf]
    %v4774 = vld [vmem:[%s4771 + $0x8] sm:$0xf]
    %v4775 = vld [vmem:[%s4771 + $0xc] sm:$0xf]
    %v4776 = vld [vmem:[%s4771 + $0x10] sm:$0xf]
    %v4777 = vld [vmem:[%s4771 + $0x14] sm:$0xf]
    %v4778 = vld [vmem:[%s4771 + $0x18] sm:$0xf]
    %v4779 = vld [vmem:[%s4771 + $0x1c] sm:$0xf]
    %v4780 = vld [vmem:[%s4771 + $0x20] sm:$0xf]
    %v4781 = vld [vmem:[%s4771 + $0x24] sm:$0xf]
    %v4782 = vld [vmem:[%s4771 + $0x28] sm:$0xf]
    %v4783 = vld [vmem:[%s4771 + $0x2c] sm:$0xf]
    %v4784 = vld [vmem:[%s4771 + $0x30] sm:$0xf]
    %v4785 = vld [vmem:[%s4771 + $0x34] sm:$0xf]
    %v4786 = vld [vmem:[%s4771 + $0x38] sm:$0xf]
    %v4787 = vld [vmem:[%s4771 + $0x3c] sm:$0xf]
    %v4788 = vld [vmem:[%s4771 + $0x40] sm:$0xf]
    %v4789 = vld [vmem:[%s4771 + $0x44] sm:$0xf]
    %v4790 = vld [vmem:[%s4771 + $0x48] sm:$0xf]
    %v4791 = vld [vmem:[%s4771 + $0x4c] sm:$0xf]
    %v4792 = vld [vmem:[%s4771 + $0x50] sm:$0xf]
    %v4793 = vld [vmem:[%s4771 + $0x54] sm:$0xf]
    %v4794 = vld [vmem:[%s4771 + $0x58] sm:$0xf]
    %v4795 = vld [vmem:[%s4771 + $0x5c] sm:$0xf]
    %v4796 = vld [vmem:[%s4771 + $0x60] sm:$0xf]
    %v4797 = vld [vmem:[%s4771 + $0x64] sm:$0xf]
    %v4798 = vld [vmem:[%s4771 + $0x68] sm:$0xf]
    %v4799 = vld [vmem:[%s4771 + $0x6c] sm:$0xf]
    %v4800 = vld [vmem:[%s4771 + $0x70] sm:$0xf]
    %v4801 = vld [vmem:[%s4771 + $0x74] sm:$0xf]
    %v4802 = vld [vmem:[%s4771 + $0x78] sm:$0xf]
    %v4803 = vld [vmem:[%s4771 + $0x7c] sm:$0xf]
    %v4804 = vld [vmem:[%s4771 + $0x80] sm:$0xf]
    %v4805 = vld [vmem:[%s4771 + $0x84] sm:$0xf]
    %v4806 = vld [vmem:[%s4771 + $0x88] sm:$0xf]
    %v4807 = vld [vmem:[%s4771 + $0x8c] sm:$0xf]
    %v4808 = vld [vmem:[%s4771 + $0x90] sm:$0xf]
    %v4809 = vld [vmem:[%s4771 + $0x94] sm:$0xf]
    %v4810 = vld [vmem:[%s4771 + $0x98] sm:$0xf]
    %v4811 = vld [vmem:[%s4771 + $0x9c] sm:$0xf]
    %v4812 = vld [vmem:[%s4771 + $0xa0] sm:$0xf]
    %v4813 = vld [vmem:[%s4771 + $0xa4] sm:$0xf]
    %v4814 = vld [vmem:[%s4771 + $0xa8] sm:$0xf]
    %v4815 = vld [vmem:[%s4771 + $0xac] sm:$0xf]
    %v4816 = vld [vmem:[%s4771 + $0xb0] sm:$0xf]
    %v4817 = vld [vmem:[%s4771 + $0xb4] sm:$0xf]
    %v4818 = vld [vmem:[%s4771 + $0xb8] sm:$0xf]
    %v4819 = vld [vmem:[%s4771 + $0xbc] sm:$0xf]
    %v4820 = vld [vmem:[%s4771 + $0xc0] sm:$0xf]
    %v4821 = vld [vmem:[%s4771 + $0xc4] sm:$0xf]
    %v4822 = vld [vmem:[%s4771 + $0xc8] sm:$0xf]
    %v4823 = vld [vmem:[%s4771 + $0xcc] sm:$0xf]
    %v4824 = vld [vmem:[%s4771 + $0xd0] sm:$0xf]
    %v4825 = vld [vmem:[%s4771 + $0xd4] sm:$0xf]
    %v4826 = vld [vmem:[%s4771 + $0xd8] sm:$0xf]
    %v4827 = vld [vmem:[%s4771 + $0xdc] sm:$0xf]
    %v4828 = vld [vmem:[%s4771 + $0xe0] sm:$0xf]
    %v4829 = vld [vmem:[%s4771 + $0xe4] sm:$0xf]
    %v4830 = vld [vmem:[%s4771 + $0xe8] sm:$0xf]
    %v4831 = vld [vmem:[%s4771 + $0xec] sm:$0xf]
    %v4832 = vld [vmem:[%s4771 + $0xf0] sm:$0xf]
    %v4833 = vld [vmem:[%s4771 + $0xf4] sm:$0xf]
    %v4834 = vld [vmem:[%s4771 + $0xf8] sm:$0xf]
    %v4835 = vld [vmem:[%s4771 + $0xfc] sm:$0xf]
    %s4836 = scalar_lea.vmem [#allocation17], 2
    %v4837 = vld [vmem:[%s4836] sm:$0x1]
    %s4838 = scalar_lea.vmem [#allocation19], 2
    %v4839 = vld [vmem:[%s4838] sm:$0x1]
    %4840 = vadd.xlane.f32.xlu0 %v4669
    %v4841 = vpop.xlane.xlu0 %4840
    %4842 = vadd.xlane.f32.xlu0 %v4670
    %v4843 = vpop.xlane.xlu0 %4842
    %v4844 = vsel %vm678, %v4671, 0.0
    %4845 = vadd.xlane.f32.xlu0 %v4844
    %v4846 = vpop.xlane.xlu0 %4845
    %v4847 = vmul.f32 %v4841, %v844
    %v4848 = vmul.f32 %v4843, %v844
    %v4849 = vmul.f32 %v4846, %v844
    %v4850 = vsub.f32 %v4669, %v4847
    %v4851 = vsub.f32 %v4670, %v4848
    %v4852 = vsub.f32 %v4671, %v4849
    %v4853 = vmul.f32 %v4850, %v4850
    %v4854 = vmul.f32 %v4851, %v4851
    %v4855 = vmul.f32 %v4852, %v4852
    %4856 = vadd.xlane.f32.xlu0 %v4853
    %v4857 = vpop.xlane.xlu0 %4856
    %4858 = vadd.xlane.f32.xlu0 %v4854
    %v4859 = vpop.xlane.xlu0 %4858
    %v4860 = vsel %vm678, %v4855, 0.0
    %4861 = vadd.xlane.f32.xlu0 %v4860
    %v4862 = vpop.xlane.xlu0 %4861
    %v4863 = vmul.f32 %v4857, %v844
    %v4864 = vmul.f32 %v4859, %v844
    %v4865 = vmul.f32 %v4862, %v844
    %v4866 = vadd.f32 %v4863, 1e-06
    %v4867 = vadd.f32 %v4864, 1e-06
    %v4868 = vadd.f32 %v4865, 1e-06
    %v4869 = vrsqrt.pop %v4866
    %v4870 = vrsqrt.pop %v4867
    %v4871 = vrsqrt.pop %v4868
    %v4872 = vmul.f32 %v4850, %v4869
    %v4873 = vmul.f32 %v4851, %v4870
    %v4874 = vmul.f32 %v4852, %v4871
    %v4876 = vlaneseq
    %v4877 = vshrl.u32 %v4876, 7
    %v4878 = vsub.s32 0, %v4877
    %v4879 = vrot.slane %v4673, %v4878
    %v4881 = vmul.f32 %v4872, %v4879
    %v4882 = vmul.f32 %v4873, %v4879
    %v4883 = vmul.f32 %v4874, %v4879
    %v4885 = vlaneseq
    %v4886 = vshrl.u32 %v4885, 7
    %v4887 = vsub.s32 0, %v4886
    %v4888 = vrot.slane %v4675, %v4887
    %v4890 = vadd.f32 %v4881, %v4888
    %v4891 = vadd.f32 %v4882, %v4888
    %v4892 = vadd.f32 %v4883, %v4888
    %v4893 = vpack.c.bf16 %v4891, %v4890
    %v4894 = vpack.c.bf16 %v4892, %v4892
    %v4896 = vlaneseq
    %v4897 = vshrl.u32 %v4896, 7
    %v4898 = vsub.s32 0, %v4897
    %v4899 = vrot.slane %v4710, %v4898
    %v4900 = vlaneseq
    %v4901 = vshrl.u32 %v4900, 7
    %v4902 = vsub.s32 1, %v4901
    %v4903 = vrot.slane %v4710, %v4902
    %v4904 = vlaneseq
    %v4905 = vshrl.u32 %v4904, 7
    %v4906 = vsub.s32 2, %v4905
    %v4907 = vrot.slane %v4710, %v4906
    %v4943 = vunpack.c.l.b16 %v4677
    %v4944 = vunpack.c.h.b16 %v4677
    %v4945 = vunpack.c.l.b16 %v4678
    %v4946 = vunpack.c.l.b16 %v4679
    %v4947 = vunpack.c.h.b16 %v4679
    %v4948 = vunpack.c.l.b16 %v4680
    %v4949 = vunpack.c.l.b16 %v4681
    %v4950 = vunpack.c.h.b16 %v4681
    %v4951 = vunpack.c.l.b16 %v4682
    %v4952 = vunpack.c.l.b16 %v4683
    %v4953 = vunpack.c.h.b16 %v4683
    %v4954 = vunpack.c.l.b16 %v4684
    %v4955 = vunpack.c.l.b16 %v4685
    %v4956 = vunpack.c.h.b16 %v4685
    %v4957 = vunpack.c.l.b16 %v4686
    %v4958 = vunpack.c.l.b16 %v4687
    %v4959 = vunpack.c.h.b16 %v4687
    %v4960 = vunpack.c.l.b16 %v4688
    %v4961 = vunpack.c.l.b16 %v4689
    %v4962 = vunpack.c.h.b16 %v4689
    %v4963 = vunpack.c.l.b16 %v4690
    %v4964 = vunpack.c.l.b16 %v4691
    %v4965 = vunpack.c.h.b16 %v4691
    %v4966 = vunpack.c.l.b16 %v4692
    %v4967 = vunpack.c.l.b16 %v4693
    %v4968 = vunpack.c.h.b16 %v4693
    %v4969 = vunpack.c.l.b16 %v4694
    %v4970 = vunpack.c.l.b16 %v4695
    %v4971 = vunpack.c.h.b16 %v4695
    %v4972 = vunpack.c.l.b16 %v4696
    %v4973 = vunpack.c.l.b16 %v4697
    %v4974 = vunpack.c.h.b16 %v4697
    %v4975 = vunpack.c.l.b16 %v4698
    %v4976 = vunpack.c.l.b16 %v4699
    %v4977 = vunpack.c.h.b16 %v4699
    %v4978 = vunpack.c.l.b16 %v4700
    %v4979 = vunpack.c.l.b16 %v4701
    %v4980 = vunpack.c.h.b16 %v4701
    %v4981 = vunpack.c.l.b16 %v4702
    %v4982 = vunpack.c.l.b16 %v4703
    %v4983 = vunpack.c.h.b16 %v4703
    %v4984 = vunpack.c.l.b16 %v4704
    %v4985 = vunpack.c.l.b16 %v4705
    %v4986 = vunpack.c.h.b16 %v4705
    %v4987 = vunpack.c.l.b16 %v4706
    %v4988 = vunpack.c.l.b16 %v4707
    %v4989 = vunpack.c.h.b16 %v4707
    %v4990 = vunpack.c.l.b16 %v4708
    %v4991 = vpack.c.b16 %v4946, %v4943
    %v4992 = vpack.c.b16 %v4947, %v4944
    %v4993 = vpack.c.b16 %v4948, %v4945
    %v4994 = vpack.c.b16 %v4952, %v4949
    %v4995 = vpack.c.b16 %v4953, %v4950
    %v4996 = vpack.c.b16 %v4954, %v4951
    %v4997 = vpack.c.b16 %v4958, %v4955
    %v4998 = vpack.c.b16 %v4959, %v4956
    %v4999 = vpack.c.b16 %v4960, %v4957
    %v5000 = vpack.c.b16 %v4964, %v4961
    %v5001 = vpack.c.b16 %v4965, %v4962
    %v5002 = vpack.c.b16 %v4966, %v4963
    %v5003 = vpack.c.b16 %v4970, %v4967
    %v5004 = vpack.c.b16 %v4971, %v4968
    %v5005 = vpack.c.b16 %v4972, %v4969
    %v5006 = vpack.c.b16 %v4976, %v4973
    %v5007 = vpack.c.b16 %v4977, %v4974
    %v5008 = vpack.c.b16 %v4978, %v4975
    %v5009 = vpack.c.b16 %v4982, %v4979
    %v5010 = vpack.c.b16 %v4983, %v4980
    %v5011 = vpack.c.b16 %v4984, %v4981
    %v5012 = vpack.c.b16 %v4988, %v4985
    %v5013 = vpack.c.b16 %v4989, %v4986
    %v5014 = vpack.c.b16 %v4990, %v4987
    %5039 = vmatprep.subr.bf16.mxu0 %v4992
    %5040 = vmatpush1.bf16.msra.mxu0 %v4991
    %5041 = vmatprep.subr.bf16.mxu0 %v4995
    %5042 = vmatpush1.bf16.msra.mxu0 %v4994
    %5043 = vmatprep.subr.bf16.mxu0 %v4998
    %5044 = vmatpush1.bf16.msra.mxu0 %v4997
    %5045 = vmatprep.subr.bf16.mxu0 %v5001
    %5046 = vmatpush1.bf16.msra.mxu0 %v5000
    %5047 = vmatprep.subr.bf16.mxu0 %v5004
    %5048 = vmatpush1.bf16.msra.mxu0 %v5003
    %5049 = vmatprep.subr.bf16.mxu0 %v5007
    %5050 = vmatpush1.bf16.msra.mxu0 %v5006
    %5051 = vmatprep.subr.bf16.mxu0 %v5010
    %5052 = vmatpush1.bf16.msra.mxu0 %v5009
    %5053 = vmatprep.subr.bf16.mxu0 %v5013
    %5054 = vmatpush1.bf16.msra.mxu0 %v5012
    %5055 = vmatprep.subr.bf16.mxu0 0
    %5056 = vmatpush1.bf16.msra.mxu0 0
    %5057 = vmatprep.subr.bf16.mxu0 0
    %5058 = vmatpush1.bf16.msra.mxu0 0
    %5059 = vmatprep.subr.bf16.mxu0 0
    %5060 = vmatpush1.bf16.msra.mxu0 0
    %5061 = vmatprep.subr.bf16.mxu0 0
    %5062 = vmatpush1.bf16.msra.mxu0 0
    %5063 = vmatprep.subr.bf16.mxu0 0
    %5064 = vmatpush1.bf16.msra.mxu0 0
    %5065 = vmatprep.subr.bf16.mxu0 0
    %5066 = vmatpush1.bf16.msra.mxu0 0
    %5067 = vmatprep.subr.bf16.mxu0 0
    %5068 = vmatpush1.bf16.msra.mxu0 0
    %5069 = vmatprep.subr.bf16.mxu0 0
    %5070 = vmatpush1.bf16.msra.mxu0 0
    %5071 = vmatprep.mubr.bf16.mxu0 0
    %5072 = vmatmul.mubr.bf16.gmra.mrb[0].mxu0 %v4893
    %v5073 = vpop.f32.mrb[0].mxu0
    %v5074 = vadd.f32 %v4899, %v5073
    %v5075 = vpop.f32.mrb[0].mxu0
    %v5076 = vadd.f32 %v4903, %v5075
    %v5077 = vpop.f32.mrb[0].mxu0
    %v5078 = vadd.f32 %v4899, %v5077
    %v5079 = vpop.f32.mrb[0].mxu0
    %v5080 = vadd.f32 %v4903, %v5079
    %5081 = vmatprep.mubr.bf16.mxu0 0
    %5082 = vmatmul.mubr.bf16.gmra.mrb[0].mxu0 %v4894
    %v5083 = vpop.f32.mrb[0].mxu0
    %v5084 = vadd.f32 %v4899, %v5083
    %v5085 = vpop.f32.mrb[0].mxu0
    %v5086 = vadd.f32 %v4903, %v5085
    %v5087 = vpop.f32.mrb[0].mxu0
    %v5088 = vpop.f32.mrb[0].mxu0
    %5089 = vdwg.mxu0
    %5090 = vmatprep.subr.bf16.mxu0 0
    %5091 = vmatpush1.bf16.msra.mxu0 %v4993
    %5092 = vmatprep.subr.bf16.mxu0 0
    %5093 = vmatpush1.bf16.msra.mxu0 %v4996
    %5094 = vmatprep.subr.bf16.mxu0 0
    %5095 = vmatpush1.bf16.msra.mxu0 %v4999
    %5096 = vmatprep.subr.bf16.mxu0 0
    %5097 = vmatpush1.bf16.msra.mxu0 %v5002
    %5098 = vmatprep.subr.bf16.mxu0 0
    %5099 = vmatpush1.bf16.msra.mxu0 %v5005
    %5100 = vmatprep.subr.bf16.mxu0 0
    %5101 = vmatpush1.bf16.msra.mxu0 %v5008
    %5102 = vmatprep.subr.bf16.mxu0 0
    %5103 = vmatpush1.bf16.msra.mxu0 %v5011
    %5104 = vmatprep.subr.bf16.mxu0 0
    %5105 = vmatpush1.bf16.msra.mxu0 %v5014
    %5106 = vmatprep.subr.bf16.mxu0 0
    %5107 = vmatpush1.bf16.msra.mxu0 0
    %5108 = vmatprep.subr.bf16.mxu0 0
    %5109 = vmatpush1.bf16.msra.mxu0 0
    %5110 = vmatprep.subr.bf16.mxu0 0
    %5111 = vmatpush1.bf16.msra.mxu0 0
    %5112 = vmatprep.subr.bf16.mxu0 0
    %5113 = vmatpush1.bf16.msra.mxu0 0
    %5114 = vmatprep.subr.bf16.mxu0 0
    %5115 = vmatpush1.bf16.msra.mxu0 0
    %5116 = vmatprep.subr.bf16.mxu0 0
    %5117 = vmatpush1.bf16.msra.mxu0 0
    %5118 = vmatprep.subr.bf16.mxu0 0
    %5119 = vmatpush1.bf16.msra.mxu0 0
    %5120 = vmatprep.subr.bf16.mxu0 0
    %5121 = vmatpush1.bf16.msra.mxu0 0
    %5122 = vmatprep.mubr.bf16.mxu0 0
    %5123 = vmatmul.mubr.bf16.gmra.mrb[0].mxu0 %v4893
    %v5124 = vpop.f32.mrb[0].mxu0
    %v5125 = vadd.f32 %v4907, %v5124
    %v5126 = vpop.f32.mrb[0].mxu0
    %v5127 = vpop.f32.mrb[0].mxu0
    %v5128 = vadd.f32 %v4907, %v5127
    %v5129 = vpop.f32.mrb[0].mxu0
    %5130 = vmatprep.mubr.bf16.mxu0 0
    %5131 = vmatmul.mubr.bf16.gmra.mrb[0].mxu0 %v4894
    %v5132 = vpop.f32.mrb[0].mxu0
    %v5133 = vadd.f32 %v4907, %v5132
    %v5134 = vpop.f32.mrb[0].mxu0
    %v5135 = vpop.f32.mrb[0].mxu0
    %v5136 = vpop.f32.mrb[0].mxu0
    %5137 = vdwg.mxu0
    %v5138 = vpack.c.bf16 %v5078, %v5074
    %v5139 = vpack.c.bf16 %v5080, %v5076
    %v5140 = vpack.c.bf16 %v5128, %v5125
    %v5141 = vpack.c.bf16 %v5084, %v5084
    %v5142 = vpack.c.bf16 %v5086, %v5086
    %v5143 = vpack.c.bf16 %v5133, %v5133
    %v5145 = vsel %vm1142, %v5138, 0
    %v5148 = vsel %vm1142, %v5141, 0
    %v5151 = vsel %vm1142, %v5139, 0
    %v5154 = vsel %vm1142, %v5142, 0
    %5156 = vmatprep.subr.bf16.mxu0 0
    %5157 = vmatpush1.bf16.xpose.msra.mxu0 %v5151
    %5158 = vmatprep.subr.bf16.mxu0 0
    %5159 = vmatpush1.bf16.xpose.msra.mxu0 %v5154
    %5160 = vmatprep.subr.bf16.mxu0 0
    %5161 = vmatpush1.bf16.xpose.msra.mxu0 0
    %5162 = vmatprep.subr.bf16.mxu0 0
    %5163 = vmatpush1.bf16.xpose.msra.mxu0 0
    %5164 = vmatprep.subr.bf16.mxu0 0
    %5165 = vmatpush1.bf16.xpose.msra.mxu0 0
    %5166 = vmatprep.subr.bf16.mxu0 0
    %5167 = vmatpush1.bf16.xpose.msra.mxu0 0
    %5168 = vmatprep.subr.bf16.mxu0 0
    %5169 = vmatpush1.bf16.xpose.msra.mxu0 0
    %5170 = vmatprep.subr.bf16.mxu0 0
    %5171 = vmatpush1.bf16.xpose.msra.mxu0 0
    %5172 = vmatprep.subr.bf16.mxu0 0
    %5173 = vmatpush1.bf16.xpose.msra.mxu0 0
    %5174 = vmatprep.subr.bf16.mxu0 0
    %5175 = vmatpush1.bf16.xpose.msra.mxu0 0
    %5176 = vmatprep.subr.bf16.mxu0 0
    %5177 = vmatpush1.bf16.xpose.msra.mxu0 0
    %5178 = vmatprep.subr.bf16.mxu0 0
    %5179 = vmatpush1.bf16.xpose.msra.mxu0 0
    %5180 = vmatprep.subr.bf16.mxu0 0
    %5181 = vmatpush1.bf16.xpose.msra.mxu0 0
    %5182 = vmatprep.subr.bf16.mxu0 0
    %5183 = vmatpush1.bf16.xpose.msra.mxu0 0
    %5184 = vmatprep.subr.bf16.mxu0 0
    %5185 = vmatpush1.bf16.xpose.msra.mxu0 0
    %5186 = vmatprep.subr.bf16.mxu0 0
    %5187 = vmatpush1.bf16.xpose.msra.mxu0 0
    %5188 = vmatprep.mubr.bf16.mxu0 0
    %5189 = vmatmul.mubr.bf16.gmra.mrb[0].mxu0 %v5145
    %v5190 = vpop.f32.mrb[0].mxu0
    %v5191 = vadd.f32 %v680, %v5190
    %v5192 = vpop.f32.mrb[0].mxu0
    %v5193 = vpop.f32.mrb[0].mxu0
    %v5194 = vadd.f32 %v681, %v5193
    %v5195 = vpop.f32.mrb[0].mxu0
    %5196 = vmatprep.mubr.bf16.mxu0 0
    %5197 = vmatmul.mubr.bf16.gmra.mrb[0].mxu0 %v5148
    %v5198 = vpop.f32.mrb[0].mxu0
    %v5199 = vadd.f32 %v682, %v5198
    %v5200 = vpop.f32.mrb[0].mxu0
    %v5201 = vpop.f32.mrb[0].mxu0
    %v5202 = vpop.f32.mrb[0].mxu0
    %5203 = vdwg.mxu0
    %v5204 = vsel %vm1203, %v5191, -inf
    %5205 = vmax.xlane.f32.xlu0 %v5204
    %v5206 = vpop.xlane.xlu0 %5205
    %v5207 = vsel %vm1203, %v5194, -inf
    %5208 = vmax.xlane.f32.xlu0 %v5207
    %v5209 = vpop.xlane.xlu0 %5208
    %v5210 = vsel %vm1210, %v5199, -inf
    %5211 = vmax.xlane.f32.xlu0 %v5210
    %v5212 = vpop.xlane.xlu0 %5211
    %v5213 = vsub.f32 %v5191, %v5206
    %v5214 = vsub.f32 %v5194, %v5209
    %v5215 = vsub.f32 %v5199, %v5212
    %v5216 = vmul.f32 %v5213, 1.442695
    %v5217 = vpow.pop %v5216
    %v5218 = vmul.f32 %v5214, 1.442695
    %v5219 = vpow.pop %v5218
    %v5220 = vmul.f32 %v5215, 1.442695
    %v5221 = vpow.pop %v5220
    %v5222 = vsel %vm1203, %v5217, 0.0
    %5223 = vadd.xlane.f32.xlu0 %v5222
    %v5224 = vpop.xlane.xlu0 %5223
    %v5225 = vsel %vm1203, %v5219, 0.0
    %5226 = vadd.xlane.f32.xlu0 %v5225
    %v5227 = vpop.xlane.xlu0 %5226
    %v5228 = vsel %vm1210, %v5221, 0.0
    %5229 = vadd.xlane.f32.xlu0 %v5228
    %v5230 = vpop.xlane.xlu0 %5229
    %v5231 = vrcp.pop %v5224
    %v5232 = vrcp.pop %v5227
    %v5233 = vrcp.pop %v5230
    %v5234 = vmul.f32 %v5217, %v5231
    %v5235 = vmul.f32 %v5219, %v5232
    %v5236 = vmul.f32 %v5221, %v5233
    %v5237 = vpack.c.bf16 %v5235, %v5234
    %v5238 = vpack.c.bf16 %v5236, %v5236
    %v5240 = vsel %vm1203, %v5237, 0
    %v5243 = vsel %vm1203, %v5238, 0
    %v5246 = vsel %vm1246, %v5143, 0
    %5248 = vmatprep.subr.bf16.mxu0 0
    %5249 = vmatpush1.bf16.msra.mxu0 %v5140
    %5250 = vmatprep.subr.bf16.mxu0 0
    %5251 = vmatpush1.bf16.msra.mxu0 %v5246
    %5252 = vmatprep.subr.bf16.mxu0 0
    %5253 = vmatpush1.bf16.msra.mxu0 0
    %5254 = vmatprep.subr.bf16.mxu0 0
    %5255 = vmatpush1.bf16.msra.mxu0 0
    %5256 = vmatprep.subr.bf16.mxu0 0
    %5257 = vmatpush1.bf16.msra.mxu0 0
    %5258 = vmatprep.subr.bf16.mxu0 0
    %5259 = vmatpush1.bf16.msra.mxu0 0
    %5260 = vmatprep.subr.bf16.mxu0 0
    %5261 = vmatpush1.bf16.msra.mxu0 0
    %5262 = vmatprep.subr.bf16.mxu0 0
    %5263 = vmatpush1.bf16.msra.mxu0 0
    %5264 = vmatprep.subr.bf16.mxu0 0
    %5265 = vmatpush1.bf16.msra.mxu0 0
    %5266 = vmatprep.subr.bf16.mxu0 0
    %5267 = vmatpush1.bf16.msra.mxu0 0
    %5268 = vmatprep.subr.bf16.mxu0 0
    %5269 = vmatpush1.bf16.msra.mxu0 0
    %5270 = vmatprep.subr.bf16.mxu0 0
    %5271 = vmatpush1.bf16.msra.mxu0 0
    %5272 = vmatprep.subr.bf16.mxu0 0
    %5273 = vmatpush1.bf16.msra.mxu0 0
    %5274 = vmatprep.subr.bf16.mxu0 0
    %5275 = vmatpush1.bf16.msra.mxu0 0
    %5276 = vmatprep.subr.bf16.mxu0 0
    %5277 = vmatpush1.bf16.msra.mxu0 0
    %5278 = vmatprep.subr.bf16.mxu0 0
    %5279 = vmatpush1.bf16.msra.mxu0 0
    %5280 = vmatprep.mubr.bf16.mxu0 0
    %5281 = vmatmul.mubr.bf16.gmra.mrb[0].mxu0 %v5240
    %v5282 = vpop.f32.mrb[0].mxu0
    %v5283 = vadd.f32 0.0, %v5282
    %v5284 = vpop.f32.mrb[0].mxu0
    %v5285 = vpop.f32.mrb[0].mxu0
    %v5286 = vadd.f32 0.0, %v5285
    %v5287 = vpop.f32.mrb[0].mxu0
    %5288 = vmatprep.mubr.bf16.mxu0 0
    %5289 = vmatmul.mubr.bf16.gmra.mrb[0].mxu0 %v5243
    %v5290 = vpop.f32.mrb[0].mxu0
    %v5291 = vadd.f32 0.0, %v5290
    %v5292 = vpop.f32.mrb[0].mxu0
    %v5293 = vpop.f32.mrb[0].mxu0
    %v5294 = vpop.f32.mrb[0].mxu0
    %5295 = vdwg.mxu0
    %5298 = vrot.lane.b32.xlu0 %v5138, 96
    %v5299 = vpop.permute.xlu0 %5298
    %5300 = vrot.lane.b32.xlu0 %v5141, 96
    %v5301 = vpop.permute.xlu0 %5300
    %5304 = vrot.lane.b32.xlu0 %v5139, 96
    %v5305 = vpop.permute.xlu0 %5304
    %5306 = vrot.lane.b32.xlu0 %v5142, 96
    %v5307 = vpop.permute.xlu0 %5306
    %v5309 = vsel %vm1142, %v5299, 0
    %v5312 = vsel %vm1142, %v5301, 0
    %v5315 = vsel %vm1142, %v5305, 0
    %v5318 = vsel %vm1142, %v5307, 0
    %5320 = vmatprep.subr.bf16.mxu0 0
    %5321 = vmatpush1.bf16.xpose.msra.mxu0 %v5315
    %5322 = vmatprep.subr.bf16.mxu0 0
    %5323 = vmatpush1.bf16.xpose.msra.mxu0 %v5318
    %5324 = vmatprep.subr.bf16.mxu0 0
    %5325 = vmatpush1.bf16.xpose.msra.mxu0 0
    %5326 = vmatprep.subr.bf16.mxu0 0
    %5327 = vmatpush1.bf16.xpose.msra.mxu0 0
    %5328 = vmatprep.subr.bf16.mxu0 0
    %5329 = vmatpush1.bf16.xpose.msra.mxu0 0
    %5330 = vmatprep.subr.bf16.mxu0 0
    %5331 = vmatpush1.bf16.xpose.msra.mxu0 0
    %5332 = vmatprep.subr.bf16.mxu0 0
    %5333 = vmatpush1.bf16.xpose.msra.mxu0 0
    %5334 = vmatprep.subr.bf16.mxu0 0
    %5335 = vmatpush1.bf16.xpose.msra.mxu0 0
    %5336 = vmatprep.subr.bf16.mxu0 0
    %5337 = vmatpush1.bf16.xpose.msra.mxu0 0
    %5338 = vmatprep.subr.bf16.mxu0 0
    %5339 = vmatpush1.bf16.xpose.msra.mxu0 0
    %5340 = vmatprep.subr.bf16.mxu0 0
    %5341 = vmatpush1.bf16.xpose.msra.mxu0 0
    %5342 = vmatprep.subr.bf16.mxu0 0
    %5343 = vmatpush1.bf16.xpose.msra.mxu0 0
    %5344 = vmatprep.subr.bf16.mxu0 0
    %5345 = vmatpush1.bf16.xpose.msra.mxu0 0
    %5346 = vmatprep.subr.bf16.mxu0 0
    %5347 = vmatpush1.bf16.xpose.msra.mxu0 0
    %5348 = vmatprep.subr.bf16.mxu0 0
    %5349 = vmatpush1.bf16.xpose.msra.mxu0 0
    %5350 = vmatprep.subr.bf16.mxu0 0
    %5351 = vmatpush1.bf16.xpose.msra.mxu0 0
    %5352 = vmatprep.mubr.bf16.mxu0 0
    %5353 = vmatmul.mubr.bf16.gmra.mrb[0].mxu0 %v5309
    %v5354 = vpop.f32.mrb[0].mxu0
    %v5355 = vadd.f32 %v680, %v5354
    %v5356 = vpop.f32.mrb[0].mxu0
    %v5357 = vpop.f32.mrb[0].mxu0
    %v5358 = vadd.f32 %v681, %v5357
    %v5359 = vpop.f32.mrb[0].mxu0
    %5360 = vmatprep.mubr.bf16.mxu0 0
    %5361 = vmatmul.mubr.bf16.gmra.mrb[0].mxu0 %v5312
    %v5362 = vpop.f32.mrb[0].mxu0
    %v5363 = vadd.f32 %v682, %v5362
    %v5364 = vpop.f32.mrb[0].mxu0
    %v5365 = vpop.f32.mrb[0].mxu0
    %v5366 = vpop.f32.mrb[0].mxu0
    %5367 = vdwg.mxu0
    %v5368 = vsel %vm1203, %v5355, -inf
    %5369 = vmax.xlane.f32.xlu0 %v5368
    %v5370 = vpop.xlane.xlu0 %5369
    %v5371 = vsel %vm1203, %v5358, -inf
    %5372 = vmax.xlane.f32.xlu0 %v5371
    %v5373 = vpop.xlane.xlu0 %5372
    %v5374 = vsel %vm1210, %v5363, -inf
    %5375 = vmax.xlane.f32.xlu0 %v5374
    %v5376 = vpop.xlane.xlu0 %5375
    %v5377 = vsub.f32 %v5355, %v5370
    %v5378 = vsub.f32 %v5358, %v5373
    %v5379 = vsub.f32 %v5363, %v5376
    %v5380 = vmul.f32 %v5377, 1.442695
    %v5381 = vpow.pop %v5380
    %v5382 = vmul.f32 %v5378, 1.442695
    %v5383 = vpow.pop %v5382
    %v5384 = vmul.f32 %v5379, 1.442695
    %v5385 = vpow.pop %v5384
    %v5386 = vsel %vm1203, %v5381, 0.0
    %5387 = vadd.xlane.f32.xlu0 %v5386
    %v5388 = vpop.xlane.xlu0 %5387
    %v5389 = vsel %vm1203, %v5383, 0.0
    %5390 = vadd.xlane.f32.xlu0 %v5389
    %v5391 = vpop.xlane.xlu0 %5390
    %v5392 = vsel %vm1210, %v5385, 0.0
    %5393 = vadd.xlane.f32.xlu0 %v5392
    %v5394 = vpop.xlane.xlu0 %5393
    %v5395 = vrcp.pop %v5388
    %v5396 = vrcp.pop %v5391
    %v5397 = vrcp.pop %v5394
    %v5398 = vmul.f32 %v5381, %v5395
    %v5399 = vmul.f32 %v5383, %v5396
    %v5400 = vmul.f32 %v5385, %v5397
    %v5401 = vpack.c.bf16 %v5399, %v5398
    %v5402 = vpack.c.bf16 %v5400, %v5400
    %5405 = vrot.lane.b32.xlu0 %v5140, 96
    %v5406 = vpop.permute.xlu0 %5405
    %5407 = vrot.lane.b32.xlu0 %v5143, 96
    %v5408 = vpop.permute.xlu0 %5407
    %v5411 = vsel %vm1203, %v5401, 0
    %v5414 = vsel %vm1203, %v5402, 0
    %v5417 = vsel %vm1246, %v5408, 0
    %5419 = vmatprep.subr.bf16.mxu0 0
    %5420 = vmatpush1.bf16.msra.mxu0 %v5406
    %5421 = vmatprep.subr.bf16.mxu0 0
    %5422 = vmatpush1.bf16.msra.mxu0 %v5417
    %5423 = vmatprep.subr.bf16.mxu0 0
    %5424 = vmatpush1.bf16.msra.mxu0 0
    %5425 = vmatprep.subr.bf16.mxu0 0
    %5426 = vmatpush1.bf16.msra.mxu0 0
    %5427 = vmatprep.subr.bf16.mxu0 0
    %5428 = vmatpush1.bf16.msra.mxu0 0
    %5429 = vmatprep.subr.bf16.mxu0 0
    %5430 = vmatpush1.bf16.msra.mxu0 0
    %5431 = vmatprep.subr.bf16.mxu0 0
    %5432 = vmatpush1.bf16.msra.mxu0 0
    %5433 = vmatprep.subr.bf16.mxu0 0
    %5434 = vmatpush1.bf16.msra.mxu0 0
    %5435 = vmatprep.subr.bf16.mxu0 0
    %5436 = vmatpush1.bf16.msra.mxu0 0
    %5437 = vmatprep.subr.bf16.mxu0 0
    %5438 = vmatpush1.bf16.msra.mxu0 0
    %5439 = vmatprep.subr.bf16.mxu0 0
    %5440 = vmatpush1.bf16.msra.mxu0 0
    %5441 = vmatprep.subr.bf16.mxu0 0
    %5442 = vmatpush1.bf16.msra.mxu0 0
    %5443 = vmatprep.subr.bf16.mxu0 0
    %5444 = vmatpush1.bf16.msra.mxu0 0
    %5445 = vmatprep.subr.bf16.mxu0 0
    %5446 = vmatpush1.bf16.msra.mxu0 0
    %5447 = vmatprep.subr.bf16.mxu0 0
    %5448 = vmatpush1.bf16.msra.mxu0 0
    %5449 = vmatprep.subr.bf16.mxu0 0
    %5450 = vmatpush1.bf16.msra.mxu0 0
    %5451 = vmatprep.mubr.bf16.mxu0 0
    %5452 = vmatmul.mubr.bf16.gmra.mrb[0].mxu0 %v5411
    %v5453 = vpop.f32.mrb[0].mxu0
    %v5454 = vadd.f32 0.0, %v5453
    %v5455 = vpop.f32.mrb[0].mxu0
    %v5456 = vpop.f32.mrb[0].mxu0
    %v5457 = vadd.f32 0.0, %v5456
    %v5458 = vpop.f32.mrb[0].mxu0
    %5459 = vmatprep.mubr.bf16.mxu0 0
    %5460 = vmatmul.mubr.bf16.gmra.mrb[0].mxu0 %v5414
    %v5461 = vpop.f32.mrb[0].mxu0
    %v5462 = vadd.f32 0.0, %v5461
    %v5463 = vpop.f32.mrb[0].mxu0
    %v5464 = vpop.f32.mrb[0].mxu0
    %v5465 = vpop.f32.mrb[0].mxu0
    %5466 = vdwg.mxu0
    %5467 = vrot.lane.b32.xlu0 %v5138, 64
    %v5468 = vpop.permute.xlu0 %5467
    %5469 = vrot.lane.b32.xlu0 %v5141, 64
    %v5470 = vpop.permute.xlu0 %5469
    %5471 = vrot.lane.b32.xlu0 %v5139, 64
    %v5472 = vpop.permute.xlu0 %5471
    %5473 = vrot.lane.b32.xlu0 %v5142, 64
    %v5474 = vpop.permute.xlu0 %5473
    %v5476 = vsel %vm1142, %v5468, 0
    %v5479 = vsel %vm1142, %v5470, 0
    %v5482 = vsel %vm1142, %v5472, 0
    %v5485 = vsel %vm1142, %v5474, 0
    %5487 = vmatprep.subr.bf16.mxu0 0
    %5488 = vmatpush1.bf16.xpose.msra.mxu0 %v5482
    %5489 = vmatprep.subr.bf16.mxu0 0
    %5490 = vmatpush1.bf16.xpose.msra.mxu0 %v5485
    %5491 = vmatprep.subr.bf16.mxu0 0
    %5492 = vmatpush1.bf16.xpose.msra.mxu0 0
    %5493 = vmatprep.subr.bf16.mxu0 0
    %5494 = vmatpush1.bf16.xpose.msra.mxu0 0
    %5495 = vmatprep.subr.bf16.mxu0 0
    %5496 = vmatpush1.bf16.xpose.msra.mxu0 0
    %5497 = vmatprep.subr.bf16.mxu0 0
    %5498 = vmatpush1.bf16.xpose.msra.mxu0 0
    %5499 = vmatprep.subr.bf16.mxu0 0
    %5500 = vmatpush1.bf16.xpose.msra.mxu0 0
    %5501 = vmatprep.subr.bf16.mxu0 0
    %5502 = vmatpush1.bf16.xpose.msra.mxu0 0
    %5503 = vmatprep.subr.bf16.mxu0 0
    %5504 = vmatpush1.bf16.xpose.msra.mxu0 0
    %5505 = vmatprep.subr.bf16.mxu0 0
    %5506 = vmatpush1.bf16.xpose.msra.mxu0 0
    %5507 = vmatprep.subr.bf16.mxu0 0
    %5508 = vmatpush1.bf16.xpose.msra.mxu0 0
    %5509 = vmatprep.subr.bf16.mxu0 0
    %5510 = vmatpush1.bf16.xpose.msra.mxu0 0
    %5511 = vmatprep.subr.bf16.mxu0 0
    %5512 = vmatpush1.bf16.xpose.msra.mxu0 0
    %5513 = vmatprep.subr.bf16.mxu0 0
    %5514 = vmatpush1.bf16.xpose.msra.mxu0 0
    %5515 = vmatprep.subr.bf16.mxu0 0
    %5516 = vmatpush1.bf16.xpose.msra.mxu0 0
    %5517 = vmatprep.subr.bf16.mxu0 0
    %5518 = vmatpush1.bf16.xpose.msra.mxu0 0
    %5519 = vmatprep.mubr.bf16.mxu0 0
    %5520 = vmatmul.mubr.bf16.gmra.mrb[0].mxu0 %v5476
    %v5521 = vpop.f32.mrb[0].mxu0
    %v5522 = vadd.f32 %v680, %v5521
    %v5523 = vpop.f32.mrb[0].mxu0
    %v5524 = vpop.f32.mrb[0].mxu0
    %v5525 = vadd.f32 %v681, %v5524
    %v5526 = vpop.f32.mrb[0].mxu0
    %5527 = vmatprep.mubr.bf16.mxu0 0
    %5528 = vmatmul.mubr.bf16.gmra.mrb[0].mxu0 %v5479
    %v5529 = vpop.f32.mrb[0].mxu0
    %v5530 = vadd.f32 %v682, %v5529
    %v5531 = vpop.f32.mrb[0].mxu0
    %v5532 = vpop.f32.mrb[0].mxu0
    %v5533 = vpop.f32.mrb[0].mxu0
    %5534 = vdwg.mxu0
    %v5535 = vsel %vm1203, %v5522, -inf
    %5536 = vmax.xlane.f32.xlu0 %v5535
    %v5537 = vpop.xlane.xlu0 %5536
    %v5538 = vsel %vm1203, %v5525, -inf
    %5539 = vmax.xlane.f32.xlu0 %v5538
    %v5540 = vpop.xlane.xlu0 %5539
    %v5541 = vsel %vm1210, %v5530, -inf
    %5542 = vmax.xlane.f32.xlu0 %v5541
    %v5543 = vpop.xlane.xlu0 %5542
    %v5544 = vsub.f32 %v5522, %v5537
    %v5545 = vsub.f32 %v5525, %v5540
    %v5546 = vsub.f32 %v5530, %v5543
    %v5547 = vmul.f32 %v5544, 1.442695
    %v5548 = vpow.pop %v5547
    %v5549 = vmul.f32 %v5545, 1.442695
    %v5550 = vpow.pop %v5549
    %v5551 = vmul.f32 %v5546, 1.442695
    %v5552 = vpow.pop %v5551
    %v5553 = vsel %vm1203, %v5548, 0.0
    %5554 = vadd.xlane.f32.xlu0 %v5553
    %v5555 = vpop.xlane.xlu0 %5554
    %v5556 = vsel %vm1203, %v5550, 0.0
    %5557 = vadd.xlane.f32.xlu0 %v5556
    %v5558 = vpop.xlane.xlu0 %5557
    %v5559 = vsel %vm1210, %v5552, 0.0
    %5560 = vadd.xlane.f32.xlu0 %v5559
    %v5561 = vpop.xlane.xlu0 %5560
    %v5562 = vrcp.pop %v5555
    %v5563 = vrcp.pop %v5558
    %v5564 = vrcp.pop %v5561
    %v5565 = vmul.f32 %v5548, %v5562
    %v5566 = vmul.f32 %v5550, %v5563
    %v5567 = vmul.f32 %v5552, %v5564
    %v5568 = vpack.c.bf16 %v5566, %v5565
    %v5569 = vpack.c.bf16 %v5567, %v5567
    %5570 = vrot.lane.b32.xlu0 %v5140, 64
    %v5571 = vpop.permute.xlu0 %5570
    %5572 = vrot.lane.b32.xlu0 %v5143, 64
    %v5573 = vpop.permute.xlu0 %5572
    %v5576 = vsel %vm1203, %v5568, 0
    %v5579 = vsel %vm1203, %v5569, 0
    %v5582 = vsel %vm1246, %v5573, 0
    %5584 = vmatprep.subr.bf16.mxu0 0
    %5585 = vmatpush1.bf16.msra.mxu0 %v5571
    %5586 = vmatprep.subr.bf16.mxu0 0
    %5587 = vmatpush1.bf16.msra.mxu0 %v5582
    %5588 = vmatprep.subr.bf16.mxu0 0
    %5589 = vmatpush1.bf16.msra.mxu0 0
    %5590 = vmatprep.subr.bf16.mxu0 0
    %5591 = vmatpush1.bf16.msra.mxu0 0
    %5592 = vmatprep.subr.bf16.mxu0 0
    %5593 = vmatpush1.bf16.msra.mxu0 0
    %5594 = vmatprep.subr.bf16.mxu0 0
    %5595 = vmatpush1.bf16.msra.mxu0 0
    %5596 = vmatprep.subr.bf16.mxu0 0
    %5597 = vmatpush1.bf16.msra.mxu0 0
    %5598 = vmatprep.subr.bf16.mxu0 0
    %5599 = vmatpush1.bf16.msra.mxu0 0
    %5600 = vmatprep.subr.bf16.mxu0 0
    %5601 = vmatpush1.bf16.msra.mxu0 0
    %5602 = vmatprep.subr.bf16.mxu0 0
    %5603 = vmatpush1.bf16.msra.mxu0 0
    %5604 = vmatprep.subr.bf16.mxu0 0
    %5605 = vmatpush1.bf16.msra.mxu0 0
    %5606 = vmatprep.subr.bf16.mxu0 0
    %5607 = vmatpush1.bf16.msra.mxu0 0
    %5608 = vmatprep.subr.bf16.mxu0 0
    %5609 = vmatpush1.bf16.msra.mxu0 0
    %5610 = vmatprep.subr.bf16.mxu0 0
    %5611 = vmatpush1.bf16.msra.mxu0 0
    %5612 = vmatprep.subr.bf16.mxu0 0
    %5613 = vmatpush1.bf16.msra.mxu0 0
    %5614 = vmatprep.subr.bf16.mxu0 0
    %5615 = vmatpush1.bf16.msra.mxu0 0
    %5616 = vmatprep.mubr.bf16.mxu0 0
    %5617 = vmatmul.mubr.bf16.gmra.mrb[0].mxu0 %v5576
    %v5618 = vpop.f32.mrb[0].mxu0
    %v5619 = vadd.f32 0.0, %v5618
    %v5620 = vpop.f32.mrb[0].mxu0
    %v5621 = vpop.f32.mrb[0].mxu0
    %v5622 = vadd.f32 0.0, %v5621
    %v5623 = vpop.f32.mrb[0].mxu0
    %5624 = vmatprep.mubr.bf16.mxu0 0
    %5625 = vmatmul.mubr.bf16.gmra.mrb[0].mxu0 %v5579
    %v5626 = vpop.f32.mrb[0].mxu0
    %v5627 = vadd.f32 0.0, %v5626
    %v5628 = vpop.f32.mrb[0].mxu0
    %v5629 = vpop.f32.mrb[0].mxu0
    %v5630 = vpop.f32.mrb[0].mxu0
    %5631 = vdwg.mxu0
    %5632 = vrot.lane.b32.xlu0 %v5138, 32
    %v5633 = vpop.permute.xlu0 %5632
    %5634 = vrot.lane.b32.xlu0 %v5141, 32
    %v5635 = vpop.permute.xlu0 %5634
    %5636 = vrot.lane.b32.xlu0 %v5139, 32
    %v5637 = vpop.permute.xlu0 %5636
    %5638 = vrot.lane.b32.xlu0 %v5142, 32
    %v5639 = vpop.permute.xlu0 %5638
    %v5641 = vsel %vm1142, %v5633, 0
    %v5644 = vsel %vm1142, %v5635, 0
    %v5647 = vsel %vm1142, %v5637, 0
    %v5650 = vsel %vm1142, %v5639, 0
    %5652 = vmatprep.subr.bf16.mxu0 0
    %5653 = vmatpush1.bf16.xpose.msra.mxu0 %v5647
    %5654 = vmatprep.subr.bf16.mxu0 0
    %5655 = vmatpush1.bf16.xpose.msra.mxu0 %v5650
    %5656 = vmatprep.subr.bf16.mxu0 0
    %5657 = vmatpush1.bf16.xpose.msra.mxu0 0
    %5658 = vmatprep.subr.bf16.mxu0 0
    %5659 = vmatpush1.bf16.xpose.msra.mxu0 0
    %5660 = vmatprep.subr.bf16.mxu0 0
    %5661 = vmatpush1.bf16.xpose.msra.mxu0 0
    %5662 = vmatprep.subr.bf16.mxu0 0
    %5663 = vmatpush1.bf16.xpose.msra.mxu0 0
    %5664 = vmatprep.subr.bf16.mxu0 0
    %5665 = vmatpush1.bf16.xpose.msra.mxu0 0
    %5666 = vmatprep.subr.bf16.mxu0 0
    %5667 = vmatpush1.bf16.xpose.msra.mxu0 0
    %5668 = vmatprep.subr.bf16.mxu0 0
    %5669 = vmatpush1.bf16.xpose.msra.mxu0 0
    %5670 = vmatprep.subr.bf16.mxu0 0
    %5671 = vmatpush1.bf16.xpose.msra.mxu0 0
    %5672 = vmatprep.subr.bf16.mxu0 0
    %5673 = vmatpush1.bf16.xpose.msra.mxu0 0
    %5674 = vmatprep.subr.bf16.mxu0 0
    %5675 = vmatpush1.bf16.xpose.msra.mxu0 0
    %5676 = vmatprep.subr.bf16.mxu0 0
    %5677 = vmatpush1.bf16.xpose.msra.mxu0 0
    %5678 = vmatprep.subr.bf16.mxu0 0
    %5679 = vmatpush1.bf16.xpose.msra.mxu0 0
    %5680 = vmatprep.subr.bf16.mxu0 0
    %5681 = vmatpush1.bf16.xpose.msra.mxu0 0
    %5682 = vmatprep.subr.bf16.mxu0 0
    %5683 = vmatpush1.bf16.xpose.msra.mxu0 0
    %5684 = vmatprep.mubr.bf16.mxu0 0
    %5685 = vmatmul.mubr.bf16.gmra.mrb[0].mxu0 %v5641
    %v5686 = vpop.f32.mrb[0].mxu0
    %v5687 = vadd.f32 %v680, %v5686
    %v5688 = vpop.f32.mrb[0].mxu0
    %v5689 = vpop.f32.mrb[0].mxu0
    %v5690 = vadd.f32 %v681, %v5689
    %v5691 = vpop.f32.mrb[0].mxu0
    %5692 = vmatprep.mubr.bf16.mxu0 0
    %5693 = vmatmul.mubr.bf16.gmra.mrb[0].mxu0 %v5644
    %v5694 = vpop.f32.mrb[0].mxu0
    %v5695 = vadd.f32 %v682, %v5694
    %v5696 = vpop.f32.mrb[0].mxu0
    %v5697 = vpop.f32.mrb[0].mxu0
    %v5698 = vpop.f32.mrb[0].mxu0
    %5699 = vdwg.mxu0
    %v5700 = vsel %vm1203, %v5687, -inf
    %5701 = vmax.xlane.f32.xlu0 %v5700
    %v5702 = vpop.xlane.xlu0 %5701
    %v5703 = vsel %vm1203, %v5690, -inf
    %5704 = vmax.xlane.f32.xlu0 %v5703
    %v5705 = vpop.xlane.xlu0 %5704
    %v5706 = vsel %vm1210, %v5695, -inf
    %5707 = vmax.xlane.f32.xlu0 %v5706
    %v5708 = vpop.xlane.xlu0 %5707
    %v5709 = vsub.f32 %v5687, %v5702
    %v5710 = vsub.f32 %v5690, %v5705
    %v5711 = vsub.f32 %v5695, %v5708
    %v5712 = vmul.f32 %v5709, 1.442695
    %v5713 = vpow.pop %v5712
    %v5714 = vmul.f32 %v5710, 1.442695
    %v5715 = vpow.pop %v5714
    %v5716 = vmul.f32 %v5711, 1.442695
    %v5717 = vpow.pop %v5716
    %v5718 = vsel %vm1203, %v5713, 0.0
    %5719 = vadd.xlane.f32.xlu0 %v5718
    %v5720 = vpop.xlane.xlu0 %5719
    %v5721 = vsel %vm1203, %v5715, 0.0
    %5722 = vadd.xlane.f32.xlu0 %v5721
    %v5723 = vpop.xlane.xlu0 %5722
    %v5724 = vsel %vm1210, %v5717, 0.0
    %5725 = vadd.xlane.f32.xlu0 %v5724
    %v5726 = vpop.xlane.xlu0 %5725
    %v5727 = vrcp.pop %v5720
    %v5728 = vrcp.pop %v5723
    %v5729 = vrcp.pop %v5726
    %v5730 = vmul.f32 %v5713, %v5727
    %v5731 = vmul.f32 %v5715, %v5728
    %v5732 = vmul.f32 %v5717, %v5729
    %v5733 = vpack.c.bf16 %v5731, %v5730
    %v5734 = vpack.c.bf16 %v5732, %v5732
    %5735 = vrot.lane.b32.xlu0 %v5140, 32
    %v5736 = vpop.permute.xlu0 %5735
    %5737 = vrot.lane.b32.xlu0 %v5143, 32
    %v5738 = vpop.permute.xlu0 %5737
    %v5741 = vsel %vm1203, %v5733, 0
    %v5744 = vsel %vm1203, %v5734, 0
    %v5747 = vsel %vm1246, %v5738, 0
    %5749 = vmatprep.subr.bf16.mxu0 0
    %5750 = vmatpush1.bf16.msra.mxu0 %v5736
    %5751 = vmatprep.subr.bf16.mxu0 0
    %5752 = vmatpush1.bf16.msra.mxu0 %v5747
    %5753 = vmatprep.subr.bf16.mxu0 0
    %5754 = vmatpush1.bf16.msra.mxu0 0
    %5755 = vmatprep.subr.bf16.mxu0 0
    %5756 = vmatpush1.bf16.msra.mxu0 0
    %5757 = vmatprep.subr.bf16.mxu0 0
    %5758 = vmatpush1.bf16.msra.mxu0 0
    %5759 = vmatprep.subr.bf16.mxu0 0
    %5760 = vmatpush1.bf16.msra.mxu0 0
    %5761 = vmatprep.subr.bf16.mxu0 0
    %5762 = vmatpush1.bf16.msra.mxu0 0
    %5763 = vmatprep.subr.bf16.mxu0 0
    %5764 = vmatpush1.bf16.msra.mxu0 0
    %5765 = vmatprep.subr.bf16.mxu0 0
    %5766 = vmatpush1.bf16.msra.mxu0 0
    %5767 = vmatprep.subr.bf16.mxu0 0
    %5768 = vmatpush1.bf16.msra.mxu0 0
    %5769 = vmatprep.subr.bf16.mxu0 0
    %5770 = vmatpush1.bf16.msra.mxu0 0
    %5771 = vmatprep.subr.bf16.mxu0 0
    %5772 = vmatpush1.bf16.msra.mxu0 0
    %5773 = vmatprep.subr.bf16.mxu0 0
    %5774 = vmatpush1.bf16.msra.mxu0 0
    %5775 = vmatprep.subr.bf16.mxu0 0
    %5776 = vmatpush1.bf16.msra.mxu0 0
    %5777 = vmatprep.subr.bf16.mxu0 0
    %5778 = vmatpush1.bf16.msra.mxu0 0
    %5779 = vmatprep.subr.bf16.mxu0 0
    %5780 = vmatpush1.bf16.msra.mxu0 0
    %5781 = vmatprep.mubr.bf16.mxu0 0
    %5782 = vmatmul.mubr.bf16.gmra.mrb[0].mxu0 %v5741
    %v5783 = vpop.f32.mrb[0].mxu0
    %v5784 = vadd.f32 0.0, %v5783
    %v5785 = vpop.f32.mrb[0].mxu0
    %v5786 = vpop.f32.mrb[0].mxu0
    %v5787 = vadd.f32 0.0, %v5786
    %v5788 = vpop.f32.mrb[0].mxu0
    %5789 = vmatprep.mubr.bf16.mxu0 0
    %5790 = vmatmul.mubr.bf16.gmra.mrb[0].mxu0 %v5744
    %v5791 = vpop.f32.mrb[0].mxu0
    %v5792 = vadd.f32 0.0, %v5791
    %v5793 = vpop.f32.mrb[0].mxu0
    %v5794 = vpop.f32.mrb[0].mxu0
    %v5795 = vpop.f32.mrb[0].mxu0
    %5796 = vdwg.mxu0
    %5800 = vrot.lane.b32.xlu0 %v5454, 32
    %v5801 = vpop.permute.xlu0 %5800
    %5802 = vrot.lane.b32.xlu0 %v5457, 32
    %v5803 = vpop.permute.xlu0 %5802
    %5804 = vrot.lane.b32.xlu0 %v5462, 32
    %v5805 = vpop.permute.xlu0 %5804
    %5812 = vrot.lane.b32.xlu0 %v5619, 64
    %v5813 = vpop.permute.xlu0 %5812
    %5814 = vrot.lane.b32.xlu0 %v5622, 64
    %v5815 = vpop.permute.xlu0 %5814
    %5816 = vrot.lane.b32.xlu0 %v5627, 64
    %v5817 = vpop.permute.xlu0 %5816
    %5824 = vrot.lane.b32.xlu0 %v5784, 96
    %v5825 = vpop.permute.xlu0 %5824
    %5826 = vrot.lane.b32.xlu0 %v5787, 96
    %v5827 = vpop.permute.xlu0 %5826
    %5828 = vrot.lane.b32.xlu0 %v5792, 96
    %v5829 = vpop.permute.xlu0 %5828
    %v5833 = vsel %vm1142, %v5283, %v5801
    %v5834 = vsel %vm1142, %v5286, %v5803
    %v5835 = vsel %vm1142, %v5291, %v5805
    %v5836 = vsel %vm1838, %v5833, %v5813
    %v5837 = vsel %vm1838, %v5834, %v5815
    %v5838 = vsel %vm1838, %v5835, %v5817
    %v5839 = vsel %vm1842, %v5836, %v5825
    %v5840 = vsel %vm1842, %v5837, %v5827
    %v5841 = vsel %vm1842, %v5838, %v5829
    %v5842 = vpack.c.bf16 %v5840, %v5839
    %v5843 = vpack.c.bf16 %v5841, %v5841
    %v5845 = vlaneseq
    %v5846 = vshrl.u32 %v5845, 7
    %v5847 = vsub.s32 0, %v5846
    %v5848 = vrot.slane %v4729, %v5847
    %v5866 = vunpack.c.l.b16 %v4712
    %v5867 = vunpack.c.l.b16 %v4713
    %v5868 = vunpack.c.l.b16 %v4714
    %v5869 = vunpack.c.l.b16 %v4715
    %v5870 = vunpack.c.l.b16 %v4716
    %v5871 = vunpack.c.l.b16 %v4717
    %v5872 = vunpack.c.l.b16 %v4718
    %v5873 = vunpack.c.l.b16 %v4719
    %v5874 = vunpack.c.l.b16 %v4720
    %v5875 = vunpack.c.l.b16 %v4721
    %v5876 = vunpack.c.l.b16 %v4722
    %v5877 = vunpack.c.l.b16 %v4723
    %v5878 = vunpack.c.l.b16 %v4724
    %v5879 = vunpack.c.l.b16 %v4725
    %v5880 = vunpack.c.l.b16 %v4726
    %v5881 = vunpack.c.l.b16 %v4727
    %v5882 = vpack.c.b16 %v5867, %v5866
    %v5883 = vpack.c.b16 %v5869, %v5868
    %v5884 = vpack.c.b16 %v5871, %v5870
    %v5885 = vpack.c.b16 %v5873, %v5872
    %v5886 = vpack.c.b16 %v5875, %v5874
    %v5887 = vpack.c.b16 %v5877, %v5876
    %v5888 = vpack.c.b16 %v5879, %v5878
    %v5889 = vpack.c.b16 %v5881, %v5880
    %5898 = vmatprep.subr.bf16.mxu0 0
    %5899 = vmatpush1.bf16.msra.mxu0 %v5882
    %5900 = vmatprep.subr.bf16.mxu0 0
    %5901 = vmatpush1.bf16.msra.mxu0 %v5883
    %5902 = vmatprep.subr.bf16.mxu0 0
    %5903 = vmatpush1.bf16.msra.mxu0 %v5884
    %5904 = vmatprep.subr.bf16.mxu0 0
    %5905 = vmatpush1.bf16.msra.mxu0 %v5885
    %5906 = vmatprep.subr.bf16.mxu0 0
    %5907 = vmatpush1.bf16.msra.mxu0 %v5886
    %5908 = vmatprep.subr.bf16.mxu0 0
    %5909 = vmatpush1.bf16.msra.mxu0 %v5887
    %5910 = vmatprep.subr.bf16.mxu0 0
    %5911 = vmatpush1.bf16.msra.mxu0 %v5888
    %5912 = vmatprep.subr.bf16.mxu0 0
    %5913 = vmatpush1.bf16.msra.mxu0 %v5889
    %5914 = vmatprep.subr.bf16.mxu0 0
    %5915 = vmatpush1.bf16.msra.mxu0 0
    %5916 = vmatprep.subr.bf16.mxu0 0
    %5917 = vmatpush1.bf16.msra.mxu0 0
    %5918 = vmatprep.subr.bf16.mxu0 0
    %5919 = vmatpush1.bf16.msra.mxu0 0
    %5920 = vmatprep.subr.bf16.mxu0 0
    %5921 = vmatpush1.bf16.msra.mxu0 0
    %5922 = vmatprep.subr.bf16.mxu0 0
    %5923 = vmatpush1.bf16.msra.mxu0 0
    %5924 = vmatprep.subr.bf16.mxu0 0
    %5925 = vmatpush1.bf16.msra.mxu0 0
    %5926 = vmatprep.subr.bf16.mxu0 0
    %5927 = vmatpush1.bf16.msra.mxu0 0
    %5928 = vmatprep.subr.bf16.mxu0 0
    %5929 = vmatpush1.bf16.msra.mxu0 0
    %5930 = vmatprep.mubr.bf16.mxu0 0
    %5931 = vmatmul.mubr.bf16.gmra.mrb[0].mxu0 %v5842
    %v5932 = vpop.f32.mrb[0].mxu0
    %v5933 = vadd.f32 %v5848, %v5932
    %v5934 = vpop.f32.mrb[0].mxu0
    %v5935 = vpop.f32.mrb[0].mxu0
    %v5936 = vadd.f32 %v5848, %v5935
    %v5937 = vpop.f32.mrb[0].mxu0
    %5938 = vmatprep.mubr.bf16.mxu0 0
    %5939 = vmatmul.mubr.bf16.gmra.mrb[0].mxu0 %v5843
    %v5940 = vpop.f32.mrb[0].mxu0
    %v5941 = vadd.f32 %v5848, %v5940
    %v5942 = vpop.f32.mrb[0].mxu0
    %v5943 = vpop.f32.mrb[0].mxu0
    %v5944 = vpop.f32.mrb[0].mxu0
    %5945 = vdwg.mxu0
    %v5947 = vlaneseq
    %v5948 = vshrl.u32 %v5947, 7
    %v5949 = vsub.s32 0, %v5948
    %v5950 = vrot.slane %v4731, %v5949
    %v5952 = vmul.f32 %v5933, %v5950
    %v5953 = vmul.f32 %v5936, %v5950
    %v5954 = vmul.f32 %v5941, %v5950
    %v5955 = vadd.f32 %v4669, %v5952
    %v5956 = vadd.f32 %v4670, %v5953
    %v5957 = vadd.f32 %v4671, %v5954
    %5958 = vadd.xlane.f32.xlu0 %v5955
    %v5959 = vpop.xlane.xlu0 %5958
    %5960 = vadd.xlane.f32.xlu0 %v5956
    %v5961 = vpop.xlane.xlu0 %5960
    %v5962 = vsel %vm678, %v5957, 0.0
    %5963 = vadd.xlane.f32.xlu0 %v5962
    %v5964 = vpop.xlane.xlu0 %5963
    %v5965 = vmul.f32 %v5959, %v844
    %v5966 = vmul.f32 %v5961, %v844
    %v5967 = vmul.f32 %v5964, %v844
    %v5968 = vsub.f32 %v5955, %v5965
    %v5969 = vsub.f32 %v5956, %v5966
    %v5970 = vsub.f32 %v5957, %v5967
    %v5971 = vmul.f32 %v5968, %v5968
    %v5972 = vmul.f32 %v5969, %v5969
    %v5973 = vmul.f32 %v5970, %v5970
    %5974 = vadd.xlane.f32.xlu0 %v5971
    %v5975 = vpop.xlane.xlu0 %5974
    %5976 = vadd.xlane.f32.xlu0 %v5972
    %v5977 = vpop.xlane.xlu0 %5976
    %v5978 = vsel %vm678, %v5973, 0.0
    %5979 = vadd.xlane.f32.xlu0 %v5978
    %v5980 = vpop.xlane.xlu0 %5979
    %v5981 = vmul.f32 %v5975, %v844
    %v5982 = vmul.f32 %v5977, %v844
    %v5983 = vmul.f32 %v5980, %v844
    %v5984 = vadd.f32 %v5981, 1e-06
    %v5985 = vadd.f32 %v5982, 1e-06
    %v5986 = vadd.f32 %v5983, 1e-06
    %v5987 = vrsqrt.pop %v5984
    %v5988 = vrsqrt.pop %v5985
    %v5989 = vrsqrt.pop %v5986
    %v5990 = vmul.f32 %v5968, %v5987
    %v5991 = vmul.f32 %v5969, %v5988
    %v5992 = vmul.f32 %v5970, %v5989
    %v5994 = vlaneseq
    %v5995 = vshrl.u32 %v5994, 7
    %v5996 = vsub.s32 0, %v5995
    %v5997 = vrot.slane %v4733, %v5996
    %v5999 = vmul.f32 %v5990, %v5997
    %v6000 = vmul.f32 %v5991, %v5997
    %v6001 = vmul.f32 %v5992, %v5997
    %v6003 = vlaneseq
    %v6004 = vshrl.u32 %v6003, 7
    %v6005 = vsub.s32 0, %v6004
    %v6006 = vrot.slane %v4735, %v6005
    %v6008 = vadd.f32 %v5999, %v6006
    %v6009 = vadd.f32 %v6000, %v6006
    %v6010 = vadd.f32 %v6001, %v6006
    %v6011 = vpack.c.bf16 %v6009, %v6008
    %v6012 = vpack.c.bf16 %v6010, %v6010
    %v6014 = vlaneseq
    %v6015 = vshrl.u32 %v6014, 7
    %v6016 = vsub.s32 0, %v6015
    %v6017 = vrot.slane %v4770, %v6016
    %v6018 = vlaneseq
    %v6019 = vshrl.u32 %v6018, 7
    %v6020 = vsub.s32 1, %v6019
    %v6021 = vrot.slane %v4770, %v6020
    %v6022 = vlaneseq
    %v6023 = vshrl.u32 %v6022, 7
    %v6024 = vsub.s32 2, %v6023
    %v6025 = vrot.slane %v4770, %v6024
    %v6026 = vlaneseq
    %v6027 = vshrl.u32 %v6026, 7
    %v6028 = vsub.s32 3, %v6027
    %v6029 = vrot.slane %v4770, %v6028
    %v6066 = vunpack.c.l.b16 %v4737
    %v6067 = vunpack.c.h.b16 %v4737
    %v6068 = vunpack.c.l.b16 %v4738
    %v6069 = vunpack.c.h.b16 %v4738
    %v6070 = vunpack.c.l.b16 %v4739
    %v6071 = vunpack.c.h.b16 %v4739
    %v6072 = vunpack.c.l.b16 %v4740
    %v6073 = vunpack.c.h.b16 %v4740
    %v6074 = vunpack.c.l.b16 %v4741
    %v6075 = vunpack.c.h.b16 %v4741
    %v6076 = vunpack.c.l.b16 %v4742
    %v6077 = vunpack.c.h.b16 %v4742
    %v6078 = vunpack.c.l.b16 %v4743
    %v6079 = vunpack.c.h.b16 %v4743
    %v6080 = vunpack.c.l.b16 %v4744
    %v6081 = vunpack.c.h.b16 %v4744
    %v6082 = vunpack.c.l.b16 %v4745
    %v6083 = vunpack.c.h.b16 %v4745
    %v6084 = vunpack.c.l.b16 %v4746
    %v6085 = vunpack.c.h.b16 %v4746
    %v6086 = vunpack.c.l.b16 %v4747
    %v6087 = vunpack.c.h.b16 %v4747
    %v6088 = vunpack.c.l.b16 %v4748
    %v6089 = vunpack.c.h.b16 %v4748
    %v6090 = vunpack.c.l.b16 %v4749
    %v6091 = vunpack.c.h.b16 %v4749
    %v6092 = vunpack.c.l.b16 %v4750
    %v6093 = vunpack.c.h.b16 %v4750
    %v6094 = vunpack.c.l.b16 %v4751
    %v6095 = vunpack.c.h.b16 %v4751
    %v6096 = vunpack.c.l.b16 %v4752
    %v6097 = vunpack.c.h.b16 %v4752
    %v6098 = vunpack.c.l.b16 %v4753
    %v6099 = vunpack.c.h.b16 %v4753
    %v6100 = vunpack.c.l.b16 %v4754
    %v6101 = vunpack.c.h.b16 %v4754
    %v6102 = vunpack.c.l.b16 %v4755
    %v6103 = vunpack.c.h.b16 %v4755
    %v6104 = vunpack.c.l.b16 %v4756
    %v6105 = vunpack.c.h.b16 %v4756
    %v6106 = vunpack.c.l.b16 %v4757
    %v6107 = vunpack.c.h.b16 %v4757
    %v6108 = vunpack.c.l.b16 %v4758
    %v6109 = vunpack.c.h.b16 %v4758
    %v6110 = vunpack.c.l.b16 %v4759
    %v6111 = vunpack.c.h.b16 %v4759
    %v6112 = vunpack.c.l.b16 %v4760
    %v6113 = vunpack.c.h.b16 %v4760
    %v6114 = vunpack.c.l.b16 %v4761
    %v6115 = vunpack.c.h.b16 %v4761
    %v6116 = vunpack.c.l.b16 %v4762
    %v6117 = vunpack.c.h.b16 %v4762
    %v6118 = vunpack.c.l.b16 %v4763
    %v6119 = vunpack.c.h.b16 %v4763
    %v6120 = vunpack.c.l.b16 %v4764
    %v6121 = vunpack.c.h.b16 %v4764
    %v6122 = vunpack.c.l.b16 %v4765
    %v6123 = vunpack.c.h.b16 %v4765
    %v6124 = vunpack.c.l.b16 %v4766
    %v6125 = vunpack.c.h.b16 %v4766
    %v6126 = vunpack.c.l.b16 %v4767
    %v6127 = vunpack.c.h.b16 %v4767
    %v6128 = vunpack.c.l.b16 %v4768
    %v6129 = vunpack.c.h.b16 %v4768
    %v6130 = vpack.c.b16 %v6070, %v6066
    %v6131 = vpack.c.b16 %v6071, %v6067
    %v6132 = vpack.c.b16 %v6072, %v6068
    %v6133 = vpack.c.b16 %v6073, %v6069
    %v6134 = vpack.c.b16 %v6078, %v6074
    %v6135 = vpack.c.b16 %v6079, %v6075
    %v6136 = vpack.c.b16 %v6080, %v6076
    %v6137 = vpack.c.b16 %v6081, %v6077
    %v6138 = vpack.c.b16 %v6086, %v6082
    %v6139 = vpack.c.b16 %v6087, %v6083
    %v6140 = vpack.c.b16 %v6088, %v6084
    %v6141 = vpack.c.b16 %v6089, %v6085
    %v6142 = vpack.c.b16 %v6094, %v6090
    %v6143 = vpack.c.b16 %v6095, %v6091
    %v6144 = vpack.c.b16 %v6096, %v6092
    %v6145 = vpack.c.b16 %v6097, %v6093
    %v6146 = vpack.c.b16 %v6102, %v6098
    %v6147 = vpack.c.b16 %v6103, %v6099
    %v6148 = vpack.c.b16 %v6104, %v6100
    %v6149 = vpack.c.b16 %v6105, %v6101
    %v6150 = vpack.c.b16 %v6110, %v6106
    %v6151 = vpack.c.b16 %v6111, %v6107
    %v6152 = vpack.c.b16 %v6112, %v6108
    %v6153 = vpack.c.b16 %v6113, %v6109
    %v6154 = vpack.c.b16 %v6118, %v6114
    %v6155 = vpack.c.b16 %v6119, %v6115
    %v6156 = vpack.c.b16 %v6120, %v6116
    %v6157 = vpack.c.b16 %v6121, %v6117
    %v6158 = vpack.c.b16 %v6126, %v6122
    %v6159 = vpack.c.b16 %v6127, %v6123
    %v6160 = vpack.c.b16 %v6128, %v6124
    %v6161 = vpack.c.b16 %v6129, %v6125
    %6194 = vmatprep.subr.bf16.mxu0 %v6131
    %6195 = vmatpush1.bf16.msra.mxu0 %v6130
    %6196 = vmatprep.subr.bf16.mxu0 %v6135
    %6197 = vmatpush1.bf16.msra.mxu0 %v6134
    %6198 = vmatprep.subr.bf16.mxu0 %v6139
    %6199 = vmatpush1.bf16.msra.mxu0 %v6138
    %6200 = vmatprep.subr.bf16.mxu0 %v6143
    %6201 = vmatpush1.bf16.msra.mxu0 %v6142
    %6202 = vmatprep.subr.bf16.mxu0 %v6147
    %6203 = vmatpush1.bf16.msra.mxu0 %v6146
    %6204 = vmatprep.subr.bf16.mxu0 %v6151
    %6205 = vmatpush1.bf16.msra.mxu0 %v6150
    %6206 = vmatprep.subr.bf16.mxu0 %v6155
    %6207 = vmatpush1.bf16.msra.mxu0 %v6154
    %6208 = vmatprep.subr.bf16.mxu0 %v6159
    %6209 = vmatpush1.bf16.msra.mxu0 %v6158
    %6210 = vmatprep.subr.bf16.mxu0 0
    %6211 = vmatpush1.bf16.msra.mxu0 0
    %6212 = vmatprep.subr.bf16.mxu0 0
    %6213 = vmatpush1.bf16.msra.mxu0 0
    %6214 = vmatprep.subr.bf16.mxu0 0
    %6215 = vmatpush1.bf16.msra.mxu0 0
    %6216 = vmatprep.subr.bf16.mxu0 0
    %6217 = vmatpush1.bf16.msra.mxu0 0
    %6218 = vmatprep.subr.bf16.mxu0 0
    %6219 = vmatpush1.bf16.msra.mxu0 0
    %6220 = vmatprep.subr.bf16.mxu0 0
    %6221 = vmatpush1.bf16.msra.mxu0 0
    %6222 = vmatprep.subr.bf16.mxu0 0
    %6223 = vmatpush1.bf16.msra.mxu0 0
    %6224 = vmatprep.subr.bf16.mxu0 0
    %6225 = vmatpush1.bf16.msra.mxu0 0
    %6226 = vmatprep.mubr.bf16.mxu0 0
    %6227 = vmatmul.mubr.bf16.gmra.mrb[0].mxu0 %v6011
    %v6228 = vpop.f32.mrb[0].mxu0
    %v6229 = vadd.f32 %v6017, %v6228
    %v6230 = vpop.f32.mrb[0].mxu0
    %v6231 = vadd.f32 %v6021, %v6230
    %v6232 = vpop.f32.mrb[0].mxu0
    %v6233 = vadd.f32 %v6017, %v6232
    %v6234 = vpop.f32.mrb[0].mxu0
    %v6235 = vadd.f32 %v6021, %v6234
    %6236 = vmatprep.mubr.bf16.mxu0 0
    %6237 = vmatmul.mubr.bf16.gmra.mrb[0].mxu0 %v6012
    %v6238 = vpop.f32.mrb[0].mxu0
    %v6239 = vadd.f32 %v6017, %v6238
    %v6240 = vpop.f32.mrb[0].mxu0
    %v6241 = vadd.f32 %v6021, %v6240
    %v6242 = vpop.f32.mrb[0].mxu0
    %v6243 = vpop.f32.mrb[0].mxu0
    %6244 = vdwg.mxu0
    %6245 = vmatprep.subr.bf16.mxu0 %v6133
    %6246 = vmatpush1.bf16.msra.mxu0 %v6132
    %6247 = vmatprep.subr.bf16.mxu0 %v6137
    %6248 = vmatpush1.bf16.msra.mxu0 %v6136
    %6249 = vmatprep.subr.bf16.mxu0 %v6141
    %6250 = vmatpush1.bf16.msra.mxu0 %v6140
    %6251 = vmatprep.subr.bf16.mxu0 %v6145
    %6252 = vmatpush1.bf16.msra.mxu0 %v6144
    %6253 = vmatprep.subr.bf16.mxu0 %v6149
    %6254 = vmatpush1.bf16.msra.mxu0 %v6148
    %6255 = vmatprep.subr.bf16.mxu0 %v6153
    %6256 = vmatpush1.bf16.msra.mxu0 %v6152
    %6257 = vmatprep.subr.bf16.mxu0 %v6157
    %6258 = vmatpush1.bf16.msra.mxu0 %v6156
    %6259 = vmatprep.subr.bf16.mxu0 %v6161
    %6260 = vmatpush1.bf16.msra.mxu0 %v6160
    %6261 = vmatprep.subr.bf16.mxu0 0
    %6262 = vmatpush1.bf16.msra.mxu0 0
    %6263 = vmatprep.subr.bf16.mxu0 0
    %6264 = vmatpush1.bf16.msra.mxu0 0
    %6265 = vmatprep.subr.bf16.mxu0 0
    %6266 = vmatpush1.bf16.msra.mxu0 0
    %6267 = vmatprep.subr.bf16.mxu0 0
    %6268 = vmatpush1.bf16.msra.mxu0 0
    %6269 = vmatprep.subr.bf16.mxu0 0
    %6270 = vmatpush1.bf16.msra.mxu0 0
    %6271 = vmatprep.subr.bf16.mxu0 0
    %6272 = vmatpush1.bf16.msra.mxu0 0
    %6273 = vmatprep.subr.bf16.mxu0 0
    %6274 = vmatpush1.bf16.msra.mxu0 0
    %6275 = vmatprep.subr.bf16.mxu0 0
    %6276 = vmatpush1.bf16.msra.mxu0 0
    %6277 = vmatprep.mubr.bf16.mxu0 0
    %6278 = vmatmul.mubr.bf16.gmra.mrb[0].mxu0 %v6011
    %v6279 = vpop.f32.mrb[0].mxu0
    %v6280 = vadd.f32 %v6025, %v6279
    %v6281 = vpop.f32.mrb[0].mxu0
    %v6282 = vadd.f32 %v6029, %v6281
    %v6283 = vpop.f32.mrb[0].mxu0
    %v6284 = vadd.f32 %v6025, %v6283
    %v6285 = vpop.f32.mrb[0].mxu0
    %v6286 = vadd.f32 %v6029, %v6285
    %6287 = vmatprep.mubr.bf16.mxu0 0
    %6288 = vmatmul.mubr.bf16.gmra.mrb[0].mxu0 %v6012
    %v6289 = vpop.f32.mrb[0].mxu0
    %v6290 = vadd.f32 %v6025, %v6289
    %v6291 = vpop.f32.mrb[0].mxu0
    %v6292 = vadd.f32 %v6029, %v6291
    %v6293 = vpop.f32.mrb[0].mxu0
    %v6294 = vpop.f32.mrb[0].mxu0
    %6295 = vdwg.mxu0
    %v6296 = vmul.f32 %v6229, 0.5
    %v6297 = vmul.f32 %v6231, 0.5
    %v6298 = vmul.f32 %v6280, 0.5
    %v6299 = vmul.f32 %v6282, 0.5
    %v6300 = vmul.f32 %v6233, 0.5
    %v6301 = vmul.f32 %v6235, 0.5
    %v6302 = vmul.f32 %v6284, 0.5
    %v6303 = vmul.f32 %v6286, 0.5
    %v6304 = vmul.f32 %v6239, 0.5
    %v6305 = vmul.f32 %v6241, 0.5
    %v6306 = vmul.f32 %v6290, 0.5
    %v6307 = vmul.f32 %v6292, 0.5
    %v6308 = vmul.f32 %v6229, 0.70710677
    %v6309 = vmul.f32 %v6231, 0.70710677
    %v6310 = vmul.f32 %v6280, 0.70710677
    %v6311 = vmul.f32 %v6282, 0.70710677
    %v6312 = vmul.f32 %v6233, 0.70710677
    %v6313 = vmul.f32 %v6235, 0.70710677
    %v6314 = vmul.f32 %v6284, 0.70710677
    %v6315 = vmul.f32 %v6286, 0.70710677
    %v6316 = vmul.f32 %v6239, 0.70710677
    %v6317 = vmul.f32 %v6241, 0.70710677
    %v6318 = vmul.f32 %v6290, 0.70710677
    %v6319 = vmul.f32 %v6292, 0.70710677
    %v6320 = verf.f32.pop %v6308
    %v6321 = verf.f32.pop %v6309
    %v6322 = verf.f32.pop %v6310
    %v6323 = verf.f32.pop %v6311
    %v6324 = verf.f32.pop %v6312
    %v6325 = verf.f32.pop %v6313
    %v6326 = verf.f32.pop %v6314
    %v6327 = verf.f32.pop %v6315
    %v6328 = verf.f32.pop %v6316
    %v6329 = verf.f32.pop %v6317
    %v6330 = verf.f32.pop %v6318
    %v6331 = verf.f32.pop %v6319
    %v6332 = vadd.f32 %v6320, 1.0
    %v6333 = vadd.f32 %v6321, 1.0
    %v6334 = vadd.f32 %v6322, 1.0
    %v6335 = vadd.f32 %v6323, 1.0
    %v6336 = vadd.f32 %v6324, 1.0
    %v6337 = vadd.f32 %v6325, 1.0
    %v6338 = vadd.f32 %v6326, 1.0
    %v6339 = vadd.f32 %v6327, 1.0
    %v6340 = vadd.f32 %v6328, 1.0
    %v6341 = vadd.f32 %v6329, 1.0
    %v6342 = vadd.f32 %v6330, 1.0
    %v6343 = vadd.f32 %v6331, 1.0
    %v6344 = vmul.f32 %v6296, %v6332
    %v6345 = vmul.f32 %v6297, %v6333
    %v6346 = vmul.f32 %v6298, %v6334
    %v6347 = vmul.f32 %v6299, %v6335
    %v6348 = vmul.f32 %v6300, %v6336
    %v6349 = vmul.f32 %v6301, %v6337
    %v6350 = vmul.f32 %v6302, %v6338
    %v6351 = vmul.f32 %v6303, %v6339
    %v6352 = vmul.f32 %v6304, %v6340
    %v6353 = vmul.f32 %v6305, %v6341
    %v6354 = vmul.f32 %v6306, %v6342
    %v6355 = vmul.f32 %v6307, %v6343
    %v6356 = vpack.c.bf16 %v6348, %v6344
    %v6357 = vpack.c.bf16 %v6349, %v6345
    %v6358 = vpack.c.bf16 %v6350, %v6346
    %v6359 = vpack.c.bf16 %v6351, %v6347
    %v6360 = vpack.c.bf16 %v6352, %v6352
    %v6361 = vpack.c.bf16 %v6353, %v6353
    %v6362 = vpack.c.bf16 %v6354, %v6354
    %v6363 = vpack.c.bf16 %v6355, %v6355
    %v6365 = vlaneseq
    %v6366 = vshrl.u32 %v6365, 7
    %v6367 = vsub.s32 0, %v6366
    %v6368 = vrot.slane %v4837, %v6367
    %v6434 = vunpack.c.l.b16 %v4772
    %v6435 = vunpack.c.l.b16 %v4773
    %v6436 = vunpack.c.l.b16 %v4774
    %v6437 = vunpack.c.l.b16 %v4775
    %v6438 = vunpack.c.l.b16 %v4776
    %v6439 = vunpack.c.l.b16 %v4777
    %v6440 = vunpack.c.l.b16 %v4778
    %v6441 = vunpack.c.l.b16 %v4779
    %v6442 = vunpack.c.l.b16 %v4780
    %v6443 = vunpack.c.l.b16 %v4781
    %v6444 = vunpack.c.l.b16 %v4782
    %v6445 = vunpack.c.l.b16 %v4783
    %v6446 = vunpack.c.l.b16 %v4784
    %v6447 = vunpack.c.l.b16 %v4785
    %v6448 = vunpack.c.l.b16 %v4786
    %v6449 = vunpack.c.l.b16 %v4787
    %v6450 = vunpack.c.l.b16 %v4788
    %v6451 = vunpack.c.l.b16 %v4789
    %v6452 = vunpack.c.l.b16 %v4790
    %v6453 = vunpack.c.l.b16 %v4791
    %v6454 = vunpack.c.l.b16 %v4792
    %v6455 = vunpack.c.l.b16 %v4793
    %v6456 = vunpack.c.l.b16 %v4794
    %v6457 = vunpack.c.l.b16 %v4795
    %v6458 = vunpack.c.l.b16 %v4796
    %v6459 = vunpack.c.l.b16 %v4797
    %v6460 = vunpack.c.l.b16 %v4798
    %v6461 = vunpack.c.l.b16 %v4799
    %v6462 = vunpack.c.l.b16 %v4800
    %v6463 = vunpack.c.l.b16 %v4801
    %v6464 = vunpack.c.l.b16 %v4802
    %v6465 = vunpack.c.l.b16 %v4803
    %v6466 = vunpack.c.l.b16 %v4804
    %v6467 = vunpack.c.l.b16 %v4805
    %v6468 = vunpack.c.l.b16 %v4806
    %v6469 = vunpack.c.l.b16 %v4807
    %v6470 = vunpack.c.l.b16 %v4808
    %v6471 = vunpack.c.l.b16 %v4809
    %v6472 = vunpack.c.l.b16 %v4810
    %v6473 = vunpack.c.l.b16 %v4811
    %v6474 = vunpack.c.l.b16 %v4812
    %v6475 = vunpack.c.l.b16 %v4813
    %v6476 = vunpack.c.l.b16 %v4814
    %v6477 = vunpack.c.l.b16 %v4815
    %v6478 = vunpack.c.l.b16 %v4816
    %v6479 = vunpack.c.l.b16 %v4817
    %v6480 = vunpack.c.l.b16 %v4818
    %v6481 = vunpack.c.l.b16 %v4819
    %v6482 = vunpack.c.l.b16 %v4820
    %v6483 = vunpack.c.l.b16 %v4821
    %v6484 = vunpack.c.l.b16 %v4822
    %v6485 = vunpack.c.l.b16 %v4823
    %v6486 = vunpack.c.l.b16 %v4824
    %v6487 = vunpack.c.l.b16 %v4825
    %v6488 = vunpack.c.l.b16 %v4826
    %v6489 = vunpack.c.l.b16 %v4827
    %v6490 = vunpack.c.l.b16 %v4828
    %v6491 = vunpack.c.l.b16 %v4829
    %v6492 = vunpack.c.l.b16 %v4830
    %v6493 = vunpack.c.l.b16 %v4831
    %v6494 = vunpack.c.l.b16 %v4832
    %v6495 = vunpack.c.l.b16 %v4833
    %v6496 = vunpack.c.l.b16 %v4834
    %v6497 = vunpack.c.l.b16 %v4835
    %v6498 = vpack.c.b16 %v6435, %v6434
    %v6499 = vpack.c.b16 %v6437, %v6436
    %v6500 = vpack.c.b16 %v6439, %v6438
    %v6501 = vpack.c.b16 %v6441, %v6440
    %v6502 = vpack.c.b16 %v6443, %v6442
    %v6503 = vpack.c.b16 %v6445, %v6444
    %v6504 = vpack.c.b16 %v6447, %v6446
    %v6505 = vpack.c.b16 %v6449, %v6448
    %v6506 = vpack.c.b16 %v6451, %v6450
    %v6507 = vpack.c.b16 %v6453, %v6452
    %v6508 = vpack.c.b16 %v6455, %v6454
    %v6509 = vpack.c.b16 %v6457, %v6456
    %v6510 = vpack.c.b16 %v6459, %v6458
    %v6511 = vpack.c.b16 %v6461, %v6460
    %v6512 = vpack.c.b16 %v6463, %v6462
    %v6513 = vpack.c.b16 %v6465, %v6464
    %v6514 = vpack.c.b16 %v6467, %v6466
    %v6515 = vpack.c.b16 %v6469, %v6468
    %v6516 = vpack.c.b16 %v6471, %v6470
    %v6517 = vpack.c.b16 %v6473, %v6472
    %v6518 = vpack.c.b16 %v6475, %v6474
    %v6519 = vpack.c.b16 %v6477, %v6476
    %v6520 = vpack.c.b16 %v6479, %v6478
    %v6521 = vpack.c.b16 %v6481, %v6480
    %v6522 = vpack.c.b16 %v6483, %v6482
    %v6523 = vpack.c.b16 %v6485, %v6484
    %v6524 = vpack.c.b16 %v6487, %v6486
    %v6525 = vpack.c.b16 %v6489, %v6488
    %v6526 = vpack.c.b16 %v6491, %v6490
    %v6527 = vpack.c.b16 %v6493, %v6492
    %v6528 = vpack.c.b16 %v6495, %v6494
    %v6529 = vpack.c.b16 %v6497, %v6496
    %6562 = vmatprep.subr.bf16.mxu0 0
    %6563 = vmatpush1.bf16.msra.mxu0 %v6498
    %6564 = vmatprep.subr.bf16.mxu0 0
    %6565 = vmatpush1.bf16.msra.mxu0 %v6499
    %6566 = vmatprep.subr.bf16.mxu0 0
    %6567 = vmatpush1.bf16.msra.mxu0 %v6500
    %6568 = vmatprep.subr.bf16.mxu0 0
    %6569 = vmatpush1.bf16.msra.mxu0 %v6501
    %6570 = vmatprep.subr.bf16.mxu0 0
    %6571 = vmatpush1.bf16.msra.mxu0 %v6502
    %6572 = vmatprep.subr.bf16.mxu0 0
    %6573 = vmatpush1.bf16.msra.mxu0 %v6503
    %6574 = vmatprep.subr.bf16.mxu0 0
    %6575 = vmatpush1.bf16.msra.mxu0 %v6504
    %6576 = vmatprep.subr.bf16.mxu0 0
    %6577 = vmatpush1.bf16.msra.mxu0 %v6505
    %6578 = vmatprep.subr.bf16.mxu0 0
    %6579 = vmatpush1.bf16.msra.mxu0 %v6506
    %6580 = vmatprep.subr.bf16.mxu0 0
    %6581 = vmatpush1.bf16.msra.mxu0 %v6507
    %6582 = vmatprep.subr.bf16.mxu0 0
    %6583 = vmatpush1.bf16.msra.mxu0 %v6508
    %6584 = vmatprep.subr.bf16.mxu0 0
    %6585 = vmatpush1.bf16.msra.mxu0 %v6509
    %6586 = vmatprep.subr.bf16.mxu0 0
    %6587 = vmatpush1.bf16.msra.mxu0 %v6510
    %6588 = vmatprep.subr.bf16.mxu0 0
    %6589 = vmatpush1.bf16.msra.mxu0 %v6511
    %6590 = vmatprep.subr.bf16.mxu0 0
    %6591 = vmatpush1.bf16.msra.mxu0 %v6512
    %6592 = vmatprep.subr.bf16.mxu0 0
    %6593 = vmatpush1.bf16.msra.mxu0 %v6513
    %6594 = vmatprep.mubr.bf16.mxu0 %v6357
    %6595 = vmatmul.mubr.bf16.gmra.mrb[0].mxu0 %v6356
    %v6596 = vpop.f32.mrb[0].mxu0
    %v6597 = vpop.f32.mrb[0].mxu0
    %v6598 = vpop.f32.mrb[0].mxu0
    %v6599 = vadd.f32 %v6368, %v6598
    %v6600 = vpop.f32.mrb[0].mxu0
    %6601 = vmatprep.mubr.bf16.mxu0 %v6361
    %6602 = vmatmul.mubr.bf16.gmra.mrb[0].mxu0 %v6360
    %v6603 = vpop.f32.mrb[0].mxu0
    %v6604 = vadd.f32 %v6368, %v6603
    %v6605 = vpop.f32.mrb[0].mxu0
    %v6606 = vpop.f32.mrb[0].mxu0
    %v6607 = vpop.f32.mrb[0].mxu0
    %6608 = vdwg.mxu0
    %6609 = vmatprep.subr.bf16.mxu0 0
    %6610 = vmatpush1.bf16.msra.mxu0 %v6514
    %6611 = vmatprep.subr.bf16.mxu0 0
    %6612 = vmatpush1.bf16.msra.mxu0 %v6515
    %6613 = vmatprep.subr.bf16.mxu0 0
    %6614 = vmatpush1.bf16.msra.mxu0 %v6516
    %6615 = vmatprep.subr.bf16.mxu0 0
    %6616 = vmatpush1.bf16.msra.mxu0 %v6517
    %6617 = vmatprep.subr.bf16.mxu0 0
    %6618 = vmatpush1.bf16.msra.mxu0 %v6518
    %6619 = vmatprep.subr.bf16.mxu0 0
    %6620 = vmatpush1.bf16.msra.mxu0 %v6519
    %6621 = vmatprep.subr.bf16.mxu0 0
    %6622 = vmatpush1.bf16.msra.mxu0 %v6520
    %6623 = vmatprep.subr.bf16.mxu0 0
    %6624 = vmatpush1.bf16.msra.mxu0 %v6521
    %6625 = vmatprep.subr.bf16.mxu0 0
    %6626 = vmatpush1.bf16.msra.mxu0 %v6522
    %6627 = vmatprep.subr.bf16.mxu0 0
    %6628 = vmatpush1.bf16.msra.mxu0 %v6523
    %6629 = vmatprep.subr.bf16.mxu0 0
    %6630 = vmatpush1.bf16.msra.mxu0 %v6524
    %6631 = vmatprep.subr.bf16.mxu0 0
    %6632 = vmatpush1.bf16.msra.mxu0 %v6525
    %6633 = vmatprep.subr.bf16.mxu0 0
    %6634 = vmatpush1.bf16.msra.mxu0 %v6526
    %6635 = vmatprep.subr.bf16.mxu0 0
    %6636 = vmatpush1.bf16.msra.mxu0 %v6527
    %6637 = vmatprep.subr.bf16.mxu0 0
    %6638 = vmatpush1.bf16.msra.mxu0 %v6528
    %6639 = vmatprep.subr.bf16.mxu0 0
    %6640 = vmatpush1.bf16.msra.mxu0 %v6529
    %6641 = vmatprep.mubr.bf16.mxu0 %v6359
    %6642 = vmatmul.mubr.bf16.gmra.mrb[0].mxu0 %v6358
    %v6643 = vpop.f32.mrb[0].mxu0
    %v6644 = vpop.f32.mrb[0].mxu0
    %v6645 = vpop.f32.mrb[0].mxu0
    %v6646 = vadd.f32 %v6599, %v6645
    %v6647 = vpop.f32.mrb[0].mxu0
    %6648 = vmatprep.mubr.bf16.mxu0 %v6363
    %6649 = vmatmul.mubr.bf16.gmra.mrb[0].mxu0 %v6362
    %v6650 = vpop.f32.mrb[0].mxu0
    %v6651 = vadd.f32 %v6604, %v6650
    %v6652 = vpop.f32.mrb[0].mxu0
    %v6653 = vpop.f32.mrb[0].mxu0
    %v6654 = vpop.f32.mrb[0].mxu0
    %6655 = vdwg.mxu0
    %v6657 = vlaneseq
    %v6658 = vshrl.u32 %v6657, 7
    %v6659 = vsub.s32 0, %v6658
    %v6660 = vrot.slane %v4839, %v6659
    %v6662 = vmul.f32 %v6646, %v6660
    %v6663 = vmul.f32 %v6651, %v6660
    %v6664 = vadd.f32 %v5956, %v6662
    %v6665 = vadd.f32 %v5957, %v6663
    %6666 = vst [vmem:[#allocation20 - $0x2] sm:$0xfc] %v6664
    %6667 = vst [vmem:[#allocation20 + $0x6] sm:$0x3] %v6665
    // Predicated region
    $region126: #{timm_dinov2_vision_encoder_forward.1} parent=1 // pred_check
      _
    $region127: #{timm_dinov2_vision_encoder_forward.1} parent=1 // pred_check_branch
      %6669 = sbr.rel (0) target = $region129
    $region128: #{timm_dinov2_vision_encoder_forward.1} parent=1 // pred_region
      %s6671 = ssub.s32 128, 128
      %6672 = vsyncadd [#allocation4], %s6671
      %s6674 = sshll.u32 [#allocation20], 4
      %s6675 = int_to_ptr.vmem [resolvable:$true] %s6674
      %6677 = dma.vmem_to_hbm [thread:$0]  %s6675, 128, %s20, [#allocation4]
    $region129: #{timm_dinov2_vision_encoder_forward.1} parent=1 // pred_fallthru
      _
    // Predicated region
    $region130: #{timm_dinov2_vision_encoder_forward.1} parent=1 // pred_check
      _
    $region131: #{timm_dinov2_vision_encoder_forward.1} parent=1 // pred_check_branch
      %6679 = sbr.rel (0) target = $region133
    $region132: #{timm_dinov2_vision_encoder_forward.1} parent=1 // pred_region
      %6680 = dma.done [#allocation4], 128
    $region133: #{timm_dinov2_vision_encoder_forward.1} parent=1 // pred_fallthru
      _
    %6681 = vsyncpa [#allocation3], 1
    %6682 = vsyncpa [#allocation6], 1
    %6683 = vsyncpa [#allocation9], 1
    %6684 = vsyncpa [#allocation12], 1
    %6685 = vsyncpa [#allocation15], 1
    %6686 = vsyncpa [#allocation18], 1
    %6687 = vsyncpa [#allocation4], 1

</llo_original>
